<compile_context>
chip_gen: v5e
topology: v5e:2x2
jax: 0.10.0
libtpu: 0.0.40
codegen_flags: <defaults>
</compile_context>

<pallas_src>
import functools

import numpy as np
import jax
import jax.numpy as jnp
from jax.experimental import pallas as pl
from jax.experimental.pallas import tpu as pltpu

CPAD = 128          # lane-padded channel width (full 128-lane vregs)
PHASE = 32          # lane sub-block per stride-2 phase plane (real Cin <= 32)
NUM_CLASSES = 3
MAX_ACC_ROWS = 256  # cap on th*Wo so the (m,128) f32 accumulator stays in vregs


@functools.lru_cache(maxsize=None)
def _vmem_limit_bytes():
    """~96 MiB on 128-MiB parts (v5e/v6e), ~48 MiB on 64-MiB parts (v7x)."""
    cap = 64 * 1024 * 1024
    try:
        cap = int(getattr(pltpu.get_tpu_info(), "vmem_capacity_bytes", cap))
    except Exception:
        pass
    return int(min(cap * 3 // 4, 112 * 1024 * 1024))


# ----------------------------------------------------------------------------
# Fused conv kernel: im2col taps + MXU matmul + bias (+ReLU), lane-dense output
# ----------------------------------------------------------------------------
def _conv_kernel(x_ref, w_ref, b_ref, o_ref, *, taps, relu, th, wo, cpad):
    """One output row-tile.

    x_ref: (1, Hs, Ws, cpad) bf16 input slab (spatially padded / s2d packed)
    w_ref: (T, cpad, cpad)   bf16 per-tap weight matrices
    b_ref: (1, cpad)         f32  bias
    o_ref: (1, th, wo, cpad) bf16 output tile
    """
    r = pl.program_id(1)
    row0 = r * th
    if (th & (th - 1)) == 0:                 # power-of-two tile: alignment hint
        row0 = pl.multiple_of(row0, th)
    m = th * wo
    acc = jnp.zeros((m, cpad), jnp.float32)
    for t, (dh, dw) in enumerate(taps):
        # TODO(synk): load one (th, wo+kw-1) halo patch per dh and derive the
        #             dw shifts with pltpu.roll instead of re-slicing.
        patch = x_ref[0, pl.ds(row0 + dh, th), pl.ds(dw, wo), :]
        acc = acc + jnp.dot(patch.reshape(m, cpad), w_ref[t],
                            preferred_element_type=jnp.float32)
    acc = acc + b_ref[...]
    if relu:
        acc = jnp.maximum(acc, 0.0)
    o_ref[0] = acc.reshape(th, wo, cpad).astype(o_ref.dtype)


def conv2d(x, w_stack, bias_pad, *, kh, kw, stride, padding, relu):
    """Conv2d on a lane-padded NHWC bf16 activation.

    x        : (N, H, W, CPAD) bf16  (real channels in the low lanes)
    w_stack  : (T, CPAD, CPAD) bf16  packed per-tap weights
    bias_pad : (1, CPAD) f32
    returns  : (N, Ho, Wo, CPAD) bf16
    """
    N, H, W, _ = x.shape
    Ho = (H + 2 * padding - kh) // stride + 1
    Wo = (W + 2 * padding - kw) // stride + 1

    if stride == 1:
        slab = jnp.pad(x, ((0, 0), (padding, padding),
                           (padding, padding), (0, 0))) if padding else x
        taps = tuple((ki, kj) for ki in range(kh) for kj in range(kw))
    elif stride == 2:
        # Space-to-depth: the 4 phase planes are packed into disjoint 32-lane
        # sub-blocks of one 128-lane channel dim (valid while real Cin <= 32).
        # Taps sharing the same output-space (dh, dw) offset were merged into a
        # single weight matrix by _pack_weight_s2 (disjoint phase row blocks).
        dh_max, dw_max = (kh - 1) // 2, (kw - 1) // 2
        hs, ws = Ho + dh_max, Wo + dw_max
        xp = jnp.pad(x, ((0, 0), (padding, padding), (padding, padding), (0, 0)))
        xp = jnp.pad(xp, ((0, 0), (0, max(0, 2 * hs - xp.shape[1])),
                          (0, max(0, 2 * ws - xp.shape[2])), (0, 0)))
        xp = xp[:, :2 * hs, :2 * ws, :PHASE]
        # TODO(synk): fold this pad + phase repack into the producing conv's
        #             output write instead of an extra XLA pass over HBM.
        slab = jnp.concatenate(
            [xp[:, pr::2, pc::2, :] for pr in (0, 1) for pc in (0, 1)], axis=-1)
        taps = tuple((dh, dw) for dh in range(dh_max + 1)
                     for dw in range(dw_max + 1))
    else:
        raise NotImplementedError("stride must be 1 or 2")
    assert w_stack.shape[0] == len(taps)

    # Largest output-row tile whose (th*Wo, 128) f32 accumulator fits in vregs.
    th = 1
    for d in range(Ho, 0, -1):
        if Ho % d == 0 and d * Wo <= MAX_ACC_ROWS:
            th = d
            break

    flops = int(2 * N * Ho * Wo * CPAD * CPAD * len(taps))
    bytes_accessed = int(slab.size * 2 + w_stack.size * 2 + CPAD * 4
                         + N * Ho * Wo * CPAD * 2)

    # TODO(synk): the whole padded image stays VMEM-resident per grid step;
    #             H-halo tiling via the index_map is needed for large inputs.
    return pl.pallas_call(
        functools.partial(_conv_kernel, taps=taps, relu=relu, th=th, wo=Wo,
                          cpad=CPAD),
        out_shape=jax.ShapeDtypeStruct((N, Ho, Wo, CPAD), jnp.bfloat16),
        grid=(N, Ho // th),
        in_specs=[pl.BlockSpec((1,) + slab.shape[1:], lambda n, r: (n, 0, 0, 0)),
                  pl.BlockSpec(w_stack.shape, lambda n, r: (0, 0, 0)),
                  pl.BlockSpec((1, CPAD), lambda n, r: (0, 0))],
        out_specs=pl.BlockSpec((1, th, Wo, CPAD), lambda n, r: (n, r, 0, 0)),
        compiler_params=pltpu.CompilerParams(
            dimension_semantics=("parallel", "parallel"),
            vmem_limit_bytes=_vmem_limit_bytes()),
        cost_estimate=pl.CostEstimate(flops=flops, transcendentals=0,
                                      bytes_accessed=bytes_accessed),
    )(slab, w_stack, bias_pad)


# ----------------------------------------------------------------------------
# Separable bilinear resize: H-pass matmul, then per-row W-pass matmul
# ----------------------------------------------------------------------------
def _bilinear_factors(in_size, out_size, align_corners):
    dst = np.arange(out_size, dtype=np.float64)
    if align_corners:
        src = (np.zeros_like(dst) if out_size == 1
               else dst * (in_size - 1) / (out_size - 1))
    else:
        src = (dst + 0.5) * (in_size / out_size) - 0.5
        src = np.maximum(src, 0.0)                    # PyTorch clamps at 0
    idx0 = np.minimum(np.floor(src).astype(np.int64), in_size - 1)
    idx1 = np.minimum(idx0 + 1, in_size - 1)
    lam = (src - idx0).astype(np.float32)
    M = np.zeros((out_size, in_size), dtype=np.float32)
    M[np.arange(out_size), idx0] += 1.0 - lam
    M[np.arange(out_size), idx1] += lam
    return M


def _resize_h_kernel(r_ref, x_ref, o_ref):
    o_ref[0] = jnp.dot(r_ref[...], x_ref[0],
                       preferred_element_type=jnp.float32).astype(o_ref.dtype)


def _resize_w_kernel(*refs, out_h, has_add):
    if has_add:
        rw_ref, x_ref, a_ref, o_ref = refs
    else:
        rw_ref, x_ref, o_ref = refs
        a_ref = None
    rw = rw_ref[...]
    for oh in range(out_h):
        row = jnp.dot(rw, x_ref[0, oh], preferred_element_type=jnp.float32)
        if has_add:
            row = row + a_ref[0, oh].astype(jnp.float32)
        o_ref[0, oh] = row.astype(o_ref.dtype)


def bilinear_resize(x, out_h, out_w, align_corners, add=None):
    """Separable bilinear resize of an NHWC lane-padded bf16 tensor.

    Pass 1 contracts H as one lane-dense (out_h, H) @ (H, W*C) matmul per
    image; pass 2 contracts W row by row.  `add` (same shape as the output)
    is fused into pass 2 and realises the decoder channel-concat for free.
    """
    N, H, W, C = x.shape
    rh = jnp.asarray(_bilinear_factors(H, out_h, align_corners), jnp.bfloat16)
    rw = jnp.asarray(_bilinear_factors(W, out_w, align_corners), jnp.bfloat16)
    vmem = _vmem_limit_bytes()

    t = pl.pallas_call(
        _resize_h_kernel,
        out_shape=jax.ShapeDtypeStruct((N, out_h, W * C), jnp.bfloat16),
        grid=(N,),
        in_specs=[pl.BlockSpec((out_h, H), lambda n: (0, 0)),
                  pl.BlockSpec((1, H, W * C), lambda n: (n, 0, 0))],
        out_specs=pl.BlockSpec((1, out_h, W * C), lambda n: (n, 0, 0)),
        compiler_params=pltpu.CompilerParams(
            dimension_semantics=("parallel",), vmem_limit_bytes=vmem),
        cost_estimate=pl.CostEstimate(
            flops=int(2 * N * out_h * H * W * C), transcendentals=0,
            bytes_accessed=int((rh.size + x.size + N * out_h * W * C) * 2)),
    )(rh, x.reshape(N, H, W * C)).reshape(N, out_h, W, C)

    has_add = add is not None
    in_specs = [pl.BlockSpec((out_w, W), lambda n: (0, 0)),
                pl.BlockSpec((1, out_h, W, C), lambda n: (n, 0, 0, 0))]
    args = [rw, t]
    if has_add:
        in_specs.append(pl.BlockSpec((1, out_h, out_w, C),
                                     lambda n: (n, 0, 0, 0)))
        args.append(add)

    return pl.pallas_call(
        functools.partial(_resize_w_kernel, out_h=out_h, has_add=has_add),
        out_shape=jax.ShapeDtypeStruct((N, out_h, out_w, C), jnp.bfloat16),
        grid=(N,),
        in_specs=in_specs,
        out_specs=pl.BlockSpec((1, out_h, out_w, C), lambda n: (n, 0, 0, 0)),
        compiler_params=pltpu.CompilerParams(
            dimension_semantics=("parallel",), vmem_limit_bytes=vmem),
        cost_estimate=pl.CostEstimate(
            flops=int(2 * N * out_h * out_w * W * C), transcendentals=0,
            bytes_accessed=int((rw.size + t.size +
                                (2 if has_add else 1) * N * out_h * out_w * C) * 2)),
    )(*args)


# ----------------------------------------------------------------------------
# Deterministic synthetic parameters + packing (BN folded into convs)
# ----------------------------------------------------------------------------
def init_params(key):
    ks = jax.random.split(key, 10)
    s = 0.1
    return {
        # backbone: two stride-2 3x3 convs -> 'low_level_feat', 'out'
        "bb_w1": s * jax.random.normal(ks[0], (8, 4, 3, 3), jnp.float32),
        "bb_b1": s * jax.random.normal(ks[1], (8,), jnp.float32),
        "bb_w2": s * jax.random.normal(ks[2], (16, 8, 3, 3), jnp.float32),
        "bb_b2": s * jax.random.normal(ks[3], (16,), jnp.float32),
        # classifier (ASPP-lite): 1x1 conv 16 -> 8
        "cls_w": s * jax.random.normal(ks[4], (8, 16, 1, 1), jnp.float32),
        "cls_b": s * jax.random.normal(ks[5], (8,), jnp.float32),
        # decoder: 1x1 low-level projection 8 -> 4, then 3x3 fuse conv 12 -> 3
        "dec_proj_w": s * jax.random.normal(ks[6], (4, 8, 1, 1), jnp.float32),
        "dec_proj_b": s * jax.random.normal(ks[7], (4,), jnp.float32),
        "dec_fuse_w": s * jax.random.normal(ks[8], (3, 12, 3, 3), jnp.float32),
        "dec_fuse_b": s * jax.random.normal(ks[9], (3,), jnp.float32),
    }


def _pack_weight_s1(w, cin_off=0, cout_off=0):
    """(Cout, Cin, kh, kw) torch layout -> (kh*kw, CPAD, CPAD) bf16 tap stack."""
    Cout, Cin, kh, kw = w.shape
    wt = jnp.transpose(w, (2, 3, 1, 0)).reshape(kh * kw, Cin, Cout)
    wp = jnp.zeros((kh * kw, CPAD, CPAD), jnp.bfloat16)
    return wp.at[:, cin_off:cin_off + Cin,
                 cout_off:cout_off + Cout].set(wt.astype(jnp.bfloat16))


def _pack_weight_s2(w):
    """(Cout, Cin, 3, 3) -> (n_groups, CPAD, CPAD) bf16 for the phase-packed
    stride-2 space-to-depth conv.  Taps sharing the same output-space offset
    (dh, dw) are merged: their phases occupy disjoint 32-lane row blocks."""
    Cout, Cin, kh, kw = w.shape
    assert Cin <= PHASE, "phase-packed s2d requires real Cin <= 32"
    dh_max, dw_max = (kh - 1) // 2, (kw - 1) // 2
    wp = jnp.zeros(((dh_max + 1) * (dw_max + 1), CPAD, CPAD), jnp.bfloat16)
    for ki in range(kh):
        for kj in range(kw):
            g = (ki // 2) * (dw_max + 1) + (kj // 2)
            phase = 2 * (ki % 2) + (kj % 2)
            wp = wp.at[g, phase * PHASE:phase * PHASE + Cin, :Cout].set(
                jnp.transpose(w[:, :, ki, kj]).astype(jnp.bfloat16))
    return wp


def _pack_bias(b, off=0):
    bp = jnp.zeros((1, CPAD), jnp.float32)
    return bp.at[0, off:off + b.shape[0]].set(b.astype(jnp.float32))


def pack_params(p):
    return {
        "bb1_w": _pack_weight_s2(p["bb_w1"]), "bb1_b": _pack_bias(p["bb_b1"]),
        "bb2_w": _pack_weight_s2(p["bb_w2"]), "bb2_b": _pack_bias(p["bb_b2"]),
        "cls_w": _pack_weight_s1(p["cls_w"]), "cls_b": _pack_bias(p["cls_b"]),
        # low-level projection writes its 4 channels at lanes 8..11 so the
        # decoder concat([up(x), low]) becomes a lane-disjoint add.
        "proj_w": _pack_weight_s1(p["dec_proj_w"], cout_off=8),
        "proj_b": _pack_bias(p["dec_proj_b"], off=8),
        "fuse_w": _pack_weight_s1(p["dec_fuse_w"]),
        "fuse_b": _pack_bias(p["dec_fuse_b"]),
    }


# ----------------------------------------------------------------------------
# _DeepLabV3Plus.forward (NHWC / bf16 / lane-padded internally)
# ----------------------------------------------------------------------------
# TODO(synk): the pretrained ResNet-101 backbone + ASPP head of the original
#             module are represented by a small synthetic conv backbone /
#             classifier with BatchNorm folded into the convs (inference);
#             Dropout is an inference no-op, aux_classifier is None.
def deeplabv3plus_forward(packed, x_nchw):
    N, C, H, W = x_nchw.shape
    # NCHW -> NHWC and channel pad to 128 lanes once at the model boundary.
    x = jnp.transpose(x_nchw, (0, 2, 3, 1))
    x = jnp.pad(x, ((0, 0), (0, 0), (0, 0), (0, CPAD - C))).astype(jnp.bfloat16)

    # backbone(x) -> {'low_level_feat', 'out'}
    low = conv2d(x, packed["bb1_w"], packed["bb1_b"],
                 kh=3, kw=3, stride=2, padding=1, relu=True)       # lanes [0:8)
    feat = conv2d(low, packed["bb2_w"], packed["bb2_b"],
                  kh=3, kw=3, stride=2, padding=1, relu=True)      # lanes [0:16)

    # classifier(features['out'])
    y = conv2d(feat, packed["cls_w"], packed["cls_b"],
               kh=1, kw=1, stride=1, padding=0, relu=True)         # lanes [0:8)

    # decoder(y, low_level_feat): project low-level features into lanes [8:12)
    ll = conv2d(low, packed["proj_w"], packed["proj_b"],
                kh=1, kw=1, stride=1, padding=0, relu=True)        # lanes [8:12)
    # Decoder upsample uses align_corners=True; the channel concat is fused
    # into the resize's second pass as a lane-disjoint add.
    y_cat = bilinear_resize(y, ll.shape[1], ll.shape[2],
                            align_corners=True, add=ll)            # lanes [0:12)
    y2 = conv2d(y_cat, packed["fuse_w"], packed["fuse_b"],
                kh=3, kw=3, stride=1, padding=1, relu=False)       # lanes [0:3)

    # F.interpolate(..., size=input_shape, mode='bilinear', align_corners=False)
    out_full = bilinear_resize(y2, H, W, align_corners=False)
    out = jnp.transpose(out_full[..., :NUM_CLASSES].astype(jnp.float32),
                        (0, 3, 1, 2))

    # aux_classifier is None for this instantiation -> no 'aux' entry.
    return {"out": out}


if __name__ == "__main__":
    key = jax.random.PRNGKey(0)
    k_param, k_input = jax.random.split(key)
    params = init_params(k_param)
    packed = pack_params(params)
    x = jax.random.normal(k_input, (2, 4, 16, 16), jnp.float32)

    fwd = jax.jit(deeplabv3plus_forward)
    result = fwd(packed, x)
    out = jax.block_until_ready(result["out"])

    assert out.shape == (2, 3, 16, 16), out.shape
    assert out.dtype == jnp.float32
    assert bool(jnp.all(jnp.isfinite(out)))
    print("KERNEL_OK")
</pallas_src>

<mosaic_0001>
module attributes {stable_mosaic.version = 11 : i64} {
  func.func @_conv_kernel(%arg0: i32, %arg1: i32, %arg2: memref<1x8x8x128xbf16, #tpu.memory_space<vmem>>, %arg3: memref<1x128x128xbf16, #tpu.memory_space<vmem>>, %arg4: memref<1x128xf32, #tpu.memory_space<vmem>>, %arg5: memref<1x8x8x128xbf16, #tpu.memory_space<vmem>>) attributes {dimension_semantics = [#tpu.dimension_semantics<parallel>, #tpu.dimension_semantics<parallel>], iteration_bounds = array<i64: 2, 1>, scalar_prefetch = 0 : i64, scratch_operands = 0 : i64, tpu.core_type = #tpu.core_type<tc>, window_params = [{transform_indices = @transform_0, window_bounds = array<i64: 1, 8, 8, 128>}, {pipeline_mode = #tpu.pipeline_mode<synchronous>, transform_indices = @transform_1, window_bounds = array<i64: 1, 128, 128>}, {pipeline_mode = #tpu.pipeline_mode<synchronous>, transform_indices = @transform_2, window_bounds = array<i64: 1, 128>}, {transform_indices = @transform_3, window_bounds = array<i64: 1, 8, 8, 128>}]} {
    %c8_i32 = arith.constant 8 : i32
    %0 = arith.muli %arg1, %c8_i32 : i32
    %1 = tpu.assume_multiple %0, 8 : i32
    %cst = arith.constant 0.000000e+00 : f32
    %2 = vector.broadcast %cst : f32 to vector<64x128xf32>
    %c0_i32 = arith.constant 0 : i32
    %3 = arith.addi %1, %c0_i32 : i32
    %c0 = arith.constant 0 : index
    %4 = arith.index_cast %3 : i32 to index
    %c0_0 = arith.constant 0 : index
    %c0_1 = arith.constant 0 : index
    %5 = vector.load %arg2[%c0, %4, %c0_0, %c0_1] : memref<1x8x8x128xbf16, #tpu.memory_space<vmem>>, vector<1x8x8x128xbf16>
    %6 = vector.shape_cast %5 : vector<1x8x8x128xbf16> to vector<8x8x128xbf16>
    %7 = vector.shape_cast %6 : vector<8x8x128xbf16> to vector<64x128xbf16>
    %c0_2 = arith.constant 0 : index
    %c0_3 = arith.constant 0 : index
    %c0_4 = arith.constant 0 : index
    %8 = vector.load %arg3[%c0_2, %c0_3, %c0_4] : memref<1x128x128xbf16, #tpu.memory_space<vmem>>, vector<1x128x128xbf16>
    %9 = vector.shape_cast %8 : vector<1x128x128xbf16> to vector<128x128xbf16>
    %cst_5 = arith.constant dense<0.000000e+00> : vector<64x128xf32>
    %10 = tpu.matmul %7, %9, %cst_5 {dimension_numbers = #tpu.dot_dimension_numbers<[1], [0], [0], [1], [0, 0, 1, 1], [], []>} : vector<64x128xbf16>, vector<128x128xbf16>, vector<64x128xf32> -> vector<64x128xf32>
    %11 = arith.addf %2, %10 : vector<64x128xf32>
    %c0_6 = arith.constant 0 : index
    %c0_7 = arith.constant 0 : index
    %12 = vector.load %arg4[%c0_6, %c0_7] : memref<1x128xf32, #tpu.memory_space<vmem>>, vector<1x128xf32>
    %13 = vector.broadcast %12 : vector<1x128xf32> to vector<64x128xf32>
    %14 = arith.addf %11, %13 : vector<64x128xf32>
    %cst_8 = arith.constant 0.000000e+00 : f32
    %15 = vector.broadcast %cst_8 : f32 to vector<64x128xf32>
    %16 = arith.maximumf %14, %15 : vector<64x128xf32>
    %17 = vector.shape_cast %16 : vector<64x128xf32> to vector<8x8x128xf32>
    %18 = arith.truncf %17 : vector<8x8x128xf32> to vector<8x8x128xbf16>
    %c0_9 = arith.constant 0 : index
    %c0_10 = arith.constant 0 : index
    %c0_11 = arith.constant 0 : index
    %c0_12 = arith.constant 0 : index
    %19 = vector.load %arg5[%c0_9, %c0_10, %c0_11, %c0_12] : memref<1x8x8x128xbf16, #tpu.memory_space<vmem>>, vector<1x8x8x128xbf16>
    %20 = vector.shape_cast %19 : vector<1x8x8x128xbf16> to vector<8x8x128xbf16>
    %21 = vector.shape_cast %18 : vector<8x8x128xbf16> to vector<1x8x8x128xbf16>
    tpu.vector_store %arg5[%c0_9, %c0_10, %c0_11, %c0_12], %21 {strides = array<i32>} : memref<1x8x8x128xbf16, #tpu.memory_space<vmem>>, vector<1x8x8x128xbf16>,
    return
  }
  func.func @transform_0(%arg0: i32, %arg1: i32) -> (i32, i32, i32, i32) {
    %c0_i32 = arith.constant 0 : i32
    %c0_i32_0 = arith.constant 0 : i32
    %c0_i32_1 = arith.constant 0 : i32
    %c0_i32_2 = arith.constant 0 : i32
    return %arg0, %c0_i32, %c0_i32_0, %c0_i32_1 : i32, i32, i32, i32
  }
  func.func @transform_1(%arg0: i32, %arg1: i32) -> (i32, i32, i32) {
    %c0_i32 = arith.constant 0 : i32
    %c0_i32_0 = arith.constant 0 : i32
    %c0_i32_1 = arith.constant 0 : i32
    %c0_i32_2 = arith.constant 0 : i32
    return %c0_i32, %c0_i32_0, %c0_i32_1 : i32, i32, i32
  }
  func.func @transform_2(%arg0: i32, %arg1: i32) -> (i32, i32) {
    %c0_i32 = arith.constant 0 : i32
    %c0_i32_0 = arith.constant 0 : i32
    %c0_i32_1 = arith.constant 0 : i32
    return %c0_i32, %c0_i32_0 : i32, i32
  }
  func.func @transform_3(%arg0: i32, %arg1: i32) -> (i32, i32, i32, i32) {
    %c0_i32 = arith.constant 0 : i32
    %c0_i32_0 = arith.constant 0 : i32
    %c0_i32_1 = arith.constant 0 : i32
    return %arg0, %arg1, %c0_i32, %c0_i32_0 : i32, i32, i32, i32
  }
}

module attributes {stable_mosaic.version = 11 : i64} {
  func.func @_conv_kernel(%arg0: i32, %arg1: i32, %arg2: memref<1x9x9x128xbf16, #tpu.memory_space<vmem>>, %arg3: memref<4x128x128xbf16, #tpu.memory_space<vmem>>, %arg4: memref<1x128xf32, #tpu.memory_space<vmem>>, %arg5: memref<1x8x8x128xbf16, #tpu.memory_space<vmem>>) attributes {dimension_semantics = [#tpu.dimension_semantics<parallel>, #tpu.dimension_semantics<parallel>], iteration_bounds = array<i64: 2, 1>, scalar_prefetch = 0 : i64, scratch_operands = 0 : i64, tpu.core_type = #tpu.core_type<tc>, window_params = [{transform_indices = @transform_0, window_bounds = array<i64: 1, 9, 9, 128>}, {pipeline_mode = #tpu.pipeline_mode<synchronous>, transform_indices = @transform_1, window_bounds = array<i64: 4, 128, 128>}, {pipeline_mode = #tpu.pipeline_mode<synchronous>, transform_indices = @transform_2, window_bounds = array<i64: 1, 128>}, {transform_indices = @transform_3, window_bounds = array<i64: 1, 8, 8, 128>}]} {
    %c8_i32 = arith.constant 8 : i32
    %0 = arith.muli %arg1, %c8_i32 : i32
    %1 = tpu.assume_multiple %0, 8 : i32
    %cst = arith.constant 0.000000e+00 : f32
    %2 = vector.broadcast %cst : f32 to vector<64x128xf32>
    %c0_i32 = arith.constant 0 : i32
    %3 = arith.addi %1, %c0_i32 : i32
    %c0 = arith.constant 0 : index
    %4 = arith.index_cast %3 : i32 to index
    %c0_0 = arith.constant 0 : index
    %c0_1 = arith.constant 0 : index
    %5 = vector.load %arg2[%c0, %4, %c0_0, %c0_1] : memref<1x9x9x128xbf16, #tpu.memory_space<vmem>>, vector<1x8x8x128xbf16>
    %6 = vector.shape_cast %5 : vector<1x8x8x128xbf16> to vector<8x8x128xbf16>
    %7 = vector.shape_cast %6 : vector<8x8x128xbf16> to vector<64x128xbf16>
    %c0_2 = arith.constant 0 : index
    %c0_3 = arith.constant 0 : index
    %c0_4 = arith.constant 0 : index
    %8 = vector.load %arg3[%c0_2, %c0_3, %c0_4] : memref<4x128x128xbf16, #tpu.memory_space<vmem>>, vector<1x128x128xbf16>
    %9 = vector.shape_cast %8 : vector<1x128x128xbf16> to vector<128x128xbf16>
    %cst_5 = arith.constant dense<0.000000e+00> : vector<64x128xf32>
    %10 = tpu.matmul %7, %9, %cst_5 {dimension_numbers = #tpu.dot_dimension_numbers<[1], [0], [0], [1], [0, 0, 1, 1], [], []>} : vector<64x128xbf16>, vector<128x128xbf16>, vector<64x128xf32> -> vector<64x128xf32>
    %11 = arith.addf %2, %10 : vector<64x128xf32>
    %c0_i32_6 = arith.constant 0 : i32
    %12 = arith.addi %1, %c0_i32_6 : i32
    %c0_7 = arith.constant 0 : index
    %13 = arith.index_cast %12 : i32 to index
    %c1 = arith.constant 1 : index
    %c0_8 = arith.constant 0 : index
    %14 = vector.load %arg2[%c0_7, %13, %c1, %c0_8] : memref<1x9x9x128xbf16, #tpu.memory_space<vmem>>, vector<1x8x8x128xbf16>
    %15 = vector.shape_cast %14 : vector<1x8x8x128xbf16> to vector<8x8x128xbf16>
    %16 = vector.shape_cast %15 : vector<8x8x128xbf16> to vector<64x128xbf16>
    %c1_9 = arith.constant 1 : index
    %c0_10 = arith.constant 0 : index
    %c0_11 = arith.constant 0 : index
    %17 = vector.load %arg3[%c1_9, %c0_10, %c0_11] : memref<4x128x128xbf16, #tpu.memory_space<vmem>>, vector<1x128x128xbf16>
    %18 = vector.shape_cast %17 : vector<1x128x128xbf16> to vector<128x128xbf16>
    %cst_12 = arith.constant dense<0.000000e+00> : vector<64x128xf32>
    %19 = tpu.matmul %16, %18, %cst_12 {dimension_numbers = #tpu.dot_dimension_numbers<[1], [0], [0], [1], [0, 0, 1, 1], [], []>} : vector<64x128xbf16>, vector<128x128xbf16>, vector<64x128xf32> -> vector<64x128xf32>
    %20 = arith.addf %11, %19 : vector<64x128xf32>
    %c1_i32 = arith.constant 1 : i32
    %21 = arith.addi %1, %c1_i32 : i32
    %c0_13 = arith.constant 0 : index
    %22 = arith.index_cast %21 : i32 to index
    %c0_14 = arith.constant 0 : index
    %c0_15 = arith.constant 0 : index
    %23 = vector.load %arg2[%c0_13, %22, %c0_14, %c0_15] : memref<1x9x9x128xbf16, #tpu.memory_space<vmem>>, vector<1x8x8x128xbf16>
    %24 = vector.shape_cast %23 : vector<1x8x8x128xbf16> to vector<8x8x128xbf16>
    %25 = vector.shape_cast %24 : vector<8x8x128xbf16> to vector<64x128xbf16>
    %c2 = arith.constant 2 : index
    %c0_16 = arith.constant 0 : index
    %c0_17 = arith.constant 0 : index
    %26 = vector.load %arg3[%c2, %c0_16, %c0_17] : memref<4x128x128xbf16, #tpu.memory_space<vmem>>, vector<1x128x128xbf16>
    %27 = vector.shape_cast %26 : vector<1x128x128xbf16> to vector<128x128xbf16>
    %cst_18 = arith.constant dense<0.000000e+00> : vector<64x128xf32>
    %28 = tpu.matmul %25, %27, %cst_18 {dimension_numbers = #tpu.dot_dimension_numbers<[1], [0], [0], [1], [0, 0, 1, 1], [], []>} : vector<64x128xbf16>, vector<128x128xbf16>, vector<64x128xf32> -> vector<64x128xf32>
    %29 = arith.addf %20, %28 : vector<64x128xf32>
    %c1_i32_19 = arith.constant 1 : i32
    %30 = arith.addi %1, %c1_i32_19 : i32
    %c0_20 = arith.constant 0 : index
    %31 = arith.index_cast %30 : i32 to index
    %c1_21 = arith.constant 1 : index
    %c0_22 = arith.constant 0 : index
    %32 = vector.load %arg2[%c0_20, %31, %c1_21, %c0_22] : memref<1x9x9x128xbf16, #tpu.memory_space<vmem>>, vector<1x8x8x128xbf16>
    %33 = vector.shape_cast %32 : vector<1x8x8x128xbf16> to vector<8x8x128xbf16>
    %34 = vector.shape_cast %33 : vector<8x8x128xbf16> to vector<64x128xbf16>
    %c3 = arith.constant 3 : index
    %c0_23 = arith.constant 0 : index
    %c0_24 = arith.constant 0 : index
    %35 = vector.load %arg3[%c3, %c0_23, %c0_24] : memref<4x128x128xbf16, #tpu.memory_space<vmem>>, vector<1x128x128xbf16>
    %36 = vector.shape_cast %35 : vector<1x128x128xbf16> to vector<128x128xbf16>
    %cst_25 = arith.constant dense<0.000000e+00> : vector<64x128xf32>
    %37 = tpu.matmul %34, %36, %cst_25 {dimension_numbers = #tpu.dot_dimension_numbers<[1], [0], [0], [1], [0, 0, 1, 1], [], []>} : vector<64x128xbf16>, vector<128x128xbf16>, vector<64x128xf32> -> vector<64x128xf32>
    %38 = arith.addf %29, %37 : vector<64x128xf32>
    %c0_26 = arith.constant 0 : index
    %c0_27 = arith.constant 0 : index
    %39 = vector.load %arg4[%c0_26, %c0_27] : memref<1x128xf32, #tpu.memory_space<vmem>>, vector<1x128xf32>
    %40 = vector.broadcast %39 : vector<1x128xf32> to vector<64x128xf32>
    %41 = arith.addf %38, %40 : vector<64x128xf32>
    %cst_28 = arith.constant 0.000000e+00 : f32
    %42 = vector.broadcast %cst_28 : f32 to vector<64x128xf32>
    %43 = arith.maximumf %41, %42 : vector<64x128xf32>
    %44 = vector.shape_cast %43 : vector<64x128xf32> to vector<8x8x128xf32>
    %45 = arith.truncf %44 : vector<8x8x128xf32> to vector<8x8x128xbf16>
    %c0_29 = arith.constant 0 : index
    %c0_30 = arith.constant 0 : index
    %c0_31 = arith.constant 0 : index
    %c0_32 = arith.constant 0 : index
    %46 = vector.load %arg5[%c0_29, %c0_30, %c0_31, %c0_32] : memref<1x8x8x128xbf16, #tpu.memory_space<vmem>>, vector<1x8x8x128xbf16>
    %47 = vector.shape_cast %46 : vector<1x8x8x128xbf16> to vector<8x8x128xbf16>
    %48 = vector.shape_cast %45 : vector<8x8x128xbf16> to vector<1x8x8x128xbf16>
    tpu.vector_store %arg5[%c0_29, %c0_30, %c0_31, %c0_32], %48 {strides = array<i32>} : memref<1x8x8x128xbf16, #tpu.memory_space<vmem>>, vector<1x8x8x128xbf16>,
    return
  }
  func.func @transform_0(%arg0: i32, %arg1: i32) -> (i32, i32, i32, i32) {
    %c0_i32 = arith.constant 0 : i32
    %c0_i32_0 = arith.constant 0 : i32
    %c0_i32_1 = arith.constant 0 : i32
    %c0_i32_2 = arith.constant 0 : i32
    return %arg0, %c0_i32, %c0_i32_0, %c0_i32_1 : i32, i32, i32, i32
  }
  func.func @transform_1(%arg0: i32, %arg1: i32) -> (i32, i32, i32) {
    %c0_i32 = arith.constant 0 : i32
    %c0_i32_0 = arith.constant 0 : i32
    %c0_i32_1 = arith.constant 0 : i32
    %c0_i32_2 = arith.constant 0 : i32
    return %c0_i32, %c0_i32_0, %c0_i32_1 : i32, i32, i32
  }
  func.func @transform_2(%arg0: i32, %arg1: i32) -> (i32, i32) {
    %c0_i32 = arith.constant 0 : i32
    %c0_i32_0 = arith.constant 0 : i32
    %c0_i32_1 = arith.constant 0 : i32
    return %c0_i32, %c0_i32_0 : i32, i32
  }
  func.func @transform_3(%arg0: i32, %arg1: i32) -> (i32, i32, i32, i32) {
    %c0_i32 = arith.constant 0 : i32
    %c0_i32_0 = arith.constant 0 : i32
    %c0_i32_1 = arith.constant 0 : i32
    return %arg0, %arg1, %c0_i32, %c0_i32_0 : i32, i32, i32, i32
  }
}

module attributes {stable_mosaic.version = 11 : i64} {
  func.func @_conv_kernel(%arg0: i32, %arg1: i32, %arg2: memref<1x5x5x128xbf16, #tpu.memory_space<vmem>>, %arg3: memref<4x128x128xbf16, #tpu.memory_space<vmem>>, %arg4: memref<1x128xf32, #tpu.memory_space<vmem>>, %arg5: memref<1x4x4x128xbf16, #tpu.memory_space<vmem>>) attributes {dimension_semantics = [#tpu.dimension_semantics<parallel>, #tpu.dimension_semantics<parallel>], iteration_bounds = array<i64: 2, 1>, scalar_prefetch = 0 : i64, scratch_operands = 0 : i64, tpu.core_type = #tpu.core_type<tc>, window_params = [{transform_indices = @transform_0, window_bounds = array<i64: 1, 5, 5, 128>}, {pipeline_mode = #tpu.pipeline_mode<synchronous>, transform_indices = @transform_1, window_bounds = array<i64: 4, 128, 128>}, {pipeline_mode = #tpu.pipeline_mode<synchronous>, transform_indices = @transform_2, window_bounds = array<i64: 1, 128>}, {transform_indices = @transform_3, window_bounds = array<i64: 1, 4, 4, 128>}]} {
    %c4_i32 = arith.constant 4 : i32
    %0 = arith.muli %arg1, %c4_i32 : i32
    %1 = tpu.assume_multiple %0, 4 : i32
    %cst = arith.constant 0.000000e+00 : f32
    %2 = vector.broadcast %cst : f32 to vector<16x128xf32>
    %c0_i32 = arith.constant 0 : i32
    %3 = arith.addi %1, %c0_i32 : i32
    %c0 = arith.constant 0 : index
    %4 = arith.index_cast %3 : i32 to index
    %c0_0 = arith.constant 0 : index
    %c0_1 = arith.constant 0 : index
    %5 = vector.load %arg2[%c0, %4, %c0_0, %c0_1] : memref<1x5x5x128xbf16, #tpu.memory_space<vmem>>, vector<1x4x4x128xbf16>
    %6 = vector.shape_cast %5 : vector<1x4x4x128xbf16> to vector<4x4x128xbf16>
    %7 = vector.shape_cast %6 : vector<4x4x128xbf16> to vector<16x128xbf16>
    %c0_2 = arith.constant 0 : index
    %c0_3 = arith.constant 0 : index
    %c0_4 = arith.constant 0 : index
    %8 = vector.load %arg3[%c0_2, %c0_3, %c0_4] : memref<4x128x128xbf16, #tpu.memory_space<vmem>>, vector<1x128x128xbf16>
    %9 = vector.shape_cast %8 : vector<1x128x128xbf16> to vector<128x128xbf16>
    %cst_5 = arith.constant dense<0.000000e+00> : vector<16x128xf32>
    %10 = tpu.matmul %7, %9, %cst_5 {dimension_numbers = #tpu.dot_dimension_numbers<[1], [0], [0], [1], [0, 0, 1, 1], [], []>} : vector<16x128xbf16>, vector<128x128xbf16>, vector<16x128xf32> -> vector<16x128xf32>
    %11 = arith.addf %2, %10 : vector<16x128xf32>
    %c0_i32_6 = arith.constant 0 : i32
    %12 = arith.addi %1, %c0_i32_6 : i32
    %c0_7 = arith.constant 0 : index
    %13 = arith.index_cast %12 : i32 to index
    %c1 = arith.constant 1 : index
    %c0_8 = arith.constant 0 : index
    %14 = vector.load %arg2[%c0_7, %13, %c1, %c0_8] : memref<1x5x5x128xbf16, #tpu.memory_space<vmem>>, vector<1x4x4x128xbf16>
    %15 = vector.shape_cast %14 : vector<1x4x4x128xbf16> to vector<4x4x128xbf16>
    %16 = vector.shape_cast %15 : vector<4x4x128xbf16> to vector<16x128xbf16>
    %c1_9 = arith.constant 1 : index
    %c0_10 = arith.constant 0 : index
    %c0_11 = arith.constant 0 : index
    %17 = vector.load %arg3[%c1_9, %c0_10, %c0_11] : memref<4x128x128xbf16, #tpu.memory_space<vmem>>, vector<1x128x128xbf16>
    %18 = vector.shape_cast %17 : vector<1x128x128xbf16> to vector<128x128xbf16>
    %cst_12 = arith.constant dense<0.000000e+00> : vector<16x128xf32>
    %19 = tpu.matmul %16, %18, %cst_12 {dimension_numbers = #tpu.dot_dimension_numbers<[1], [0], [0], [1], [0, 0, 1, 1], [], []>} : vector<16x128xbf16>, vector<128x128xbf16>, vector<16x128xf32> -> vector<16x128xf32>
    %20 = arith.addf %11, %19 : vector<16x128xf32>
    %c1_i32 = arith.constant 1 : i32
    %21 = arith.addi %1, %c1_i32 : i32
    %c0_13 = arith.constant 0 : index
    %22 = arith.index_cast %21 : i32 to index
    %c0_14 = arith.constant 0 : index
    %c0_15 = arith.constant 0 : index
    %23 = vector.load %arg2[%c0_13, %22, %c0_14, %c0_15] : memref<1x5x5x128xbf16, #tpu.memory_space<vmem>>, vector<1x4x4x128xbf16>
    %24 = vector.shape_cast %23 : vector<1x4x4x128xbf16> to vector<4x4x128xbf16>
    %25 = vector.shape_cast %24 : vector<4x4x128xbf16> to vector<16x128xbf16>
    %c2 = arith.constant 2 : index
    %c0_16 = arith.constant 0 : index
    %c0_17 = arith.constant 0 : index
    %26 = vector.load %arg3[%c2, %c0_16, %c0_17] : memref<4x128x128xbf16, #tpu.memory_space<vmem>>, vector<1x128x128xbf16>
    %27 = vector.shape_cast %26 : vector<1x128x128xbf16> to vector<128x128xbf16>
    %cst_18 = arith.constant dense<0.000000e+00> : vector<16x128xf32>
    %28 = tpu.matmul %25, %27, %cst_18 {dimension_numbers = #tpu.dot_dimension_numbers<[1], [0], [0], [1], [0, 0, 1, 1], [], []>} : vector<16x128xbf16>, vector<128x128xbf16>, vector<16x128xf32> -> vector<16x128xf32>
    %29 = arith.addf %20, %28 : vector<16x128xf32>
    %c1_i32_19 = arith.constant 1 : i32
    %30 = arith.addi %1, %c1_i32_19 : i32
    %c0_20 = arith.constant 0 : index
    %31 = arith.index_cast %30 : i32 to index
    %c1_21 = arith.constant 1 : index
    %c0_22 = arith.constant 0 : index
    %32 = vector.load %arg2[%c0_20, %31, %c1_21, %c0_22] : memref<1x5x5x128xbf16, #tpu.memory_space<vmem>>, vector<1x4x4x128xbf16>
    %33 = vector.shape_cast %32 : vector<1x4x4x128xbf16> to vector<4x4x128xbf16>
    %34 = vector.shape_cast %33 : vector<4x4x128xbf16> to vector<16x128xbf16>
    %c3 = arith.constant 3 : index
    %c0_23 = arith.constant 0 : index
    %c0_24 = arith.constant 0 : index
    %35 = vector.load %arg3[%c3, %c0_23, %c0_24] : memref<4x128x128xbf16, #tpu.memory_space<vmem>>, vector<1x128x128xbf16>
    %36 = vector.shape_cast %35 : vector<1x128x128xbf16> to vector<128x128xbf16>
    %cst_25 = arith.constant dense<0.000000e+00> : vector<16x128xf32>
    %37 = tpu.matmul %34, %36, %cst_25 {dimension_numbers = #tpu.dot_dimension_numbers<[1], [0], [0], [1], [0, 0, 1, 1], [], []>} : vector<16x128xbf16>, vector<128x128xbf16>, vector<16x128xf32> -> vector<16x128xf32>
    %38 = arith.addf %29, %37 : vector<16x128xf32>
    %c0_26 = arith.constant 0 : index
    %c0_27 = arith.constant 0 : index
    %39 = vector.load %arg4[%c0_26, %c0_27] : memref<1x128xf32, #tpu.memory_space<vmem>>, vector<1x128xf32>
    %40 = vector.broadcast %39 : vector<1x128xf32> to vector<16x128xf32>
    %41 = arith.addf %38, %40 : vector<16x128xf32>
    %cst_28 = arith.constant 0.000000e+00 : f32
    %42 = vector.broadcast %cst_28 : f32 to vector<16x128xf32>
    %43 = arith.maximumf %41, %42 : vector<16x128xf32>
    %44 = vector.shape_cast %43 : vector<16x128xf32> to vector<4x4x128xf32>
    %45 = arith.truncf %44 : vector<4x4x128xf32> to vector<4x4x128xbf16>
    %c0_29 = arith.constant 0 : index
    %c0_30 = arith.constant 0 : index
    %c0_31 = arith.constant 0 : index
    %c0_32 = arith.constant 0 : index
    %46 = vector.load %arg5[%c0_29, %c0_30, %c0_31, %c0_32] : memref<1x4x4x128xbf16, #tpu.memory_space<vmem>>, vector<1x4x4x128xbf16>
    %47 = vector.shape_cast %46 : vector<1x4x4x128xbf16> to vector<4x4x128xbf16>
    %48 = vector.shape_cast %45 : vector<4x4x128xbf16> to vector<1x4x4x128xbf16>
    tpu.vector_store %arg5[%c0_29, %c0_30, %c0_31, %c0_32], %48 {strides = array<i32>} : memref<1x4x4x128xbf16, #tpu.memory_space<vmem>>, vector<1x4x4x128xbf16>,
    return
  }
  func.func @transform_0(%arg0: i32, %arg1: i32) -> (i32, i32, i32, i32) {
    %c0_i32 = arith.constant 0 : i32
    %c0_i32_0 = arith.constant 0 : i32
    %c0_i32_1 = arith.constant 0 : i32
    %c0_i32_2 = arith.constant 0 : i32
    return %arg0, %c0_i32, %c0_i32_0, %c0_i32_1 : i32, i32, i32, i32
  }
  func.func @transform_1(%arg0: i32, %arg1: i32) -> (i32, i32, i32) {
    %c0_i32 = arith.constant 0 : i32
    %c0_i32_0 = arith.constant 0 : i32
    %c0_i32_1 = arith.constant 0 : i32
    %c0_i32_2 = arith.constant 0 : i32
    return %c0_i32, %c0_i32_0, %c0_i32_1 : i32, i32, i32
  }
  func.func @transform_2(%arg0: i32, %arg1: i32) -> (i32, i32) {
    %c0_i32 = arith.constant 0 : i32
    %c0_i32_0 = arith.constant 0 : i32
    %c0_i32_1 = arith.constant 0 : i32
    return %c0_i32, %c0_i32_0 : i32, i32
  }
  func.func @transform_3(%arg0: i32, %arg1: i32) -> (i32, i32, i32, i32) {
    %c0_i32 = arith.constant 0 : i32
    %c0_i32_0 = arith.constant 0 : i32
    %c0_i32_1 = arith.constant 0 : i32
    return %arg0, %arg1, %c0_i32, %c0_i32_0 : i32, i32, i32, i32
  }
}

module attributes {stable_mosaic.version = 11 : i64} {
  func.func @_resize_h_kernel(%arg0: i32, %arg1: memref<8x4xbf16, #tpu.memory_space<vmem>>, %arg2: memref<1x4x512xbf16, #tpu.memory_space<vmem>>, %arg3: memref<1x8x512xbf16, #tpu.memory_space<vmem>>) attributes {dimension_semantics = [#tpu.dimension_semantics<parallel>], iteration_bounds = array<i64: 2>, scalar_prefetch = 0 : i64, scratch_operands = 0 : i64, tpu.core_type = #tpu.core_type<tc>, window_params = [{pipeline_mode = #tpu.pipeline_mode<synchronous>, transform_indices = @transform_0, window_bounds = array<i64: 8, 4>}, {transform_indices = @transform_1, window_bounds = array<i64: 1, 4, 512>}, {transform_indices = @transform_2, window_bounds = array<i64: 1, 8, 512>}]} {
    %c0 = arith.constant 0 : index
    %c0_0 = arith.constant 0 : index
    %0 = vector.load %arg1[%c0, %c0_0] : memref<8x4xbf16, #tpu.memory_space<vmem>>, vector<8x4xbf16>
    %c0_1 = arith.constant 0 : index
    %c0_2 = arith.constant 0 : index
    %c0_3 = arith.constant 0 : index
    %1 = vector.load %arg2[%c0_1, %c0_2, %c0_3] : memref<1x4x512xbf16, #tpu.memory_space<vmem>>, vector<1x4x512xbf16>
    %2 = vector.shape_cast %1 : vector<1x4x512xbf16> to vector<4x512xbf16>
    %cst = arith.constant dense<0.000000e+00> : vector<8x512xf32>
    %3 = tpu.matmul %0, %2, %cst {dimension_numbers = #tpu.dot_dimension_numbers<[1], [0], [0], [1], [0, 0, 1, 1], [], []>} : vector<8x4xbf16>, vector<4x512xbf16>, vector<8x512xf32> -> vector<8x512xf32>
    %4 = arith.truncf %3 : vector<8x512xf32> to vector<8x512xbf16>
    %c0_4 = arith.constant 0 : index
    %c0_5 = arith.constant 0 : index
    %c0_6 = arith.constant 0 : index
    %5 = vector.load %arg3[%c0_4, %c0_5, %c0_6] : memref<1x8x512xbf16, #tpu.memory_space<vmem>>, vector<1x8x512xbf16>
    %6 = vector.shape_cast %5 : vector<1x8x512xbf16> to vector<8x512xbf16>
    %7 = vector.shape_cast %4 : vector<8x512xbf16> to vector<1x8x512xbf16>
    tpu.vector_store %arg3[%c0_4, %c0_5, %c0_6], %7 {strides = array<i32>} : memref<1x8x512xbf16, #tpu.memory_space<vmem>>, vector<1x8x512xbf16>,
    return
  }
  func.func @transform_0(%arg0: i32) -> (i32, i32) {
    %c0_i32 = arith.constant 0 : i32
    %c0_i32_0 = arith.constant 0 : i32
    %c0_i32_1 = arith.constant 0 : i32
    return %c0_i32, %c0_i32_0 : i32, i32
  }
  func.func @transform_1(%arg0: i32) -> (i32, i32, i32) {
    %c0_i32 = arith.constant 0 : i32
    %c0_i32_0 = arith.constant 0 : i32
    %c0_i32_1 = arith.constant 0 : i32
    return %arg0, %c0_i32, %c0_i32_0 : i32, i32, i32
  }
  func.func @transform_2(%arg0: i32) -> (i32, i32, i32) {
    %c0_i32 = arith.constant 0 : i32
    %c0_i32_0 = arith.constant 0 : i32
    %c0_i32_1 = arith.constant 0 : i32
    return %arg0, %c0_i32, %c0_i32_0 : i32, i32, i32
  }
}

module attributes {stable_mosaic.version = 11 : i64} {
  func.func @_conv_kernel(%arg0: i32, %arg1: i32, %arg2: memref<1x4x4x128xbf16, #tpu.memory_space<vmem>>, %arg3: memref<1x128x128xbf16, #tpu.memory_space<vmem>>, %arg4: memref<1x128xf32, #tpu.memory_space<vmem>>, %arg5: memref<1x4x4x128xbf16, #tpu.memory_space<vmem>>) attributes {dimension_semantics = [#tpu.dimension_semantics<parallel>, #tpu.dimension_semantics<parallel>], iteration_bounds = array<i64: 2, 1>, scalar_prefetch = 0 : i64, scratch_operands = 0 : i64, tpu.core_type = #tpu.core_type<tc>, window_params = [{transform_indices = @transform_0, window_bounds = array<i64: 1, 4, 4, 128>}, {pipeline_mode = #tpu.pipeline_mode<synchronous>, transform_indices = @transform_1, window_bounds = array<i64: 1, 128, 128>}, {pipeline_mode = #tpu.pipeline_mode<synchronous>, transform_indices = @transform_2, window_bounds = array<i64: 1, 128>}, {transform_indices = @transform_3, window_bounds = array<i64: 1, 4, 4, 128>}]} {
    %c4_i32 = arith.constant 4 : i32
    %0 = arith.muli %arg1, %c4_i32 : i32
    %1 = tpu.assume_multiple %0, 4 : i32
    %cst = arith.constant 0.000000e+00 : f32
    %2 = vector.broadcast %cst : f32 to vector<16x128xf32>
    %c0_i32 = arith.constant 0 : i32
    %3 = arith.addi %1, %c0_i32 : i32
    %c0 = arith.constant 0 : index
    %4 = arith.index_cast %3 : i32 to index
    %c0_0 = arith.constant 0 : index
    %c0_1 = arith.constant 0 : index
    %5 = vector.load %arg2[%c0, %4, %c0_0, %c0_1] : memref<1x4x4x128xbf16, #tpu.memory_space<vmem>>, vector<1x4x4x128xbf16>
    %6 = vector.shape_cast %5 : vector<1x4x4x128xbf16> to vector<4x4x128xbf16>
    %7 = vector.shape_cast %6 : vector<4x4x128xbf16> to vector<16x128xbf16>
    %c0_2 = arith.constant 0 : index
    %c0_3 = arith.constant 0 : index
    %c0_4 = arith.constant 0 : index
    %8 = vector.load %arg3[%c0_2, %c0_3, %c0_4] : memref<1x128x128xbf16, #tpu.memory_space<vmem>>, vector<1x128x128xbf16>
    %9 = vector.shape_cast %8 : vector<1x128x128xbf16> to vector<128x128xbf16>
    %cst_5 = arith.constant dense<0.000000e+00> : vector<16x128xf32>
    %10 = tpu.matmul %7, %9, %cst_5 {dimension_numbers = #tpu.dot_dimension_numbers<[1], [0], [0], [1], [0, 0, 1, 1], [], []>} : vector<16x128xbf16>, vector<128x128xbf16>, vector<16x128xf32> -> vector<16x128xf32>
    %11 = arith.addf %2, %10 : vector<16x128xf32>
    %c0_6 = arith.constant 0 : index
    %c0_7 = arith.constant 0 : index
    %12 = vector.load %arg4[%c0_6, %c0_7] : memref<1x128xf32, #tpu.memory_space<vmem>>, vector<1x128xf32>
    %13 = vector.broadcast %12 : vector<1x128xf32> to vector<16x128xf32>
    %14 = arith.addf %11, %13 : vector<16x128xf32>
    %cst_8 = arith.constant 0.000000e+00 : f32
    %15 = vector.broadcast %cst_8 : f32 to vector<16x128xf32>
    %16 = arith.maximumf %14, %15 : vector<16x128xf32>
    %17 = vector.shape_cast %16 : vector<16x128xf32> to vector<4x4x128xf32>
    %18 = arith.truncf %17 : vector<4x4x128xf32> to vector<4x4x128xbf16>
    %c0_9 = arith.constant 0 : index
    %c0_10 = arith.constant 0 : index
    %c0_11 = arith.constant 0 : index
    %c0_12 = arith.constant 0 : index
    %19 = vector.load %arg5[%c0_9, %c0_10, %c0_11, %c0_12] : memref<1x4x4x128xbf16, #tpu.memory_space<vmem>>, vector<1x4x4x128xbf16>
    %20 = vector.shape_cast %19 : vector<1x4x4x128xbf16> to vector<4x4x128xbf16>
    %21 = vector.shape_cast %18 : vector<4x4x128xbf16> to vector<1x4x4x128xbf16>
    tpu.vector_store %arg5[%c0_9, %c0_10, %c0_11, %c0_12], %21 {strides = array<i32>} : memref<1x4x4x128xbf16, #tpu.memory_space<vmem>>, vector<1x4x4x128xbf16>,
    return
  }
  func.func @transform_0(%arg0: i32, %arg1: i32) -> (i32, i32, i32, i32) {
    %c0_i32 = arith.constant 0 : i32
    %c0_i32_0 = arith.constant 0 : i32
    %c0_i32_1 = arith.constant 0 : i32
    %c0_i32_2 = arith.constant 0 : i32
    return %arg0, %c0_i32, %c0_i32_0, %c0_i32_1 : i32, i32, i32, i32
  }
  func.func @transform_1(%arg0: i32, %arg1: i32) -> (i32, i32, i32) {
    %c0_i32 = arith.constant 0 : i32
    %c0_i32_0 = arith.constant 0 : i32
    %c0_i32_1 = arith.constant 0 : i32
    %c0_i32_2 = arith.constant 0 : i32
    return %c0_i32, %c0_i32_0, %c0_i32_1 : i32, i32, i32
  }
  func.func @transform_2(%arg0: i32, %arg1: i32) -> (i32, i32) {
    %c0_i32 = arith.constant 0 : i32
    %c0_i32_0 = arith.constant 0 : i32
    %c0_i32_1 = arith.constant 0 : i32
    return %c0_i32, %c0_i32_0 : i32, i32
  }
  func.func @transform_3(%arg0: i32, %arg1: i32) -> (i32, i32, i32, i32) {
    %c0_i32 = arith.constant 0 : i32
    %c0_i32_0 = arith.constant 0 : i32
    %c0_i32_1 = arith.constant 0 : i32
    return %arg0, %arg1, %c0_i32, %c0_i32_0 : i32, i32, i32, i32
  }
}

module attributes {stable_mosaic.version = 11 : i64} {
  func.func @_resize_w_kernel(%arg0: i32, %arg1: memref<8x4xbf16, #tpu.memory_space<vmem>>, %arg2: memref<1x8x4x128xbf16, #tpu.memory_space<vmem>>, %arg3: memref<1x8x8x128xbf16, #tpu.memory_space<vmem>>, %arg4: memref<1x8x8x128xbf16, #tpu.memory_space<vmem>>) attributes {dimension_semantics = [#tpu.dimension_semantics<parallel>], iteration_bounds = array<i64: 2>, scalar_prefetch = 0 : i64, scratch_operands = 0 : i64, tpu.core_type = #tpu.core_type<tc>, window_params = [{pipeline_mode = #tpu.pipeline_mode<synchronous>, transform_indices = @transform_0, window_bounds = array<i64: 8, 4>}, {transform_indices = @transform_1, window_bounds = array<i64: 1, 8, 4, 128>}, {transform_indices = @transform_2, window_bounds = array<i64: 1, 8, 8, 128>}, {transform_indices = @transform_3, window_bounds = array<i64: 1, 8, 8, 128>}]} {
    %c0 = arith.constant 0 : index
    %c0_0 = arith.constant 0 : index
    %0 = vector.load %arg1[%c0, %c0_0] : memref<8x4xbf16, #tpu.memory_space<vmem>>, vector<8x4xbf16>
    %c0_1 = arith.constant 0 : index
    %c0_2 = arith.constant 0 : index
    %c0_3 = arith.constant 0 : index
    %c0_4 = arith.constant 0 : index
    %1 = vector.load %arg2[%c0_1, %c0_2, %c0_3, %c0_4] : memref<1x8x4x128xbf16, #tpu.memory_space<vmem>>, vector<1x1x4x128xbf16>
    %2 = vector.shape_cast %1 : vector<1x1x4x128xbf16> to vector<4x128xbf16>
    %cst = arith.constant dense<0.000000e+00> : vector<8x128xf32>
    %3 = tpu.matmul %0, %2, %cst {dimension_numbers = #tpu.dot_dimension_numbers<[1], [0], [0], [1], [0, 0, 1, 1], [], []>} : vector<8x4xbf16>, vector<4x128xbf16>, vector<8x128xf32> -> vector<8x128xf32>
    %c0_5 = arith.constant 0 : index
    %c0_6 = arith.constant 0 : index
    %c0_7 = arith.constant 0 : index
    %c0_8 = arith.constant 0 : index
    %4 = vector.load %arg3[%c0_5, %c0_6, %c0_7, %c0_8] : memref<1x8x8x128xbf16, #tpu.memory_space<vmem>>, vector<1x1x8x128xbf16>
    %5 = vector.shape_cast %4 : vector<1x1x8x128xbf16> to vector<8x128xbf16>
    %6 = arith.extf %5 : vector<8x128xbf16> to vector<8x128xf32>
    %7 = arith.addf %3, %6 : vector<8x128xf32>
    %8 = arith.truncf %7 : vector<8x128xf32> to vector<8x128xbf16>
    %c0_9 = arith.constant 0 : index
    %c0_10 = arith.constant 0 : index
    %c0_11 = arith.constant 0 : index
    %c0_12 = arith.constant 0 : index
    %9 = vector.load %arg4[%c0_9, %c0_10, %c0_11, %c0_12] : memref<1x8x8x128xbf16, #tpu.memory_space<vmem>>, vector<1x1x8x128xbf16>
    %10 = vector.shape_cast %9 : vector<1x1x8x128xbf16> to vector<8x128xbf16>
    %11 = vector.shape_cast %8 : vector<8x128xbf16> to vector<1x1x8x128xbf16>
    tpu.vector_store %arg4[%c0_9, %c0_10, %c0_11, %c0_12], %11 {strides = array<i32>} : memref<1x8x8x128xbf16, #tpu.memory_space<vmem>>, vector<1x1x8x128xbf16>,
    %c0_13 = arith.constant 0 : index
    %c1 = arith.constant 1 : index
    %c0_14 = arith.constant 0 : index
    %c0_15 = arith.constant 0 : index
    %12 = vector.load %arg2[%c0_13, %c1, %c0_14, %c0_15] : memref<1x8x4x128xbf16, #tpu.memory_space<vmem>>, vector<1x1x4x128xbf16>
    %13 = vector.shape_cast %12 : vector<1x1x4x128xbf16> to vector<4x128xbf16>
    %cst_16 = arith.constant dense<0.000000e+00> : vector<8x128xf32>
    %14 = tpu.matmul %0, %13, %cst_16 {dimension_numbers = #tpu.dot_dimension_numbers<[1], [0], [0], [1], [0, 0, 1, 1], [], []>} : vector<8x4xbf16>, vector<4x128xbf16>, vector<8x128xf32> -> vector<8x128xf32>
    %c0_17 = arith.constant 0 : index
    %c1_18 = arith.constant 1 : index
    %c0_19 = arith.constant 0 : index
    %c0_20 = arith.constant 0 : index
    %15 = vector.load %arg3[%c0_17, %c1_18, %c0_19, %c0_20] : memref<1x8x8x128xbf16, #tpu.memory_space<vmem>>, vector<1x1x8x128xbf16>
    %16 = vector.shape_cast %15 : vector<1x1x8x128xbf16> to vector<8x128xbf16>
    %17 = arith.extf %16 : vector<8x128xbf16> to vector<8x128xf32>
    %18 = arith.addf %14, %17 : vector<8x128xf32>
    %19 = arith.truncf %18 : vector<8x128xf32> to vector<8x128xbf16>
    %c0_21 = arith.constant 0 : index
    %c1_22 = arith.constant 1 : index
    %c0_23 = arith.constant 0 : index
    %c0_24 = arith.constant 0 : index
    %20 = vector.load %arg4[%c0_21, %c1_22, %c0_23, %c0_24] : memref<1x8x8x128xbf16, #tpu.memory_space<vmem>>, vector<1x1x8x128xbf16>
    %21 = vector.shape_cast %20 : vector<1x1x8x128xbf16> to vector<8x128xbf16>
    %22 = vector.shape_cast %19 : vector<8x128xbf16> to vector<1x1x8x128xbf16>
    tpu.vector_store %arg4[%c0_21, %c1_22, %c0_23, %c0_24], %22 {strides = array<i32>} : memref<1x8x8x128xbf16, #tpu.memory_space<vmem>>, vector<1x1x8x128xbf16>,
    %c0_25 = arith.constant 0 : index
    %c2 = arith.constant 2 : index
    %c0_26 = arith.constant 0 : index
    %c0_27 = arith.constant 0 : index
    %23 = vector.load %arg2[%c0_25, %c2, %c0_26, %c0_27] : memref<1x8x4x128xbf16, #tpu.memory_space<vmem>>, vector<1x1x4x128xbf16>
    %24 = vector.shape_cast %23 : vector<1x1x4x128xbf16> to vector<4x128xbf16>
    %cst_28 = arith.constant dense<0.000000e+00> : vector<8x128xf32>
    %25 = tpu.matmul %0, %24, %cst_28 {dimension_numbers = #tpu.dot_dimension_numbers<[1], [0], [0], [1], [0, 0, 1, 1], [], []>} : vector<8x4xbf16>, vector<4x128xbf16>, vector<8x128xf32> -> vector<8x128xf32>
    %c0_29 = arith.constant 0 : index
    %c2_30 = arith.constant 2 : index
    %c0_31 = arith.constant 0 : index
    %c0_32 = arith.constant 0 : index
    %26 = vector.load %arg3[%c0_29, %c2_30, %c0_31, %c0_32] : memref<1x8x8x128xbf16, #tpu.memory_space<vmem>>, vector<1x1x8x128xbf16>
    %27 = vector.shape_cast %26 : vector<1x1x8x128xbf16> to vector<8x128xbf16>
    %28 = arith.extf %27 : vector<8x128xbf16> to vector<8x128xf32>
    %29 = arith.addf %25, %28 : vector<8x128xf32>
    %30 = arith.truncf %29 : vector<8x128xf32> to vector<8x128xbf16>
    %c0_33 = arith.constant 0 : index
    %c2_34 = arith.constant 2 : index
    %c0_35 = arith.constant 0 : index
    %c0_36 = arith.constant 0 : index
    %31 = vector.load %arg4[%c0_33, %c2_34, %c0_35, %c0_36] : memref<1x8x8x128xbf16, #tpu.memory_space<vmem>>, vector<1x1x8x128xbf16>
    %32 = vector.shape_cast %31 : vector<1x1x8x128xbf16> to vector<8x128xbf16>
    %33 = vector.shape_cast %30 : vector<8x128xbf16> to vector<1x1x8x128xbf16>
    tpu.vector_store %arg4[%c0_33, %c2_34, %c0_35, %c0_36], %33 {strides = array<i32>} : memref<1x8x8x128xbf16, #tpu.memory_space<vmem>>, vector<1x1x8x128xbf16>,
    %c0_37 = arith.constant 0 : index
    %c3 = arith.constant 3 : index
    %c0_38 = arith.constant 0 : index
    %c0_39 = arith.constant 0 : index
    %34 = vector.load %arg2[%c0_37, %c3, %c0_38, %c0_39] : memref<1x8x4x128xbf16, #tpu.memory_space<vmem>>, vector<1x1x4x128xbf16>
    %35 = vector.shape_cast %34 : vector<1x1x4x128xbf16> to vector<4x128xbf16>
    %cst_40 = arith.constant dense<0.000000e+00> : vector<8x128xf32>
    %36 = tpu.matmul %0, %35, %cst_40 {dimension_numbers = #tpu.dot_dimension_numbers<[1], [0], [0], [1], [0, 0, 1, 1], [], []>} : vector<8x4xbf16>, vector<4x128xbf16>, vector<8x128xf32> -> vector<8x128xf32>
    %c0_41 = arith.constant 0 : index
    %c3_42 = arith.constant 3 : index
    %c0_43 = arith.constant 0 : index
    %c0_44 = arith.constant 0 : index
    %37 = vector.load %arg3[%c0_41, %c3_42, %c0_43, %c0_44] : memref<1x8x8x128xbf16, #tpu.memory_space<vmem>>, vector<1x1x8x128xbf16>
    %38 = vector.shape_cast %37 : vector<1x1x8x128xbf16> to vector<8x128xbf16>
    %39 = arith.extf %38 : vector<8x128xbf16> to vector<8x128xf32>
    %40 = arith.addf %36, %39 : vector<8x128xf32>
    %41 = arith.truncf %40 : vector<8x128xf32> to vector<8x128xbf16>
    %c0_45 = arith.constant 0 : index
    %c3_46 = arith.constant 3 : index
    %c0_47 = arith.constant 0 : index
    %c0_48 = arith.constant 0 : index
    %42 = vector.load %arg4[%c0_45, %c3_46, %c0_47, %c0_48] : memref<1x8x8x128xbf16, #tpu.memory_space<vmem>>, vector<1x1x8x128xbf16>
    %43 = vector.shape_cast %42 : vector<1x1x8x128xbf16> to vector<8x128xbf16>
    %44 = vector.shape_cast %41 : vector<8x128xbf16> to vector<1x1x8x128xbf16>
    tpu.vector_store %arg4[%c0_45, %c3_46, %c0_47, %c0_48], %44 {strides = array<i32>} : memref<1x8x8x128xbf16, #tpu.memory_space<vmem>>, vector<1x1x8x128xbf16>,
    %c0_49 = arith.constant 0 : index
    %c4 = arith.constant 4 : index
    %c0_50 = arith.constant 0 : index
    %c0_51 = arith.constant 0 : index
    %45 = vector.load %arg2[%c0_49, %c4, %c0_50, %c0_51] : memref<1x8x4x128xbf16, #tpu.memory_space<vmem>>, vector<1x1x4x128xbf16>
    %46 = vector.shape_cast %45 : vector<1x1x4x128xbf16> to vector<4x128xbf16>
    %cst_52 = arith.constant dense<0.000000e+00> : vector<8x128xf32>
    %47 = tpu.matmul %0, %46, %cst_52 {dimension_numbers = #tpu.dot_dimension_numbers<[1], [0], [0], [1], [0, 0, 1, 1], [], []>} : vector<8x4xbf16>, vector<4x128xbf16>, vector<8x128xf32> -> vector<8x128xf32>
    %c0_53 = arith.constant 0 : index
    %c4_54 = arith.constant 4 : index
    %c0_55 = arith.constant 0 : index
    %c0_56 = arith.constant 0 : index
    %48 = vector.load %arg3[%c0_53, %c4_54, %c0_55, %c0_56] : memref<1x8x8x128xbf16, #tpu.memory_space<vmem>>, vector<1x1x8x128xbf16>
    %49 = vector.shape_cast %48 : vector<1x1x8x128xbf16> to vector<8x128xbf16>
    %50 = arith.extf %49 : vector<8x128xbf16> to vector<8x128xf32>
    %51 = arith.addf %47, %50 : vector<8x128xf32>
    %52 = arith.truncf %51 : vector<8x128xf32> to vector<8x128xbf16>
    %c0_57 = arith.constant 0 : index
    %c4_58 = arith.constant 4 : index
    %c0_59 = arith.constant 0 : index
    %c0_60 = arith.constant 0 : index
    %53 = vector.load %arg4[%c0_57, %c4_58, %c0_59, %c0_60] : memref<1x8x8x128xbf16, #tpu.memory_space<vmem>>, vector<1x1x8x128xbf16>
    %54 = vector.shape_cast %53 : vector<1x1x8x128xbf16> to vector<8x128xbf16>
    %55 = vector.shape_cast %52 : vector<8x128xbf16> to vector<1x1x8x128xbf16>
    tpu.vector_store %arg4[%c0_57, %c4_58, %c0_59, %c0_60], %55 {strides = array<i32>} : memref<1x8x8x128xbf16, #tpu.memory_space<vmem>>, vector<1x1x8x128xbf16>,
    %c0_61 = arith.constant 0 : index
    %c5 = arith.constant 5 : index
    %c0_62 = arith.constant 0 : index
    %c0_63 = arith.constant 0 : index
    %56 = vector.load %arg2[%c0_61, %c5, %c0_62, %c0_63] : memref<1x8x4x128xbf16, #tpu.memory_space<vmem>>, vector<1x1x4x128xbf16>
    %57 = vector.shape_cast %56 : vector<1x1x4x128xbf16> to vector<4x128xbf16>
    %cst_64 = arith.constant dense<0.000000e+00> : vector<8x128xf32>
    %58 = tpu.matmul %0, %57, %cst_64 {dimension_numbers = #tpu.dot_dimension_numbers<[1], [0], [0], [1], [0, 0, 1, 1], [], []>} : vector<8x4xbf16>, vector<4x128xbf16>, vector<8x128xf32> -> vector<8x128xf32>
    %c0_65 = arith.constant 0 : index
    %c5_66 = arith.constant 5 : index
    %c0_67 = arith.constant 0 : index
    %c0_68 = arith.constant 0 : index
    %59 = vector.load %arg3[%c0_65, %c5_66, %c0_67, %c0_68] : memref<1x8x8x128xbf16, #tpu.memory_space<vmem>>, vector<1x1x8x128xbf16>
    %60 = vector.shape_cast %59 : vector<1x1x8x128xbf16> to vector<8x128xbf16>
    %61 = arith.extf %60 : vector<8x128xbf16> to vector<8x128xf32>
    %62 = arith.addf %58, %61 : vector<8x128xf32>
    %63 = arith.truncf %62 : vector<8x128xf32> to vector<8x128xbf16>
    %c0_69 = arith.constant 0 : index
    %c5_70 = arith.constant 5 : index
    %c0_71 = arith.constant 0 : index
    %c0_72 = arith.constant 0 : index
    %64 = vector.load %arg4[%c0_69, %c5_70, %c0_71, %c0_72] : memref<1x8x8x128xbf16, #tpu.memory_space<vmem>>, vector<1x1x8x128xbf16>
    %65 = vector.shape_cast %64 : vector<1x1x8x128xbf16> to vector<8x128xbf16>
    %66 = vector.shape_cast %63 : vector<8x128xbf16> to vector<1x1x8x128xbf16>
    tpu.vector_store %arg4[%c0_69, %c5_70, %c0_71, %c0_72], %66 {strides = array<i32>} : memref<1x8x8x128xbf16, #tpu.memory_space<vmem>>, vector<1x1x8x128xbf16>,
    %c0_73 = arith.constant 0 : index
    %c6 = arith.constant 6 : index
    %c0_74 = arith.constant 0 : index
    %c0_75 = arith.constant 0 : index
    %67 = vector.load %arg2[%c0_73, %c6, %c0_74, %c0_75] : memref<1x8x4x128xbf16, #tpu.memory_space<vmem>>, vector<1x1x4x128xbf16>
    %68 = vector.shape_cast %67 : vector<1x1x4x128xbf16> to vector<4x128xbf16>
    %cst_76 = arith.constant dense<0.000000e+00> : vector<8x128xf32>
    %69 = tpu.matmul %0, %68, %cst_76 {dimension_numbers = #tpu.dot_dimension_numbers<[1], [0], [0], [1], [0, 0, 1, 1], [], []>} : vector<8x4xbf16>, vector<4x128xbf16>, vector<8x128xf32> -> vector<8x128xf32>
    %c0_77 = arith.constant 0 : index
    %c6_78 = arith.constant 6 : index
    %c0_79 = arith.constant 0 : index
    %c0_80 = arith.constant 0 : index
    %70 = vector.load %arg3[%c0_77, %c6_78, %c0_79, %c0_80] : memref<1x8x8x128xbf16, #tpu.memory_space<vmem>>, vector<1x1x8x128xbf16>
    %71 = vector.shape_cast %70 : vector<1x1x8x128xbf16> to vector<8x128xbf16>
    %72 = arith.extf %71 : vector<8x128xbf16> to vector<8x128xf32>
    %73 = arith.addf %69, %72 : vector<8x128xf32>
    %74 = arith.truncf %73 : vector<8x128xf32> to vector<8x128xbf16>
    %c0_81 = arith.constant 0 : index
    %c6_82 = arith.constant 6 : index
    %c0_83 = arith.constant 0 : index
    %c0_84 = arith.constant 0 : index
    %75 = vector.load %arg4[%c0_81, %c6_82, %c0_83, %c0_84] : memref<1x8x8x128xbf16, #tpu.memory_space<vmem>>, vector<1x1x8x128xbf16>
    %76 = vector.shape_cast %75 : vector<1x1x8x128xbf16> to vector<8x128xbf16>
    %77 = vector.shape_cast %74 : vector<8x128xbf16> to vector<1x1x8x128xbf16>
    tpu.vector_store %arg4[%c0_81, %c6_82, %c0_83, %c0_84], %77 {strides = array<i32>} : memref<1x8x8x128xbf16, #tpu.memory_space<vmem>>, vector<1x1x8x128xbf16>,
    %c0_85 = arith.constant 0 : index
    %c7 = arith.constant 7 : index
    %c0_86 = arith.constant 0 : index
    %c0_87 = arith.constant 0 : index
    %78 = vector.load %arg2[%c0_85, %c7, %c0_86, %c0_87] : memref<1x8x4x128xbf16, #tpu.memory_space<vmem>>, vector<1x1x4x128xbf16>
    %79 = vector.shape_cast %78 : vector<1x1x4x128xbf16> to vector<4x128xbf16>
    %cst_88 = arith.constant dense<0.000000e+00> : vector<8x128xf32>
    %80 = tpu.matmul %0, %79, %cst_88 {dimension_numbers = #tpu.dot_dimension_numbers<[1], [0], [0], [1], [0, 0, 1, 1], [], []>} : vector<8x4xbf16>, vector<4x128xbf16>, vector<8x128xf32> -> vector<8x128xf32>
    %c0_89 = arith.constant 0 : index
    %c7_90 = arith.constant 7 : index
    %c0_91 = arith.constant 0 : index
    %c0_92 = arith.constant 0 : index
    %81 = vector.load %arg3[%c0_89, %c7_90, %c0_91, %c0_92] : memref<1x8x8x128xbf16, #tpu.memory_space<vmem>>, vector<1x1x8x128xbf16>
    %82 = vector.shape_cast %81 : vector<1x1x8x128xbf16> to vector<8x128xbf16>
    %83 = arith.extf %82 : vector<8x128xbf16> to vector<8x128xf32>
    %84 = arith.addf %80, %83 : vector<8x128xf32>
    %85 = arith.truncf %84 : vector<8x128xf32> to vector<8x128xbf16>
    %c0_93 = arith.constant 0 : index
    %c7_94 = arith.constant 7 : index
    %c0_95 = arith.constant 0 : index
    %c0_96 = arith.constant 0 : index
    %86 = vector.load %arg4[%c0_93, %c7_94, %c0_95, %c0_96] : memref<1x8x8x128xbf16, #tpu.memory_space<vmem>>, vector<1x1x8x128xbf16>
    %87 = vector.shape_cast %86 : vector<1x1x8x128xbf16> to vector<8x128xbf16>
    %88 = vector.shape_cast %85 : vector<8x128xbf16> to vector<1x1x8x128xbf16>
    tpu.vector_store %arg4[%c0_93, %c7_94, %c0_95, %c0_96], %88 {strides = array<i32>} : memref<1x8x8x128xbf16, #tpu.memory_space<vmem>>, vector<1x1x8x128xbf16>,
    return
  }
  func.func @transform_0(%arg0: i32) -> (i32, i32) {
    %c0_i32 = arith.constant 0 : i32
    %c0_i32_0 = arith.constant 0 : i32
    %c0_i32_1 = arith.constant 0 : i32
    return %c0_i32, %c0_i32_0 : i32, i32
  }
  func.func @transform_1(%arg0: i32) -> (i32, i32, i32, i32) {
    %c0_i32 = arith.constant 0 : i32
    %c0_i32_0 = arith.constant 0 : i32
    %c0_i32_1 = arith.constant 0 : i32
    %c0_i32_2 = arith.constant 0 : i32
    return %arg0, %c0_i32, %c0_i32_0, %c0_i32_1 : i32, i32, i32, i32
  }
  func.func @transform_2(%arg0: i32) -> (i32, i32, i32, i32) {
    %c0_i32 = arith.constant 0 : i32
    %c0_i32_0 = arith.constant 0 : i32
    %c0_i32_1 = arith.constant 0 : i32
    %c0_i32_2 = arith.constant 0 : i32
    return %arg0, %c0_i32, %c0_i32_0, %c0_i32_1 : i32, i32, i32, i32
  }
  func.func @transform_3(%arg0: i32) -> (i32, i32, i32, i32) {
    %c0_i32 = arith.constant 0 : i32
    %c0_i32_0 = arith.constant 0 : i32
    %c0_i32_1 = arith.constant 0 : i32
    %c0_i32_2 = arith.constant 0 : i32
    return %arg0, %c0_i32, %c0_i32_0, %c0_i32_1 : i32, i32, i32, i32
  }
}

module attributes {stable_mosaic.version = 11 : i64} {
  func.func @_resize_h_kernel(%arg0: i32, %arg1: memref<16x8xbf16, #tpu.memory_space<vmem>>, %arg2: memref<1x8x1024xbf16, #tpu.memory_space<vmem>>, %arg3: memref<1x16x1024xbf16, #tpu.memory_space<vmem>>) attributes {dimension_semantics = [#tpu.dimension_semantics<parallel>], iteration_bounds = array<i64: 2>, scalar_prefetch = 0 : i64, scratch_operands = 0 : i64, tpu.core_type = #tpu.core_type<tc>, window_params = [{pipeline_mode = #tpu.pipeline_mode<synchronous>, transform_indices = @transform_0, window_bounds = array<i64: 16, 8>}, {transform_indices = @transform_1, window_bounds = array<i64: 1, 8, 1024>}, {transform_indices = @transform_2, window_bounds = array<i64: 1, 16, 1024>}]} {
    %c0 = arith.constant 0 : index
    %c0_0 = arith.constant 0 : index
    %0 = vector.load %arg1[%c0, %c0_0] : memref<16x8xbf16, #tpu.memory_space<vmem>>, vector<16x8xbf16>
    %c0_1 = arith.constant 0 : index
    %c0_2 = arith.constant 0 : index
    %c0_3 = arith.constant 0 : index
    %1 = vector.load %arg2[%c0_1, %c0_2, %c0_3] : memref<1x8x1024xbf16, #tpu.memory_space<vmem>>, vector<1x8x1024xbf16>
    %2 = vector.shape_cast %1 : vector<1x8x1024xbf16> to vector<8x1024xbf16>
    %cst = arith.constant dense<0.000000e+00> : vector<16x1024xf32>
    %3 = tpu.matmul %0, %2, %cst {dimension_numbers = #tpu.dot_dimension_numbers<[1], [0], [0], [1], [0, 0, 1, 1], [], []>} : vector<16x8xbf16>, vector<8x1024xbf16>, vector<16x1024xf32> -> vector<16x1024xf32>
    %4 = arith.truncf %3 : vector<16x1024xf32> to vector<16x1024xbf16>
    %c0_4 = arith.constant 0 : index
    %c0_5 = arith.constant 0 : index
    %c0_6 = arith.constant 0 : index
    %5 = vector.load %arg3[%c0_4, %c0_5, %c0_6] : memref<1x16x1024xbf16, #tpu.memory_space<vmem>>, vector<1x16x1024xbf16>
    %6 = vector.shape_cast %5 : vector<1x16x1024xbf16> to vector<16x1024xbf16>
    %7 = vector.shape_cast %4 : vector<16x1024xbf16> to vector<1x16x1024xbf16>
    tpu.vector_store %arg3[%c0_4, %c0_5, %c0_6], %7 {strides = array<i32>} : memref<1x16x1024xbf16, #tpu.memory_space<vmem>>, vector<1x16x1024xbf16>,
    return
  }
  func.func @transform_0(%arg0: i32) -> (i32, i32) {
    %c0_i32 = arith.constant 0 : i32
    %c0_i32_0 = arith.constant 0 : i32
    %c0_i32_1 = arith.constant 0 : i32
    return %c0_i32, %c0_i32_0 : i32, i32
  }
  func.func @transform_1(%arg0: i32) -> (i32, i32, i32) {
    %c0_i32 = arith.constant 0 : i32
    %c0_i32_0 = arith.constant 0 : i32
    %c0_i32_1 = arith.constant 0 : i32
    return %arg0, %c0_i32, %c0_i32_0 : i32, i32, i32
  }
  func.func @transform_2(%arg0: i32) -> (i32, i32, i32) {
    %c0_i32 = arith.constant 0 : i32
    %c0_i32_0 = arith.constant 0 : i32
    %c0_i32_1 = arith.constant 0 : i32
    return %arg0, %c0_i32, %c0_i32_0 : i32, i32, i32
  }
}

module attributes {stable_mosaic.version = 11 : i64} {
  func.func @_conv_kernel(%arg0: i32, %arg1: i32, %arg2: memref<1x10x10x128xbf16, #tpu.memory_space<vmem>>, %arg3: memref<9x128x128xbf16, #tpu.memory_space<vmem>>, %arg4: memref<1x128xf32, #tpu.memory_space<vmem>>, %arg5: memref<1x8x8x128xbf16, #tpu.memory_space<vmem>>) attributes {dimension_semantics = [#tpu.dimension_semantics<parallel>, #tpu.dimension_semantics<parallel>], iteration_bounds = array<i64: 2, 1>, scalar_prefetch = 0 : i64, scratch_operands = 0 : i64, tpu.core_type = #tpu.core_type<tc>, window_params = [{transform_indices = @transform_0, window_bounds = array<i64: 1, 10, 10, 128>}, {pipeline_mode = #tpu.pipeline_mode<synchronous>, transform_indices = @transform_1, window_bounds = array<i64: 9, 128, 128>}, {pipeline_mode = #tpu.pipeline_mode<synchronous>, transform_indices = @transform_2, window_bounds = array<i64: 1, 128>}, {transform_indices = @transform_3, window_bounds = array<i64: 1, 8, 8, 128>}]} {
    %c8_i32 = arith.constant 8 : i32
    %0 = arith.muli %arg1, %c8_i32 : i32
    %1 = tpu.assume_multiple %0, 8 : i32
    %cst = arith.constant 0.000000e+00 : f32
    %2 = vector.broadcast %cst : f32 to vector<64x128xf32>
    %c0_i32 = arith.constant 0 : i32
    %3 = arith.addi %1, %c0_i32 : i32
    %c0 = arith.constant 0 : index
    %4 = arith.index_cast %3 : i32 to index
    %c0_0 = arith.constant 0 : index
    %c0_1 = arith.constant 0 : index
    %5 = vector.load %arg2[%c0, %4, %c0_0, %c0_1] : memref<1x10x10x128xbf16, #tpu.memory_space<vmem>>, vector<1x8x8x128xbf16>
    %6 = vector.shape_cast %5 : vector<1x8x8x128xbf16> to vector<8x8x128xbf16>
    %7 = vector.shape_cast %6 : vector<8x8x128xbf16> to vector<64x128xbf16>
    %c0_2 = arith.constant 0 : index
    %c0_3 = arith.constant 0 : index
    %c0_4 = arith.constant 0 : index
    %8 = vector.load %arg3[%c0_2, %c0_3, %c0_4] : memref<9x128x128xbf16, #tpu.memory_space<vmem>>, vector<1x128x128xbf16>
    %9 = vector.shape_cast %8 : vector<1x128x128xbf16> to vector<128x128xbf16>
    %cst_5 = arith.constant dense<0.000000e+00> : vector<64x128xf32>
    %10 = tpu.matmul %7, %9, %cst_5 {dimension_numbers = #tpu.dot_dimension_numbers<[1], [0], [0], [1], [0, 0, 1, 1], [], []>} : vector<64x128xbf16>, vector<128x128xbf16>, vector<64x128xf32> -> vector<64x128xf32>
    %11 = arith.addf %2, %10 : vector<64x128xf32>
    %c0_i32_6 = arith.constant 0 : i32
    %12 = arith.addi %1, %c0_i32_6 : i32
    %c0_7 = arith.constant 0 : index
    %13 = arith.index_cast %12 : i32 to index
    %c1 = arith.constant 1 : index
    %c0_8 = arith.constant 0 : index
    %14 = vector.load %arg2[%c0_7, %13, %c1, %c0_8] : memref<1x10x10x128xbf16, #tpu.memory_space<vmem>>, vector<1x8x8x128xbf16>
    %15 = vector.shape_cast %14 : vector<1x8x8x128xbf16> to vector<8x8x128xbf16>
    %16 = vector.shape_cast %15 : vector<8x8x128xbf16> to vector<64x128xbf16>
    %c1_9 = arith.constant 1 : index
    %c0_10 = arith.constant 0 : index
    %c0_11 = arith.constant 0 : index
    %17 = vector.load %arg3[%c1_9, %c0_10, %c0_11] : memref<9x128x128xbf16, #tpu.memory_space<vmem>>, vector<1x128x128xbf16>
    %18 = vector.shape_cast %17 : vector<1x128x128xbf16> to vector<128x128xbf16>
    %cst_12 = arith.constant dense<0.000000e+00> : vector<64x128xf32>
    %19 = tpu.matmul %16, %18, %cst_12 {dimension_numbers = #tpu.dot_dimension_numbers<[1], [0], [0], [1], [0, 0, 1, 1], [], []>} : vector<64x128xbf16>, vector<128x128xbf16>, vector<64x128xf32> -> vector<64x128xf32>
    %20 = arith.addf %11, %19 : vector<64x128xf32>
    %c0_i32_13 = arith.constant 0 : i32
    %21 = arith.addi %1, %c0_i32_13 : i32
    %c0_14 = arith.constant 0 : index
    %22 = arith.index_cast %21 : i32 to index
    %c2 = arith.constant 2 : index
    %c0_15 = arith.constant 0 : index
    %23 = vector.load %arg2[%c0_14, %22, %c2, %c0_15] : memref<1x10x10x128xbf16, #tpu.memory_space<vmem>>, vector<1x8x8x128xbf16>
    %24 = vector.shape_cast %23 : vector<1x8x8x128xbf16> to vector<8x8x128xbf16>
    %25 = vector.shape_cast %24 : vector<8x8x128xbf16> to vector<64x128xbf16>
    %c2_16 = arith.constant 2 : index
    %c0_17 = arith.constant 0 : index
    %c0_18 = arith.constant 0 : index
    %26 = vector.load %arg3[%c2_16, %c0_17, %c0_18] : memref<9x128x128xbf16, #tpu.memory_space<vmem>>, vector<1x128x128xbf16>
    %27 = vector.shape_cast %26 : vector<1x128x128xbf16> to vector<128x128xbf16>
    %cst_19 = arith.constant dense<0.000000e+00> : vector<64x128xf32>
    %28 = tpu.matmul %25, %27, %cst_19 {dimension_numbers = #tpu.dot_dimension_numbers<[1], [0], [0], [1], [0, 0, 1, 1], [], []>} : vector<64x128xbf16>, vector<128x128xbf16>, vector<64x128xf32> -> vector<64x128xf32>
    %29 = arith.addf %20, %28 : vector<64x128xf32>
    %c1_i32 = arith.constant 1 : i32
    %30 = arith.addi %1, %c1_i32 : i32
    %c0_20 = arith.constant 0 : index
    %31 = arith.index_cast %30 : i32 to index
    %c0_21 = arith.constant 0 : index
    %c0_22 = arith.constant 0 : index
    %32 = vector.load %arg2[%c0_20, %31, %c0_21, %c0_22] : memref<1x10x10x128xbf16, #tpu.memory_space<vmem>>, vector<1x8x8x128xbf16>
    %33 = vector.shape_cast %32 : vector<1x8x8x128xbf16> to vector<8x8x128xbf16>
    %34 = vector.shape_cast %33 : vector<8x8x128xbf16> to vector<64x128xbf16>
    %c3 = arith.constant 3 : index
    %c0_23 = arith.constant 0 : index
    %c0_24 = arith.constant 0 : index
    %35 = vector.load %arg3[%c3, %c0_23, %c0_24] : memref<9x128x128xbf16, #tpu.memory_space<vmem>>, vector<1x128x128xbf16>
    %36 = vector.shape_cast %35 : vector<1x128x128xbf16> to vector<128x128xbf16>
    %cst_25 = arith.constant dense<0.000000e+00> : vector<64x128xf32>
    %37 = tpu.matmul %34, %36, %cst_25 {dimension_numbers = #tpu.dot_dimension_numbers<[1], [0], [0], [1], [0, 0, 1, 1], [], []>} : vector<64x128xbf16>, vector<128x128xbf16>, vector<64x128xf32> -> vector<64x128xf32>
    %38 = arith.addf %29, %37 : vector<64x128xf32>
    %c1_i32_26 = arith.constant 1 : i32
    %39 = arith.addi %1, %c1_i32_26 : i32
    %c0_27 = arith.constant 0 : index
    %40 = arith.index_cast %39 : i32 to index
    %c1_28 = arith.constant 1 : index
    %c0_29 = arith.constant 0 : index
    %41 = vector.load %arg2[%c0_27, %40, %c1_28, %c0_29] : memref<1x10x10x128xbf16, #tpu.memory_space<vmem>>, vector<1x8x8x128xbf16>
    %42 = vector.shape_cast %41 : vector<1x8x8x128xbf16> to vector<8x8x128xbf16>
    %43 = vector.shape_cast %42 : vector<8x8x128xbf16> to vector<64x128xbf16>
    %c4 = arith.constant 4 : index
    %c0_30 = arith.constant 0 : index
    %c0_31 = arith.constant 0 : index
    %44 = vector.load %arg3[%c4, %c0_30, %c0_31] : memref<9x128x128xbf16, #tpu.memory_space<vmem>>, vector<1x128x128xbf16>
    %45 = vector.shape_cast %44 : vector<1x128x128xbf16> to vector<128x128xbf16>
    %cst_32 = arith.constant dense<0.000000e+00> : vector<64x128xf32>
    %46 = tpu.matmul %43, %45, %cst_32 {dimension_numbers = #tpu.dot_dimension_numbers<[1], [0], [0], [1], [0, 0, 1, 1], [], []>} : vector<64x128xbf16>, vector<128x128xbf16>, vector<64x128xf32> -> vector<64x128xf32>
    %47 = arith.addf %38, %46 : vector<64x128xf32>
    %c1_i32_33 = arith.constant 1 : i32
    %48 = arith.addi %1, %c1_i32_33 : i32
    %c0_34 = arith.constant 0 : index
    %49 = arith.index_cast %48 : i32 to index
    %c2_35 = arith.constant 2 : index
    %c0_36 = arith.constant 0 : index
    %50 = vector.load %arg2[%c0_34, %49, %c2_35, %c0_36] : memref<1x10x10x128xbf16, #tpu.memory_space<vmem>>, vector<1x8x8x128xbf16>
    %51 = vector.shape_cast %50 : vector<1x8x8x128xbf16> to vector<8x8x128xbf16>
    %52 = vector.shape_cast %51 : vector<8x8x128xbf16> to vector<64x128xbf16>
    %c5 = arith.constant 5 : index
    %c0_37 = arith.constant 0 : index
    %c0_38 = arith.constant 0 : index
    %53 = vector.load %arg3[%c5, %c0_37, %c0_38] : memref<9x128x128xbf16, #tpu.memory_space<vmem>>, vector<1x128x128xbf16>
    %54 = vector.shape_cast %53 : vector<1x128x128xbf16> to vector<128x128xbf16>
    %cst_39 = arith.constant dense<0.000000e+00> : vector<64x128xf32>
    %55 = tpu.matmul %52, %54, %cst_39 {dimension_numbers = #tpu.dot_dimension_numbers<[1], [0], [0], [1], [0, 0, 1, 1], [], []>} : vector<64x128xbf16>, vector<128x128xbf16>, vector<64x128xf32> -> vector<64x128xf32>
    %56 = arith.addf %47, %55 : vector<64x128xf32>
    %c2_i32 = arith.constant 2 : i32
    %57 = arith.addi %1, %c2_i32 : i32
    %c0_40 = arith.constant 0 : index
    %58 = arith.index_cast %57 : i32 to index
    %c0_41 = arith.constant 0 : index
    %c0_42 = arith.constant 0 : index
    %59 = vector.load %arg2[%c0_40, %58, %c0_41, %c0_42] : memref<1x10x10x128xbf16, #tpu.memory_space<vmem>>, vector<1x8x8x128xbf16>
    %60 = vector.shape_cast %59 : vector<1x8x8x128xbf16> to vector<8x8x128xbf16>
    %61 = vector.shape_cast %60 : vector<8x8x128xbf16> to vector<64x128xbf16>
    %c6 = arith.constant 6 : index
    %c0_43 = arith.constant 0 : index
    %c0_44 = arith.constant 0 : index
    %62 = vector.load %arg3[%c6, %c0_43, %c0_44] : memref<9x128x128xbf16, #tpu.memory_space<vmem>>, vector<1x128x128xbf16>
    %63 = vector.shape_cast %62 : vector<1x128x128xbf16> to vector<128x128xbf16>
    %cst_45 = arith.constant dense<0.000000e+00> : vector<64x128xf32>
    %64 = tpu.matmul %61, %63, %cst_45 {dimension_numbers = #tpu.dot_dimension_numbers<[1], [0], [0], [1], [0, 0, 1, 1], [], []>} : vector<64x128xbf16>, vector<128x128xbf16>, vector<64x128xf32> -> vector<64x128xf32>
    %65 = arith.addf %56, %64 : vector<64x128xf32>
    %c2_i32_46 = arith.constant 2 : i32
    %66 = arith.addi %1, %c2_i32_46 : i32
    %c0_47 = arith.constant 0 : index
    %67 = arith.index_cast %66 : i32 to index
    %c1_48 = arith.constant 1 : index
    %c0_49 = arith.constant 0 : index
    %68 = vector.load %arg2[%c0_47, %67, %c1_48, %c0_49] : memref<1x10x10x128xbf16, #tpu.memory_space<vmem>>, vector<1x8x8x128xbf16>
    %69 = vector.shape_cast %68 : vector<1x8x8x128xbf16> to vector<8x8x128xbf16>
    %70 = vector.shape_cast %69 : vector<8x8x128xbf16> to vector<64x128xbf16>
    %c7 = arith.constant 7 : index
    %c0_50 = arith.constant 0 : index
    %c0_51 = arith.constant 0 : index
    %71 = vector.load %arg3[%c7, %c0_50, %c0_51] : memref<9x128x128xbf16, #tpu.memory_space<vmem>>, vector<1x128x128xbf16>
    %72 = vector.shape_cast %71 : vector<1x128x128xbf16> to vector<128x128xbf16>
    %cst_52 = arith.constant dense<0.000000e+00> : vector<64x128xf32>
    %73 = tpu.matmul %70, %72, %cst_52 {dimension_numbers = #tpu.dot_dimension_numbers<[1], [0], [0], [1], [0, 0, 1, 1], [], []>} : vector<64x128xbf16>, vector<128x128xbf16>, vector<64x128xf32> -> vector<64x128xf32>
    %74 = arith.addf %65, %73 : vector<64x128xf32>
    %c2_i32_53 = arith.constant 2 : i32
    %75 = arith.addi %1, %c2_i32_53 : i32
    %c0_54 = arith.constant 0 : index
    %76 = arith.index_cast %75 : i32 to index
    %c2_55 = arith.constant 2 : index
    %c0_56 = arith.constant 0 : index
    %77 = vector.load %arg2[%c0_54, %76, %c2_55, %c0_56] : memref<1x10x10x128xbf16, #tpu.memory_space<vmem>>, vector<1x8x8x128xbf16>
    %78 = vector.shape_cast %77 : vector<1x8x8x128xbf16> to vector<8x8x128xbf16>
    %79 = vector.shape_cast %78 : vector<8x8x128xbf16> to vector<64x128xbf16>
    %c8 = arith.constant 8 : index
    %c0_57 = arith.constant 0 : index
    %c0_58 = arith.constant 0 : index
    %80 = vector.load %arg3[%c8, %c0_57, %c0_58] : memref<9x128x128xbf16, #tpu.memory_space<vmem>>, vector<1x128x128xbf16>
    %81 = vector.shape_cast %80 : vector<1x128x128xbf16> to vector<128x128xbf16>
    %cst_59 = arith.constant dense<0.000000e+00> : vector<64x128xf32>
    %82 = tpu.matmul %79, %81, %cst_59 {dimension_numbers = #tpu.dot_dimension_numbers<[1], [0], [0], [1], [0, 0, 1, 1], [], []>} : vector<64x128xbf16>, vector<128x128xbf16>, vector<64x128xf32> -> vector<64x128xf32>
    %83 = arith.addf %74, %82 : vector<64x128xf32>
    %c0_60 = arith.constant 0 : index
    %c0_61 = arith.constant 0 : index
    %84 = vector.load %arg4[%c0_60, %c0_61] : memref<1x128xf32, #tpu.memory_space<vmem>>, vector<1x128xf32>
    %85 = vector.broadcast %84 : vector<1x128xf32> to vector<64x128xf32>
    %86 = arith.addf %83, %85 : vector<64x128xf32>
    %87 = vector.shape_cast %86 : vector<64x128xf32> to vector<8x8x128xf32>
    %88 = arith.truncf %87 : vector<8x8x128xf32> to vector<8x8x128xbf16>
    %c0_62 = arith.constant 0 : index
    %c0_63 = arith.constant 0 : index
    %c0_64 = arith.constant 0 : index
    %c0_65 = arith.constant 0 : index
    %89 = vector.load %arg5[%c0_62, %c0_63, %c0_64, %c0_65] : memref<1x8x8x128xbf16, #tpu.memory_space<vmem>>, vector<1x8x8x128xbf16>
    %90 = vector.shape_cast %89 : vector<1x8x8x128xbf16> to vector<8x8x128xbf16>
    %91 = vector.shape_cast %88 : vector<8x8x128xbf16> to vector<1x8x8x128xbf16>
    tpu.vector_store %arg5[%c0_62, %c0_63, %c0_64, %c0_65], %91 {strides = array<i32>} : memref<1x8x8x128xbf16, #tpu.memory_space<vmem>>, vector<1x8x8x128xbf16>,
    return
  }
  func.func @transform_0(%arg0: i32, %arg1: i32) -> (i32, i32, i32, i32) {
    %c0_i32 = arith.constant 0 : i32
    %c0_i32_0 = arith.constant 0 : i32
    %c0_i32_1 = arith.constant 0 : i32
    %c0_i32_2 = arith.constant 0 : i32
    return %arg0, %c0_i32, %c0_i32_0, %c0_i32_1 : i32, i32, i32, i32
  }
  func.func @transform_1(%arg0: i32, %arg1: i32) -> (i32, i32, i32) {
    %c0_i32 = arith.constant 0 : i32
    %c0_i32_0 = arith.constant 0 : i32
    %c0_i32_1 = arith.constant 0 : i32
    %c0_i32_2 = arith.constant 0 : i32
    return %c0_i32, %c0_i32_0, %c0_i32_1 : i32, i32, i32
  }
  func.func @transform_2(%arg0: i32, %arg1: i32) -> (i32, i32) {
    %c0_i32 = arith.constant 0 : i32
    %c0_i32_0 = arith.constant 0 : i32
    %c0_i32_1 = arith.constant 0 : i32
    return %c0_i32, %c0_i32_0 : i32, i32
  }
  func.func @transform_3(%arg0: i32, %arg1: i32) -> (i32, i32, i32, i32) {
    %c0_i32 = arith.constant 0 : i32
    %c0_i32_0 = arith.constant 0 : i32
    %c0_i32_1 = arith.constant 0 : i32
    return %arg0, %arg1, %c0_i32, %c0_i32_0 : i32, i32, i32, i32
  }
}

module attributes {stable_mosaic.version = 11 : i64} {
  func.func @_resize_w_kernel(%arg0: i32, %arg1: memref<16x8xbf16, #tpu.memory_space<vmem>>, %arg2: memref<1x16x8x128xbf16, #tpu.memory_space<vmem>>, %arg3: memref<1x16x16x128xbf16, #tpu.memory_space<vmem>>) attributes {dimension_semantics = [#tpu.dimension_semantics<parallel>], iteration_bounds = array<i64: 2>, scalar_prefetch = 0 : i64, scratch_operands = 0 : i64, tpu.core_type = #tpu.core_type<tc>, window_params = [{pipeline_mode = #tpu.pipeline_mode<synchronous>, transform_indices = @transform_0, window_bounds = array<i64: 16, 8>}, {transform_indices = @transform_1, window_bounds = array<i64: 1, 16, 8, 128>}, {transform_indices = @transform_2, window_bounds = array<i64: 1, 16, 16, 128>}]} {
    %c0 = arith.constant 0 : index
    %c0_0 = arith.constant 0 : index
    %0 = vector.load %arg1[%c0, %c0_0] : memref<16x8xbf16, #tpu.memory_space<vmem>>, vector<16x8xbf16>
    %c0_1 = arith.constant 0 : index
    %c0_2 = arith.constant 0 : index
    %c0_3 = arith.constant 0 : index
    %c0_4 = arith.constant 0 : index
    %1 = vector.load %arg2[%c0_1, %c0_2, %c0_3, %c0_4] : memref<1x16x8x128xbf16, #tpu.memory_space<vmem>>, vector<1x1x8x128xbf16>
    %2 = vector.shape_cast %1 : vector<1x1x8x128xbf16> to vector<8x128xbf16>
    %cst = arith.constant dense<0.000000e+00> : vector<16x128xf32>
    %3 = tpu.matmul %0, %2, %cst {dimension_numbers = #tpu.dot_dimension_numbers<[1], [0], [0], [1], [0, 0, 1, 1], [], []>} : vector<16x8xbf16>, vector<8x128xbf16>, vector<16x128xf32> -> vector<16x128xf32>
    %4 = arith.truncf %3 : vector<16x128xf32> to vector<16x128xbf16>
    %c0_5 = arith.constant 0 : index
    %c0_6 = arith.constant 0 : index
    %c0_7 = arith.constant 0 : index
    %c0_8 = arith.constant 0 : index
    %5 = vector.load %arg3[%c0_5, %c0_6, %c0_7, %c0_8] : memref<1x16x16x128xbf16, #tpu.memory_space<vmem>>, vector<1x1x16x128xbf16>
    %6 = vector.shape_cast %5 : vector<1x1x16x128xbf16> to vector<16x128xbf16>
    %7 = vector.shape_cast %4 : vector<16x128xbf16> to vector<1x1x16x128xbf16>
    tpu.vector_store %arg3[%c0_5, %c0_6, %c0_7, %c0_8], %7 {strides = array<i32>} : memref<1x16x16x128xbf16, #tpu.memory_space<vmem>>, vector<1x1x16x128xbf16>,
    %c0_9 = arith.constant 0 : index
    %c1 = arith.constant 1 : index
    %c0_10 = arith.constant 0 : index
    %c0_11 = arith.constant 0 : index
    %8 = vector.load %arg2[%c0_9, %c1, %c0_10, %c0_11] : memref<1x16x8x128xbf16, #tpu.memory_space<vmem>>, vector<1x1x8x128xbf16>
    %9 = vector.shape_cast %8 : vector<1x1x8x128xbf16> to vector<8x128xbf16>
    %cst_12 = arith.constant dense<0.000000e+00> : vector<16x128xf32>
    %10 = tpu.matmul %0, %9, %cst_12 {dimension_numbers = #tpu.dot_dimension_numbers<[1], [0], [0], [1], [0, 0, 1, 1], [], []>} : vector<16x8xbf16>, vector<8x128xbf16>, vector<16x128xf32> -> vector<16x128xf32>
    %11 = arith.truncf %10 : vector<16x128xf32> to vector<16x128xbf16>
    %c0_13 = arith.constant 0 : index
    %c1_14 = arith.constant 1 : index
    %c0_15 = arith.constant 0 : index
    %c0_16 = arith.constant 0 : index
    %12 = vector.load %arg3[%c0_13, %c1_14, %c0_15, %c0_16] : memref<1x16x16x128xbf16, #tpu.memory_space<vmem>>, vector<1x1x16x128xbf16>
    %13 = vector.shape_cast %12 : vector<1x1x16x128xbf16> to vector<16x128xbf16>
    %14 = vector.shape_cast %11 : vector<16x128xbf16> to vector<1x1x16x128xbf16>
    tpu.vector_store %arg3[%c0_13, %c1_14, %c0_15, %c0_16], %14 {strides = array<i32>} : memref<1x16x16x128xbf16, #tpu.memory_space<vmem>>, vector<1x1x16x128xbf16>,
    %c0_17 = arith.constant 0 : index
    %c2 = arith.constant 2 : index
    %c0_18 = arith.constant 0 : index
    %c0_19 = arith.constant 0 : index
    %15 = vector.load %arg2[%c0_17, %c2, %c0_18, %c0_19] : memref<1x16x8x128xbf16, #tpu.memory_space<vmem>>, vector<1x1x8x128xbf16>
    %16 = vector.shape_cast %15 : vector<1x1x8x128xbf16> to vector<8x128xbf16>
    %cst_20 = arith.constant dense<0.000000e+00> : vector<16x128xf32>
    %17 = tpu.matmul %0, %16, %cst_20 {dimension_numbers = #tpu.dot_dimension_numbers<[1], [0], [0], [1], [0, 0, 1, 1], [], []>} : vector<16x8xbf16>, vector<8x128xbf16>, vector<16x128xf32> -> vector<16x128xf32>
    %18 = arith.truncf %17 : vector<16x128xf32> to vector<16x128xbf16>
    %c0_21 = arith.constant 0 : index
    %c2_22 = arith.constant 2 : index
    %c0_23 = arith.constant 0 : index
    %c0_24 = arith.constant 0 : index
    %19 = vector.load %arg3[%c0_21, %c2_22, %c0_23, %c0_24] : memref<1x16x16x128xbf16, #tpu.memory_space<vmem>>, vector<1x1x16x128xbf16>
    %20 = vector.shape_cast %19 : vector<1x1x16x128xbf16> to vector<16x128xbf16>
    %21 = vector.shape_cast %18 : vector<16x128xbf16> to vector<1x1x16x128xbf16>
    tpu.vector_store %arg3[%c0_21, %c2_22, %c0_23, %c0_24], %21 {strides = array<i32>} : memref<1x16x16x128xbf16, #tpu.memory_space<vmem>>, vector<1x1x16x128xbf16>,
    %c0_25 = arith.constant 0 : index
    %c3 = arith.constant 3 : index
    %c0_26 = arith.constant 0 : index
    %c0_27 = arith.constant 0 : index
    %22 = vector.load %arg2[%c0_25, %c3, %c0_26, %c0_27] : memref<1x16x8x128xbf16, #tpu.memory_space<vmem>>, vector<1x1x8x128xbf16>
    %23 = vector.shape_cast %22 : vector<1x1x8x128xbf16> to vector<8x128xbf16>
    %cst_28 = arith.constant dense<0.000000e+00> : vector<16x128xf32>
    %24 = tpu.matmul %0, %23, %cst_28 {dimension_numbers = #tpu.dot_dimension_numbers<[1], [0], [0], [1], [0, 0, 1, 1], [], []>} : vector<16x8xbf16>, vector<8x128xbf16>, vector<16x128xf32> -> vector<16x128xf32>
    %25 = arith.truncf %24 : vector<16x128xf32> to vector<16x128xbf16>
    %c0_29 = arith.constant 0 : index
    %c3_30 = arith.constant 3 : index
    %c0_31 = arith.constant 0 : index
    %c0_32 = arith.constant 0 : index
    %26 = vector.load %arg3[%c0_29, %c3_30, %c0_31, %c0_32] : memref<1x16x16x128xbf16, #tpu.memory_space<vmem>>, vector<1x1x16x128xbf16>
    %27 = vector.shape_cast %26 : vector<1x1x16x128xbf16> to vector<16x128xbf16>
    %28 = vector.shape_cast %25 : vector<16x128xbf16> to vector<1x1x16x128xbf16>
    tpu.vector_store %arg3[%c0_29, %c3_30, %c0_31, %c0_32], %28 {strides = array<i32>} : memref<1x16x16x128xbf16, #tpu.memory_space<vmem>>, vector<1x1x16x128xbf16>,
    %c0_33 = arith.constant 0 : index
    %c4 = arith.constant 4 : index
    %c0_34 = arith.constant 0 : index
    %c0_35 = arith.constant 0 : index
    %29 = vector.load %arg2[%c0_33, %c4, %c0_34, %c0_35] : memref<1x16x8x128xbf16, #tpu.memory_space<vmem>>, vector<1x1x8x128xbf16>
    %30 = vector.shape_cast %29 : vector<1x1x8x128xbf16> to vector<8x128xbf16>
    %cst_36 = arith.constant dense<0.000000e+00> : vector<16x128xf32>
    %31 = tpu.matmul %0, %30, %cst_36 {dimension_numbers = #tpu.dot_dimension_numbers<[1], [0], [0], [1], [0, 0, 1, 1], [], []>} : vector<16x8xbf16>, vector<8x128xbf16>, vector<16x128xf32> -> vector<16x128xf32>
    %32 = arith.truncf %31 : vector<16x128xf32> to vector<16x128xbf16>
    %c0_37 = arith.constant 0 : index
    %c4_38 = arith.constant 4 : index
    %c0_39 = arith.constant 0 : index
    %c0_40 = arith.constant 0 : index
    %33 = vector.load %arg3[%c0_37, %c4_38, %c0_39, %c0_40] : memref<1x16x16x128xbf16, #tpu.memory_space<vmem>>, vector<1x1x16x128xbf16>
    %34 = vector.shape_cast %33 : vector<1x1x16x128xbf16> to vector<16x128xbf16>
    %35 = vector.shape_cast %32 : vector<16x128xbf16> to vector<1x1x16x128xbf16>
    tpu.vector_store %arg3[%c0_37, %c4_38, %c0_39, %c0_40], %35 {strides = array<i32>} : memref<1x16x16x128xbf16, #tpu.memory_space<vmem>>, vector<1x1x16x128xbf16>,
    %c0_41 = arith.constant 0 : index
    %c5 = arith.constant 5 : index
    %c0_42 = arith.constant 0 : index
    %c0_43 = arith.constant 0 : index
    %36 = vector.load %arg2[%c0_41, %c5, %c0_42, %c0_43] : memref<1x16x8x128xbf16, #tpu.memory_space<vmem>>, vector<1x1x8x128xbf16>
    %37 = vector.shape_cast %36 : vector<1x1x8x128xbf16> to vector<8x128xbf16>
    %cst_44 = arith.constant dense<0.000000e+00> : vector<16x128xf32>
    %38 = tpu.matmul %0, %37, %cst_44 {dimension_numbers = #tpu.dot_dimension_numbers<[1], [0], [0], [1], [0, 0, 1, 1], [], []>} : vector<16x8xbf16>, vector<8x128xbf16>, vector<16x128xf32> -> vector<16x128xf32>
    %39 = arith.truncf %38 : vector<16x128xf32> to vector<16x128xbf16>
    %c0_45 = arith.constant 0 : index
    %c5_46 = arith.constant 5 : index
    %c0_47 = arith.constant 0 : index
    %c0_48 = arith.constant 0 : index
    %40 = vector.load %arg3[%c0_45, %c5_46, %c0_47, %c0_48] : memref<1x16x16x128xbf16, #tpu.memory_space<vmem>>, vector<1x1x16x128xbf16>
    %41 = vector.shape_cast %40 : vector<1x1x16x128xbf16> to vector<16x128xbf16>
    %42 = vector.shape_cast %39 : vector<16x128xbf16> to vector<1x1x16x128xbf16>
    tpu.vector_store %arg3[%c0_45, %c5_46, %c0_47, %c0_48], %42 {strides = array<i32>} : memref<1x16x16x128xbf16, #tpu.memory_space<vmem>>, vector<1x1x16x128xbf16>,
    %c0_49 = arith.constant 0 : index
    %c6 = arith.constant 6 : index
    %c0_50 = arith.constant 0 : index
    %c0_51 = arith.constant 0 : index
    %43 = vector.load %arg2[%c0_49, %c6, %c0_50, %c0_51] : memref<1x16x8x128xbf16, #tpu.memory_space<vmem>>, vector<1x1x8x128xbf16>
    %44 = vector.shape_cast %43 : vector<1x1x8x128xbf16> to vector<8x128xbf16>
    %cst_52 = arith.constant dense<0.000000e+00> : vector<16x128xf32>
    %45 = tpu.matmul %0, %44, %cst_52 {dimension_numbers = #tpu.dot_dimension_numbers<[1], [0], [0], [1], [0, 0, 1, 1], [], []>} : vector<16x8xbf16>, vector<8x128xbf16>, vector<16x128xf32> -> vector<16x128xf32>
    %46 = arith.truncf %45 : vector<16x128xf32> to vector<16x128xbf16>
    %c0_53 = arith.constant 0 : index
    %c6_54 = arith.constant 6 : index
    %c0_55 = arith.constant 0 : index
    %c0_56 = arith.constant 0 : index
    %47 = vector.load %arg3[%c0_53, %c6_54, %c0_55, %c0_56] : memref<1x16x16x128xbf16, #tpu.memory_space<vmem>>, vector<1x1x16x128xbf16>
    %48 = vector.shape_cast %47 : vector<1x1x16x128xbf16> to vector<16x128xbf16>
    %49 = vector.shape_cast %46 : vector<16x128xbf16> to vector<1x1x16x128xbf16>
    tpu.vector_store %arg3[%c0_53, %c6_54, %c0_55, %c0_56], %49 {strides = array<i32>} : memref<1x16x16x128xbf16, #tpu.memory_space<vmem>>, vector<1x1x16x128xbf16>,
    %c0_57 = arith.constant 0 : index
    %c7 = arith.constant 7 : index
    %c0_58 = arith.constant 0 : index
    %c0_59 = arith.constant 0 : index
    %50 = vector.load %arg2[%c0_57, %c7, %c0_58, %c0_59] : memref<1x16x8x128xbf16, #tpu.memory_space<vmem>>, vector<1x1x8x128xbf16>
    %51 = vector.shape_cast %50 : vector<1x1x8x128xbf16> to vector<8x128xbf16>
    %cst_60 = arith.constant dense<0.000000e+00> : vector<16x128xf32>
    %52 = tpu.matmul %0, %51, %cst_60 {dimension_numbers = #tpu.dot_dimension_numbers<[1], [0], [0], [1], [0, 0, 1, 1], [], []>} : vector<16x8xbf16>, vector<8x128xbf16>, vector<16x128xf32> -> vector<16x128xf32>
    %53 = arith.truncf %52 : vector<16x128xf32> to vector<16x128xbf16>
    %c0_61 = arith.constant 0 : index
    %c7_62 = arith.constant 7 : index
    %c0_63 = arith.constant 0 : index
    %c0_64 = arith.constant 0 : index
    %54 = vector.load %arg3[%c0_61, %c7_62, %c0_63, %c0_64] : memref<1x16x16x128xbf16, #tpu.memory_space<vmem>>, vector<1x1x16x128xbf16>
    %55 = vector.shape_cast %54 : vector<1x1x16x128xbf16> to vector<16x128xbf16>
    %56 = vector.shape_cast %53 : vector<16x128xbf16> to vector<1x1x16x128xbf16>
    tpu.vector_store %arg3[%c0_61, %c7_62, %c0_63, %c0_64], %56 {strides = array<i32>} : memref<1x16x16x128xbf16, #tpu.memory_space<vmem>>, vector<1x1x16x128xbf16>,
    %c0_65 = arith.constant 0 : index
    %c8 = arith.constant 8 : index
    %c0_66 = arith.constant 0 : index
    %c0_67 = arith.constant 0 : index
    %57 = vector.load %arg2[%c0_65, %c8, %c0_66, %c0_67] : memref<1x16x8x128xbf16, #tpu.memory_space<vmem>>, vector<1x1x8x128xbf16>
    %58 = vector.shape_cast %57 : vector<1x1x8x128xbf16> to vector<8x128xbf16>
    %cst_68 = arith.constant dense<0.000000e+00> : vector<16x128xf32>
    %59 = tpu.matmul %0, %58, %cst_68 {dimension_numbers = #tpu.dot_dimension_numbers<[1], [0], [0], [1], [0, 0, 1, 1], [], []>} : vector<16x8xbf16>, vector<8x128xbf16>, vector<16x128xf32> -> vector<16x128xf32>
    %60 = arith.truncf %59 : vector<16x128xf32> to vector<16x128xbf16>
    %c0_69 = arith.constant 0 : index
    %c8_70 = arith.constant 8 : index
    %c0_71 = arith.constant 0 : index
    %c0_72 = arith.constant 0 : index
    %61 = vector.load %arg3[%c0_69, %c8_70, %c0_71, %c0_72] : memref<1x16x16x128xbf16, #tpu.memory_space<vmem>>, vector<1x1x16x128xbf16>
    %62 = vector.shape_cast %61 : vector<1x1x16x128xbf16> to vector<16x128xbf16>
    %63 = vector.shape_cast %60 : vector<16x128xbf16> to vector<1x1x16x128xbf16>
    tpu.vector_store %arg3[%c0_69, %c8_70, %c0_71, %c0_72], %63 {strides = array<i32>} : memref<1x16x16x128xbf16, #tpu.memory_space<vmem>>, vector<1x1x16x128xbf16>,
    %c0_73 = arith.constant 0 : index
    %c9 = arith.constant 9 : index
    %c0_74 = arith.constant 0 : index
    %c0_75 = arith.constant 0 : index
    %64 = vector.load %arg2[%c0_73, %c9, %c0_74, %c0_75] : memref<1x16x8x128xbf16, #tpu.memory_space<vmem>>, vector<1x1x8x128xbf16>
    %65 = vector.shape_cast %64 : vector<1x1x8x128xbf16> to vector<8x128xbf16>
    %cst_76 = arith.constant dense<0.000000e+00> : vector<16x128xf32>
    %66 = tpu.matmul %0, %65, %cst_76 {dimension_numbers = #tpu.dot_dimension_numbers<[1], [0], [0], [1], [0, 0, 1, 1], [], []>} : vector<16x8xbf16>, vector<8x128xbf16>, vector<16x128xf32> -> vector<16x128xf32>
    %67 = arith.truncf %66 : vector<16x128xf32> to vector<16x128xbf16>
    %c0_77 = arith.constant 0 : index
    %c9_78 = arith.constant 9 : index
    %c0_79 = arith.constant 0 : index
    %c0_80 = arith.constant 0 : index
    %68 = vector.load %arg3[%c0_77, %c9_78, %c0_79, %c0_80] : memref<1x16x16x128xbf16, #tpu.memory_space<vmem>>, vector<1x1x16x128xbf16>
    %69 = vector.shape_cast %68 : vector<1x1x16x128xbf16> to vector<16x128xbf16>
    %70 = vector.shape_cast %67 : vector<16x128xbf16> to vector<1x1x16x128xbf16>
    tpu.vector_store %arg3[%c0_77, %c9_78, %c0_79, %c0_80], %70 {strides = array<i32>} : memref<1x16x16x128xbf16, #tpu.memory_space<vmem>>, vector<1x1x16x128xbf16>,
    %c0_81 = arith.constant 0 : index
    %c10 = arith.constant 10 : index
    %c0_82 = arith.constant 0 : index
    %c0_83 = arith.constant 0 : index
    %71 = vector.load %arg2[%c0_81, %c10, %c0_82, %c0_83] : memref<1x16x8x128xbf16, #tpu.memory_space<vmem>>, vector<1x1x8x128xbf16>
    %72 = vector.shape_cast %71 : vector<1x1x8x128xbf16> to vector<8x128xbf16>
    %cst_84 = arith.constant dense<0.000000e+00> : vector<16x128xf32>
    %73 = tpu.matmul %0, %72, %cst_84 {dimension_numbers = #tpu.dot_dimension_numbers<[1], [0], [0], [1], [0, 0, 1, 1], [], []>} : vector<16x8xbf16>, vector<8x128xbf16>, vector<16x128xf32> -> vector<16x128xf32>
    %74 = arith.truncf %73 : vector<16x128xf32> to vector<16x128xbf16>
    %c0_85 = arith.constant 0 : index
    %c10_86 = arith.constant 10 : index
    %c0_87 = arith.constant 0 : index
    %c0_88 = arith.constant 0 : index
    %75 = vector.load %arg3[%c0_85, %c10_86, %c0_87, %c0_88] : memref<1x16x16x128xbf16, #tpu.memory_space<vmem>>, vector<1x1x16x128xbf16>
    %76 = vector.shape_cast %75 : vector<1x1x16x128xbf16> to vector<16x128xbf16>
    %77 = vector.shape_cast %74 : vector<16x128xbf16> to vector<1x1x16x128xbf16>
    tpu.vector_store %arg3[%c0_85, %c10_86, %c0_87, %c0_88], %77 {strides = array<i32>} : memref<1x16x16x128xbf16, #tpu.memory_space<vmem>>, vector<1x1x16x128xbf16>,
    %c0_89 = arith.constant 0 : index
    %c11 = arith.constant 11 : index
    %c0_90 = arith.constant 0 : index
    %c0_91 = arith.constant 0 : index
    %78 = vector.load %arg2[%c0_89, %c11, %c0_90, %c0_91] : memref<1x16x8x128xbf16, #tpu.memory_space<vmem>>, vector<1x1x8x128xbf16>
    %79 = vector.shape_cast %78 : vector<1x1x8x128xbf16> to vector<8x128xbf16>
    %cst_92 = arith.constant dense<0.000000e+00> : vector<16x128xf32>
    %80 = tpu.matmul %0, %79, %cst_92 {dimension_numbers = #tpu.dot_dimension_numbers<[1], [0], [0], [1], [0, 0, 1, 1], [], []>} : vector<16x8xbf16>, vector<8x128xbf16>, vector<16x128xf32> -> vector<16x128xf32>
    %81 = arith.truncf %80 : vector<16x128xf32> to vector<16x128xbf16>
    %c0_93 = arith.constant 0 : index
    %c11_94 = arith.constant 11 : index
    %c0_95 = arith.constant 0 : index
    %c0_96 = arith.constant 0 : index
    %82 = vector.load %arg3[%c0_93, %c11_94, %c0_95, %c0_96] : memref<1x16x16x128xbf16, #tpu.memory_space<vmem>>, vector<1x1x16x128xbf16>
    %83 = vector.shape_cast %82 : vector<1x1x16x128xbf16> to vector<16x128xbf16>
    %84 = vector.shape_cast %81 : vector<16x128xbf16> to vector<1x1x16x128xbf16>
    tpu.vector_store %arg3[%c0_93, %c11_94, %c0_95, %c0_96], %84 {strides = array<i32>} : memref<1x16x16x128xbf16, #tpu.memory_space<vmem>>, vector<1x1x16x128xbf16>,
    %c0_97 = arith.constant 0 : index
    %c12 = arith.constant 12 : index
    %c0_98 = arith.constant 0 : index
    %c0_99 = arith.constant 0 : index
    %85 = vector.load %arg2[%c0_97, %c12, %c0_98, %c0_99] : memref<1x16x8x128xbf16, #tpu.memory_space<vmem>>, vector<1x1x8x128xbf16>
    %86 = vector.shape_cast %85 : vector<1x1x8x128xbf16> to vector<8x128xbf16>
    %cst_100 = arith.constant dense<0.000000e+00> : vector<16x128xf32>
    %87 = tpu.matmul %0, %86, %cst_100 {dimension_numbers = #tpu.dot_dimension_numbers<[1], [0], [0], [1], [0, 0, 1, 1], [], []>} : vector<16x8xbf16>, vector<8x128xbf16>, vector<16x128xf32> -> vector<16x128xf32>
    %88 = arith.truncf %87 : vector<16x128xf32> to vector<16x128xbf16>
    %c0_101 = arith.constant 0 : index
    %c12_102 = arith.constant 12 : index
    %c0_103 = arith.constant 0 : index
    %c0_104 = arith.constant 0 : index
    %89 = vector.load %arg3[%c0_101, %c12_102, %c0_103, %c0_104] : memref<1x16x16x128xbf16, #tpu.memory_space<vmem>>, vector<1x1x16x128xbf16>
    %90 = vector.shape_cast %89 : vector<1x1x16x128xbf16> to vector<16x128xbf16>
    %91 = vector.shape_cast %88 : vector<16x128xbf16> to vector<1x1x16x128xbf16>
    tpu.vector_store %arg3[%c0_101, %c12_102, %c0_103, %c0_104], %91 {strides = array<i32>} : memref<1x16x16x128xbf16, #tpu.memory_space<vmem>>, vector<1x1x16x128xbf16>,
    %c0_105 = arith.constant 0 : index
    %c13 = arith.constant 13 : index
    %c0_106 = arith.constant 0 : index
    %c0_107 = arith.constant 0 : index
    %92 = vector.load %arg2[%c0_105, %c13, %c0_106, %c0_107] : memref<1x16x8x128xbf16, #tpu.memory_space<vmem>>, vector<1x1x8x128xbf16>
    %93 = vector.shape_cast %92 : vector<1x1x8x128xbf16> to vector<8x128xbf16>
    %cst_108 = arith.constant dense<0.000000e+00> : vector<16x128xf32>
    %94 = tpu.matmul %0, %93, %cst_108 {dimension_numbers = #tpu.dot_dimension_numbers<[1], [0], [0], [1], [0, 0, 1, 1], [], []>} : vector<16x8xbf16>, vector<8x128xbf16>, vector<16x128xf32> -> vector<16x128xf32>
    %95 = arith.truncf %94 : vector<16x128xf32> to vector<16x128xbf16>
    %c0_109 = arith.constant 0 : index
    %c13_110 = arith.constant 13 : index
    %c0_111 = arith.constant 0 : index
    %c0_112 = arith.constant 0 : index
    %96 = vector.load %arg3[%c0_109, %c13_110, %c0_111, %c0_112] : memref<1x16x16x128xbf16, #tpu.memory_space<vmem>>, vector<1x1x16x128xbf16>
    %97 = vector.shape_cast %96 : vector<1x1x16x128xbf16> to vector<16x128xbf16>
    %98 = vector.shape_cast %95 : vector<16x128xbf16> to vector<1x1x16x128xbf16>
    tpu.vector_store %arg3[%c0_109, %c13_110, %c0_111, %c0_112], %98 {strides = array<i32>} : memref<1x16x16x128xbf16, #tpu.memory_space<vmem>>, vector<1x1x16x128xbf16>,
    %c0_113 = arith.constant 0 : index
    %c14 = arith.constant 14 : index
    %c0_114 = arith.constant 0 : index
    %c0_115 = arith.constant 0 : index
    %99 = vector.load %arg2[%c0_113, %c14, %c0_114, %c0_115] : memref<1x16x8x128xbf16, #tpu.memory_space<vmem>>, vector<1x1x8x128xbf16>
    %100 = vector.shape_cast %99 : vector<1x1x8x128xbf16> to vector<8x128xbf16>
    %cst_116 = arith.constant dense<0.000000e+00> : vector<16x128xf32>
    %101 = tpu.matmul %0, %100, %cst_116 {dimension_numbers = #tpu.dot_dimension_numbers<[1], [0], [0], [1], [0, 0, 1, 1], [], []>} : vector<16x8xbf16>, vector<8x128xbf16>, vector<16x128xf32> -> vector<16x128xf32>
    %102 = arith.truncf %101 : vector<16x128xf32> to vector<16x128xbf16>
    %c0_117 = arith.constant 0 : index
    %c14_118 = arith.constant 14 : index
    %c0_119 = arith.constant 0 : index
    %c0_120 = arith.constant 0 : index
    %103 = vector.load %arg3[%c0_117, %c14_118, %c0_119, %c0_120] : memref<1x16x16x128xbf16, #tpu.memory_space<vmem>>, vector<1x1x16x128xbf16>
    %104 = vector.shape_cast %103 : vector<1x1x16x128xbf16> to vector<16x128xbf16>
    %105 = vector.shape_cast %102 : vector<16x128xbf16> to vector<1x1x16x128xbf16>
    tpu.vector_store %arg3[%c0_117, %c14_118, %c0_119, %c0_120], %105 {strides = array<i32>} : memref<1x16x16x128xbf16, #tpu.memory_space<vmem>>, vector<1x1x16x128xbf16>,
    %c0_121 = arith.constant 0 : index
    %c15 = arith.constant 15 : index
    %c0_122 = arith.constant 0 : index
    %c0_123 = arith.constant 0 : index
    %106 = vector.load %arg2[%c0_121, %c15, %c0_122, %c0_123] : memref<1x16x8x128xbf16, #tpu.memory_space<vmem>>, vector<1x1x8x128xbf16>
    %107 = vector.shape_cast %106 : vector<1x1x8x128xbf16> to vector<8x128xbf16>
    %cst_124 = arith.constant dense<0.000000e+00> : vector<16x128xf32>
    %108 = tpu.matmul %0, %107, %cst_124 {dimension_numbers = #tpu.dot_dimension_numbers<[1], [0], [0], [1], [0, 0, 1, 1], [], []>} : vector<16x8xbf16>, vector<8x128xbf16>, vector<16x128xf32> -> vector<16x128xf32>
    %109 = arith.truncf %108 : vector<16x128xf32> to vector<16x128xbf16>
    %c0_125 = arith.constant 0 : index
    %c15_126 = arith.constant 15 : index
    %c0_127 = arith.constant 0 : index
    %c0_128 = arith.constant 0 : index
    %110 = vector.load %arg3[%c0_125, %c15_126, %c0_127, %c0_128] : memref<1x16x16x128xbf16, #tpu.memory_space<vmem>>, vector<1x1x16x128xbf16>
    %111 = vector.shape_cast %110 : vector<1x1x16x128xbf16> to vector<16x128xbf16>
    %112 = vector.shape_cast %109 : vector<16x128xbf16> to vector<1x1x16x128xbf16>
    tpu.vector_store %arg3[%c0_125, %c15_126, %c0_127, %c0_128], %112 {strides = array<i32>} : memref<1x16x16x128xbf16, #tpu.memory_space<vmem>>, vector<1x1x16x128xbf16>,
    return
  }
  func.func @transform_0(%arg0: i32) -> (i32, i32) {
    %c0_i32 = arith.constant 0 : i32
    %c0_i32_0 = arith.constant 0 : i32
    %c0_i32_1 = arith.constant 0 : i32
    return %c0_i32, %c0_i32_0 : i32, i32
  }
  func.func @transform_1(%arg0: i32) -> (i32, i32, i32, i32) {
    %c0_i32 = arith.constant 0 : i32
    %c0_i32_0 = arith.constant 0 : i32
    %c0_i32_1 = arith.constant 0 : i32
    %c0_i32_2 = arith.constant 0 : i32
    return %arg0, %c0_i32, %c0_i32_0, %c0_i32_1 : i32, i32, i32, i32
  }
  func.func @transform_2(%arg0: i32) -> (i32, i32, i32, i32) {
    %c0_i32 = arith.constant 0 : i32
    %c0_i32_0 = arith.constant 0 : i32
    %c0_i32_1 = arith.constant 0 : i32
    %c0_i32_2 = arith.constant 0 : i32
    return %arg0, %c0_i32, %c0_i32_0, %c0_i32_1 : i32, i32, i32, i32
  }
}

</mosaic_0001>

<llo_original>
// kernel: deeplabv3plus_forward.12
$region0: #{deeplabv3plus_forward.12}
  #allocation0 [shape = 'u32[]', space=smem, size = 0x4, offset = 0x4, fixed_abs, tag = 'smem constant byte address 0x4 - core index']
  #allocation1 [shape = 'u32[72,128]{1,0:T(1,128)}', space=vmem, size = 0x9000, scoped, tag = 'internal scratch']
  %s0 = inlined_call_operand.vmem [shape: bf16[2,8,8,128], index: 0, kind: input, shape index: {}]
  %s1 = inlined_call_operand.vmem [shape: bf16[1,128,128], index: 1, kind: input, shape index: {}]
  %s2 = inlined_call_operand.vmem [shape: f32[1,128], index: 2, kind: input, shape index: {}]
  %s3 = inlined_call_operand.vmem [shape: bf16[2,8,8,128], index: 3, kind: output, shape index: {}]
  %s4 = sld [smem:[#allocation0]]
  $region45: #{deeplabv3plus_forward.12} parent=0
    _
  %s6 = ssub.s32 1, %s4
  %s7 = scalar_select 0, %s6, %s4
  loop: start=0, step=1, limit=4
  $region2: #{deeplabv3plus_forward.12} parent=0 // loop_pre_header
    _
  $region3: #{deeplabv3plus_forward.12} parent=0 // loop_header
    %s9 = sphi 0, %s13
    %p10 = scmp.ge.s32.totalorder %s9, 4
    %s16 = sphi 0, %s28
    %s17 = sphi 0, %s24
    %s18 = sphi 0, %s16
    %s19 = sphi 0, %s17
    %s20 = sphi 0, %s18
    %s21 = sphi 0, %s19
    %s31 = sphi 0, %s33
    %s34 = sphi 0, %s31
    %s35 = sphi 0, %s34
    %s51 = sphi 0, %s35
    %s55 = sphi 0, %s55
    %s57 = sphi 0, %s55
    %s58 = sphi 0, %s57
    %s72 = sphi 0, %s58
    %s76 = sphi 0, %s76
    %s78 = sphi 0, %s76
    %s79 = sphi 0, %s78
    %s93 = sphi 0, %s79
    %s101 = sphi 0, %s103
    %s104 = sphi 0, %s101
    %s105 = sphi 0, %s104
    %s121 = sphi 0, %s105
  $region4: #{deeplabv3plus_forward.12} parent=0 // loop_header_branch
    %12 = sbr.rel (%p10) target = $region8
  $region5: #{deeplabv3plus_forward.12} parent=0 // loop_body
    %s14 = ssub.s32 %s9, 1
    %s15 = ssub.s32 %s9, 2
    %s22 = sadd.s32 1, %s17
    %p23 = scmp.ge.s32.totalorder %s22, 1
    %s24 = scalar_select %p23, 0, %s22
    %s25 = sadd.s32 1, %s16
    %s26 = scalar_select %p23, %s25, %s16
    %p27 = scmp.ge.s32.totalorder %s26, 2
    %s28 = scalar_select %p27, 0, %s26
    %s29 = ssub.s32 %s16, %s28
    %p30 = scmp.eq.s32.totalorder %s29, 0
    %s32 = sadd.s32 %s31, 1
    %s33 = scalar_select %p30, %s31, %s32
    %p36 = pneg %p30
    %p37 = scmp.eq.s32.totalorder %s9, 1
    %p38 = por %p36, %p37
    %p39 = scmp.ne.s32.totalorder %s31, %s34
    %p40 = scmp.eq.s32.totalorder %s9, 0
    %p41 = por %p39, %p40
    %p42 = scmp.ne.s32.totalorder %s31, %s34
    %p43 = scmp.eq.s32.totalorder %s14, 1
    %p44 = por %p42, %p43
    %p45 = scmp.ne.s32.totalorder %s34, %s35
    %p46 = scmp.eq.s32.totalorder %s14, 0
    %p47 = por %p45, %p46
    %p48 = scmp.ne.s32.totalorder %s34, %s35
    %p49 = scmp.eq.s32.totalorder %s15, 1
    %p50 = por %p48, %p49
    %p52 = scmp.ne.s32.totalorder %s35, %s51
    %p53 = scmp.eq.s32.totalorder %s15, 0
    %p54 = por %p52, %p53
    %s56 = sadd.s32 %s55, 1
    %p59 = scmp.eq.s32.totalorder %s9, 1
    %p60 = scmp.ne.s32.totalorder %s55, %s57
    %p61 = scmp.eq.s32.totalorder %s9, 0
    %p62 = por %p60, %p61
    %p63 = scmp.ne.s32.totalorder %s55, %s57
    %p64 = scmp.eq.s32.totalorder %s14, 1
    %p65 = por %p63, %p64
    %p66 = scmp.ne.s32.totalorder %s57, %s58
    %p67 = scmp.eq.s32.totalorder %s14, 0
    %p68 = por %p66, %p67
    %p69 = scmp.ne.s32.totalorder %s57, %s58
    %p70 = scmp.eq.s32.totalorder %s15, 1
    %p71 = por %p69, %p70
    %p73 = scmp.ne.s32.totalorder %s58, %s72
    %p74 = scmp.eq.s32.totalorder %s15, 0
    %p75 = por %p73, %p74
    %s77 = sadd.s32 %s76, 1
    %p80 = scmp.eq.s32.totalorder %s9, 1
    %p81 = scmp.ne.s32.totalorder %s76, %s78
    %p82 = scmp.eq.s32.totalorder %s9, 0
    %p83 = por %p81, %p82
    %p84 = scmp.ne.s32.totalorder %s76, %s78
    %p85 = scmp.eq.s32.totalorder %s14, 1
    %p86 = por %p84, %p85
    %p87 = scmp.ne.s32.totalorder %s78, %s79
    %p88 = scmp.eq.s32.totalorder %s14, 0
    %p89 = por %p87, %p88
    %p90 = scmp.ne.s32.totalorder %s78, %s79
    %p91 = scmp.eq.s32.totalorder %s15, 1
    %p92 = por %p90, %p91
    %p94 = scmp.ne.s32.totalorder %s79, %s93
    %p95 = scmp.eq.s32.totalorder %s15, 0
    %p96 = por %p94, %p95
    %s97 = ssub.s32 %s16, %s28
    %s98 = ssub.s32 %s17, %s24
    %s99 = sor.u32 %s97, %s98
    %p100 = scmp.eq.s32.totalorder %s99, 0
    %s102 = sadd.s32 %s101, 1
    %s103 = scalar_select %p100, %s101, %s102
    %p106 = pneg %p100
    %p107 = scmp.eq.s32.totalorder %s9, 1
    %p108 = por %p106, %p107
    %p109 = scmp.ne.s32.totalorder %s101, %s104
    %p110 = scmp.eq.s32.totalorder %s9, 0
    %p111 = por %p109, %p110
    %p112 = scmp.ne.s32.totalorder %s101, %s104
    %p113 = scmp.eq.s32.totalorder %s14, 1
    %p114 = por %p112, %p113
    %p115 = scmp.ne.s32.totalorder %s104, %s105
    %p116 = scmp.eq.s32.totalorder %s14, 0
    %p117 = por %p115, %p116
    %p118 = scmp.ne.s32.totalorder %s104, %s105
    %p119 = scmp.eq.s32.totalorder %s15, 1
    %p120 = por %p118, %p119
    %p122 = scmp.ne.s32.totalorder %s105, %s121
    %p123 = scmp.eq.s32.totalorder %s15, 0
    %p124 = por %p122, %p123
    %p125 = scmp.le.s32.totalorder 1, %s9
    %p126 = scmp.lt.s32.totalorder %s9, 3
    %p127 = pnand %p125, %p126
    %p128 = pneg %p127
    // Predicated region
    $region9: #{deeplabv3plus_forward.12} parent=5 // pred_check
      _
    $region10: #{deeplabv3plus_forward.12} parent=5 // pred_check_branch
      %130 = sbr.rel (%p127) target = $region12
    $region11: #{deeplabv3plus_forward.12} parent=5 // pred_region
      %s131 = ssub.s32 %s9, 1
      // Predicated region
      $region13: #{deeplabv3plus_forward.12} parent=11 // pred_check
        %p132 = pneg %p68
      $region14: #{deeplabv3plus_forward.12} parent=11 // pred_check_branch
        %134 = sbr.rel (%p132) target = $region16
      $region15: #{deeplabv3plus_forward.12} parent=11 // pred_region
        _
      $region16: #{deeplabv3plus_forward.12} parent=11 // pred_fallthru
        _
      // Predicated region
      $region17: #{deeplabv3plus_forward.12} parent=11 // pred_check
        %p135 = pneg %p89
      $region18: #{deeplabv3plus_forward.12} parent=11 // pred_check_branch
        %137 = sbr.rel (%p135) target = $region20
      $region19: #{deeplabv3plus_forward.12} parent=11 // pred_region
        _
      $region20: #{deeplabv3plus_forward.12} parent=11 // pred_fallthru
        _
    $region12: #{deeplabv3plus_forward.12} parent=5 // pred_fallthru
      _
    %p138 = scmp.lt.s32.totalorder %s9, 2
    // Predicated region
    $region21: #{deeplabv3plus_forward.12} parent=5 // pred_check
      %p139 = pneg %p138
    $region22: #{deeplabv3plus_forward.12} parent=5 // pred_check_branch
      %141 = sbr.rel (%p139) target = $region24
    $region23: #{deeplabv3plus_forward.12} parent=5 // pred_region
      // Predicated region
      $region25: #{deeplabv3plus_forward.12} parent=23 // pred_check
        %p142 = pneg %p41
      $region26: #{deeplabv3plus_forward.12} parent=23 // pred_check_branch
        %144 = sbr.rel (%p142) target = $region28
      $region27: #{deeplabv3plus_forward.12} parent=23 // pred_region
        %p145 = scmp.lt.s32.totalorder %s16, 1
        %s146 = scalar_select %p145, %s16, 1
        %s147 = smul.addr %s146, 8
        %s148 = smul.addr %s147, 4
        %s149 = scalar_lea.vmem %s0, %s148
      $region28: #{deeplabv3plus_forward.12} parent=23 // pred_fallthru
        _
    $region24: #{deeplabv3plus_forward.12} parent=5 // pred_fallthru
      _
    %p150 = scmp.le.s32.totalorder 1, %s9
    %p151 = scmp.lt.s32.totalorder %s9, 3
    %p152 = pnand %p150, %p151
    %p153 = pneg %p152
    // Predicated region
    $region29: #{deeplabv3plus_forward.12} parent=5 // pred_check
      _
    $region30: #{deeplabv3plus_forward.12} parent=5 // pred_check_branch
      %155 = sbr.rel (%p152) target = $region32
    $region31: #{deeplabv3plus_forward.12} parent=5 // pred_region
      %s156 = ssub.s32 %s9, 1
      %p157 = scmp.lt.s32.totalorder %s18, 1
      %s158 = scalar_select %p157, %s18, 1
      %s159 = smul.addr %s158, 8
      %s160 = smul.addr %s159, 4
      %s161 = scalar_lea.vmem %s0, %s160
      %p162 = pneg %p47
      %p163 = pneg %p44
      %p164 = pneg %p68
      %p165 = pneg %p65
      %p166 = pneg %p89
      %p167 = pneg %p86
      %p168 = pneg %p117
      %p169 = pneg %p114
      %s170 = smul.u32 8, %s19
      %p171 = scmp.lt.s32.totalorder %s18, 1
      %s172 = scalar_select %p171, %s18, 1
      %p173 = scmp.lt.s32.totalorder %s170, 7
      %s174 = scalar_select %p173, %s170, 7
      %s175 = smul.addr %s172, 8
      %s176 = sadd.s32 %s174, %s175
      %s177 = smul.addr %s176, 4
      %s178 = scalar_lea.vmem %s3, %s177
      %p179 = scmp.lt.s32.totalorder %s18, 1
      %s180 = scalar_select %p179, %s18, 1
      %s181 = smul.addr %s180, 8
      %s182 = smul.addr %s181, 4
      %s183 = scalar_lea.vmem %s0, %s182
      %s184 = smul.u32 8, %s19
      %p185 = scmp.lt.s32.totalorder %s18, 1
      %s186 = scalar_select %p185, %s18, 1
      %p187 = scmp.lt.s32.totalorder %s184, 7
      %s188 = scalar_select %p187, %s184, 7
      %s189 = smul.addr %s186, 8
      %s190 = sadd.s32 %s188, %s189
      %s191 = smul.addr %s190, 4
      %s192 = scalar_lea.vmem %s3, %s191
      %s193 = smul.u32 8, %s19
      %s194 = smul.u32 %s19, 8
      %s195 = smul.addr %s194, 4
      %s196 = scalar_lea.vmem %s183, %s195
      %v197 = vld [vmem:[%s196] sm:$0xf]
      %v198 = vld [vmem:[%s196 + $0x4] sm:$0xf]
      %v199 = vld [vmem:[%s196 + $0x8] sm:$0xf]
      %v200 = vld [vmem:[%s196 + $0xc] sm:$0xf]
      %v201 = vld [vmem:[%s196 + $0x10] sm:$0xf]
      %v202 = vld [vmem:[%s196 + $0x14] sm:$0xf]
      %v203 = vld [vmem:[%s196 + $0x18] sm:$0xf]
      %v204 = vld [vmem:[%s196 + $0x1c] sm:$0xf]
      %v205 = vld [vmem:[%s1] sm:$0xf]
      %v206 = vld [vmem:[%s1 + $0x4] sm:$0xf]
      %v207 = vld [vmem:[%s1 + $0x8] sm:$0xf]
      %v208 = vld [vmem:[%s1 + $0xc] sm:$0xf]
      %v209 = vld [vmem:[%s1 + $0x10] sm:$0xf]
      %v210 = vld [vmem:[%s1 + $0x14] sm:$0xf]
      %v211 = vld [vmem:[%s1 + $0x18] sm:$0xf]
      %v212 = vld [vmem:[%s1 + $0x1c] sm:$0xf]
      %v213 = vld [vmem:[%s1 + $0x20] sm:$0xf]
      %v214 = vld [vmem:[%s1 + $0x24] sm:$0xf]
      %v215 = vld [vmem:[%s1 + $0x28] sm:$0xf]
      %v216 = vld [vmem:[%s1 + $0x2c] sm:$0xf]
      %v217 = vld [vmem:[%s1 + $0x30] sm:$0xf]
      %v218 = vld [vmem:[%s1 + $0x34] sm:$0xf]
      %v219 = vld [vmem:[%s1 + $0x38] sm:$0xf]
      %v220 = vld [vmem:[%s1 + $0x3c] sm:$0xf]
      %v221 = vld [vmem:[%s2] sm:$0x1]
      %v223 = vperm.slane %v221, 0
      %v233 = vunpack.c.l.b16 %v197
      %v234 = vunpack.c.l.b16 %v198
      %v235 = vunpack.c.l.b16 %v199
      %v236 = vunpack.c.l.b16 %v200
      %v237 = vunpack.c.l.b16 %v201
      %v238 = vunpack.c.l.b16 %v202
      %v239 = vunpack.c.l.b16 %v203
      %v240 = vunpack.c.l.b16 %v204
      %v241 = vpack.c.b16 %v234, %v233
      %v242 = vpack.c.b16 %v236, %v235
      %v243 = vpack.c.b16 %v238, %v237
      %v244 = vpack.c.b16 %v240, %v239
      %v265 = vunpack.c.l.b16 %v205
      %v266 = vunpack.c.l.b16 %v206
      %v267 = vunpack.c.l.b16 %v207
      %v268 = vunpack.c.l.b16 %v208
      %v269 = vunpack.c.l.b16 %v209
      %v270 = vunpack.c.l.b16 %v210
      %v271 = vunpack.c.l.b16 %v211
      %v272 = vunpack.c.l.b16 %v212
      %v273 = vunpack.c.l.b16 %v213
      %v274 = vunpack.c.l.b16 %v214
      %v275 = vunpack.c.l.b16 %v215
      %v276 = vunpack.c.l.b16 %v216
      %v277 = vunpack.c.l.b16 %v217
      %v278 = vunpack.c.l.b16 %v218
      %v279 = vunpack.c.l.b16 %v219
      %v280 = vunpack.c.l.b16 %v220
      %v281 = vpack.c.b16 %v266, %v265
      %v282 = vpack.c.b16 %v268, %v267
      %v283 = vpack.c.b16 %v270, %v269
      %v284 = vpack.c.b16 %v272, %v271
      %v285 = vpack.c.b16 %v274, %v273
      %v286 = vpack.c.b16 %v276, %v275
      %v287 = vpack.c.b16 %v278, %v277
      %v288 = vpack.c.b16 %v280, %v279
      %297 = vmatpush.bf16.msra.mxu0 %v288
      %298 = vmatpush.bf16.msra.mxu0 %v287
      %299 = vmatpush.bf16.msra.mxu0 %v286
      %300 = vmatpush.bf16.msra.mxu0 %v285
      %301 = vmatpush.bf16.msra.mxu0 %v284
      %302 = vmatpush.bf16.msra.mxu0 %v283
      %303 = vmatpush.bf16.msra.mxu0 %v282
      %304 = vmatpush.bf16.msra.mxu0 %v281
      %305 = vmatmul.bf16.gmra.mxu0 %v241
      %v306 = vpop.f32.mrf.mxu0
      %v307 = vadd.f32 %v223, %v306
      %v308 = vpop.f32.mrf.mxu0
      %v309 = vadd.f32 %v223, %v308
      %310 = vmatmul.bf16.gmra.mxu0 %v242
      %v311 = vpop.f32.mrf.mxu0
      %v312 = vadd.f32 %v223, %v311
      %v313 = vpop.f32.mrf.mxu0
      %v314 = vadd.f32 %v223, %v313
      %315 = vmatmul.bf16.gmra.mxu0 %v243
      %v316 = vpop.f32.mrf.mxu0
      %v317 = vadd.f32 %v223, %v316
      %v318 = vpop.f32.mrf.mxu0
      %v319 = vadd.f32 %v223, %v318
      %320 = vmatmul.bf16.gmra.mxu0 %v244
      %v321 = vpop.f32.mrf.mxu0
      %v322 = vadd.f32 %v223, %v321
      %v323 = vpop.f32.mrf.mxu0
      %v324 = vadd.f32 %v223, %v323
      %325 = vdwg.mxu0
      %v326 = vmax.f32 %v307, 0.0
      %v327 = vmax.f32 %v309, 0.0
      %v328 = vmax.f32 %v312, 0.0
      %v329 = vmax.f32 %v314, 0.0
      %v330 = vmax.f32 %v317, 0.0
      %v331 = vmax.f32 %v319, 0.0
      %v332 = vmax.f32 %v322, 0.0
      %v333 = vmax.f32 %v324, 0.0
      %v334 = vpack.c.bf16 %v326, %v326
      %v335 = vpack.c.bf16 %v327, %v327
      %v336 = vpack.c.bf16 %v328, %v328
      %v337 = vpack.c.bf16 %v329, %v329
      %v338 = vpack.c.bf16 %v330, %v330
      %v339 = vpack.c.bf16 %v331, %v331
      %v340 = vpack.c.bf16 %v332, %v332
      %v341 = vpack.c.bf16 %v333, %v333
      %342 = vst [vmem:[%s192] sm:$0xf] %v334
      %343 = vst [vmem:[%s192 + $0x4] sm:$0xf] %v335
      %344 = vst [vmem:[%s192 + $0x8] sm:$0xf] %v336
      %345 = vst [vmem:[%s192 + $0xc] sm:$0xf] %v337
      %346 = vst [vmem:[%s192 + $0x10] sm:$0xf] %v338
      %347 = vst [vmem:[%s192 + $0x14] sm:$0xf] %v339
      %348 = vst [vmem:[%s192 + $0x18] sm:$0xf] %v340
      %349 = vst [vmem:[%s192 + $0x1c] sm:$0xf] %v341
      %s350 = smul.u32 8, %s19
      %p351 = scmp.lt.s32.totalorder %s18, 1
      %s352 = scalar_select %p351, %s18, 1
      %p353 = scmp.lt.s32.totalorder %s350, 7
      %s354 = scalar_select %p353, %s350, 7
      %s355 = smul.addr %s352, 8
      %s356 = sadd.s32 %s354, %s355
      %s357 = smul.addr %s356, 4
      %s358 = scalar_lea.vmem %s3, %s357
      // Predicated region
      $region33: #{deeplabv3plus_forward.12} parent=31 // pred_check
        %p359 = pneg %p114
      $region34: #{deeplabv3plus_forward.12} parent=31 // pred_check_branch
        %361 = sbr.rel (%p359) target = $region36
      $region35: #{deeplabv3plus_forward.12} parent=31 // pred_region
        %s362 = smul.u32 8, %s19
      $region36: #{deeplabv3plus_forward.12} parent=31 // pred_fallthru
        _
    $region32: #{deeplabv3plus_forward.12} parent=5 // pred_fallthru
      _
    %p363 = scmp.le.s32.totalorder 2, %s9
    // Predicated region
    $region37: #{deeplabv3plus_forward.12} parent=5 // pred_check
      %p364 = pneg %p363
    $region38: #{deeplabv3plus_forward.12} parent=5 // pred_check_branch
      %366 = sbr.rel (%p364) target = $region40
    $region39: #{deeplabv3plus_forward.12} parent=5 // pred_region
      %s367 = ssub.s32 %s9, 2
      // Predicated region
      $region41: #{deeplabv3plus_forward.12} parent=39 // pred_check
        %p368 = pneg %p120
      $region42: #{deeplabv3plus_forward.12} parent=39 // pred_check_branch
        %370 = sbr.rel (%p368) target = $region44
      $region43: #{deeplabv3plus_forward.12} parent=39 // pred_region
        %s371 = smul.u32 8, %s21
        %p372 = scmp.lt.s32.totalorder %s20, 1
        %s373 = scalar_select %p372, %s20, 1
        %p374 = scmp.lt.s32.totalorder %s371, 7
        %s375 = scalar_select %p374, %s371, 7
        %s376 = smul.addr %s373, 8
        %s377 = sadd.s32 %s375, %s376
        %s378 = smul.addr %s377, 4
        %s379 = scalar_lea.vmem %s3, %s378
      $region44: #{deeplabv3plus_forward.12} parent=39 // pred_fallthru
        _
    $region40: #{deeplabv3plus_forward.12} parent=5 // pred_fallthru
      _
  $region6: #{deeplabv3plus_forward.12} parent=0 // loop_footer
    %s13 = sadd.s32 1, %s9
  $region7: #{deeplabv3plus_forward.12} parent=0 // loop_footer_branch
    %8 = sbr.rel target = $region3
  $region8: #{deeplabv3plus_forward.12} parent=0 // loop_exit
    _

// kernel: deeplabv3plus_forward.9
$region0: #{deeplabv3plus_forward.9}
  #allocation0 [shape = 'u32[]', space=smem, size = 0x4, offset = 0x4, fixed_abs, tag = 'smem constant byte address 0x4 - core index']
  #allocation1 [shape = 'u32[72,128]{1,0:T(1,128)}', space=vmem, size = 0x9000, scoped, tag = 'internal scratch']
  %s0 = inlined_call_operand.vmem [shape: bf16[2,9,9,128], index: 0, kind: input, shape index: {}]
  %s1 = inlined_call_operand.vmem [shape: bf16[4,128,128], index: 1, kind: input, shape index: {}]
  %s2 = inlined_call_operand.vmem [shape: f32[1,128], index: 2, kind: input, shape index: {}]
  %s3 = inlined_call_operand.vmem [shape: bf16[2,8,8,128], index: 3, kind: output, shape index: {}]
  %s4 = sld [smem:[#allocation0]]
  $region45: #{deeplabv3plus_forward.9} parent=0
    _
  %s6 = ssub.s32 1, %s4
  %s7 = scalar_select 0, %s6, %s4
  loop: start=0, step=1, limit=4
  $region2: #{deeplabv3plus_forward.9} parent=0 // loop_pre_header
    _
  $region3: #{deeplabv3plus_forward.9} parent=0 // loop_header
    %s9 = sphi 0, %s13
    %p10 = scmp.ge.s32.totalorder %s9, 4
    %s16 = sphi 0, %s28
    %s17 = sphi 0, %s24
    %s18 = sphi 0, %s16
    %s19 = sphi 0, %s17
    %s20 = sphi 0, %s18
    %s21 = sphi 0, %s19
    %s31 = sphi 0, %s33
    %s34 = sphi 0, %s31
    %s35 = sphi 0, %s34
    %s51 = sphi 0, %s35
    %s55 = sphi 0, %s55
    %s57 = sphi 0, %s55
    %s58 = sphi 0, %s57
    %s72 = sphi 0, %s58
    %s76 = sphi 0, %s76
    %s78 = sphi 0, %s76
    %s79 = sphi 0, %s78
    %s93 = sphi 0, %s79
    %s101 = sphi 0, %s103
    %s104 = sphi 0, %s101
    %s105 = sphi 0, %s104
    %s121 = sphi 0, %s105
  $region4: #{deeplabv3plus_forward.9} parent=0 // loop_header_branch
    %12 = sbr.rel (%p10) target = $region8
  $region5: #{deeplabv3plus_forward.9} parent=0 // loop_body
    %s14 = ssub.s32 %s9, 1
    %s15 = ssub.s32 %s9, 2
    %s22 = sadd.s32 1, %s17
    %p23 = scmp.ge.s32.totalorder %s22, 1
    %s24 = scalar_select %p23, 0, %s22
    %s25 = sadd.s32 1, %s16
    %s26 = scalar_select %p23, %s25, %s16
    %p27 = scmp.ge.s32.totalorder %s26, 2
    %s28 = scalar_select %p27, 0, %s26
    %s29 = ssub.s32 %s16, %s28
    %p30 = scmp.eq.s32.totalorder %s29, 0
    %s32 = sadd.s32 %s31, 1
    %s33 = scalar_select %p30, %s31, %s32
    %p36 = pneg %p30
    %p37 = scmp.eq.s32.totalorder %s9, 1
    %p38 = por %p36, %p37
    %p39 = scmp.ne.s32.totalorder %s31, %s34
    %p40 = scmp.eq.s32.totalorder %s9, 0
    %p41 = por %p39, %p40
    %p42 = scmp.ne.s32.totalorder %s31, %s34
    %p43 = scmp.eq.s32.totalorder %s14, 1
    %p44 = por %p42, %p43
    %p45 = scmp.ne.s32.totalorder %s34, %s35
    %p46 = scmp.eq.s32.totalorder %s14, 0
    %p47 = por %p45, %p46
    %p48 = scmp.ne.s32.totalorder %s34, %s35
    %p49 = scmp.eq.s32.totalorder %s15, 1
    %p50 = por %p48, %p49
    %p52 = scmp.ne.s32.totalorder %s35, %s51
    %p53 = scmp.eq.s32.totalorder %s15, 0
    %p54 = por %p52, %p53
    %s56 = sadd.s32 %s55, 1
    %p59 = scmp.eq.s32.totalorder %s9, 1
    %p60 = scmp.ne.s32.totalorder %s55, %s57
    %p61 = scmp.eq.s32.totalorder %s9, 0
    %p62 = por %p60, %p61
    %p63 = scmp.ne.s32.totalorder %s55, %s57
    %p64 = scmp.eq.s32.totalorder %s14, 1
    %p65 = por %p63, %p64
    %p66 = scmp.ne.s32.totalorder %s57, %s58
    %p67 = scmp.eq.s32.totalorder %s14, 0
    %p68 = por %p66, %p67
    %p69 = scmp.ne.s32.totalorder %s57, %s58
    %p70 = scmp.eq.s32.totalorder %s15, 1
    %p71 = por %p69, %p70
    %p73 = scmp.ne.s32.totalorder %s58, %s72
    %p74 = scmp.eq.s32.totalorder %s15, 0
    %p75 = por %p73, %p74
    %s77 = sadd.s32 %s76, 1
    %p80 = scmp.eq.s32.totalorder %s9, 1
    %p81 = scmp.ne.s32.totalorder %s76, %s78
    %p82 = scmp.eq.s32.totalorder %s9, 0
    %p83 = por %p81, %p82
    %p84 = scmp.ne.s32.totalorder %s76, %s78
    %p85 = scmp.eq.s32.totalorder %s14, 1
    %p86 = por %p84, %p85
    %p87 = scmp.ne.s32.totalorder %s78, %s79
    %p88 = scmp.eq.s32.totalorder %s14, 0
    %p89 = por %p87, %p88
    %p90 = scmp.ne.s32.totalorder %s78, %s79
    %p91 = scmp.eq.s32.totalorder %s15, 1
    %p92 = por %p90, %p91
    %p94 = scmp.ne.s32.totalorder %s79, %s93
    %p95 = scmp.eq.s32.totalorder %s15, 0
    %p96 = por %p94, %p95
    %s97 = ssub.s32 %s16, %s28
    %s98 = ssub.s32 %s17, %s24
    %s99 = sor.u32 %s97, %s98
    %p100 = scmp.eq.s32.totalorder %s99, 0
    %s102 = sadd.s32 %s101, 1
    %s103 = scalar_select %p100, %s101, %s102
    %p106 = pneg %p100
    %p107 = scmp.eq.s32.totalorder %s9, 1
    %p108 = por %p106, %p107
    %p109 = scmp.ne.s32.totalorder %s101, %s104
    %p110 = scmp.eq.s32.totalorder %s9, 0
    %p111 = por %p109, %p110
    %p112 = scmp.ne.s32.totalorder %s101, %s104
    %p113 = scmp.eq.s32.totalorder %s14, 1
    %p114 = por %p112, %p113
    %p115 = scmp.ne.s32.totalorder %s104, %s105
    %p116 = scmp.eq.s32.totalorder %s14, 0
    %p117 = por %p115, %p116
    %p118 = scmp.ne.s32.totalorder %s104, %s105
    %p119 = scmp.eq.s32.totalorder %s15, 1
    %p120 = por %p118, %p119
    %p122 = scmp.ne.s32.totalorder %s105, %s121
    %p123 = scmp.eq.s32.totalorder %s15, 0
    %p124 = por %p122, %p123
    %p125 = scmp.le.s32.totalorder 1, %s9
    %p126 = scmp.lt.s32.totalorder %s9, 3
    %p127 = pnand %p125, %p126
    %p128 = pneg %p127
    // Predicated region
    $region9: #{deeplabv3plus_forward.9} parent=5 // pred_check
      _
    $region10: #{deeplabv3plus_forward.9} parent=5 // pred_check_branch
      %130 = sbr.rel (%p127) target = $region12
    $region11: #{deeplabv3plus_forward.9} parent=5 // pred_region
      %s131 = ssub.s32 %s9, 1
      // Predicated region
      $region13: #{deeplabv3plus_forward.9} parent=11 // pred_check
        %p132 = pneg %p68
      $region14: #{deeplabv3plus_forward.9} parent=11 // pred_check_branch
        %134 = sbr.rel (%p132) target = $region16
      $region15: #{deeplabv3plus_forward.9} parent=11 // pred_region
        _
      $region16: #{deeplabv3plus_forward.9} parent=11 // pred_fallthru
        _
      // Predicated region
      $region17: #{deeplabv3plus_forward.9} parent=11 // pred_check
        %p135 = pneg %p89
      $region18: #{deeplabv3plus_forward.9} parent=11 // pred_check_branch
        %137 = sbr.rel (%p135) target = $region20
      $region19: #{deeplabv3plus_forward.9} parent=11 // pred_region
        _
      $region20: #{deeplabv3plus_forward.9} parent=11 // pred_fallthru
        _
    $region12: #{deeplabv3plus_forward.9} parent=5 // pred_fallthru
      _
    %p138 = scmp.lt.s32.totalorder %s9, 2
    // Predicated region
    $region21: #{deeplabv3plus_forward.9} parent=5 // pred_check
      %p139 = pneg %p138
    $region22: #{deeplabv3plus_forward.9} parent=5 // pred_check_branch
      %141 = sbr.rel (%p139) target = $region24
    $region23: #{deeplabv3plus_forward.9} parent=5 // pred_region
      // Predicated region
      $region25: #{deeplabv3plus_forward.9} parent=23 // pred_check
        %p142 = pneg %p41
      $region26: #{deeplabv3plus_forward.9} parent=23 // pred_check_branch
        %144 = sbr.rel (%p142) target = $region28
      $region27: #{deeplabv3plus_forward.9} parent=23 // pred_region
        %p145 = scmp.lt.s32.totalorder %s16, 1
        %s146 = scalar_select %p145, %s16, 1
        %s147 = smul.addr %s146, 18
        %s148 = smul.addr %s147, 4
        %s149 = scalar_lea.vmem %s0, %s148
      $region28: #{deeplabv3plus_forward.9} parent=23 // pred_fallthru
        _
    $region24: #{deeplabv3plus_forward.9} parent=5 // pred_fallthru
      _
    %p150 = scmp.le.s32.totalorder 1, %s9
    %p151 = scmp.lt.s32.totalorder %s9, 3
    %p152 = pnand %p150, %p151
    %p153 = pneg %p152
    // Predicated region
    $region29: #{deeplabv3plus_forward.9} parent=5 // pred_check
      _
    $region30: #{deeplabv3plus_forward.9} parent=5 // pred_check_branch
      %155 = sbr.rel (%p152) target = $region32
    $region31: #{deeplabv3plus_forward.9} parent=5 // pred_region
      %s156 = ssub.s32 %s9, 1
      %p157 = scmp.lt.s32.totalorder %s18, 1
      %s158 = scalar_select %p157, %s18, 1
      %s159 = smul.addr %s158, 18
      %s160 = smul.addr %s159, 4
      %s161 = scalar_lea.vmem %s0, %s160
      %p162 = pneg %p47
      %p163 = pneg %p44
      %p164 = pneg %p68
      %p165 = pneg %p65
      %p166 = pneg %p89
      %p167 = pneg %p86
      %p168 = pneg %p117
      %p169 = pneg %p114
      %s170 = smul.u32 8, %s19
      %p171 = scmp.lt.s32.totalorder %s18, 1
      %s172 = scalar_select %p171, %s18, 1
      %p173 = scmp.lt.s32.totalorder %s170, 7
      %s174 = scalar_select %p173, %s170, 7
      %s175 = smul.addr %s172, 8
      %s176 = sadd.s32 %s174, %s175
      %s177 = smul.addr %s176, 4
      %s178 = scalar_lea.vmem %s3, %s177
      %p179 = scmp.lt.s32.totalorder %s18, 1
      %s180 = scalar_select %p179, %s18, 1
      %s181 = smul.addr %s180, 18
      %s182 = smul.addr %s181, 4
      %s183 = scalar_lea.vmem %s0, %s182
      %s184 = smul.u32 8, %s19
      %p185 = scmp.lt.s32.totalorder %s18, 1
      %s186 = scalar_select %p185, %s18, 1
      %p187 = scmp.lt.s32.totalorder %s184, 7
      %s188 = scalar_select %p187, %s184, 7
      %s189 = smul.addr %s186, 8
      %s190 = sadd.s32 %s188, %s189
      %s191 = smul.addr %s190, 4
      %s192 = scalar_lea.vmem %s3, %s191
      %s193 = smul.u32 8, %s19
      %s194 = smul.u32 %s19, 8
      %s195 = smul.u32 %s194, 2
      %s196 = smul.addr %s195, 4
      %s197 = scalar_lea.vmem %s183, %s196
      %v198 = vld [vmem:[%s197] sm:$0xf]
      %v199 = vld [vmem:[%s197 + $0x8] sm:$0xf]
      %v200 = vld [vmem:[%s197 + $0x10] sm:$0xf]
      %v201 = vld [vmem:[%s197 + $0x18] sm:$0xf]
      %v202 = vld [vmem:[%s197 + $0x20] sm:$0xf]
      %v203 = vld [vmem:[%s197 + $0x28] sm:$0xf]
      %v204 = vld [vmem:[%s197 + $0x30] sm:$0xf]
      %v205 = vld [vmem:[%s197 + $0x38] sm:$0xf]
      %v206 = vld [vmem:[%s1] sm:$0xf]
      %v207 = vld [vmem:[%s1 + $0x4] sm:$0xf]
      %v208 = vld [vmem:[%s1 + $0x8] sm:$0xf]
      %v209 = vld [vmem:[%s1 + $0xc] sm:$0xf]
      %v210 = vld [vmem:[%s1 + $0x10] sm:$0xf]
      %v211 = vld [vmem:[%s1 + $0x14] sm:$0xf]
      %v212 = vld [vmem:[%s1 + $0x18] sm:$0xf]
      %v213 = vld [vmem:[%s1 + $0x1c] sm:$0xf]
      %v214 = vld [vmem:[%s1 + $0x20] sm:$0xf]
      %v215 = vld [vmem:[%s1 + $0x24] sm:$0xf]
      %v216 = vld [vmem:[%s1 + $0x28] sm:$0xf]
      %v217 = vld [vmem:[%s1 + $0x2c] sm:$0xf]
      %v218 = vld [vmem:[%s1 + $0x30] sm:$0xf]
      %v219 = vld [vmem:[%s1 + $0x34] sm:$0xf]
      %v220 = vld [vmem:[%s1 + $0x38] sm:$0xf]
      %v221 = vld [vmem:[%s1 + $0x3c] sm:$0xf]
      %v222 = vld [vmem:[%s197 + $0x4] sm:$0x1]
      %v223 = vld [vmem:[%s197 + $0xc] sm:$0x1]
      %v224 = vld [vmem:[%s197 + $0x14] sm:$0x1]
      %v225 = vld [vmem:[%s197 + $0x1c] sm:$0x1]
      %v226 = vld [vmem:[%s197 + $0x24] sm:$0x1]
      %v227 = vld [vmem:[%s197 + $0x2c] sm:$0x1]
      %v228 = vld [vmem:[%s197 + $0x34] sm:$0x1]
      %v229 = vld [vmem:[%s197 + $0x3c] sm:$0x1]
      %vm230 = vsmask.f32 3328
      %vm231 = vsmask.f32 7440
      %vm232 = vmor %vm230, %vm231
      %v234 = vshrl.u32 %v198, 16
      %v236 = vrot.slane %v234, 4
      %v237 = vshll.u32 %v198, 16
      %v239 = vrot.slane %v237, 5
      %v240 = vor.u32 %v236, %v239
      %v241 = vrot.slane %v240, 4
      %v243 = vshll.u32 %v222, 16
      %v245 = vrot.slane %v243, 5
      %v246 = vsel %vm232, %v241, %v245
      %v248 = vshrl.u32 %v199, 16
      %v250 = vrot.slane %v248, 4
      %v251 = vshll.u32 %v199, 16
      %v253 = vrot.slane %v251, 5
      %v254 = vor.u32 %v250, %v253
      %v255 = vrot.slane %v254, 4
      %v257 = vshll.u32 %v223, 16
      %v259 = vrot.slane %v257, 5
      %v260 = vsel %vm232, %v255, %v259
      %v262 = vshrl.u32 %v200, 16
      %v264 = vrot.slane %v262, 4
      %v265 = vshll.u32 %v200, 16
      %v267 = vrot.slane %v265, 5
      %v268 = vor.u32 %v264, %v267
      %v269 = vrot.slane %v268, 4
      %v271 = vshll.u32 %v224, 16
      %v273 = vrot.slane %v271, 5
      %v274 = vsel %vm232, %v269, %v273
      %v276 = vshrl.u32 %v201, 16
      %v278 = vrot.slane %v276, 4
      %v279 = vshll.u32 %v201, 16
      %v281 = vrot.slane %v279, 5
      %v282 = vor.u32 %v278, %v281
      %v283 = vrot.slane %v282, 4
      %v285 = vshll.u32 %v225, 16
      %v287 = vrot.slane %v285, 5
      %v288 = vsel %vm232, %v283, %v287
      %v290 = vshrl.u32 %v202, 16
      %v292 = vrot.slane %v290, 4
      %v293 = vshll.u32 %v202, 16
      %v295 = vrot.slane %v293, 5
      %v296 = vor.u32 %v292, %v295
      %v297 = vrot.slane %v296, 4
      %v299 = vshll.u32 %v226, 16
      %v301 = vrot.slane %v299, 5
      %v302 = vsel %vm232, %v297, %v301
      %v304 = vshrl.u32 %v203, 16
      %v306 = vrot.slane %v304, 4
      %v307 = vshll.u32 %v203, 16
      %v309 = vrot.slane %v307, 5
      %v310 = vor.u32 %v306, %v309
      %v311 = vrot.slane %v310, 4
      %v313 = vshll.u32 %v227, 16
      %v315 = vrot.slane %v313, 5
      %v316 = vsel %vm232, %v311, %v315
      %v318 = vshrl.u32 %v204, 16
      %v320 = vrot.slane %v318, 4
      %v321 = vshll.u32 %v204, 16
      %v323 = vrot.slane %v321, 5
      %v324 = vor.u32 %v320, %v323
      %v325 = vrot.slane %v324, 4
      %v327 = vshll.u32 %v228, 16
      %v329 = vrot.slane %v327, 5
      %v330 = vsel %vm232, %v325, %v329
      %v332 = vshrl.u32 %v205, 16
      %v334 = vrot.slane %v332, 4
      %v335 = vshll.u32 %v205, 16
      %v337 = vrot.slane %v335, 5
      %v338 = vor.u32 %v334, %v337
      %v339 = vrot.slane %v338, 4
      %v341 = vshll.u32 %v229, 16
      %v343 = vrot.slane %v341, 5
      %v344 = vsel %vm232, %v339, %v343
      %s345 = scalar_lea.vmem %s1, 64
      %v346 = vld [vmem:[%s345] sm:$0xf]
      %v347 = vld [vmem:[%s345 + $0x4] sm:$0xf]
      %v348 = vld [vmem:[%s345 + $0x8] sm:$0xf]
      %v349 = vld [vmem:[%s345 + $0xc] sm:$0xf]
      %v350 = vld [vmem:[%s345 + $0x10] sm:$0xf]
      %v351 = vld [vmem:[%s345 + $0x14] sm:$0xf]
      %v352 = vld [vmem:[%s345 + $0x18] sm:$0xf]
      %v353 = vld [vmem:[%s345 + $0x1c] sm:$0xf]
      %v354 = vld [vmem:[%s345 + $0x20] sm:$0xf]
      %v355 = vld [vmem:[%s345 + $0x24] sm:$0xf]
      %v356 = vld [vmem:[%s345 + $0x28] sm:$0xf]
      %v357 = vld [vmem:[%s345 + $0x2c] sm:$0xf]
      %v358 = vld [vmem:[%s345 + $0x30] sm:$0xf]
      %v359 = vld [vmem:[%s345 + $0x34] sm:$0xf]
      %v360 = vld [vmem:[%s345 + $0x38] sm:$0xf]
      %v361 = vld [vmem:[%s345 + $0x3c] sm:$0xf]
      %v362 = vunpack.c.l.b16 %v246
      %v363 = vunpack.c.l.b16 %v260
      %v364 = vunpack.c.l.b16 %v274
      %v365 = vunpack.c.l.b16 %v288
      %v366 = vunpack.c.l.b16 %v302
      %v367 = vunpack.c.l.b16 %v316
      %v368 = vunpack.c.l.b16 %v330
      %v369 = vunpack.c.l.b16 %v344
      %v370 = vpack.c.b16 %v363, %v362
      %v371 = vpack.c.b16 %v365, %v364
      %v372 = vpack.c.b16 %v367, %v366
      %v373 = vpack.c.b16 %v369, %v368
      %v394 = vunpack.c.l.b16 %v346
      %v395 = vunpack.c.l.b16 %v347
      %v396 = vunpack.c.l.b16 %v348
      %v397 = vunpack.c.l.b16 %v349
      %v398 = vunpack.c.l.b16 %v350
      %v399 = vunpack.c.l.b16 %v351
      %v400 = vunpack.c.l.b16 %v352
      %v401 = vunpack.c.l.b16 %v353
      %v402 = vunpack.c.l.b16 %v354
      %v403 = vunpack.c.l.b16 %v355
      %v404 = vunpack.c.l.b16 %v356
      %v405 = vunpack.c.l.b16 %v357
      %v406 = vunpack.c.l.b16 %v358
      %v407 = vunpack.c.l.b16 %v359
      %v408 = vunpack.c.l.b16 %v360
      %v409 = vunpack.c.l.b16 %v361
      %v410 = vpack.c.b16 %v395, %v394
      %v411 = vpack.c.b16 %v397, %v396
      %v412 = vpack.c.b16 %v399, %v398
      %v413 = vpack.c.b16 %v401, %v400
      %v414 = vpack.c.b16 %v403, %v402
      %v415 = vpack.c.b16 %v405, %v404
      %v416 = vpack.c.b16 %v407, %v406
      %v417 = vpack.c.b16 %v409, %v408
      %426 = vmatpush.bf16.msra.mxu0 %v417
      %427 = vmatpush.bf16.msra.mxu0 %v416
      %428 = vmatpush.bf16.msra.mxu0 %v415
      %429 = vmatpush.bf16.msra.mxu0 %v414
      %430 = vmatpush.bf16.msra.mxu0 %v413
      %431 = vmatpush.bf16.msra.mxu0 %v412
      %432 = vmatpush.bf16.msra.mxu0 %v411
      %433 = vmatpush.bf16.msra.mxu0 %v410
      %434 = vmatmul.bf16.gmra.mxu0 %v370
      %v435 = vpop.f32.mrf.mxu0
      %v436 = vadd.f32 0.0, %v435
      %v437 = vpop.f32.mrf.mxu0
      %v438 = vadd.f32 0.0, %v437
      %439 = vmatmul.bf16.gmra.mxu0 %v371
      %v440 = vpop.f32.mrf.mxu0
      %v441 = vadd.f32 0.0, %v440
      %v442 = vpop.f32.mrf.mxu0
      %v443 = vadd.f32 0.0, %v442
      %444 = vmatmul.bf16.gmra.mxu0 %v372
      %v445 = vpop.f32.mrf.mxu0
      %v446 = vadd.f32 0.0, %v445
      %v447 = vpop.f32.mrf.mxu0
      %v448 = vadd.f32 0.0, %v447
      %449 = vmatmul.bf16.gmra.mxu0 %v373
      %v450 = vpop.f32.mrf.mxu0
      %v451 = vadd.f32 0.0, %v450
      %v452 = vpop.f32.mrf.mxu0
      %v453 = vadd.f32 0.0, %v452
      %454 = vdwg.mxu0
      %v463 = vunpack.c.l.b16 %v198
      %v464 = vunpack.c.l.b16 %v199
      %v465 = vunpack.c.l.b16 %v200
      %v466 = vunpack.c.l.b16 %v201
      %v467 = vunpack.c.l.b16 %v202
      %v468 = vunpack.c.l.b16 %v203
      %v469 = vunpack.c.l.b16 %v204
      %v470 = vunpack.c.l.b16 %v205
      %v471 = vpack.c.b16 %v464, %v463
      %v472 = vpack.c.b16 %v466, %v465
      %v473 = vpack.c.b16 %v468, %v467
      %v474 = vpack.c.b16 %v470, %v469
      %v495 = vunpack.c.l.b16 %v206
      %v496 = vunpack.c.l.b16 %v207
      %v497 = vunpack.c.l.b16 %v208
      %v498 = vunpack.c.l.b16 %v209
      %v499 = vunpack.c.l.b16 %v210
      %v500 = vunpack.c.l.b16 %v211
      %v501 = vunpack.c.l.b16 %v212
      %v502 = vunpack.c.l.b16 %v213
      %v503 = vunpack.c.l.b16 %v214
      %v504 = vunpack.c.l.b16 %v215
      %v505 = vunpack.c.l.b16 %v216
      %v506 = vunpack.c.l.b16 %v217
      %v507 = vunpack.c.l.b16 %v218
      %v508 = vunpack.c.l.b16 %v219
      %v509 = vunpack.c.l.b16 %v220
      %v510 = vunpack.c.l.b16 %v221
      %v511 = vpack.c.b16 %v496, %v495
      %v512 = vpack.c.b16 %v498, %v497
      %v513 = vpack.c.b16 %v500, %v499
      %v514 = vpack.c.b16 %v502, %v501
      %v515 = vpack.c.b16 %v504, %v503
      %v516 = vpack.c.b16 %v506, %v505
      %v517 = vpack.c.b16 %v508, %v507
      %v518 = vpack.c.b16 %v510, %v509
      %527 = vmatpush.bf16.msra.mxu0 %v518
      %528 = vmatpush.bf16.msra.mxu0 %v517
      %529 = vmatpush.bf16.msra.mxu0 %v516
      %530 = vmatpush.bf16.msra.mxu0 %v515
      %531 = vmatpush.bf16.msra.mxu0 %v514
      %532 = vmatpush.bf16.msra.mxu0 %v513
      %533 = vmatpush.bf16.msra.mxu0 %v512
      %534 = vmatpush.bf16.msra.mxu0 %v511
      %535 = vmatmul.bf16.gmra.mxu0 %v471
      %v536 = vpop.f32.mrf.mxu0
      %v537 = vadd.f32 %v436, %v536
      %v538 = vpop.f32.mrf.mxu0
      %v539 = vadd.f32 %v438, %v538
      %540 = vmatmul.bf16.gmra.mxu0 %v472
      %v541 = vpop.f32.mrf.mxu0
      %v542 = vadd.f32 %v441, %v541
      %v543 = vpop.f32.mrf.mxu0
      %v544 = vadd.f32 %v443, %v543
      %545 = vmatmul.bf16.gmra.mxu0 %v473
      %v546 = vpop.f32.mrf.mxu0
      %v547 = vadd.f32 %v446, %v546
      %v548 = vpop.f32.mrf.mxu0
      %v549 = vadd.f32 %v448, %v548
      %550 = vmatmul.bf16.gmra.mxu0 %v474
      %v551 = vpop.f32.mrf.mxu0
      %v552 = vadd.f32 %v451, %v551
      %v553 = vpop.f32.mrf.mxu0
      %v554 = vadd.f32 %v453, %v553
      %555 = vdwg.mxu0
      %s556 = sadd.s32 %s194, 1
      %s557 = smul.u32 %s556, 2
      %s558 = smul.addr %s557, 4
      %s559 = scalar_lea.vmem %s183, %s558
      %v560 = vld [vmem:[%s559] sm:$0xf]
      %v561 = vld [vmem:[%s559 + $0x8] sm:$0xf]
      %v562 = vld [vmem:[%s559 + $0x10] sm:$0xf]
      %v563 = vld [vmem:[%s559 + $0x18] sm:$0xf]
      %v564 = vld [vmem:[%s559 + $0x20] sm:$0xf]
      %v565 = vld [vmem:[%s559 + $0x28] sm:$0xf]
      %v566 = vld [vmem:[%s559 + $0x30] sm:$0xf]
      %v567 = vld [vmem:[%s559 + $0x38] sm:$0xf]
      %s568 = scalar_lea.vmem %s1, 128
      %v569 = vld [vmem:[%s568] sm:$0xf]
      %v570 = vld [vmem:[%s568 + $0x4] sm:$0xf]
      %v571 = vld [vmem:[%s568 + $0x8] sm:$0xf]
      %v572 = vld [vmem:[%s568 + $0xc] sm:$0xf]
      %v573 = vld [vmem:[%s568 + $0x10] sm:$0xf]
      %v574 = vld [vmem:[%s568 + $0x14] sm:$0xf]
      %v575 = vld [vmem:[%s568 + $0x18] sm:$0xf]
      %v576 = vld [vmem:[%s568 + $0x1c] sm:$0xf]
      %v577 = vld [vmem:[%s568 + $0x20] sm:$0xf]
      %v578 = vld [vmem:[%s568 + $0x24] sm:$0xf]
      %v579 = vld [vmem:[%s568 + $0x28] sm:$0xf]
      %v580 = vld [vmem:[%s568 + $0x2c] sm:$0xf]
      %v581 = vld [vmem:[%s568 + $0x30] sm:$0xf]
      %v582 = vld [vmem:[%s568 + $0x34] sm:$0xf]
      %v583 = vld [vmem:[%s568 + $0x38] sm:$0xf]
      %v584 = vld [vmem:[%s568 + $0x3c] sm:$0xf]
      %v593 = vunpack.c.l.b16 %v560
      %v594 = vunpack.c.l.b16 %v561
      %v595 = vunpack.c.l.b16 %v562
      %v596 = vunpack.c.l.b16 %v563
      %v597 = vunpack.c.l.b16 %v564
      %v598 = vunpack.c.l.b16 %v565
      %v599 = vunpack.c.l.b16 %v566
      %v600 = vunpack.c.l.b16 %v567
      %v601 = vpack.c.b16 %v594, %v593
      %v602 = vpack.c.b16 %v596, %v595
      %v603 = vpack.c.b16 %v598, %v597
      %v604 = vpack.c.b16 %v600, %v599
      %v625 = vunpack.c.l.b16 %v569
      %v626 = vunpack.c.l.b16 %v570
      %v627 = vunpack.c.l.b16 %v571
      %v628 = vunpack.c.l.b16 %v572
      %v629 = vunpack.c.l.b16 %v573
      %v630 = vunpack.c.l.b16 %v574
      %v631 = vunpack.c.l.b16 %v575
      %v632 = vunpack.c.l.b16 %v576
      %v633 = vunpack.c.l.b16 %v577
      %v634 = vunpack.c.l.b16 %v578
      %v635 = vunpack.c.l.b16 %v579
      %v636 = vunpack.c.l.b16 %v580
      %v637 = vunpack.c.l.b16 %v581
      %v638 = vunpack.c.l.b16 %v582
      %v639 = vunpack.c.l.b16 %v583
      %v640 = vunpack.c.l.b16 %v584
      %v641 = vpack.c.b16 %v626, %v625
      %v642 = vpack.c.b16 %v628, %v627
      %v643 = vpack.c.b16 %v630, %v629
      %v644 = vpack.c.b16 %v632, %v631
      %v645 = vpack.c.b16 %v634, %v633
      %v646 = vpack.c.b16 %v636, %v635
      %v647 = vpack.c.b16 %v638, %v637
      %v648 = vpack.c.b16 %v640, %v639
      %657 = vmatpush.bf16.msra.mxu0 %v648
      %658 = vmatpush.bf16.msra.mxu0 %v647
      %659 = vmatpush.bf16.msra.mxu0 %v646
      %660 = vmatpush.bf16.msra.mxu0 %v645
      %661 = vmatpush.bf16.msra.mxu0 %v644
      %662 = vmatpush.bf16.msra.mxu0 %v643
      %663 = vmatpush.bf16.msra.mxu0 %v642
      %664 = vmatpush.bf16.msra.mxu0 %v641
      %665 = vmatmul.bf16.gmra.mxu0 %v601
      %v666 = vpop.f32.mrf.mxu0
      %v667 = vadd.f32 0.0, %v666
      %v668 = vpop.f32.mrf.mxu0
      %v669 = vadd.f32 0.0, %v668
      %670 = vmatmul.bf16.gmra.mxu0 %v602
      %v671 = vpop.f32.mrf.mxu0
      %v672 = vadd.f32 0.0, %v671
      %v673 = vpop.f32.mrf.mxu0
      %v674 = vadd.f32 0.0, %v673
      %675 = vmatmul.bf16.gmra.mxu0 %v603
      %v676 = vpop.f32.mrf.mxu0
      %v677 = vadd.f32 0.0, %v676
      %v678 = vpop.f32.mrf.mxu0
      %v679 = vadd.f32 0.0, %v678
      %680 = vmatmul.bf16.gmra.mxu0 %v604
      %v681 = vpop.f32.mrf.mxu0
      %v682 = vadd.f32 0.0, %v681
      %v683 = vpop.f32.mrf.mxu0
      %v684 = vadd.f32 0.0, %v683
      %685 = vdwg.mxu0
      %v686 = vadd.f32 %v537, %v667
      %v687 = vadd.f32 %v539, %v669
      %v688 = vadd.f32 %v542, %v672
      %v689 = vadd.f32 %v544, %v674
      %v690 = vadd.f32 %v547, %v677
      %v691 = vadd.f32 %v549, %v679
      %v692 = vadd.f32 %v552, %v682
      %v693 = vadd.f32 %v554, %v684
      %v694 = vld [vmem:[%s559] sm:$0xf]
      %v695 = vld [vmem:[%s559 + $0x4] sm:$0x1]
      %v696 = vld [vmem:[%s559 + $0x8] sm:$0xf]
      %v697 = vld [vmem:[%s559 + $0xc] sm:$0x1]
      %v698 = vld [vmem:[%s559 + $0x10] sm:$0xf]
      %v699 = vld [vmem:[%s559 + $0x14] sm:$0x1]
      %v700 = vld [vmem:[%s559 + $0x18] sm:$0xf]
      %v701 = vld [vmem:[%s559 + $0x1c] sm:$0x1]
      %v702 = vld [vmem:[%s559 + $0x20] sm:$0xf]
      %v703 = vld [vmem:[%s559 + $0x24] sm:$0x1]
      %v704 = vld [vmem:[%s559 + $0x28] sm:$0xf]
      %v705 = vld [vmem:[%s559 + $0x2c] sm:$0x1]
      %v706 = vld [vmem:[%s559 + $0x30] sm:$0xf]
      %v707 = vld [vmem:[%s559 + $0x34] sm:$0x1]
      %v708 = vld [vmem:[%s559 + $0x38] sm:$0xf]
      %v709 = vld [vmem:[%s559 + $0x3c] sm:$0x1]
      %v711 = vshrl.u32 %v694, 16
      %v713 = vrot.slane %v711, 4
      %v714 = vshll.u32 %v694, 16
      %v716 = vrot.slane %v714, 5
      %v717 = vor.u32 %v713, %v716
      %v718 = vrot.slane %v717, 4
      %v720 = vshll.u32 %v695, 16
      %v722 = vrot.slane %v720, 5
      %v723 = vsel %vm232, %v718, %v722
      %v725 = vshrl.u32 %v696, 16
      %v727 = vrot.slane %v725, 4
      %v728 = vshll.u32 %v696, 16
      %v730 = vrot.slane %v728, 5
      %v731 = vor.u32 %v727, %v730
      %v732 = vrot.slane %v731, 4
      %v734 = vshll.u32 %v697, 16
      %v736 = vrot.slane %v734, 5
      %v737 = vsel %vm232, %v732, %v736
      %v739 = vshrl.u32 %v698, 16
      %v741 = vrot.slane %v739, 4
      %v742 = vshll.u32 %v698, 16
      %v744 = vrot.slane %v742, 5
      %v745 = vor.u32 %v741, %v744
      %v746 = vrot.slane %v745, 4
      %v748 = vshll.u32 %v699, 16
      %v750 = vrot.slane %v748, 5
      %v751 = vsel %vm232, %v746, %v750
      %v753 = vshrl.u32 %v700, 16
      %v755 = vrot.slane %v753, 4
      %v756 = vshll.u32 %v700, 16
      %v758 = vrot.slane %v756, 5
      %v759 = vor.u32 %v755, %v758
      %v760 = vrot.slane %v759, 4
      %v762 = vshll.u32 %v701, 16
      %v764 = vrot.slane %v762, 5
      %v765 = vsel %vm232, %v760, %v764
      %v767 = vshrl.u32 %v702, 16
      %v769 = vrot.slane %v767, 4
      %v770 = vshll.u32 %v702, 16
      %v772 = vrot.slane %v770, 5
      %v773 = vor.u32 %v769, %v772
      %v774 = vrot.slane %v773, 4
      %v776 = vshll.u32 %v703, 16
      %v778 = vrot.slane %v776, 5
      %v779 = vsel %vm232, %v774, %v778
      %v781 = vshrl.u32 %v704, 16
      %v783 = vrot.slane %v781, 4
      %v784 = vshll.u32 %v704, 16
      %v786 = vrot.slane %v784, 5
      %v787 = vor.u32 %v783, %v786
      %v788 = vrot.slane %v787, 4
      %v790 = vshll.u32 %v705, 16
      %v792 = vrot.slane %v790, 5
      %v793 = vsel %vm232, %v788, %v792
      %v795 = vshrl.u32 %v706, 16
      %v797 = vrot.slane %v795, 4
      %v798 = vshll.u32 %v706, 16
      %v800 = vrot.slane %v798, 5
      %v801 = vor.u32 %v797, %v800
      %v802 = vrot.slane %v801, 4
      %v804 = vshll.u32 %v707, 16
      %v806 = vrot.slane %v804, 5
      %v807 = vsel %vm232, %v802, %v806
      %v809 = vshrl.u32 %v708, 16
      %v811 = vrot.slane %v809, 4
      %v812 = vshll.u32 %v708, 16
      %v814 = vrot.slane %v812, 5
      %v815 = vor.u32 %v811, %v814
      %v816 = vrot.slane %v815, 4
      %v818 = vshll.u32 %v709, 16
      %v820 = vrot.slane %v818, 5
      %v821 = vsel %vm232, %v816, %v820
      %s822 = scalar_lea.vmem %s1, 192
      %v823 = vld [vmem:[%s822] sm:$0xf]
      %v824 = vld [vmem:[%s822 + $0x4] sm:$0xf]
      %v825 = vld [vmem:[%s822 + $0x8] sm:$0xf]
      %v826 = vld [vmem:[%s822 + $0xc] sm:$0xf]
      %v827 = vld [vmem:[%s822 + $0x10] sm:$0xf]
      %v828 = vld [vmem:[%s822 + $0x14] sm:$0xf]
      %v829 = vld [vmem:[%s822 + $0x18] sm:$0xf]
      %v830 = vld [vmem:[%s822 + $0x1c] sm:$0xf]
      %v831 = vld [vmem:[%s822 + $0x20] sm:$0xf]
      %v832 = vld [vmem:[%s822 + $0x24] sm:$0xf]
      %v833 = vld [vmem:[%s822 + $0x28] sm:$0xf]
      %v834 = vld [vmem:[%s822 + $0x2c] sm:$0xf]
      %v835 = vld [vmem:[%s822 + $0x30] sm:$0xf]
      %v836 = vld [vmem:[%s822 + $0x34] sm:$0xf]
      %v837 = vld [vmem:[%s822 + $0x38] sm:$0xf]
      %v838 = vld [vmem:[%s822 + $0x3c] sm:$0xf]
      %v839 = vunpack.c.l.b16 %v723
      %v840 = vunpack.c.l.b16 %v737
      %v841 = vunpack.c.l.b16 %v751
      %v842 = vunpack.c.l.b16 %v765
      %v843 = vunpack.c.l.b16 %v779
      %v844 = vunpack.c.l.b16 %v793
      %v845 = vunpack.c.l.b16 %v807
      %v846 = vunpack.c.l.b16 %v821
      %v847 = vpack.c.b16 %v840, %v839
      %v848 = vpack.c.b16 %v842, %v841
      %v849 = vpack.c.b16 %v844, %v843
      %v850 = vpack.c.b16 %v846, %v845
      %v871 = vunpack.c.l.b16 %v823
      %v872 = vunpack.c.l.b16 %v824
      %v873 = vunpack.c.l.b16 %v825
      %v874 = vunpack.c.l.b16 %v826
      %v875 = vunpack.c.l.b16 %v827
      %v876 = vunpack.c.l.b16 %v828
      %v877 = vunpack.c.l.b16 %v829
      %v878 = vunpack.c.l.b16 %v830
      %v879 = vunpack.c.l.b16 %v831
      %v880 = vunpack.c.l.b16 %v832
      %v881 = vunpack.c.l.b16 %v833
      %v882 = vunpack.c.l.b16 %v834
      %v883 = vunpack.c.l.b16 %v835
      %v884 = vunpack.c.l.b16 %v836
      %v885 = vunpack.c.l.b16 %v837
      %v886 = vunpack.c.l.b16 %v838
      %v887 = vpack.c.b16 %v872, %v871
      %v888 = vpack.c.b16 %v874, %v873
      %v889 = vpack.c.b16 %v876, %v875
      %v890 = vpack.c.b16 %v878, %v877
      %v891 = vpack.c.b16 %v880, %v879
      %v892 = vpack.c.b16 %v882, %v881
      %v893 = vpack.c.b16 %v884, %v883
      %v894 = vpack.c.b16 %v886, %v885
      %903 = vmatpush.bf16.msra.mxu0 %v894
      %904 = vmatpush.bf16.msra.mxu0 %v893
      %905 = vmatpush.bf16.msra.mxu0 %v892
      %906 = vmatpush.bf16.msra.mxu0 %v891
      %907 = vmatpush.bf16.msra.mxu0 %v890
      %908 = vmatpush.bf16.msra.mxu0 %v889
      %909 = vmatpush.bf16.msra.mxu0 %v888
      %910 = vmatpush.bf16.msra.mxu0 %v887
      %911 = vmatmul.bf16.gmra.mxu0 %v847
      %v912 = vpop.f32.mrf.mxu0
      %v913 = vadd.f32 0.0, %v912
      %v914 = vpop.f32.mrf.mxu0
      %v915 = vadd.f32 0.0, %v914
      %916 = vmatmul.bf16.gmra.mxu0 %v848
      %v917 = vpop.f32.mrf.mxu0
      %v918 = vadd.f32 0.0, %v917
      %v919 = vpop.f32.mrf.mxu0
      %v920 = vadd.f32 0.0, %v919
      %921 = vmatmul.bf16.gmra.mxu0 %v849
      %v922 = vpop.f32.mrf.mxu0
      %v923 = vadd.f32 0.0, %v922
      %v924 = vpop.f32.mrf.mxu0
      %v925 = vadd.f32 0.0, %v924
      %926 = vmatmul.bf16.gmra.mxu0 %v850
      %v927 = vpop.f32.mrf.mxu0
      %v928 = vadd.f32 0.0, %v927
      %v929 = vpop.f32.mrf.mxu0
      %v930 = vadd.f32 0.0, %v929
      %931 = vdwg.mxu0
      %v932 = vadd.f32 %v686, %v913
      %v933 = vadd.f32 %v687, %v915
      %v934 = vadd.f32 %v688, %v918
      %v935 = vadd.f32 %v689, %v920
      %v936 = vadd.f32 %v690, %v923
      %v937 = vadd.f32 %v691, %v925
      %v938 = vadd.f32 %v692, %v928
      %v939 = vadd.f32 %v693, %v930
      %v940 = vld [vmem:[%s2] sm:$0x1]
      %v942 = vperm.slane %v940, 0
      %v944 = vadd.f32 %v932, %v942
      %v945 = vadd.f32 %v933, %v942
      %v946 = vadd.f32 %v934, %v942
      %v947 = vadd.f32 %v935, %v942
      %v948 = vadd.f32 %v936, %v942
      %v949 = vadd.f32 %v937, %v942
      %v950 = vadd.f32 %v938, %v942
      %v951 = vadd.f32 %v939, %v942
      %v952 = vmax.f32 %v944, 0.0
      %v953 = vmax.f32 %v945, 0.0
      %v954 = vmax.f32 %v946, 0.0
      %v955 = vmax.f32 %v947, 0.0
      %v956 = vmax.f32 %v948, 0.0
      %v957 = vmax.f32 %v949, 0.0
      %v958 = vmax.f32 %v950, 0.0
      %v959 = vmax.f32 %v951, 0.0
      %v960 = vpack.c.bf16 %v952, %v952
      %v961 = vpack.c.bf16 %v953, %v953
      %v962 = vpack.c.bf16 %v954, %v954
      %v963 = vpack.c.bf16 %v955, %v955
      %v964 = vpack.c.bf16 %v956, %v956
      %v965 = vpack.c.bf16 %v957, %v957
      %v966 = vpack.c.bf16 %v958, %v958
      %v967 = vpack.c.bf16 %v959, %v959
      %968 = vst [vmem:[%s192] sm:$0xf] %v960
      %969 = vst [vmem:[%s192 + $0x4] sm:$0xf] %v961
      %970 = vst [vmem:[%s192 + $0x8] sm:$0xf] %v962
      %971 = vst [vmem:[%s192 + $0xc] sm:$0xf] %v963
      %972 = vst [vmem:[%s192 + $0x10] sm:$0xf] %v964
      %973 = vst [vmem:[%s192 + $0x14] sm:$0xf] %v965
      %974 = vst [vmem:[%s192 + $0x18] sm:$0xf] %v966
      %975 = vst [vmem:[%s192 + $0x1c] sm:$0xf] %v967
      %s976 = smul.u32 8, %s19
      %p977 = scmp.lt.s32.totalorder %s18, 1
      %s978 = scalar_select %p977, %s18, 1
      %p979 = scmp.lt.s32.totalorder %s976, 7
      %s980 = scalar_select %p979, %s976, 7
      %s981 = smul.addr %s978, 8
      %s982 = sadd.s32 %s980, %s981
      %s983 = smul.addr %s982, 4
      %s984 = scalar_lea.vmem %s3, %s983
      // Predicated region
      $region33: #{deeplabv3plus_forward.9} parent=31 // pred_check
        %p985 = pneg %p114
      $region34: #{deeplabv3plus_forward.9} parent=31 // pred_check_branch
        %987 = sbr.rel (%p985) target = $region36
      $region35: #{deeplabv3plus_forward.9} parent=31 // pred_region
        %s988 = smul.u32 8, %s19
      $region36: #{deeplabv3plus_forward.9} parent=31 // pred_fallthru
        _
    $region32: #{deeplabv3plus_forward.9} parent=5 // pred_fallthru
      _
    %p989 = scmp.le.s32.totalorder 2, %s9
    // Predicated region
    $region37: #{deeplabv3plus_forward.9} parent=5 // pred_check
      %p990 = pneg %p989
    $region38: #{deeplabv3plus_forward.9} parent=5 // pred_check_branch
      %992 = sbr.rel (%p990) target = $region40
    $region39: #{deeplabv3plus_forward.9} parent=5 // pred_region
      %s993 = ssub.s32 %s9, 2
      // Predicated region
      $region41: #{deeplabv3plus_forward.9} parent=39 // pred_check
        %p994 = pneg %p120
      $region42: #{deeplabv3plus_forward.9} parent=39 // pred_check_branch
        %996 = sbr.rel (%p994) target = $region44
      $region43: #{deeplabv3plus_forward.9} parent=39 // pred_region
        %s997 = smul.u32 8, %s21
        %p998 = scmp.lt.s32.totalorder %s20, 1
        %s999 = scalar_select %p998, %s20, 1
        %p1000 = scmp.lt.s32.totalorder %s997, 7
        %s1001 = scalar_select %p1000, %s997, 7
        %s1002 = smul.addr %s999, 8
        %s1003 = sadd.s32 %s1001, %s1002
        %s1004 = smul.addr %s1003, 4
        %s1005 = scalar_lea.vmem %s3, %s1004
      $region44: #{deeplabv3plus_forward.9} parent=39 // pred_fallthru
        _
    $region40: #{deeplabv3plus_forward.9} parent=5 // pred_fallthru
      _
  $region6: #{deeplabv3plus_forward.9} parent=0 // loop_footer
    %s13 = sadd.s32 1, %s9
  $region7: #{deeplabv3plus_forward.9} parent=0 // loop_footer_branch
    %8 = sbr.rel target = $region3
  $region8: #{deeplabv3plus_forward.9} parent=0 // loop_exit
    _

// kernel: deeplabv3plus_forward.13
$region0: #{deeplabv3plus_forward.13}
  #allocation0 [shape = 'u32[]', space=smem, size = 0x4, offset = 0x4, fixed_abs, tag = 'smem constant byte address 0x4 - core index']
  #allocation1 [shape = 'u32[72,128]{1,0:T(1,128)}', space=vmem, size = 0x9000, scoped, tag = 'internal scratch']
  %s0 = inlined_call_operand.vmem [shape: bf16[8,4], index: 0, kind: input, shape index: {}]
  %s1 = inlined_call_operand.vmem [shape: bf16[2,4,512], index: 1, kind: input, shape index: {}]
  %s2 = inlined_call_operand.vmem [shape: bf16[2,8,512], index: 2, kind: output, shape index: {}]
  %s3 = sld [smem:[#allocation0]]
  $region41: #{deeplabv3plus_forward.13} parent=0
    _
  %s5 = ssub.s32 1, %s3
  %s6 = scalar_select 0, %s5, %s3
  loop: start=0, step=1, limit=4
  $region2: #{deeplabv3plus_forward.13} parent=0 // loop_pre_header
    _
  $region3: #{deeplabv3plus_forward.13} parent=0 // loop_header
    %s8 = sphi 0, %s12
    %p9 = scmp.ge.s32.totalorder %s8, 4
    %s16 = sphi 0, %s16
    %s18 = sphi 0, %s16
    %s19 = sphi 0, %s18
    %s33 = sphi 0, %s19
    %s39 = sphi 0, %s41
    %s42 = sphi 0, %s39
    %s43 = sphi 0, %s42
    %s59 = sphi 0, %s43
    %s65 = sphi 0, %s67
    %s68 = sphi 0, %s65
    %s69 = sphi 0, %s68
    %s85 = sphi 0, %s69
  $region4: #{deeplabv3plus_forward.13} parent=0 // loop_header_branch
    %11 = sbr.rel (%p9) target = $region8
  $region5: #{deeplabv3plus_forward.13} parent=0 // loop_body
    %s13 = ssub.s32 %s8, 1
    %s14 = ssub.s32 %s8, 2
    %s15 = sadd.s32 %s8, 1
    %s17 = sadd.s32 %s16, 1
    %p20 = scmp.eq.s32.totalorder %s8, 1
    %p21 = scmp.ne.s32.totalorder %s16, %s18
    %p22 = scmp.eq.s32.totalorder %s8, 0
    %p23 = por %p21, %p22
    %p24 = scmp.ne.s32.totalorder %s16, %s18
    %p25 = scmp.eq.s32.totalorder %s13, 1
    %p26 = por %p24, %p25
    %p27 = scmp.ne.s32.totalorder %s18, %s19
    %p28 = scmp.eq.s32.totalorder %s13, 0
    %p29 = por %p27, %p28
    %p30 = scmp.ne.s32.totalorder %s18, %s19
    %p31 = scmp.eq.s32.totalorder %s14, 1
    %p32 = por %p30, %p31
    %p34 = scmp.ne.s32.totalorder %s19, %s33
    %p35 = scmp.eq.s32.totalorder %s14, 0
    %p36 = por %p34, %p35
    %s37 = ssub.s32 %s8, %s15
    %p38 = scmp.eq.s32.totalorder %s37, 0
    %s40 = sadd.s32 %s39, 1
    %s41 = scalar_select %p38, %s39, %s40
    %p44 = pneg %p38
    %p45 = scmp.eq.s32.totalorder %s8, 1
    %p46 = por %p44, %p45
    %p47 = scmp.ne.s32.totalorder %s39, %s42
    %p48 = scmp.eq.s32.totalorder %s8, 0
    %p49 = por %p47, %p48
    %p50 = scmp.ne.s32.totalorder %s39, %s42
    %p51 = scmp.eq.s32.totalorder %s13, 1
    %p52 = por %p50, %p51
    %p53 = scmp.ne.s32.totalorder %s42, %s43
    %p54 = scmp.eq.s32.totalorder %s13, 0
    %p55 = por %p53, %p54
    %p56 = scmp.ne.s32.totalorder %s42, %s43
    %p57 = scmp.eq.s32.totalorder %s14, 1
    %p58 = por %p56, %p57
    %p60 = scmp.ne.s32.totalorder %s43, %s59
    %p61 = scmp.eq.s32.totalorder %s14, 0
    %p62 = por %p60, %p61
    %s63 = ssub.s32 %s8, %s15
    %p64 = scmp.eq.s32.totalorder %s63, 0
    %s66 = sadd.s32 %s65, 1
    %s67 = scalar_select %p64, %s65, %s66
    %p70 = pneg %p64
    %p71 = scmp.eq.s32.totalorder %s8, 1
    %p72 = por %p70, %p71
    %p73 = scmp.ne.s32.totalorder %s65, %s68
    %p74 = scmp.eq.s32.totalorder %s8, 0
    %p75 = por %p73, %p74
    %p76 = scmp.ne.s32.totalorder %s65, %s68
    %p77 = scmp.eq.s32.totalorder %s13, 1
    %p78 = por %p76, %p77
    %p79 = scmp.ne.s32.totalorder %s68, %s69
    %p80 = scmp.eq.s32.totalorder %s13, 0
    %p81 = por %p79, %p80
    %p82 = scmp.ne.s32.totalorder %s68, %s69
    %p83 = scmp.eq.s32.totalorder %s14, 1
    %p84 = por %p82, %p83
    %p86 = scmp.ne.s32.totalorder %s69, %s85
    %p87 = scmp.eq.s32.totalorder %s14, 0
    %p88 = por %p86, %p87
    %p89 = scmp.le.s32.totalorder 1, %s8
    %p90 = scmp.lt.s32.totalorder %s8, 3
    %p91 = pnand %p89, %p90
    %p92 = pneg %p91
    // Predicated region
    $region9: #{deeplabv3plus_forward.13} parent=5 // pred_check
      _
    $region10: #{deeplabv3plus_forward.13} parent=5 // pred_check_branch
      %94 = sbr.rel (%p91) target = $region12
    $region11: #{deeplabv3plus_forward.13} parent=5 // pred_region
      %s95 = ssub.s32 %s8, 1
      // Predicated region
      $region13: #{deeplabv3plus_forward.13} parent=11 // pred_check
        %p96 = pneg %p29
      $region14: #{deeplabv3plus_forward.13} parent=11 // pred_check_branch
        %98 = sbr.rel (%p96) target = $region16
      $region15: #{deeplabv3plus_forward.13} parent=11 // pred_region
        _
      $region16: #{deeplabv3plus_forward.13} parent=11 // pred_fallthru
        _
    $region12: #{deeplabv3plus_forward.13} parent=5 // pred_fallthru
      _
    %p99 = scmp.lt.s32.totalorder %s8, 2
    // Predicated region
    $region17: #{deeplabv3plus_forward.13} parent=5 // pred_check
      %p100 = pneg %p99
    $region18: #{deeplabv3plus_forward.13} parent=5 // pred_check_branch
      %102 = sbr.rel (%p100) target = $region20
    $region19: #{deeplabv3plus_forward.13} parent=5 // pred_region
      // Predicated region
      $region21: #{deeplabv3plus_forward.13} parent=19 // pred_check
        %p103 = pneg %p49
      $region22: #{deeplabv3plus_forward.13} parent=19 // pred_check_branch
        %105 = sbr.rel (%p103) target = $region24
      $region23: #{deeplabv3plus_forward.13} parent=19 // pred_region
        %p106 = scmp.lt.s32.totalorder %s8, 1
        %s107 = scalar_select %p106, %s8, 1
        %s108 = smul.addr %s107, 4
        %s109 = smul.addr %s108, 2
        %s110 = scalar_lea.vmem %s1, %s109
      $region24: #{deeplabv3plus_forward.13} parent=19 // pred_fallthru
        _
    $region20: #{deeplabv3plus_forward.13} parent=5 // pred_fallthru
      _
    %p111 = scmp.le.s32.totalorder 1, %s8
    %p112 = scmp.lt.s32.totalorder %s8, 3
    %p113 = pnand %p111, %p112
    %p114 = pneg %p113
    // Predicated region
    $region25: #{deeplabv3plus_forward.13} parent=5 // pred_check
      _
    $region26: #{deeplabv3plus_forward.13} parent=5 // pred_check_branch
      %116 = sbr.rel (%p113) target = $region28
    $region27: #{deeplabv3plus_forward.13} parent=5 // pred_region
      %s117 = ssub.s32 %s8, 1
      %p118 = pneg %p29
      %p119 = pneg %p26
      %p120 = scmp.lt.s32.totalorder %s13, 1
      %s121 = scalar_select %p120, %s13, 1
      %s122 = smul.addr %s121, 4
      %s123 = smul.addr %s122, 2
      %s124 = scalar_lea.vmem %s1, %s123
      %p125 = pneg %p55
      %p126 = pneg %p52
      %p127 = pneg %p81
      %p128 = pneg %p78
      %p129 = scmp.lt.s32.totalorder %s13, 1
      %s130 = scalar_select %p129, %s13, 1
      %s131 = smul.addr %s130, 4
      %s132 = smul.addr %s131, 4
      %s133 = scalar_lea.vmem %s2, %s132
      %p134 = scmp.lt.s32.totalorder %s13, 1
      %s135 = scalar_select %p134, %s13, 1
      %s136 = smul.addr %s135, 4
      %s137 = smul.addr %s136, 2
      %s138 = scalar_lea.vmem %s1, %s137
      %p139 = scmp.lt.s32.totalorder %s13, 1
      %s140 = scalar_select %p139, %s13, 1
      %s141 = smul.addr %s140, 4
      %s142 = smul.addr %s141, 4
      %s143 = scalar_lea.vmem %s2, %s142
      %v145 = vld [vmem:[%s0] sm:$0xf]
      %v146 = vld [vmem:[%s138] sm:$0xff]
      %148 = vst [vmem:[#allocation1] ss:$4 sm:$0xff] %v146
      %v149 = vld.sshfl [vmem:[#allocation1] sm:$0xff pattern:$0x73625140]
      %v150 = vld.sshfl [vmem:[#allocation1 + $0x8] sm:$0xff pattern:$0x73625140]
      %v151 = vld.sshfl [vmem:[#allocation1 + $0x10] sm:$0xff pattern:$0x73625140]
      %v152 = vld.sshfl [vmem:[#allocation1 + $0x18] sm:$0xff pattern:$0x73625140]
      %vm153 = vcmask 31744
      %v155 = vsel %vm153, %v145, 0
      %vm157 = vcmask 1041408
      %v158 = vsel %vm157, %v149, 0
      %v160 = vsel %vm157, %v150, 0
      %v162 = vsel %vm157, %v151, 0
      %v164 = vsel %vm157, %v152, 0
      %166 = vmatpush.bf16.msra.mxu0 0
      %167 = vmatpush.bf16.msra.mxu0 0
      %168 = vmatpush.bf16.msra.mxu0 0
      %169 = vmatpush.bf16.msra.mxu0 0
      %170 = vmatpush.bf16.msra.mxu0 0
      %171 = vmatpush.bf16.msra.mxu0 0
      %172 = vmatpush.bf16.msra.mxu0 0
      %173 = vmatpush.bf16.msra.mxu0 %v158
      %174 = vmatmul.bf16.gmra.mxu0 %v155
      %v175 = vpop.f32.mrf.mxu0
      %v176 = vadd.f32 0.0, %v175
      %v177 = vpop.f32.mrf.mxu0
      %178 = vdwg.mxu0
      %179 = vmatpush.bf16.msra.mxu0 0
      %180 = vmatpush.bf16.msra.mxu0 0
      %181 = vmatpush.bf16.msra.mxu0 0
      %182 = vmatpush.bf16.msra.mxu0 0
      %183 = vmatpush.bf16.msra.mxu0 0
      %184 = vmatpush.bf16.msra.mxu0 0
      %185 = vmatpush.bf16.msra.mxu0 0
      %186 = vmatpush.bf16.msra.mxu0 %v160
      %187 = vmatmul.bf16.gmra.mxu0 %v155
      %v188 = vpop.f32.mrf.mxu0
      %v189 = vadd.f32 0.0, %v188
      %v190 = vpop.f32.mrf.mxu0
      %191 = vdwg.mxu0
      %192 = vmatpush.bf16.msra.mxu0 0
      %193 = vmatpush.bf16.msra.mxu0 0
      %194 = vmatpush.bf16.msra.mxu0 0
      %195 = vmatpush.bf16.msra.mxu0 0
      %196 = vmatpush.bf16.msra.mxu0 0
      %197 = vmatpush.bf16.msra.mxu0 0
      %198 = vmatpush.bf16.msra.mxu0 0
      %199 = vmatpush.bf16.msra.mxu0 %v162
      %200 = vmatmul.bf16.gmra.mxu0 %v155
      %v201 = vpop.f32.mrf.mxu0
      %v202 = vadd.f32 0.0, %v201
      %v203 = vpop.f32.mrf.mxu0
      %204 = vdwg.mxu0
      %205 = vmatpush.bf16.msra.mxu0 0
      %206 = vmatpush.bf16.msra.mxu0 0
      %207 = vmatpush.bf16.msra.mxu0 0
      %208 = vmatpush.bf16.msra.mxu0 0
      %209 = vmatpush.bf16.msra.mxu0 0
      %210 = vmatpush.bf16.msra.mxu0 0
      %211 = vmatpush.bf16.msra.mxu0 0
      %212 = vmatpush.bf16.msra.mxu0 %v164
      %213 = vmatmul.bf16.gmra.mxu0 %v155
      %v214 = vpop.f32.mrf.mxu0
      %v215 = vadd.f32 0.0, %v214
      %v216 = vpop.f32.mrf.mxu0
      %217 = vdwg.mxu0
      %v218 = vpack.c.bf16 %v189, %v176
      %v219 = vpack.c.bf16 %v215, %v202
      %220 = vst [vmem:[%s143] sm:$0xff] %v218
      %221 = vst [vmem:[%s143 + $0x8] sm:$0xff] %v219
      %p222 = scmp.lt.s32.totalorder %s13, 1
      %s223 = scalar_select %p222, %s13, 1
      %s224 = smul.addr %s223, 4
      %s225 = smul.addr %s224, 4
      %s226 = scalar_lea.vmem %s2, %s225
      // Predicated region
      $region29: #{deeplabv3plus_forward.13} parent=27 // pred_check
        %p227 = pneg %p78
      $region30: #{deeplabv3plus_forward.13} parent=27 // pred_check_branch
        %229 = sbr.rel (%p227) target = $region32
      $region31: #{deeplabv3plus_forward.13} parent=27 // pred_region
        _
      $region32: #{deeplabv3plus_forward.13} parent=27 // pred_fallthru
        _
    $region28: #{deeplabv3plus_forward.13} parent=5 // pred_fallthru
      _
    %p230 = scmp.le.s32.totalorder 2, %s8
    // Predicated region
    $region33: #{deeplabv3plus_forward.13} parent=5 // pred_check
      %p231 = pneg %p230
    $region34: #{deeplabv3plus_forward.13} parent=5 // pred_check_branch
      %233 = sbr.rel (%p231) target = $region36
    $region35: #{deeplabv3plus_forward.13} parent=5 // pred_region
      %s234 = ssub.s32 %s8, 2
      // Predicated region
      $region37: #{deeplabv3plus_forward.13} parent=35 // pred_check
        %p235 = pneg %p84
      $region38: #{deeplabv3plus_forward.13} parent=35 // pred_check_branch
        %237 = sbr.rel (%p235) target = $region40
      $region39: #{deeplabv3plus_forward.13} parent=35 // pred_region
        %p238 = scmp.lt.s32.totalorder %s14, 1
        %s239 = scalar_select %p238, %s14, 1
        %s240 = smul.addr %s239, 4
        %s241 = smul.addr %s240, 4
        %s242 = scalar_lea.vmem %s2, %s241
      $region40: #{deeplabv3plus_forward.13} parent=35 // pred_fallthru
        _
    $region36: #{deeplabv3plus_forward.13} parent=5 // pred_fallthru
      _
  $region6: #{deeplabv3plus_forward.13} parent=0 // loop_footer
    %s12 = sadd.s32 1, %s8
  $region7: #{deeplabv3plus_forward.13} parent=0 // loop_footer_branch
    %7 = sbr.rel target = $region3
  $region8: #{deeplabv3plus_forward.13} parent=0 // loop_exit
    _

// kernel: deeplabv3plus_forward.10
$region0: #{deeplabv3plus_forward.10}
  #allocation0 [shape = 'u32[]', space=smem, size = 0x4, offset = 0x4, fixed_abs, tag = 'smem constant byte address 0x4 - core index']
  #allocation1 [shape = 'u32[72,128]{1,0:T(1,128)}', space=vmem, size = 0x9000, scoped, tag = 'internal scratch']
  %s0 = inlined_call_operand.vmem [shape: bf16[2,5,5,128], index: 0, kind: input, shape index: {}]
  %s1 = inlined_call_operand.vmem [shape: bf16[4,128,128], index: 1, kind: input, shape index: {}]
  %s2 = inlined_call_operand.vmem [shape: f32[1,128], index: 2, kind: input, shape index: {}]
  %s3 = inlined_call_operand.vmem [shape: bf16[2,4,4,128], index: 3, kind: output, shape index: {}]
  %s4 = sld [smem:[#allocation0]]
  $region45: #{deeplabv3plus_forward.10} parent=0
    _
  %s6 = ssub.s32 1, %s4
  %s7 = scalar_select 0, %s6, %s4
  loop: start=0, step=1, limit=4
  $region2: #{deeplabv3plus_forward.10} parent=0 // loop_pre_header
    _
  $region3: #{deeplabv3plus_forward.10} parent=0 // loop_header
    %s9 = sphi 0, %s13
    %p10 = scmp.ge.s32.totalorder %s9, 4
    %s16 = sphi 0, %s28
    %s17 = sphi 0, %s24
    %s18 = sphi 0, %s16
    %s19 = sphi 0, %s17
    %s20 = sphi 0, %s18
    %s21 = sphi 0, %s19
    %s31 = sphi 0, %s33
    %s34 = sphi 0, %s31
    %s35 = sphi 0, %s34
    %s51 = sphi 0, %s35
    %s55 = sphi 0, %s55
    %s57 = sphi 0, %s55
    %s58 = sphi 0, %s57
    %s72 = sphi 0, %s58
    %s76 = sphi 0, %s76
    %s78 = sphi 0, %s76
    %s79 = sphi 0, %s78
    %s93 = sphi 0, %s79
    %s101 = sphi 0, %s103
    %s104 = sphi 0, %s101
    %s105 = sphi 0, %s104
    %s121 = sphi 0, %s105
  $region4: #{deeplabv3plus_forward.10} parent=0 // loop_header_branch
    %12 = sbr.rel (%p10) target = $region8
  $region5: #{deeplabv3plus_forward.10} parent=0 // loop_body
    %s14 = ssub.s32 %s9, 1
    %s15 = ssub.s32 %s9, 2
    %s22 = sadd.s32 1, %s17
    %p23 = scmp.ge.s32.totalorder %s22, 1
    %s24 = scalar_select %p23, 0, %s22
    %s25 = sadd.s32 1, %s16
    %s26 = scalar_select %p23, %s25, %s16
    %p27 = scmp.ge.s32.totalorder %s26, 2
    %s28 = scalar_select %p27, 0, %s26
    %s29 = ssub.s32 %s16, %s28
    %p30 = scmp.eq.s32.totalorder %s29, 0
    %s32 = sadd.s32 %s31, 1
    %s33 = scalar_select %p30, %s31, %s32
    %p36 = pneg %p30
    %p37 = scmp.eq.s32.totalorder %s9, 1
    %p38 = por %p36, %p37
    %p39 = scmp.ne.s32.totalorder %s31, %s34
    %p40 = scmp.eq.s32.totalorder %s9, 0
    %p41 = por %p39, %p40
    %p42 = scmp.ne.s32.totalorder %s31, %s34
    %p43 = scmp.eq.s32.totalorder %s14, 1
    %p44 = por %p42, %p43
    %p45 = scmp.ne.s32.totalorder %s34, %s35
    %p46 = scmp.eq.s32.totalorder %s14, 0
    %p47 = por %p45, %p46
    %p48 = scmp.ne.s32.totalorder %s34, %s35
    %p49 = scmp.eq.s32.totalorder %s15, 1
    %p50 = por %p48, %p49
    %p52 = scmp.ne.s32.totalorder %s35, %s51
    %p53 = scmp.eq.s32.totalorder %s15, 0
    %p54 = por %p52, %p53
    %s56 = sadd.s32 %s55, 1
    %p59 = scmp.eq.s32.totalorder %s9, 1
    %p60 = scmp.ne.s32.totalorder %s55, %s57
    %p61 = scmp.eq.s32.totalorder %s9, 0
    %p62 = por %p60, %p61
    %p63 = scmp.ne.s32.totalorder %s55, %s57
    %p64 = scmp.eq.s32.totalorder %s14, 1
    %p65 = por %p63, %p64
    %p66 = scmp.ne.s32.totalorder %s57, %s58
    %p67 = scmp.eq.s32.totalorder %s14, 0
    %p68 = por %p66, %p67
    %p69 = scmp.ne.s32.totalorder %s57, %s58
    %p70 = scmp.eq.s32.totalorder %s15, 1
    %p71 = por %p69, %p70
    %p73 = scmp.ne.s32.totalorder %s58, %s72
    %p74 = scmp.eq.s32.totalorder %s15, 0
    %p75 = por %p73, %p74
    %s77 = sadd.s32 %s76, 1
    %p80 = scmp.eq.s32.totalorder %s9, 1
    %p81 = scmp.ne.s32.totalorder %s76, %s78
    %p82 = scmp.eq.s32.totalorder %s9, 0
    %p83 = por %p81, %p82
    %p84 = scmp.ne.s32.totalorder %s76, %s78
    %p85 = scmp.eq.s32.totalorder %s14, 1
    %p86 = por %p84, %p85
    %p87 = scmp.ne.s32.totalorder %s78, %s79
    %p88 = scmp.eq.s32.totalorder %s14, 0
    %p89 = por %p87, %p88
    %p90 = scmp.ne.s32.totalorder %s78, %s79
    %p91 = scmp.eq.s32.totalorder %s15, 1
    %p92 = por %p90, %p91
    %p94 = scmp.ne.s32.totalorder %s79, %s93
    %p95 = scmp.eq.s32.totalorder %s15, 0
    %p96 = por %p94, %p95
    %s97 = ssub.s32 %s16, %s28
    %s98 = ssub.s32 %s17, %s24
    %s99 = sor.u32 %s97, %s98
    %p100 = scmp.eq.s32.totalorder %s99, 0
    %s102 = sadd.s32 %s101, 1
    %s103 = scalar_select %p100, %s101, %s102
    %p106 = pneg %p100
    %p107 = scmp.eq.s32.totalorder %s9, 1
    %p108 = por %p106, %p107
    %p109 = scmp.ne.s32.totalorder %s101, %s104
    %p110 = scmp.eq.s32.totalorder %s9, 0
    %p111 = por %p109, %p110
    %p112 = scmp.ne.s32.totalorder %s101, %s104
    %p113 = scmp.eq.s32.totalorder %s14, 1
    %p114 = por %p112, %p113
    %p115 = scmp.ne.s32.totalorder %s104, %s105
    %p116 = scmp.eq.s32.totalorder %s14, 0
    %p117 = por %p115, %p116
    %p118 = scmp.ne.s32.totalorder %s104, %s105
    %p119 = scmp.eq.s32.totalorder %s15, 1
    %p120 = por %p118, %p119
    %p122 = scmp.ne.s32.totalorder %s105, %s121
    %p123 = scmp.eq.s32.totalorder %s15, 0
    %p124 = por %p122, %p123
    %p125 = scmp.le.s32.totalorder 1, %s9
    %p126 = scmp.lt.s32.totalorder %s9, 3
    %p127 = pnand %p125, %p126
    %p128 = pneg %p127
    // Predicated region
    $region9: #{deeplabv3plus_forward.10} parent=5 // pred_check
      _
    $region10: #{deeplabv3plus_forward.10} parent=5 // pred_check_branch
      %130 = sbr.rel (%p127) target = $region12
    $region11: #{deeplabv3plus_forward.10} parent=5 // pred_region
      %s131 = ssub.s32 %s9, 1
      // Predicated region
      $region13: #{deeplabv3plus_forward.10} parent=11 // pred_check
        %p132 = pneg %p68
      $region14: #{deeplabv3plus_forward.10} parent=11 // pred_check_branch
        %134 = sbr.rel (%p132) target = $region16
      $region15: #{deeplabv3plus_forward.10} parent=11 // pred_region
        _
      $region16: #{deeplabv3plus_forward.10} parent=11 // pred_fallthru
        _
      // Predicated region
      $region17: #{deeplabv3plus_forward.10} parent=11 // pred_check
        %p135 = pneg %p89
      $region18: #{deeplabv3plus_forward.10} parent=11 // pred_check_branch
        %137 = sbr.rel (%p135) target = $region20
      $region19: #{deeplabv3plus_forward.10} parent=11 // pred_region
        _
      $region20: #{deeplabv3plus_forward.10} parent=11 // pred_fallthru
        _
    $region12: #{deeplabv3plus_forward.10} parent=5 // pred_fallthru
      _
    %p138 = scmp.lt.s32.totalorder %s9, 2
    // Predicated region
    $region21: #{deeplabv3plus_forward.10} parent=5 // pred_check
      %p139 = pneg %p138
    $region22: #{deeplabv3plus_forward.10} parent=5 // pred_check_branch
      %141 = sbr.rel (%p139) target = $region24
    $region23: #{deeplabv3plus_forward.10} parent=5 // pred_region
      // Predicated region
      $region25: #{deeplabv3plus_forward.10} parent=23 // pred_check
        %p142 = pneg %p41
      $region26: #{deeplabv3plus_forward.10} parent=23 // pred_check_branch
        %144 = sbr.rel (%p142) target = $region28
      $region27: #{deeplabv3plus_forward.10} parent=23 // pred_region
        %p145 = scmp.lt.s32.totalorder %s16, 1
        %s146 = scalar_select %p145, %s16, 1
        %s147 = smul.addr %s146, 5
        %s148 = smul.addr %s147, 4
        %s149 = scalar_lea.vmem %s0, %s148
      $region28: #{deeplabv3plus_forward.10} parent=23 // pred_fallthru
        _
    $region24: #{deeplabv3plus_forward.10} parent=5 // pred_fallthru
      _
    %p150 = scmp.le.s32.totalorder 1, %s9
    %p151 = scmp.lt.s32.totalorder %s9, 3
    %p152 = pnand %p150, %p151
    %p153 = pneg %p152
    // Predicated region
    $region29: #{deeplabv3plus_forward.10} parent=5 // pred_check
      _
    $region30: #{deeplabv3plus_forward.10} parent=5 // pred_check_branch
      %155 = sbr.rel (%p152) target = $region32
    $region31: #{deeplabv3plus_forward.10} parent=5 // pred_region
      %s156 = ssub.s32 %s9, 1
      %p157 = scmp.lt.s32.totalorder %s18, 1
      %s158 = scalar_select %p157, %s18, 1
      %s159 = smul.addr %s158, 5
      %s160 = smul.addr %s159, 4
      %s161 = scalar_lea.vmem %s0, %s160
      %p162 = pneg %p47
      %p163 = pneg %p44
      %p164 = pneg %p68
      %p165 = pneg %p65
      %p166 = pneg %p89
      %p167 = pneg %p86
      %p168 = pneg %p117
      %p169 = pneg %p114
      %s170 = smul.u32 4, %s19
      %p171 = scmp.lt.s32.totalorder %s18, 1
      %s172 = scalar_select %p171, %s18, 1
      %p173 = scmp.lt.s32.totalorder %s170, 3
      %s174 = scalar_select %p173, %s170, 3
      %s175 = smul.addr %s172, 4
      %s176 = sadd.s32 %s174, %s175
      %s177 = smul.addr %s176, 2
      %s178 = scalar_lea.vmem %s3, %s177
      %p179 = scmp.lt.s32.totalorder %s18, 1
      %s180 = scalar_select %p179, %s18, 1
      %s181 = smul.addr %s180, 5
      %s182 = smul.addr %s181, 4
      %s183 = scalar_lea.vmem %s0, %s182
      %s184 = smul.u32 4, %s19
      %p185 = scmp.lt.s32.totalorder %s18, 1
      %s186 = scalar_select %p185, %s18, 1
      %p187 = scmp.lt.s32.totalorder %s184, 3
      %s188 = scalar_select %p187, %s184, 3
      %s189 = smul.addr %s186, 4
      %s190 = sadd.s32 %s188, %s189
      %s191 = smul.addr %s190, 2
      %s192 = scalar_lea.vmem %s3, %s191
      %s193 = smul.u32 4, %s19
      %s194 = smul.u32 %s19, 4
      %s195 = smul.addr %s194, 4
      %s196 = scalar_lea.vmem %s183, %s195
      %v197 = vld [vmem:[%s196] sm:$0x3]
      %v198 = vld [vmem:[%s196 + $0x4] sm:$0x3]
      %v199 = vld [vmem:[%s196 + $0x8] sm:$0x3]
      %v200 = vld [vmem:[%s196 + $0xc] sm:$0x3]
      %v201 = vld [vmem:[%s1] sm:$0xf]
      %v202 = vld [vmem:[%s1 + $0x4] sm:$0xf]
      %v203 = vld [vmem:[%s1 + $0x8] sm:$0xf]
      %v204 = vld [vmem:[%s1 + $0xc] sm:$0xf]
      %v205 = vld [vmem:[%s1 + $0x10] sm:$0xf]
      %v206 = vld [vmem:[%s1 + $0x14] sm:$0xf]
      %v207 = vld [vmem:[%s1 + $0x18] sm:$0xf]
      %v208 = vld [vmem:[%s1 + $0x1c] sm:$0xf]
      %v209 = vld [vmem:[%s1 + $0x20] sm:$0xf]
      %v210 = vld [vmem:[%s1 + $0x24] sm:$0xf]
      %v211 = vld [vmem:[%s1 + $0x28] sm:$0xf]
      %v212 = vld [vmem:[%s1 + $0x2c] sm:$0xf]
      %v213 = vld [vmem:[%s1 + $0x30] sm:$0xf]
      %v214 = vld [vmem:[%s1 + $0x34] sm:$0xf]
      %v215 = vld [vmem:[%s1 + $0x38] sm:$0xf]
      %v216 = vld [vmem:[%s1 + $0x3c] sm:$0xf]
      %v217 = vld [vmem:[%s196] sm:$0x7]
      %v218 = vld [vmem:[%s196 + $0x4] sm:$0x7]
      %v219 = vld [vmem:[%s196 + $0x8] sm:$0x7]
      %v220 = vld [vmem:[%s196 + $0xc] sm:$0x7]
      %v225 = vrot.slane %v217, 2
      %v226 = vrot.slane %v218, 2
      %v227 = vrot.slane %v219, 2
      %v228 = vrot.slane %v220, 2
      %vm229 = vcmask 1041408
      %v232 = vsel %vm229, %v217, %v225
      %vm233 = vcmask 1043458
      %v234 = vsel %vm233, %v217, %v225
      %v236 = vrot.slane %v234, 2
      %v239 = vsel %vm229, %v218, %v226
      %v240 = vsel %vm233, %v218, %v226
      %v242 = vrot.slane %v240, 2
      %v245 = vsel %vm229, %v219, %v227
      %v246 = vsel %vm233, %v219, %v227
      %v248 = vrot.slane %v246, 2
      %v251 = vsel %vm229, %v220, %v228
      %v252 = vsel %vm233, %v220, %v228
      %v254 = vrot.slane %v252, 2
      %vm255 = vsmask.f32 1280
      %vm256 = vsmask.f32 3336
      %vm257 = vmor %vm255, %vm256
      %vm258 = vsmask.f32 5392
      %vm259 = vmor %vm257, %vm258
      %vm260 = vsmask.f32 7448
      %vm261 = vmor %vm259, %vm260
      %v262 = vshrl.u32 %v232, 16
      %v264 = vrot.slane %v262, 6
      %v265 = vshll.u32 %v232, 16
      %v267 = vrot.slane %v265, 7
      %v268 = vor.u32 %v264, %v267
      %v269 = vrot.slane %v268, 2
      %v271 = vshll.u32 %v236, 16
      %v273 = vrot.slane %v271, 7
      %v274 = vsel %vm261, %v269, %v273
      %v275 = vshrl.u32 %v239, 16
      %v277 = vrot.slane %v275, 6
      %v278 = vshll.u32 %v239, 16
      %v280 = vrot.slane %v278, 7
      %v281 = vor.u32 %v277, %v280
      %v282 = vrot.slane %v281, 2
      %v284 = vshll.u32 %v242, 16
      %v286 = vrot.slane %v284, 7
      %v287 = vsel %vm261, %v282, %v286
      %v288 = vshrl.u32 %v245, 16
      %v290 = vrot.slane %v288, 6
      %v291 = vshll.u32 %v245, 16
      %v293 = vrot.slane %v291, 7
      %v294 = vor.u32 %v290, %v293
      %v295 = vrot.slane %v294, 2
      %v297 = vshll.u32 %v248, 16
      %v299 = vrot.slane %v297, 7
      %v300 = vsel %vm261, %v295, %v299
      %v301 = vshrl.u32 %v251, 16
      %v303 = vrot.slane %v301, 6
      %v304 = vshll.u32 %v251, 16
      %v306 = vrot.slane %v304, 7
      %v307 = vor.u32 %v303, %v306
      %v308 = vrot.slane %v307, 2
      %v310 = vshll.u32 %v254, 16
      %v312 = vrot.slane %v310, 7
      %v313 = vsel %vm261, %v308, %v312
      %s314 = scalar_lea.vmem %s1, 64
      %v315 = vld [vmem:[%s314] sm:$0xf]
      %v316 = vld [vmem:[%s314 + $0x4] sm:$0xf]
      %v317 = vld [vmem:[%s314 + $0x8] sm:$0xf]
      %v318 = vld [vmem:[%s314 + $0xc] sm:$0xf]
      %v319 = vld [vmem:[%s314 + $0x10] sm:$0xf]
      %v320 = vld [vmem:[%s314 + $0x14] sm:$0xf]
      %v321 = vld [vmem:[%s314 + $0x18] sm:$0xf]
      %v322 = vld [vmem:[%s314 + $0x1c] sm:$0xf]
      %v323 = vld [vmem:[%s314 + $0x20] sm:$0xf]
      %v324 = vld [vmem:[%s314 + $0x24] sm:$0xf]
      %v325 = vld [vmem:[%s314 + $0x28] sm:$0xf]
      %v326 = vld [vmem:[%s314 + $0x2c] sm:$0xf]
      %v327 = vld [vmem:[%s314 + $0x30] sm:$0xf]
      %v328 = vld [vmem:[%s314 + $0x34] sm:$0xf]
      %v329 = vld [vmem:[%s314 + $0x38] sm:$0xf]
      %v330 = vld [vmem:[%s314 + $0x3c] sm:$0xf]
      %332 = vst [vmem:[#allocation1] ss:$4 sm:$0xff] %v274
      %s334 = scalar_lea.vmem [#allocation1], 1
      %335 = vst [vmem:[%s334] ss:$4 sm:$0xff] %v287
      %s337 = scalar_lea.vmem [#allocation1], 2
      %338 = vst [vmem:[%s337] ss:$4 sm:$0xff] %v300
      %s340 = scalar_lea.vmem [#allocation1], 3
      %341 = vst [vmem:[%s340] ss:$4 sm:$0xff] %v313
      %v342 = vld.sshfl [vmem:[#allocation1] sm:$0xff pattern:$0x73625140]
      %v360 = vunpack.c.l.b16 %v315
      %v361 = vunpack.c.l.b16 %v316
      %v362 = vunpack.c.l.b16 %v317
      %v363 = vunpack.c.l.b16 %v318
      %v364 = vunpack.c.l.b16 %v319
      %v365 = vunpack.c.l.b16 %v320
      %v366 = vunpack.c.l.b16 %v321
      %v367 = vunpack.c.l.b16 %v322
      %v368 = vunpack.c.l.b16 %v323
      %v369 = vunpack.c.l.b16 %v324
      %v370 = vunpack.c.l.b16 %v325
      %v371 = vunpack.c.l.b16 %v326
      %v372 = vunpack.c.l.b16 %v327
      %v373 = vunpack.c.l.b16 %v328
      %v374 = vunpack.c.l.b16 %v329
      %v375 = vunpack.c.l.b16 %v330
      %v376 = vpack.c.b16 %v361, %v360
      %v377 = vpack.c.b16 %v363, %v362
      %v378 = vpack.c.b16 %v365, %v364
      %v379 = vpack.c.b16 %v367, %v366
      %v380 = vpack.c.b16 %v369, %v368
      %v381 = vpack.c.b16 %v371, %v370
      %v382 = vpack.c.b16 %v373, %v372
      %v383 = vpack.c.b16 %v375, %v374
      %392 = vmatpush.bf16.msra.mxu0 %v383
      %393 = vmatpush.bf16.msra.mxu0 %v382
      %394 = vmatpush.bf16.msra.mxu0 %v381
      %395 = vmatpush.bf16.msra.mxu0 %v380
      %396 = vmatpush.bf16.msra.mxu0 %v379
      %397 = vmatpush.bf16.msra.mxu0 %v378
      %398 = vmatpush.bf16.msra.mxu0 %v377
      %399 = vmatpush.bf16.msra.mxu0 %v376
      %400 = vmatmul.bf16.gmra.mxu0 %v342
      %v401 = vpop.f32.mrf.mxu0
      %v402 = vadd.f32 0.0, %v401
      %v403 = vpop.f32.mrf.mxu0
      %v404 = vadd.f32 0.0, %v403
      %405 = vdwg.mxu0
      %407 = vst [vmem:[#allocation1] ss:$4 sm:$0xff] %v197
      %s409 = scalar_lea.vmem [#allocation1], 1
      %410 = vst [vmem:[%s409] ss:$4 sm:$0xff] %v198
      %s412 = scalar_lea.vmem [#allocation1], 2
      %413 = vst [vmem:[%s412] ss:$4 sm:$0xff] %v199
      %s415 = scalar_lea.vmem [#allocation1], 3
      %416 = vst [vmem:[%s415] ss:$4 sm:$0xff] %v200
      %v417 = vld.sshfl [vmem:[#allocation1] sm:$0xff pattern:$0x73625140]
      %v435 = vunpack.c.l.b16 %v201
      %v436 = vunpack.c.l.b16 %v202
      %v437 = vunpack.c.l.b16 %v203
      %v438 = vunpack.c.l.b16 %v204
      %v439 = vunpack.c.l.b16 %v205
      %v440 = vunpack.c.l.b16 %v206
      %v441 = vunpack.c.l.b16 %v207
      %v442 = vunpack.c.l.b16 %v208
      %v443 = vunpack.c.l.b16 %v209
      %v444 = vunpack.c.l.b16 %v210
      %v445 = vunpack.c.l.b16 %v211
      %v446 = vunpack.c.l.b16 %v212
      %v447 = vunpack.c.l.b16 %v213
      %v448 = vunpack.c.l.b16 %v214
      %v449 = vunpack.c.l.b16 %v215
      %v450 = vunpack.c.l.b16 %v216
      %v451 = vpack.c.b16 %v436, %v435
      %v452 = vpack.c.b16 %v438, %v437
      %v453 = vpack.c.b16 %v440, %v439
      %v454 = vpack.c.b16 %v442, %v441
      %v455 = vpack.c.b16 %v444, %v443
      %v456 = vpack.c.b16 %v446, %v445
      %v457 = vpack.c.b16 %v448, %v447
      %v458 = vpack.c.b16 %v450, %v449
      %467 = vmatpush.bf16.msra.mxu0 %v458
      %468 = vmatpush.bf16.msra.mxu0 %v457
      %469 = vmatpush.bf16.msra.mxu0 %v456
      %470 = vmatpush.bf16.msra.mxu0 %v455
      %471 = vmatpush.bf16.msra.mxu0 %v454
      %472 = vmatpush.bf16.msra.mxu0 %v453
      %473 = vmatpush.bf16.msra.mxu0 %v452
      %474 = vmatpush.bf16.msra.mxu0 %v451
      %475 = vmatmul.bf16.gmra.mxu0 %v417
      %v476 = vpop.f32.mrf.mxu0
      %v477 = vadd.f32 %v402, %v476
      %v478 = vpop.f32.mrf.mxu0
      %v479 = vadd.f32 %v404, %v478
      %480 = vdwg.mxu0
      %s481 = sadd.s32 %s194, 1
      %s482 = smul.addr %s481, 4
      %s483 = scalar_lea.vmem %s183, %s482
      %v484 = vld [vmem:[%s483] sm:$0x3]
      %v485 = vld [vmem:[%s483 + $0x4] sm:$0x3]
      %v486 = vld [vmem:[%s483 + $0x8] sm:$0x3]
      %v487 = vld [vmem:[%s483 + $0xc] sm:$0x3]
      %s488 = scalar_lea.vmem %s1, 128
      %v489 = vld [vmem:[%s488] sm:$0xf]
      %v490 = vld [vmem:[%s488 + $0x4] sm:$0xf]
      %v491 = vld [vmem:[%s488 + $0x8] sm:$0xf]
      %v492 = vld [vmem:[%s488 + $0xc] sm:$0xf]
      %v493 = vld [vmem:[%s488 + $0x10] sm:$0xf]
      %v494 = vld [vmem:[%s488 + $0x14] sm:$0xf]
      %v495 = vld [vmem:[%s488 + $0x18] sm:$0xf]
      %v496 = vld [vmem:[%s488 + $0x1c] sm:$0xf]
      %v497 = vld [vmem:[%s488 + $0x20] sm:$0xf]
      %v498 = vld [vmem:[%s488 + $0x24] sm:$0xf]
      %v499 = vld [vmem:[%s488 + $0x28] sm:$0xf]
      %v500 = vld [vmem:[%s488 + $0x2c] sm:$0xf]
      %v501 = vld [vmem:[%s488 + $0x30] sm:$0xf]
      %v502 = vld [vmem:[%s488 + $0x34] sm:$0xf]
      %v503 = vld [vmem:[%s488 + $0x38] sm:$0xf]
      %v504 = vld [vmem:[%s488 + $0x3c] sm:$0xf]
      %506 = vst [vmem:[#allocation1] ss:$4 sm:$0xff] %v484
      %s508 = scalar_lea.vmem [#allocation1], 1
      %509 = vst [vmem:[%s508] ss:$4 sm:$0xff] %v485
      %s511 = scalar_lea.vmem [#allocation1], 2
      %512 = vst [vmem:[%s511] ss:$4 sm:$0xff] %v486
      %s514 = scalar_lea.vmem [#allocation1], 3
      %515 = vst [vmem:[%s514] ss:$4 sm:$0xff] %v487
      %v516 = vld.sshfl [vmem:[#allocation1] sm:$0xff pattern:$0x73625140]
      %v534 = vunpack.c.l.b16 %v489
      %v535 = vunpack.c.l.b16 %v490
      %v536 = vunpack.c.l.b16 %v491
      %v537 = vunpack.c.l.b16 %v492
      %v538 = vunpack.c.l.b16 %v493
      %v539 = vunpack.c.l.b16 %v494
      %v540 = vunpack.c.l.b16 %v495
      %v541 = vunpack.c.l.b16 %v496
      %v542 = vunpack.c.l.b16 %v497
      %v543 = vunpack.c.l.b16 %v498
      %v544 = vunpack.c.l.b16 %v499
      %v545 = vunpack.c.l.b16 %v500
      %v546 = vunpack.c.l.b16 %v501
      %v547 = vunpack.c.l.b16 %v502
      %v548 = vunpack.c.l.b16 %v503
      %v549 = vunpack.c.l.b16 %v504
      %v550 = vpack.c.b16 %v535, %v534
      %v551 = vpack.c.b16 %v537, %v536
      %v552 = vpack.c.b16 %v539, %v538
      %v553 = vpack.c.b16 %v541, %v540
      %v554 = vpack.c.b16 %v543, %v542
      %v555 = vpack.c.b16 %v545, %v544
      %v556 = vpack.c.b16 %v547, %v546
      %v557 = vpack.c.b16 %v549, %v548
      %566 = vmatpush.bf16.msra.mxu0 %v557
      %567 = vmatpush.bf16.msra.mxu0 %v556
      %568 = vmatpush.bf16.msra.mxu0 %v555
      %569 = vmatpush.bf16.msra.mxu0 %v554
      %570 = vmatpush.bf16.msra.mxu0 %v553
      %571 = vmatpush.bf16.msra.mxu0 %v552
      %572 = vmatpush.bf16.msra.mxu0 %v551
      %573 = vmatpush.bf16.msra.mxu0 %v550
      %574 = vmatmul.bf16.gmra.mxu0 %v516
      %v575 = vpop.f32.mrf.mxu0
      %v576 = vadd.f32 0.0, %v575
      %v577 = vpop.f32.mrf.mxu0
      %v578 = vadd.f32 0.0, %v577
      %579 = vdwg.mxu0
      %v580 = vadd.f32 %v477, %v576
      %v581 = vadd.f32 %v479, %v578
      %v582 = vld [vmem:[%s483] sm:$0x7]
      %v583 = vld [vmem:[%s483 + $0x4] sm:$0x7]
      %v584 = vld [vmem:[%s483 + $0x8] sm:$0x7]
      %v585 = vld [vmem:[%s483 + $0xc] sm:$0x7]
      %v590 = vrot.slane %v582, 2
      %v591 = vrot.slane %v583, 2
      %v592 = vrot.slane %v584, 2
      %v593 = vrot.slane %v585, 2
      %v596 = vsel %vm229, %v582, %v590
      %v597 = vsel %vm233, %v582, %v590
      %v599 = vrot.slane %v597, 2
      %v602 = vsel %vm229, %v583, %v591
      %v603 = vsel %vm233, %v583, %v591
      %v605 = vrot.slane %v603, 2
      %v608 = vsel %vm229, %v584, %v592
      %v609 = vsel %vm233, %v584, %v592
      %v611 = vrot.slane %v609, 2
      %v614 = vsel %vm229, %v585, %v593
      %v615 = vsel %vm233, %v585, %v593
      %v617 = vrot.slane %v615, 2
      %v618 = vshrl.u32 %v596, 16
      %v620 = vrot.slane %v618, 6
      %v621 = vshll.u32 %v596, 16
      %v623 = vrot.slane %v621, 7
      %v624 = vor.u32 %v620, %v623
      %v625 = vrot.slane %v624, 2
      %v627 = vshll.u32 %v599, 16
      %v629 = vrot.slane %v627, 7
      %v630 = vsel %vm261, %v625, %v629
      %v631 = vshrl.u32 %v602, 16
      %v633 = vrot.slane %v631, 6
      %v634 = vshll.u32 %v602, 16
      %v636 = vrot.slane %v634, 7
      %v637 = vor.u32 %v633, %v636
      %v638 = vrot.slane %v637, 2
      %v640 = vshll.u32 %v605, 16
      %v642 = vrot.slane %v640, 7
      %v643 = vsel %vm261, %v638, %v642
      %v644 = vshrl.u32 %v608, 16
      %v646 = vrot.slane %v644, 6
      %v647 = vshll.u32 %v608, 16
      %v649 = vrot.slane %v647, 7
      %v650 = vor.u32 %v646, %v649
      %v651 = vrot.slane %v650, 2
      %v653 = vshll.u32 %v611, 16
      %v655 = vrot.slane %v653, 7
      %v656 = vsel %vm261, %v651, %v655
      %v657 = vshrl.u32 %v614, 16
      %v659 = vrot.slane %v657, 6
      %v660 = vshll.u32 %v614, 16
      %v662 = vrot.slane %v660, 7
      %v663 = vor.u32 %v659, %v662
      %v664 = vrot.slane %v663, 2
      %v666 = vshll.u32 %v617, 16
      %v668 = vrot.slane %v666, 7
      %v669 = vsel %vm261, %v664, %v668
      %s670 = scalar_lea.vmem %s1, 192
      %v671 = vld [vmem:[%s670] sm:$0xf]
      %v672 = vld [vmem:[%s670 + $0x4] sm:$0xf]
      %v673 = vld [vmem:[%s670 + $0x8] sm:$0xf]
      %v674 = vld [vmem:[%s670 + $0xc] sm:$0xf]
      %v675 = vld [vmem:[%s670 + $0x10] sm:$0xf]
      %v676 = vld [vmem:[%s670 + $0x14] sm:$0xf]
      %v677 = vld [vmem:[%s670 + $0x18] sm:$0xf]
      %v678 = vld [vmem:[%s670 + $0x1c] sm:$0xf]
      %v679 = vld [vmem:[%s670 + $0x20] sm:$0xf]
      %v680 = vld [vmem:[%s670 + $0x24] sm:$0xf]
      %v681 = vld [vmem:[%s670 + $0x28] sm:$0xf]
      %v682 = vld [vmem:[%s670 + $0x2c] sm:$0xf]
      %v683 = vld [vmem:[%s670 + $0x30] sm:$0xf]
      %v684 = vld [vmem:[%s670 + $0x34] sm:$0xf]
      %v685 = vld [vmem:[%s670 + $0x38] sm:$0xf]
      %v686 = vld [vmem:[%s670 + $0x3c] sm:$0xf]
      %688 = vst [vmem:[#allocation1] ss:$4 sm:$0xff] %v630
      %s690 = scalar_lea.vmem [#allocation1], 1
      %691 = vst [vmem:[%s690] ss:$4 sm:$0xff] %v643
      %s693 = scalar_lea.vmem [#allocation1], 2
      %694 = vst [vmem:[%s693] ss:$4 sm:$0xff] %v656
      %s696 = scalar_lea.vmem [#allocation1], 3
      %697 = vst [vmem:[%s696] ss:$4 sm:$0xff] %v669
      %v698 = vld.sshfl [vmem:[#allocation1] sm:$0xff pattern:$0x73625140]
      %v716 = vunpack.c.l.b16 %v671
      %v717 = vunpack.c.l.b16 %v672
      %v718 = vunpack.c.l.b16 %v673
      %v719 = vunpack.c.l.b16 %v674
      %v720 = vunpack.c.l.b16 %v675
      %v721 = vunpack.c.l.b16 %v676
      %v722 = vunpack.c.l.b16 %v677
      %v723 = vunpack.c.l.b16 %v678
      %v724 = vunpack.c.l.b16 %v679
      %v725 = vunpack.c.l.b16 %v680
      %v726 = vunpack.c.l.b16 %v681
      %v727 = vunpack.c.l.b16 %v682
      %v728 = vunpack.c.l.b16 %v683
      %v729 = vunpack.c.l.b16 %v684
      %v730 = vunpack.c.l.b16 %v685
      %v731 = vunpack.c.l.b16 %v686
      %v732 = vpack.c.b16 %v717, %v716
      %v733 = vpack.c.b16 %v719, %v718
      %v734 = vpack.c.b16 %v721, %v720
      %v735 = vpack.c.b16 %v723, %v722
      %v736 = vpack.c.b16 %v725, %v724
      %v737 = vpack.c.b16 %v727, %v726
      %v738 = vpack.c.b16 %v729, %v728
      %v739 = vpack.c.b16 %v731, %v730
      %748 = vmatpush.bf16.msra.mxu0 %v739
      %749 = vmatpush.bf16.msra.mxu0 %v738
      %750 = vmatpush.bf16.msra.mxu0 %v737
      %751 = vmatpush.bf16.msra.mxu0 %v736
      %752 = vmatpush.bf16.msra.mxu0 %v735
      %753 = vmatpush.bf16.msra.mxu0 %v734
      %754 = vmatpush.bf16.msra.mxu0 %v733
      %755 = vmatpush.bf16.msra.mxu0 %v732
      %756 = vmatmul.bf16.gmra.mxu0 %v698
      %v757 = vpop.f32.mrf.mxu0
      %v758 = vadd.f32 0.0, %v757
      %v759 = vpop.f32.mrf.mxu0
      %v760 = vadd.f32 0.0, %v759
      %761 = vdwg.mxu0
      %v762 = vadd.f32 %v580, %v758
      %v763 = vadd.f32 %v581, %v760
      %v764 = vld [vmem:[%s2] sm:$0x1]
      %v766 = vperm.slane %v764, 0
      %v768 = vadd.f32 %v762, %v766
      %v769 = vadd.f32 %v763, %v766
      %v770 = vmax.f32 %v768, 0.0
      %v771 = vmax.f32 %v769, 0.0
      %v774 = vrot.slane %v770, 4
      %v775 = vrot.slane %v771, 4
      %v778 = vpack.c.bf16 %v770, %v770
      %v779 = vpack.c.bf16 %v774, %v774
      %v780 = vpack.c.bf16 %v771, %v771
      %v781 = vpack.c.bf16 %v775, %v775
      %782 = vst [vmem:[%s192] sm:$0x3] %v778
      %783 = vst [vmem:[%s192 + $0x2] sm:$0x3] %v779
      %784 = vst [vmem:[%s192 + $0x4] sm:$0x3] %v780
      %785 = vst [vmem:[%s192 + $0x6] sm:$0x3] %v781
      %s786 = smul.u32 4, %s19
      %p787 = scmp.lt.s32.totalorder %s18, 1
      %s788 = scalar_select %p787, %s18, 1
      %p789 = scmp.lt.s32.totalorder %s786, 3
      %s790 = scalar_select %p789, %s786, 3
      %s791 = smul.addr %s788, 4
      %s792 = sadd.s32 %s790, %s791
      %s793 = smul.addr %s792, 2
      %s794 = scalar_lea.vmem %s3, %s793
      // Predicated region
      $region33: #{deeplabv3plus_forward.10} parent=31 // pred_check
        %p795 = pneg %p114
      $region34: #{deeplabv3plus_forward.10} parent=31 // pred_check_branch
        %797 = sbr.rel (%p795) target = $region36
      $region35: #{deeplabv3plus_forward.10} parent=31 // pred_region
        %s798 = smul.u32 4, %s19
      $region36: #{deeplabv3plus_forward.10} parent=31 // pred_fallthru
        _
    $region32: #{deeplabv3plus_forward.10} parent=5 // pred_fallthru
      _
    %p799 = scmp.le.s32.totalorder 2, %s9
    // Predicated region
    $region37: #{deeplabv3plus_forward.10} parent=5 // pred_check
      %p800 = pneg %p799
    $region38: #{deeplabv3plus_forward.10} parent=5 // pred_check_branch
      %802 = sbr.rel (%p800) target = $region40
    $region39: #{deeplabv3plus_forward.10} parent=5 // pred_region
      %s803 = ssub.s32 %s9, 2
      // Predicated region
      $region41: #{deeplabv3plus_forward.10} parent=39 // pred_check
        %p804 = pneg %p120
      $region42: #{deeplabv3plus_forward.10} parent=39 // pred_check_branch
        %806 = sbr.rel (%p804) target = $region44
      $region43: #{deeplabv3plus_forward.10} parent=39 // pred_region
        %s807 = smul.u32 4, %s21
        %p808 = scmp.lt.s32.totalorder %s20, 1
        %s809 = scalar_select %p808, %s20, 1
        %p810 = scmp.lt.s32.totalorder %s807, 3
        %s811 = scalar_select %p810, %s807, 3
        %s812 = smul.addr %s809, 4
        %s813 = sadd.s32 %s811, %s812
        %s814 = smul.addr %s813, 2
        %s815 = scalar_lea.vmem %s3, %s814
      $region44: #{deeplabv3plus_forward.10} parent=39 // pred_fallthru
        _
    $region40: #{deeplabv3plus_forward.10} parent=5 // pred_fallthru
      _
  $region6: #{deeplabv3plus_forward.10} parent=0 // loop_footer
    %s13 = sadd.s32 1, %s9
  $region7: #{deeplabv3plus_forward.10} parent=0 // loop_footer_branch
    %8 = sbr.rel target = $region3
  $region8: #{deeplabv3plus_forward.10} parent=0 // loop_exit
    _

// kernel: deeplabv3plus_forward.11
$region0: #{deeplabv3plus_forward.11}
  #allocation0 [shape = 'u32[]', space=smem, size = 0x4, offset = 0x4, fixed_abs, tag = 'smem constant byte address 0x4 - core index']
  #allocation1 [shape = 'u32[72,128]{1,0:T(1,128)}', space=vmem, size = 0x9000, scoped, tag = 'internal scratch']
  %s0 = inlined_call_operand.vmem [shape: bf16[2,4,4,128], index: 0, kind: input, shape index: {}]
  %s1 = inlined_call_operand.vmem [shape: bf16[1,128,128], index: 1, kind: input, shape index: {}]
  %s2 = inlined_call_operand.vmem [shape: f32[1,128], index: 2, kind: input, shape index: {}]
  %s3 = inlined_call_operand.vmem [shape: bf16[2,4,4,128], index: 3, kind: output, shape index: {}]
  %s4 = sld [smem:[#allocation0]]
  $region45: #{deeplabv3plus_forward.11} parent=0
    _
  %s6 = ssub.s32 1, %s4
  %s7 = scalar_select 0, %s6, %s4
  loop: start=0, step=1, limit=4
  $region2: #{deeplabv3plus_forward.11} parent=0 // loop_pre_header
    _
  $region3: #{deeplabv3plus_forward.11} parent=0 // loop_header
    %s9 = sphi 0, %s13
    %p10 = scmp.ge.s32.totalorder %s9, 4
    %s16 = sphi 0, %s28
    %s17 = sphi 0, %s24
    %s18 = sphi 0, %s16
    %s19 = sphi 0, %s17
    %s20 = sphi 0, %s18
    %s21 = sphi 0, %s19
    %s31 = sphi 0, %s33
    %s34 = sphi 0, %s31
    %s35 = sphi 0, %s34
    %s51 = sphi 0, %s35
    %s55 = sphi 0, %s55
    %s57 = sphi 0, %s55
    %s58 = sphi 0, %s57
    %s72 = sphi 0, %s58
    %s76 = sphi 0, %s76
    %s78 = sphi 0, %s76
    %s79 = sphi 0, %s78
    %s93 = sphi 0, %s79
    %s101 = sphi 0, %s103
    %s104 = sphi 0, %s101
    %s105 = sphi 0, %s104
    %s121 = sphi 0, %s105
  $region4: #{deeplabv3plus_forward.11} parent=0 // loop_header_branch
    %12 = sbr.rel (%p10) target = $region8
  $region5: #{deeplabv3plus_forward.11} parent=0 // loop_body
    %s14 = ssub.s32 %s9, 1
    %s15 = ssub.s32 %s9, 2
    %s22 = sadd.s32 1, %s17
    %p23 = scmp.ge.s32.totalorder %s22, 1
    %s24 = scalar_select %p23, 0, %s22
    %s25 = sadd.s32 1, %s16
    %s26 = scalar_select %p23, %s25, %s16
    %p27 = scmp.ge.s32.totalorder %s26, 2
    %s28 = scalar_select %p27, 0, %s26
    %s29 = ssub.s32 %s16, %s28
    %p30 = scmp.eq.s32.totalorder %s29, 0
    %s32 = sadd.s32 %s31, 1
    %s33 = scalar_select %p30, %s31, %s32
    %p36 = pneg %p30
    %p37 = scmp.eq.s32.totalorder %s9, 1
    %p38 = por %p36, %p37
    %p39 = scmp.ne.s32.totalorder %s31, %s34
    %p40 = scmp.eq.s32.totalorder %s9, 0
    %p41 = por %p39, %p40
    %p42 = scmp.ne.s32.totalorder %s31, %s34
    %p43 = scmp.eq.s32.totalorder %s14, 1
    %p44 = por %p42, %p43
    %p45 = scmp.ne.s32.totalorder %s34, %s35
    %p46 = scmp.eq.s32.totalorder %s14, 0
    %p47 = por %p45, %p46
    %p48 = scmp.ne.s32.totalorder %s34, %s35
    %p49 = scmp.eq.s32.totalorder %s15, 1
    %p50 = por %p48, %p49
    %p52 = scmp.ne.s32.totalorder %s35, %s51
    %p53 = scmp.eq.s32.totalorder %s15, 0
    %p54 = por %p52, %p53
    %s56 = sadd.s32 %s55, 1
    %p59 = scmp.eq.s32.totalorder %s9, 1
    %p60 = scmp.ne.s32.totalorder %s55, %s57
    %p61 = scmp.eq.s32.totalorder %s9, 0
    %p62 = por %p60, %p61
    %p63 = scmp.ne.s32.totalorder %s55, %s57
    %p64 = scmp.eq.s32.totalorder %s14, 1
    %p65 = por %p63, %p64
    %p66 = scmp.ne.s32.totalorder %s57, %s58
    %p67 = scmp.eq.s32.totalorder %s14, 0
    %p68 = por %p66, %p67
    %p69 = scmp.ne.s32.totalorder %s57, %s58
    %p70 = scmp.eq.s32.totalorder %s15, 1
    %p71 = por %p69, %p70
    %p73 = scmp.ne.s32.totalorder %s58, %s72
    %p74 = scmp.eq.s32.totalorder %s15, 0
    %p75 = por %p73, %p74
    %s77 = sadd.s32 %s76, 1
    %p80 = scmp.eq.s32.totalorder %s9, 1
    %p81 = scmp.ne.s32.totalorder %s76, %s78
    %p82 = scmp.eq.s32.totalorder %s9, 0
    %p83 = por %p81, %p82
    %p84 = scmp.ne.s32.totalorder %s76, %s78
    %p85 = scmp.eq.s32.totalorder %s14, 1
    %p86 = por %p84, %p85
    %p87 = scmp.ne.s32.totalorder %s78, %s79
    %p88 = scmp.eq.s32.totalorder %s14, 0
    %p89 = por %p87, %p88
    %p90 = scmp.ne.s32.totalorder %s78, %s79
    %p91 = scmp.eq.s32.totalorder %s15, 1
    %p92 = por %p90, %p91
    %p94 = scmp.ne.s32.totalorder %s79, %s93
    %p95 = scmp.eq.s32.totalorder %s15, 0
    %p96 = por %p94, %p95
    %s97 = ssub.s32 %s16, %s28
    %s98 = ssub.s32 %s17, %s24
    %s99 = sor.u32 %s97, %s98
    %p100 = scmp.eq.s32.totalorder %s99, 0
    %s102 = sadd.s32 %s101, 1
    %s103 = scalar_select %p100, %s101, %s102
    %p106 = pneg %p100
    %p107 = scmp.eq.s32.totalorder %s9, 1
    %p108 = por %p106, %p107
    %p109 = scmp.ne.s32.totalorder %s101, %s104
    %p110 = scmp.eq.s32.totalorder %s9, 0
    %p111 = por %p109, %p110
    %p112 = scmp.ne.s32.totalorder %s101, %s104
    %p113 = scmp.eq.s32.totalorder %s14, 1
    %p114 = por %p112, %p113
    %p115 = scmp.ne.s32.totalorder %s104, %s105
    %p116 = scmp.eq.s32.totalorder %s14, 0
    %p117 = por %p115, %p116
    %p118 = scmp.ne.s32.totalorder %s104, %s105
    %p119 = scmp.eq.s32.totalorder %s15, 1
    %p120 = por %p118, %p119
    %p122 = scmp.ne.s32.totalorder %s105, %s121
    %p123 = scmp.eq.s32.totalorder %s15, 0
    %p124 = por %p122, %p123
    %p125 = scmp.le.s32.totalorder 1, %s9
    %p126 = scmp.lt.s32.totalorder %s9, 3
    %p127 = pnand %p125, %p126
    %p128 = pneg %p127
    // Predicated region
    $region9: #{deeplabv3plus_forward.11} parent=5 // pred_check
      _
    $region10: #{deeplabv3plus_forward.11} parent=5 // pred_check_branch
      %130 = sbr.rel (%p127) target = $region12
    $region11: #{deeplabv3plus_forward.11} parent=5 // pred_region
      %s131 = ssub.s32 %s9, 1
      // Predicated region
      $region13: #{deeplabv3plus_forward.11} parent=11 // pred_check
        %p132 = pneg %p68
      $region14: #{deeplabv3plus_forward.11} parent=11 // pred_check_branch
        %134 = sbr.rel (%p132) target = $region16
      $region15: #{deeplabv3plus_forward.11} parent=11 // pred_region
        _
      $region16: #{deeplabv3plus_forward.11} parent=11 // pred_fallthru
        _
      // Predicated region
      $region17: #{deeplabv3plus_forward.11} parent=11 // pred_check
        %p135 = pneg %p89
      $region18: #{deeplabv3plus_forward.11} parent=11 // pred_check_branch
        %137 = sbr.rel (%p135) target = $region20
      $region19: #{deeplabv3plus_forward.11} parent=11 // pred_region
        _
      $region20: #{deeplabv3plus_forward.11} parent=11 // pred_fallthru
        _
    $region12: #{deeplabv3plus_forward.11} parent=5 // pred_fallthru
      _
    %p138 = scmp.lt.s32.totalorder %s9, 2
    // Predicated region
    $region21: #{deeplabv3plus_forward.11} parent=5 // pred_check
      %p139 = pneg %p138
    $region22: #{deeplabv3plus_forward.11} parent=5 // pred_check_branch
      %141 = sbr.rel (%p139) target = $region24
    $region23: #{deeplabv3plus_forward.11} parent=5 // pred_region
      // Predicated region
      $region25: #{deeplabv3plus_forward.11} parent=23 // pred_check
        %p142 = pneg %p41
      $region26: #{deeplabv3plus_forward.11} parent=23 // pred_check_branch
        %144 = sbr.rel (%p142) target = $region28
      $region27: #{deeplabv3plus_forward.11} parent=23 // pred_region
        %p145 = scmp.lt.s32.totalorder %s16, 1
        %s146 = scalar_select %p145, %s16, 1
        %s147 = smul.addr %s146, 4
        %s148 = smul.addr %s147, 2
        %s149 = scalar_lea.vmem %s0, %s148
      $region28: #{deeplabv3plus_forward.11} parent=23 // pred_fallthru
        _
    $region24: #{deeplabv3plus_forward.11} parent=5 // pred_fallthru
      _
    %p150 = scmp.le.s32.totalorder 1, %s9
    %p151 = scmp.lt.s32.totalorder %s9, 3
    %p152 = pnand %p150, %p151
    %p153 = pneg %p152
    // Predicated region
    $region29: #{deeplabv3plus_forward.11} parent=5 // pred_check
      _
    $region30: #{deeplabv3plus_forward.11} parent=5 // pred_check_branch
      %155 = sbr.rel (%p152) target = $region32
    $region31: #{deeplabv3plus_forward.11} parent=5 // pred_region
      %s156 = ssub.s32 %s9, 1
      %p157 = scmp.lt.s32.totalorder %s18, 1
      %s158 = scalar_select %p157, %s18, 1
      %s159 = smul.addr %s158, 4
      %s160 = smul.addr %s159, 2
      %s161 = scalar_lea.vmem %s0, %s160
      %p162 = pneg %p47
      %p163 = pneg %p44
      %p164 = pneg %p68
      %p165 = pneg %p65
      %p166 = pneg %p89
      %p167 = pneg %p86
      %p168 = pneg %p117
      %p169 = pneg %p114
      %s170 = smul.u32 4, %s19
      %p171 = scmp.lt.s32.totalorder %s18, 1
      %s172 = scalar_select %p171, %s18, 1
      %p173 = scmp.lt.s32.totalorder %s170, 3
      %s174 = scalar_select %p173, %s170, 3
      %s175 = smul.addr %s172, 4
      %s176 = sadd.s32 %s174, %s175
      %s177 = smul.addr %s176, 2
      %s178 = scalar_lea.vmem %s3, %s177
      %p179 = scmp.lt.s32.totalorder %s18, 1
      %s180 = scalar_select %p179, %s18, 1
      %s181 = smul.addr %s180, 4
      %s182 = smul.addr %s181, 2
      %s183 = scalar_lea.vmem %s0, %s182
      %s184 = smul.u32 4, %s19
      %p185 = scmp.lt.s32.totalorder %s18, 1
      %s186 = scalar_select %p185, %s18, 1
      %p187 = scmp.lt.s32.totalorder %s184, 3
      %s188 = scalar_select %p187, %s184, 3
      %s189 = smul.addr %s186, 4
      %s190 = sadd.s32 %s188, %s189
      %s191 = smul.addr %s190, 2
      %s192 = scalar_lea.vmem %s3, %s191
      %s193 = smul.u32 4, %s19
      %s194 = smul.u32 %s19, 4
      %s195 = smul.addr %s194, 2
      %s196 = scalar_lea.vmem %s183, %s195
      %v197 = vld [vmem:[%s196] sm:$0x3]
      %v198 = vld [vmem:[%s196 + $0x2] sm:$0x3]
      %v199 = vld [vmem:[%s196 + $0x4] sm:$0x3]
      %v200 = vld [vmem:[%s196 + $0x6] sm:$0x3]
      %v201 = vld [vmem:[%s1] sm:$0xf]
      %v202 = vld [vmem:[%s1 + $0x4] sm:$0xf]
      %v203 = vld [vmem:[%s1 + $0x8] sm:$0xf]
      %v204 = vld [vmem:[%s1 + $0xc] sm:$0xf]
      %v205 = vld [vmem:[%s1 + $0x10] sm:$0xf]
      %v206 = vld [vmem:[%s1 + $0x14] sm:$0xf]
      %v207 = vld [vmem:[%s1 + $0x18] sm:$0xf]
      %v208 = vld [vmem:[%s1 + $0x1c] sm:$0xf]
      %v209 = vld [vmem:[%s1 + $0x20] sm:$0xf]
      %v210 = vld [vmem:[%s1 + $0x24] sm:$0xf]
      %v211 = vld [vmem:[%s1 + $0x28] sm:$0xf]
      %v212 = vld [vmem:[%s1 + $0x2c] sm:$0xf]
      %v213 = vld [vmem:[%s1 + $0x30] sm:$0xf]
      %v214 = vld [vmem:[%s1 + $0x34] sm:$0xf]
      %v215 = vld [vmem:[%s1 + $0x38] sm:$0xf]
      %v216 = vld [vmem:[%s1 + $0x3c] sm:$0xf]
      %v217 = vld [vmem:[%s2] sm:$0x1]
      %v219 = vperm.slane %v217, 0
      %222 = vst [vmem:[#allocation1] ss:$4 sm:$0xff] %v197
      %s224 = scalar_lea.vmem [#allocation1], 1
      %225 = vst [vmem:[%s224] ss:$4 sm:$0xff] %v198
      %s227 = scalar_lea.vmem [#allocation1], 2
      %228 = vst [vmem:[%s227] ss:$4 sm:$0xff] %v199
      %s230 = scalar_lea.vmem [#allocation1], 3
      %231 = vst [vmem:[%s230] ss:$4 sm:$0xff] %v200
      %v232 = vld.sshfl [vmem:[#allocation1] sm:$0xff pattern:$0x73625140]
      %v250 = vunpack.c.l.b16 %v201
      %v251 = vunpack.c.l.b16 %v202
      %v252 = vunpack.c.l.b16 %v203
      %v253 = vunpack.c.l.b16 %v204
      %v254 = vunpack.c.l.b16 %v205
      %v255 = vunpack.c.l.b16 %v206
      %v256 = vunpack.c.l.b16 %v207
      %v257 = vunpack.c.l.b16 %v208
      %v258 = vunpack.c.l.b16 %v209
      %v259 = vunpack.c.l.b16 %v210
      %v260 = vunpack.c.l.b16 %v211
      %v261 = vunpack.c.l.b16 %v212
      %v262 = vunpack.c.l.b16 %v213
      %v263 = vunpack.c.l.b16 %v214
      %v264 = vunpack.c.l.b16 %v215
      %v265 = vunpack.c.l.b16 %v216
      %v266 = vpack.c.b16 %v251, %v250
      %v267 = vpack.c.b16 %v253, %v252
      %v268 = vpack.c.b16 %v255, %v254
      %v269 = vpack.c.b16 %v257, %v256
      %v270 = vpack.c.b16 %v259, %v258
      %v271 = vpack.c.b16 %v261, %v260
      %v272 = vpack.c.b16 %v263, %v262
      %v273 = vpack.c.b16 %v265, %v264
      %282 = vmatpush.bf16.msra.mxu0 %v273
      %283 = vmatpush.bf16.msra.mxu0 %v272
      %284 = vmatpush.bf16.msra.mxu0 %v271
      %285 = vmatpush.bf16.msra.mxu0 %v270
      %286 = vmatpush.bf16.msra.mxu0 %v269
      %287 = vmatpush.bf16.msra.mxu0 %v268
      %288 = vmatpush.bf16.msra.mxu0 %v267
      %289 = vmatpush.bf16.msra.mxu0 %v266
      %290 = vmatmul.bf16.gmra.mxu0 %v232
      %v291 = vpop.f32.mrf.mxu0
      %v292 = vadd.f32 %v219, %v291
      %v293 = vpop.f32.mrf.mxu0
      %v294 = vadd.f32 %v219, %v293
      %295 = vdwg.mxu0
      %v296 = vmax.f32 %v292, 0.0
      %v297 = vmax.f32 %v294, 0.0
      %v300 = vrot.slane %v296, 4
      %v301 = vrot.slane %v297, 4
      %v304 = vpack.c.bf16 %v296, %v296
      %v305 = vpack.c.bf16 %v300, %v300
      %v306 = vpack.c.bf16 %v297, %v297
      %v307 = vpack.c.bf16 %v301, %v301
      %308 = vst [vmem:[%s192] sm:$0x3] %v304
      %309 = vst [vmem:[%s192 + $0x2] sm:$0x3] %v305
      %310 = vst [vmem:[%s192 + $0x4] sm:$0x3] %v306
      %311 = vst [vmem:[%s192 + $0x6] sm:$0x3] %v307
      %s312 = smul.u32 4, %s19
      %p313 = scmp.lt.s32.totalorder %s18, 1
      %s314 = scalar_select %p313, %s18, 1
      %p315 = scmp.lt.s32.totalorder %s312, 3
      %s316 = scalar_select %p315, %s312, 3
      %s317 = smul.addr %s314, 4
      %s318 = sadd.s32 %s316, %s317
      %s319 = smul.addr %s318, 2
      %s320 = scalar_lea.vmem %s3, %s319
      // Predicated region
      $region33: #{deeplabv3plus_forward.11} parent=31 // pred_check
        %p321 = pneg %p114
      $region34: #{deeplabv3plus_forward.11} parent=31 // pred_check_branch
        %323 = sbr.rel (%p321) target = $region36
      $region35: #{deeplabv3plus_forward.11} parent=31 // pred_region
        %s324 = smul.u32 4, %s19
      $region36: #{deeplabv3plus_forward.11} parent=31 // pred_fallthru
        _
    $region32: #{deeplabv3plus_forward.11} parent=5 // pred_fallthru
      _
    %p325 = scmp.le.s32.totalorder 2, %s9
    // Predicated region
    $region37: #{deeplabv3plus_forward.11} parent=5 // pred_check
      %p326 = pneg %p325
    $region38: #{deeplabv3plus_forward.11} parent=5 // pred_check_branch
      %328 = sbr.rel (%p326) target = $region40
    $region39: #{deeplabv3plus_forward.11} parent=5 // pred_region
      %s329 = ssub.s32 %s9, 2
      // Predicated region
      $region41: #{deeplabv3plus_forward.11} parent=39 // pred_check
        %p330 = pneg %p120
      $region42: #{deeplabv3plus_forward.11} parent=39 // pred_check_branch
        %332 = sbr.rel (%p330) target = $region44
      $region43: #{deeplabv3plus_forward.11} parent=39 // pred_region
        %s333 = smul.u32 4, %s21
        %p334 = scmp.lt.s32.totalorder %s20, 1
        %s335 = scalar_select %p334, %s20, 1
        %p336 = scmp.lt.s32.totalorder %s333, 3
        %s337 = scalar_select %p336, %s333, 3
        %s338 = smul.addr %s335, 4
        %s339 = sadd.s32 %s337, %s338
        %s340 = smul.addr %s339, 2
        %s341 = scalar_lea.vmem %s3, %s340
      $region44: #{deeplabv3plus_forward.11} parent=39 // pred_fallthru
        _
    $region40: #{deeplabv3plus_forward.11} parent=5 // pred_fallthru
      _
  $region6: #{deeplabv3plus_forward.11} parent=0 // loop_footer
    %s13 = sadd.s32 1, %s9
  $region7: #{deeplabv3plus_forward.11} parent=0 // loop_footer_branch
    %8 = sbr.rel target = $region3
  $region8: #{deeplabv3plus_forward.11} parent=0 // loop_exit
    _

// kernel: deeplabv3plus_forward.14
$region0: #{deeplabv3plus_forward.14}
  #allocation0 [shape = 'u32[]', space=smem, size = 0x4, offset = 0x4, fixed_abs, tag = 'smem constant byte address 0x4 - core index']
  #allocation1 [shape = 'u32[72,128]{1,0:T(1,128)}', space=vmem, size = 0x9000, scoped, tag = 'internal scratch']
  %s0 = inlined_call_operand.vmem [shape: bf16[8,4], index: 0, kind: input, shape index: {}]
  %s1 = inlined_call_operand.vmem [shape: bf16[2,8,4,128], index: 1, kind: input, shape index: {}]
  %s2 = inlined_call_operand.vmem [shape: bf16[2,8,8,128], index: 2, kind: input, shape index: {}]
  %s3 = inlined_call_operand.vmem [shape: bf16[2,8,8,128], index: 3, kind: output, shape index: {}]
  %s4 = sld [smem:[#allocation0]]
  $region45: #{deeplabv3plus_forward.14} parent=0
    _
  %s6 = ssub.s32 1, %s4
  %s7 = scalar_select 0, %s6, %s4
  loop: start=0, step=1, limit=4
  $region2: #{deeplabv3plus_forward.14} parent=0 // loop_pre_header
    _
  $region3: #{deeplabv3plus_forward.14} parent=0 // loop_header
    %s9 = sphi 0, %s13
    %p10 = scmp.ge.s32.totalorder %s9, 4
    %s17 = sphi 0, %s17
    %s19 = sphi 0, %s17
    %s20 = sphi 0, %s19
    %s34 = sphi 0, %s20
    %s40 = sphi 0, %s42
    %s43 = sphi 0, %s40
    %s44 = sphi 0, %s43
    %s60 = sphi 0, %s44
    %s66 = sphi 0, %s68
    %s69 = sphi 0, %s66
    %s70 = sphi 0, %s69
    %s86 = sphi 0, %s70
    %s92 = sphi 0, %s94
    %s95 = sphi 0, %s92
    %s96 = sphi 0, %s95
    %s112 = sphi 0, %s96
  $region4: #{deeplabv3plus_forward.14} parent=0 // loop_header_branch
    %12 = sbr.rel (%p10) target = $region8
  $region5: #{deeplabv3plus_forward.14} parent=0 // loop_body
    %s14 = ssub.s32 %s9, 1
    %s15 = ssub.s32 %s9, 2
    %s16 = sadd.s32 %s9, 1
    %s18 = sadd.s32 %s17, 1
    %p21 = scmp.eq.s32.totalorder %s9, 1
    %p22 = scmp.ne.s32.totalorder %s17, %s19
    %p23 = scmp.eq.s32.totalorder %s9, 0
    %p24 = por %p22, %p23
    %p25 = scmp.ne.s32.totalorder %s17, %s19
    %p26 = scmp.eq.s32.totalorder %s14, 1
    %p27 = por %p25, %p26
    %p28 = scmp.ne.s32.totalorder %s19, %s20
    %p29 = scmp.eq.s32.totalorder %s14, 0
    %p30 = por %p28, %p29
    %p31 = scmp.ne.s32.totalorder %s19, %s20
    %p32 = scmp.eq.s32.totalorder %s15, 1
    %p33 = por %p31, %p32
    %p35 = scmp.ne.s32.totalorder %s20, %s34
    %p36 = scmp.eq.s32.totalorder %s15, 0
    %p37 = por %p35, %p36
    %s38 = ssub.s32 %s9, %s16
    %p39 = scmp.eq.s32.totalorder %s38, 0
    %s41 = sadd.s32 %s40, 1
    %s42 = scalar_select %p39, %s40, %s41
    %p45 = pneg %p39
    %p46 = scmp.eq.s32.totalorder %s9, 1
    %p47 = por %p45, %p46
    %p48 = scmp.ne.s32.totalorder %s40, %s43
    %p49 = scmp.eq.s32.totalorder %s9, 0
    %p50 = por %p48, %p49
    %p51 = scmp.ne.s32.totalorder %s40, %s43
    %p52 = scmp.eq.s32.totalorder %s14, 1
    %p53 = por %p51, %p52
    %p54 = scmp.ne.s32.totalorder %s43, %s44
    %p55 = scmp.eq.s32.totalorder %s14, 0
    %p56 = por %p54, %p55
    %p57 = scmp.ne.s32.totalorder %s43, %s44
    %p58 = scmp.eq.s32.totalorder %s15, 1
    %p59 = por %p57, %p58
    %p61 = scmp.ne.s32.totalorder %s44, %s60
    %p62 = scmp.eq.s32.totalorder %s15, 0
    %p63 = por %p61, %p62
    %s64 = ssub.s32 %s9, %s16
    %p65 = scmp.eq.s32.totalorder %s64, 0
    %s67 = sadd.s32 %s66, 1
    %s68 = scalar_select %p65, %s66, %s67
    %p71 = pneg %p65
    %p72 = scmp.eq.s32.totalorder %s9, 1
    %p73 = por %p71, %p72
    %p74 = scmp.ne.s32.totalorder %s66, %s69
    %p75 = scmp.eq.s32.totalorder %s9, 0
    %p76 = por %p74, %p75
    %p77 = scmp.ne.s32.totalorder %s66, %s69
    %p78 = scmp.eq.s32.totalorder %s14, 1
    %p79 = por %p77, %p78
    %p80 = scmp.ne.s32.totalorder %s69, %s70
    %p81 = scmp.eq.s32.totalorder %s14, 0
    %p82 = por %p80, %p81
    %p83 = scmp.ne.s32.totalorder %s69, %s70
    %p84 = scmp.eq.s32.totalorder %s15, 1
    %p85 = por %p83, %p84
    %p87 = scmp.ne.s32.totalorder %s70, %s86
    %p88 = scmp.eq.s32.totalorder %s15, 0
    %p89 = por %p87, %p88
    %s90 = ssub.s32 %s9, %s16
    %p91 = scmp.eq.s32.totalorder %s90, 0
    %s93 = sadd.s32 %s92, 1
    %s94 = scalar_select %p91, %s92, %s93
    %p97 = pneg %p91
    %p98 = scmp.eq.s32.totalorder %s9, 1
    %p99 = por %p97, %p98
    %p100 = scmp.ne.s32.totalorder %s92, %s95
    %p101 = scmp.eq.s32.totalorder %s9, 0
    %p102 = por %p100, %p101
    %p103 = scmp.ne.s32.totalorder %s92, %s95
    %p104 = scmp.eq.s32.totalorder %s14, 1
    %p105 = por %p103, %p104
    %p106 = scmp.ne.s32.totalorder %s95, %s96
    %p107 = scmp.eq.s32.totalorder %s14, 0
    %p108 = por %p106, %p107
    %p109 = scmp.ne.s32.totalorder %s95, %s96
    %p110 = scmp.eq.s32.totalorder %s15, 1
    %p111 = por %p109, %p110
    %p113 = scmp.ne.s32.totalorder %s96, %s112
    %p114 = scmp.eq.s32.totalorder %s15, 0
    %p115 = por %p113, %p114
    %p116 = scmp.le.s32.totalorder 1, %s9
    %p117 = scmp.lt.s32.totalorder %s9, 3
    %p118 = pnand %p116, %p117
    %p119 = pneg %p118
    // Predicated region
    $region9: #{deeplabv3plus_forward.14} parent=5 // pred_check
      _
    $region10: #{deeplabv3plus_forward.14} parent=5 // pred_check_branch
      %121 = sbr.rel (%p118) target = $region12
    $region11: #{deeplabv3plus_forward.14} parent=5 // pred_region
      %s122 = ssub.s32 %s9, 1
      // Predicated region
      $region13: #{deeplabv3plus_forward.14} parent=11 // pred_check
        %p123 = pneg %p30
      $region14: #{deeplabv3plus_forward.14} parent=11 // pred_check_branch
        %125 = sbr.rel (%p123) target = $region16
      $region15: #{deeplabv3plus_forward.14} parent=11 // pred_region
        _
      $region16: #{deeplabv3plus_forward.14} parent=11 // pred_fallthru
        _
    $region12: #{deeplabv3plus_forward.14} parent=5 // pred_fallthru
      _
    %p126 = scmp.lt.s32.totalorder %s9, 2
    // Predicated region
    $region17: #{deeplabv3plus_forward.14} parent=5 // pred_check
      %p127 = pneg %p126
    $region18: #{deeplabv3plus_forward.14} parent=5 // pred_check_branch
      %129 = sbr.rel (%p127) target = $region20
    $region19: #{deeplabv3plus_forward.14} parent=5 // pred_region
      // Predicated region
      $region21: #{deeplabv3plus_forward.14} parent=19 // pred_check
        %p130 = pneg %p50
      $region22: #{deeplabv3plus_forward.14} parent=19 // pred_check_branch
        %132 = sbr.rel (%p130) target = $region24
      $region23: #{deeplabv3plus_forward.14} parent=19 // pred_region
        %p133 = scmp.lt.s32.totalorder %s9, 1
        %s134 = scalar_select %p133, %s9, 1
        %s135 = smul.addr %s134, 8
        %s136 = smul.addr %s135, 2
        %s137 = scalar_lea.vmem %s1, %s136
      $region24: #{deeplabv3plus_forward.14} parent=19 // pred_fallthru
        _
      // Predicated region
      $region25: #{deeplabv3plus_forward.14} parent=19 // pred_check
        %p138 = pneg %p76
      $region26: #{deeplabv3plus_forward.14} parent=19 // pred_check_branch
        %140 = sbr.rel (%p138) target = $region28
      $region27: #{deeplabv3plus_forward.14} parent=19 // pred_region
        %p141 = scmp.lt.s32.totalorder %s9, 1
        %s142 = scalar_select %p141, %s9, 1
        %s143 = smul.addr %s142, 8
        %s144 = smul.addr %s143, 4
        %s145 = scalar_lea.vmem %s2, %s144
      $region28: #{deeplabv3plus_forward.14} parent=19 // pred_fallthru
        _
    $region20: #{deeplabv3plus_forward.14} parent=5 // pred_fallthru
      _
    %p146 = scmp.le.s32.totalorder 1, %s9
    %p147 = scmp.lt.s32.totalorder %s9, 3
    %p148 = pnand %p146, %p147
    %p149 = pneg %p148
    // Predicated region
    $region29: #{deeplabv3plus_forward.14} parent=5 // pred_check
      _
    $region30: #{deeplabv3plus_forward.14} parent=5 // pred_check_branch
      %151 = sbr.rel (%p148) target = $region32
    $region31: #{deeplabv3plus_forward.14} parent=5 // pred_region
      %s152 = ssub.s32 %s9, 1
      %p153 = pneg %p30
      %p154 = pneg %p27
      %p155 = scmp.lt.s32.totalorder %s14, 1
      %s156 = scalar_select %p155, %s14, 1
      %s157 = smul.addr %s156, 8
      %s158 = smul.addr %s157, 2
      %s159 = scalar_lea.vmem %s1, %s158
      %p160 = pneg %p56
      %p161 = pneg %p53
      %p162 = scmp.lt.s32.totalorder %s14, 1
      %s163 = scalar_select %p162, %s14, 1
      %s164 = smul.addr %s163, 8
      %s165 = smul.addr %s164, 4
      %s166 = scalar_lea.vmem %s2, %s165
      %p167 = pneg %p82
      %p168 = pneg %p79
      %p169 = pneg %p108
      %p170 = pneg %p105
      %p171 = scmp.lt.s32.totalorder %s14, 1
      %s172 = scalar_select %p171, %s14, 1
      %s173 = smul.addr %s172, 8
      %s174 = smul.addr %s173, 4
      %s175 = scalar_lea.vmem %s3, %s174
      %p176 = scmp.lt.s32.totalorder %s14, 1
      %s177 = scalar_select %p176, %s14, 1
      %s178 = smul.addr %s177, 8
      %s179 = smul.addr %s178, 2
      %s180 = scalar_lea.vmem %s1, %s179
      %p181 = scmp.lt.s32.totalorder %s14, 1
      %s182 = scalar_select %p181, %s14, 1
      %s183 = smul.addr %s182, 8
      %s184 = smul.addr %s183, 4
      %s185 = scalar_lea.vmem %s2, %s184
      %p186 = scmp.lt.s32.totalorder %s14, 1
      %s187 = scalar_select %p186, %s14, 1
      %s188 = smul.addr %s187, 8
      %s189 = smul.addr %s188, 4
      %s190 = scalar_lea.vmem %s3, %s189
      %v192 = vld [vmem:[%s0] sm:$0xf]
      %v193 = vld [vmem:[%s180] sm:$0x3]
      %v194 = vld [vmem:[%s185] sm:$0xf]
      %v195 = vunpack.c.l.bf16 %v194
      %vm196 = vcmask 31744
      %v198 = vsel %vm196, %v192, 0
      %vm200 = vcmask 1041408
      %v202 = vsel %vm200, %v193, 0
      %204 = vmatpush.bf16.msra.mxu0 0
      %205 = vmatpush.bf16.msra.mxu0 0
      %206 = vmatpush.bf16.msra.mxu0 0
      %207 = vmatpush.bf16.msra.mxu0 0
      %208 = vmatpush.bf16.msra.mxu0 0
      %209 = vmatpush.bf16.msra.mxu0 0
      %210 = vmatpush.bf16.msra.mxu0 0
      %211 = vmatpush.bf16.msra.mxu0 %v202
      %212 = vmatmul.bf16.gmra.mxu0 %v198
      %v213 = vpop.f32.mrf.mxu0
      %v214 = vadd.f32 %v195, %v213
      %v215 = vpop.f32.mrf.mxu0
      %216 = vdwg.mxu0
      %v217 = vpack.c.bf16 %v214, %v214
      %218 = vst [vmem:[%s190] sm:$0xf] %v217
      %s219 = scalar_lea.vmem %s180, 2
      %v220 = vld [vmem:[%s219] sm:$0x3]
      %s221 = scalar_lea.vmem %s185, 4
      %v222 = vld [vmem:[%s221] sm:$0xf]
      %v223 = vunpack.c.l.bf16 %v222
      %v225 = vsel %vm200, %v220, 0
      %227 = vmatpush.bf16.msra.mxu0 0
      %228 = vmatpush.bf16.msra.mxu0 0
      %229 = vmatpush.bf16.msra.mxu0 0
      %230 = vmatpush.bf16.msra.mxu0 0
      %231 = vmatpush.bf16.msra.mxu0 0
      %232 = vmatpush.bf16.msra.mxu0 0
      %233 = vmatpush.bf16.msra.mxu0 0
      %234 = vmatpush.bf16.msra.mxu0 %v225
      %235 = vmatmul.bf16.gmra.mxu0 %v198
      %v236 = vpop.f32.mrf.mxu0
      %v237 = vadd.f32 %v223, %v236
      %v238 = vpop.f32.mrf.mxu0
      %239 = vdwg.mxu0
      %v240 = vpack.c.bf16 %v237, %v237
      %s241 = scalar_lea.vmem %s190, 4
      %242 = vst [vmem:[%s241] sm:$0xf] %v240
      %s243 = scalar_lea.vmem %s180, 4
      %v244 = vld [vmem:[%s243] sm:$0x3]
      %s245 = scalar_lea.vmem %s185, 8
      %v246 = vld [vmem:[%s245] sm:$0xf]
      %v247 = vunpack.c.l.bf16 %v246
      %v249 = vsel %vm200, %v244, 0
      %251 = vmatpush.bf16.msra.mxu0 0
      %252 = vmatpush.bf16.msra.mxu0 0
      %253 = vmatpush.bf16.msra.mxu0 0
      %254 = vmatpush.bf16.msra.mxu0 0
      %255 = vmatpush.bf16.msra.mxu0 0
      %256 = vmatpush.bf16.msra.mxu0 0
      %257 = vmatpush.bf16.msra.mxu0 0
      %258 = vmatpush.bf16.msra.mxu0 %v249
      %259 = vmatmul.bf16.gmra.mxu0 %v198
      %v260 = vpop.f32.mrf.mxu0
      %v261 = vadd.f32 %v247, %v260
      %v262 = vpop.f32.mrf.mxu0
      %263 = vdwg.mxu0
      %v264 = vpack.c.bf16 %v261, %v261
      %s265 = scalar_lea.vmem %s190, 8
      %266 = vst [vmem:[%s265] sm:$0xf] %v264
      %s267 = scalar_lea.vmem %s180, 6
      %v268 = vld [vmem:[%s267] sm:$0x3]
      %s269 = scalar_lea.vmem %s185, 12
      %v270 = vld [vmem:[%s269] sm:$0xf]
      %v271 = vunpack.c.l.bf16 %v270
      %v273 = vsel %vm200, %v268, 0
      %275 = vmatpush.bf16.msra.mxu0 0
      %276 = vmatpush.bf16.msra.mxu0 0
      %277 = vmatpush.bf16.msra.mxu0 0
      %278 = vmatpush.bf16.msra.mxu0 0
      %279 = vmatpush.bf16.msra.mxu0 0
      %280 = vmatpush.bf16.msra.mxu0 0
      %281 = vmatpush.bf16.msra.mxu0 0
      %282 = vmatpush.bf16.msra.mxu0 %v273
      %283 = vmatmul.bf16.gmra.mxu0 %v198
      %v284 = vpop.f32.mrf.mxu0
      %v285 = vadd.f32 %v271, %v284
      %v286 = vpop.f32.mrf.mxu0
      %287 = vdwg.mxu0
      %v288 = vpack.c.bf16 %v285, %v285
      %s289 = scalar_lea.vmem %s190, 12
      %290 = vst [vmem:[%s289] sm:$0xf] %v288
      %s291 = scalar_lea.vmem %s180, 8
      %v292 = vld [vmem:[%s291] sm:$0x3]
      %s293 = scalar_lea.vmem %s185, 16
      %v294 = vld [vmem:[%s293] sm:$0xf]
      %v295 = vunpack.c.l.bf16 %v294
      %v297 = vsel %vm200, %v292, 0
      %299 = vmatpush.bf16.msra.mxu0 0
      %300 = vmatpush.bf16.msra.mxu0 0
      %301 = vmatpush.bf16.msra.mxu0 0
      %302 = vmatpush.bf16.msra.mxu0 0
      %303 = vmatpush.bf16.msra.mxu0 0
      %304 = vmatpush.bf16.msra.mxu0 0
      %305 = vmatpush.bf16.msra.mxu0 0
      %306 = vmatpush.bf16.msra.mxu0 %v297
      %307 = vmatmul.bf16.gmra.mxu0 %v198
      %v308 = vpop.f32.mrf.mxu0
      %v309 = vadd.f32 %v295, %v308
      %v310 = vpop.f32.mrf.mxu0
      %311 = vdwg.mxu0
      %v312 = vpack.c.bf16 %v309, %v309
      %s313 = scalar_lea.vmem %s190, 16
      %314 = vst [vmem:[%s313] sm:$0xf] %v312
      %s315 = scalar_lea.vmem %s180, 10
      %v316 = vld [vmem:[%s315] sm:$0x3]
      %s317 = scalar_lea.vmem %s185, 20
      %v318 = vld [vmem:[%s317] sm:$0xf]
      %v319 = vunpack.c.l.bf16 %v318
      %v321 = vsel %vm200, %v316, 0
      %323 = vmatpush.bf16.msra.mxu0 0
      %324 = vmatpush.bf16.msra.mxu0 0
      %325 = vmatpush.bf16.msra.mxu0 0
      %326 = vmatpush.bf16.msra.mxu0 0
      %327 = vmatpush.bf16.msra.mxu0 0
      %328 = vmatpush.bf16.msra.mxu0 0
      %329 = vmatpush.bf16.msra.mxu0 0
      %330 = vmatpush.bf16.msra.mxu0 %v321
      %331 = vmatmul.bf16.gmra.mxu0 %v198
      %v332 = vpop.f32.mrf.mxu0
      %v333 = vadd.f32 %v319, %v332
      %v334 = vpop.f32.mrf.mxu0
      %335 = vdwg.mxu0
      %v336 = vpack.c.bf16 %v333, %v333
      %s337 = scalar_lea.vmem %s190, 20
      %338 = vst [vmem:[%s337] sm:$0xf] %v336
      %s339 = scalar_lea.vmem %s180, 12
      %v340 = vld [vmem:[%s339] sm:$0x3]
      %s341 = scalar_lea.vmem %s185, 24
      %v342 = vld [vmem:[%s341] sm:$0xf]
      %v343 = vunpack.c.l.bf16 %v342
      %v345 = vsel %vm200, %v340, 0
      %347 = vmatpush.bf16.msra.mxu0 0
      %348 = vmatpush.bf16.msra.mxu0 0
      %349 = vmatpush.bf16.msra.mxu0 0
      %350 = vmatpush.bf16.msra.mxu0 0
      %351 = vmatpush.bf16.msra.mxu0 0
      %352 = vmatpush.bf16.msra.mxu0 0
      %353 = vmatpush.bf16.msra.mxu0 0
      %354 = vmatpush.bf16.msra.mxu0 %v345
      %355 = vmatmul.bf16.gmra.mxu0 %v198
      %v356 = vpop.f32.mrf.mxu0
      %v357 = vadd.f32 %v343, %v356
      %v358 = vpop.f32.mrf.mxu0
      %359 = vdwg.mxu0
      %v360 = vpack.c.bf16 %v357, %v357
      %s361 = scalar_lea.vmem %s190, 24
      %362 = vst [vmem:[%s361] sm:$0xf] %v360
      %s363 = scalar_lea.vmem %s180, 14
      %v364 = vld [vmem:[%s363] sm:$0x3]
      %s365 = scalar_lea.vmem %s185, 28
      %v366 = vld [vmem:[%s365] sm:$0xf]
      %v367 = vunpack.c.l.bf16 %v366
      %v369 = vsel %vm200, %v364, 0
      %371 = vmatpush.bf16.msra.mxu0 0
      %372 = vmatpush.bf16.msra.mxu0 0
      %373 = vmatpush.bf16.msra.mxu0 0
      %374 = vmatpush.bf16.msra.mxu0 0
      %375 = vmatpush.bf16.msra.mxu0 0
      %376 = vmatpush.bf16.msra.mxu0 0
      %377 = vmatpush.bf16.msra.mxu0 0
      %378 = vmatpush.bf16.msra.mxu0 %v369
      %379 = vmatmul.bf16.gmra.mxu0 %v198
      %v380 = vpop.f32.mrf.mxu0
      %v381 = vadd.f32 %v367, %v380
      %v382 = vpop.f32.mrf.mxu0
      %383 = vdwg.mxu0
      %v384 = vpack.c.bf16 %v381, %v381
      %s385 = scalar_lea.vmem %s190, 28
      %386 = vst [vmem:[%s385] sm:$0xf] %v384
      %p387 = scmp.lt.s32.totalorder %s14, 1
      %s388 = scalar_select %p387, %s14, 1
      %s389 = smul.addr %s388, 8
      %s390 = smul.addr %s389, 4
      %s391 = scalar_lea.vmem %s3, %s390
      // Predicated region
      $region33: #{deeplabv3plus_forward.14} parent=31 // pred_check
        %p392 = pneg %p105
      $region34: #{deeplabv3plus_forward.14} parent=31 // pred_check_branch
        %394 = sbr.rel (%p392) target = $region36
      $region35: #{deeplabv3plus_forward.14} parent=31 // pred_region
        _
      $region36: #{deeplabv3plus_forward.14} parent=31 // pred_fallthru
        _
    $region32: #{deeplabv3plus_forward.14} parent=5 // pred_fallthru
      _
    %p395 = scmp.le.s32.totalorder 2, %s9
    // Predicated region
    $region37: #{deeplabv3plus_forward.14} parent=5 // pred_check
      %p396 = pneg %p395
    $region38: #{deeplabv3plus_forward.14} parent=5 // pred_check_branch
      %398 = sbr.rel (%p396) target = $region40
    $region39: #{deeplabv3plus_forward.14} parent=5 // pred_region
      %s399 = ssub.s32 %s9, 2
      // Predicated region
      $region41: #{deeplabv3plus_forward.14} parent=39 // pred_check
        %p400 = pneg %p111
      $region42: #{deeplabv3plus_forward.14} parent=39 // pred_check_branch
        %402 = sbr.rel (%p400) target = $region44
      $region43: #{deeplabv3plus_forward.14} parent=39 // pred_region
        %p403 = scmp.lt.s32.totalorder %s15, 1
        %s404 = scalar_select %p403, %s15, 1
        %s405 = smul.addr %s404, 8
        %s406 = smul.addr %s405, 4
        %s407 = scalar_lea.vmem %s3, %s406
      $region44: #{deeplabv3plus_forward.14} parent=39 // pred_fallthru
        _
    $region40: #{deeplabv3plus_forward.14} parent=5 // pred_fallthru
      _
  $region6: #{deeplabv3plus_forward.14} parent=0 // loop_footer
    %s13 = sadd.s32 1, %s9
  $region7: #{deeplabv3plus_forward.14} parent=0 // loop_footer_branch
    %8 = sbr.rel target = $region3
  $region8: #{deeplabv3plus_forward.14} parent=0 // loop_exit
    _

// kernel: deeplabv3plus_forward.16
$region0: #{deeplabv3plus_forward.16}
  #allocation0 [shape = 'u32[]', space=smem, size = 0x4, offset = 0x4, fixed_abs, tag = 'smem constant byte address 0x4 - core index']
  #allocation1 [shape = 'u32[72,128]{1,0:T(1,128)}', space=vmem, size = 0x9000, scoped, tag = 'internal scratch']
  %s0 = inlined_call_operand.vmem [shape: bf16[16,8], index: 0, kind: input, shape index: {}]
  %s1 = inlined_call_operand.vmem [shape: bf16[2,8,1024], index: 1, kind: input, shape index: {}]
  %s2 = inlined_call_operand.vmem [shape: bf16[2,16,1024], index: 2, kind: output, shape index: {}]
  %s3 = sld [smem:[#allocation0]]
  $region41: #{deeplabv3plus_forward.16} parent=0
    _
  %s5 = ssub.s32 1, %s3
  %s6 = scalar_select 0, %s5, %s3
  loop: start=0, step=1, limit=4
  $region2: #{deeplabv3plus_forward.16} parent=0 // loop_pre_header
    _
  $region3: #{deeplabv3plus_forward.16} parent=0 // loop_header
    %s8 = sphi 0, %s12
    %p9 = scmp.ge.s32.totalorder %s8, 4
    %s16 = sphi 0, %s16
    %s18 = sphi 0, %s16
    %s19 = sphi 0, %s18
    %s33 = sphi 0, %s19
    %s39 = sphi 0, %s41
    %s42 = sphi 0, %s39
    %s43 = sphi 0, %s42
    %s59 = sphi 0, %s43
    %s65 = sphi 0, %s67
    %s68 = sphi 0, %s65
    %s69 = sphi 0, %s68
    %s85 = sphi 0, %s69
  $region4: #{deeplabv3plus_forward.16} parent=0 // loop_header_branch
    %11 = sbr.rel (%p9) target = $region8
  $region5: #{deeplabv3plus_forward.16} parent=0 // loop_body
    %s13 = ssub.s32 %s8, 1
    %s14 = ssub.s32 %s8, 2
    %s15 = sadd.s32 %s8, 1
    %s17 = sadd.s32 %s16, 1
    %p20 = scmp.eq.s32.totalorder %s8, 1
    %p21 = scmp.ne.s32.totalorder %s16, %s18
    %p22 = scmp.eq.s32.totalorder %s8, 0
    %p23 = por %p21, %p22
    %p24 = scmp.ne.s32.totalorder %s16, %s18
    %p25 = scmp.eq.s32.totalorder %s13, 1
    %p26 = por %p24, %p25
    %p27 = scmp.ne.s32.totalorder %s18, %s19
    %p28 = scmp.eq.s32.totalorder %s13, 0
    %p29 = por %p27, %p28
    %p30 = scmp.ne.s32.totalorder %s18, %s19
    %p31 = scmp.eq.s32.totalorder %s14, 1
    %p32 = por %p30, %p31
    %p34 = scmp.ne.s32.totalorder %s19, %s33
    %p35 = scmp.eq.s32.totalorder %s14, 0
    %p36 = por %p34, %p35
    %s37 = ssub.s32 %s8, %s15
    %p38 = scmp.eq.s32.totalorder %s37, 0
    %s40 = sadd.s32 %s39, 1
    %s41 = scalar_select %p38, %s39, %s40
    %p44 = pneg %p38
    %p45 = scmp.eq.s32.totalorder %s8, 1
    %p46 = por %p44, %p45
    %p47 = scmp.ne.s32.totalorder %s39, %s42
    %p48 = scmp.eq.s32.totalorder %s8, 0
    %p49 = por %p47, %p48
    %p50 = scmp.ne.s32.totalorder %s39, %s42
    %p51 = scmp.eq.s32.totalorder %s13, 1
    %p52 = por %p50, %p51
    %p53 = scmp.ne.s32.totalorder %s42, %s43
    %p54 = scmp.eq.s32.totalorder %s13, 0
    %p55 = por %p53, %p54
    %p56 = scmp.ne.s32.totalorder %s42, %s43
    %p57 = scmp.eq.s32.totalorder %s14, 1
    %p58 = por %p56, %p57
    %p60 = scmp.ne.s32.totalorder %s43, %s59
    %p61 = scmp.eq.s32.totalorder %s14, 0
    %p62 = por %p60, %p61
    %s63 = ssub.s32 %s8, %s15
    %p64 = scmp.eq.s32.totalorder %s63, 0
    %s66 = sadd.s32 %s65, 1
    %s67 = scalar_select %p64, %s65, %s66
    %p70 = pneg %p64
    %p71 = scmp.eq.s32.totalorder %s8, 1
    %p72 = por %p70, %p71
    %p73 = scmp.ne.s32.totalorder %s65, %s68
    %p74 = scmp.eq.s32.totalorder %s8, 0
    %p75 = por %p73, %p74
    %p76 = scmp.ne.s32.totalorder %s65, %s68
    %p77 = scmp.eq.s32.totalorder %s13, 1
    %p78 = por %p76, %p77
    %p79 = scmp.ne.s32.totalorder %s68, %s69
    %p80 = scmp.eq.s32.totalorder %s13, 0
    %p81 = por %p79, %p80
    %p82 = scmp.ne.s32.totalorder %s68, %s69
    %p83 = scmp.eq.s32.totalorder %s14, 1
    %p84 = por %p82, %p83
    %p86 = scmp.ne.s32.totalorder %s69, %s85
    %p87 = scmp.eq.s32.totalorder %s14, 0
    %p88 = por %p86, %p87
    %p89 = scmp.le.s32.totalorder 1, %s8
    %p90 = scmp.lt.s32.totalorder %s8, 3
    %p91 = pnand %p89, %p90
    %p92 = pneg %p91
    // Predicated region
    $region9: #{deeplabv3plus_forward.16} parent=5 // pred_check
      _
    $region10: #{deeplabv3plus_forward.16} parent=5 // pred_check_branch
      %94 = sbr.rel (%p91) target = $region12
    $region11: #{deeplabv3plus_forward.16} parent=5 // pred_region
      %s95 = ssub.s32 %s8, 1
      // Predicated region
      $region13: #{deeplabv3plus_forward.16} parent=11 // pred_check
        %p96 = pneg %p29
      $region14: #{deeplabv3plus_forward.16} parent=11 // pred_check_branch
        %98 = sbr.rel (%p96) target = $region16
      $region15: #{deeplabv3plus_forward.16} parent=11 // pred_region
        _
      $region16: #{deeplabv3plus_forward.16} parent=11 // pred_fallthru
        _
    $region12: #{deeplabv3plus_forward.16} parent=5 // pred_fallthru
      _
    %p99 = scmp.lt.s32.totalorder %s8, 2
    // Predicated region
    $region17: #{deeplabv3plus_forward.16} parent=5 // pred_check
      %p100 = pneg %p99
    $region18: #{deeplabv3plus_forward.16} parent=5 // pred_check_branch
      %102 = sbr.rel (%p100) target = $region20
    $region19: #{deeplabv3plus_forward.16} parent=5 // pred_region
      // Predicated region
      $region21: #{deeplabv3plus_forward.16} parent=19 // pred_check
        %p103 = pneg %p49
      $region22: #{deeplabv3plus_forward.16} parent=19 // pred_check_branch
        %105 = sbr.rel (%p103) target = $region24
      $region23: #{deeplabv3plus_forward.16} parent=19 // pred_region
        %p106 = scmp.lt.s32.totalorder %s8, 1
        %s107 = scalar_select %p106, %s8, 1
        %s108 = smul.addr %s107, 8
        %s109 = smul.addr %s108, 4
        %s110 = scalar_lea.vmem %s1, %s109
      $region24: #{deeplabv3plus_forward.16} parent=19 // pred_fallthru
        _
    $region20: #{deeplabv3plus_forward.16} parent=5 // pred_fallthru
      _
    %p111 = scmp.le.s32.totalorder 1, %s8
    %p112 = scmp.lt.s32.totalorder %s8, 3
    %p113 = pnand %p111, %p112
    %p114 = pneg %p113
    // Predicated region
    $region25: #{deeplabv3plus_forward.16} parent=5 // pred_check
      _
    $region26: #{deeplabv3plus_forward.16} parent=5 // pred_check_branch
      %116 = sbr.rel (%p113) target = $region28
    $region27: #{deeplabv3plus_forward.16} parent=5 // pred_region
      %s117 = ssub.s32 %s8, 1
      %p118 = pneg %p29
      %p119 = pneg %p26
      %p120 = scmp.lt.s32.totalorder %s13, 1
      %s121 = scalar_select %p120, %s13, 1
      %s122 = smul.addr %s121, 8
      %s123 = smul.addr %s122, 4
      %s124 = scalar_lea.vmem %s1, %s123
      %p125 = pneg %p55
      %p126 = pneg %p52
      %p127 = pneg %p81
      %p128 = pneg %p78
      %p129 = scmp.lt.s32.totalorder %s13, 1
      %s130 = scalar_select %p129, %s13, 1
      %s131 = smul.addr %s130, 16
      %s132 = smul.addr %s131, 4
      %s133 = scalar_lea.vmem %s2, %s132
      %p134 = scmp.lt.s32.totalorder %s13, 1
      %s135 = scalar_select %p134, %s13, 1
      %s136 = smul.addr %s135, 8
      %s137 = smul.addr %s136, 4
      %s138 = scalar_lea.vmem %s1, %s137
      %p139 = scmp.lt.s32.totalorder %s13, 1
      %s140 = scalar_select %p139, %s13, 1
      %s141 = smul.addr %s140, 16
      %s142 = smul.addr %s141, 4
      %s143 = scalar_lea.vmem %s2, %s142
      %v145 = vld [vmem:[%s0] sm:$0xf]
      %v146 = vld [vmem:[%s0 + $0x4] sm:$0xf]
      %v147 = vld [vmem:[%s138] sm:$0xff]
      %v148 = vld [vmem:[%s138 + $0x8] sm:$0xff]
      %v149 = vld [vmem:[%s138 + $0x10] sm:$0xff]
      %v150 = vld [vmem:[%s138 + $0x18] sm:$0xff]
      %v153 = vunpack.c.l.b16 %v145
      %v154 = vunpack.c.l.b16 %v146
      %v155 = vpack.c.b16 %v154, %v153
      %v160 = vunpack.c.l.b16 %v147
      %v161 = vunpack.c.h.b16 %v147
      %v162 = vunpack.c.l.b16 %v148
      %v163 = vunpack.c.h.b16 %v148
      %v164 = vunpack.c.l.b16 %v149
      %v165 = vunpack.c.h.b16 %v149
      %v166 = vunpack.c.l.b16 %v150
      %v167 = vunpack.c.h.b16 %v150
      %v168 = vpack.c.b16 %v160, %v160
      %v169 = vpack.c.b16 %v161, %v161
      %v170 = vpack.c.b16 %v162, %v162
      %v171 = vpack.c.b16 %v163, %v163
      %v172 = vpack.c.b16 %v164, %v164
      %v173 = vpack.c.b16 %v165, %v165
      %v174 = vpack.c.b16 %v166, %v166
      %v175 = vpack.c.b16 %v167, %v167
      %vm176 = vcmask 64512
      %v178 = vsel %vm176, %v155, 0
      %vm180 = vcmask 1043456
      %v182 = vsel %vm180, %v168, 0
      %v185 = vsel %vm180, %v169, 0
      %v188 = vsel %vm180, %v170, 0
      %v191 = vsel %vm180, %v171, 0
      %v194 = vsel %vm180, %v172, 0
      %v197 = vsel %vm180, %v173, 0
      %v200 = vsel %vm180, %v174, 0
      %v203 = vsel %vm180, %v175, 0
      %205 = vmatpush.bf16.msra.mxu0 0
      %206 = vmatpush.bf16.msra.mxu0 0
      %207 = vmatpush.bf16.msra.mxu0 0
      %208 = vmatpush.bf16.msra.mxu0 0
      %209 = vmatpush.bf16.msra.mxu0 0
      %210 = vmatpush.bf16.msra.mxu0 0
      %211 = vmatpush.bf16.msra.mxu0 0
      %212 = vmatpush.bf16.msra.mxu0 %v182
      %213 = vmatmul.bf16.gmra.mxu0 %v178
      %v214 = vpop.f32.mrf.mxu0
      %v215 = vadd.f32 0.0, %v214
      %v216 = vpop.f32.mrf.mxu0
      %v217 = vadd.f32 0.0, %v216
      %218 = vdwg.mxu0
      %219 = vmatpush.bf16.msra.mxu0 0
      %220 = vmatpush.bf16.msra.mxu0 0
      %221 = vmatpush.bf16.msra.mxu0 0
      %222 = vmatpush.bf16.msra.mxu0 0
      %223 = vmatpush.bf16.msra.mxu0 0
      %224 = vmatpush.bf16.msra.mxu0 0
      %225 = vmatpush.bf16.msra.mxu0 0
      %226 = vmatpush.bf16.msra.mxu0 %v185
      %227 = vmatmul.bf16.gmra.mxu0 %v178
      %v228 = vpop.f32.mrf.mxu0
      %v229 = vadd.f32 0.0, %v228
      %v230 = vpop.f32.mrf.mxu0
      %v231 = vadd.f32 0.0, %v230
      %232 = vdwg.mxu0
      %233 = vmatpush.bf16.msra.mxu0 0
      %234 = vmatpush.bf16.msra.mxu0 0
      %235 = vmatpush.bf16.msra.mxu0 0
      %236 = vmatpush.bf16.msra.mxu0 0
      %237 = vmatpush.bf16.msra.mxu0 0
      %238 = vmatpush.bf16.msra.mxu0 0
      %239 = vmatpush.bf16.msra.mxu0 0
      %240 = vmatpush.bf16.msra.mxu0 %v188
      %241 = vmatmul.bf16.gmra.mxu0 %v178
      %v242 = vpop.f32.mrf.mxu0
      %v243 = vadd.f32 0.0, %v242
      %v244 = vpop.f32.mrf.mxu0
      %v245 = vadd.f32 0.0, %v244
      %246 = vdwg.mxu0
      %247 = vmatpush.bf16.msra.mxu0 0
      %248 = vmatpush.bf16.msra.mxu0 0
      %249 = vmatpush.bf16.msra.mxu0 0
      %250 = vmatpush.bf16.msra.mxu0 0
      %251 = vmatpush.bf16.msra.mxu0 0
      %252 = vmatpush.bf16.msra.mxu0 0
      %253 = vmatpush.bf16.msra.mxu0 0
      %254 = vmatpush.bf16.msra.mxu0 %v191
      %255 = vmatmul.bf16.gmra.mxu0 %v178
      %v256 = vpop.f32.mrf.mxu0
      %v257 = vadd.f32 0.0, %v256
      %v258 = vpop.f32.mrf.mxu0
      %v259 = vadd.f32 0.0, %v258
      %260 = vdwg.mxu0
      %261 = vmatpush.bf16.msra.mxu0 0
      %262 = vmatpush.bf16.msra.mxu0 0
      %263 = vmatpush.bf16.msra.mxu0 0
      %264 = vmatpush.bf16.msra.mxu0 0
      %265 = vmatpush.bf16.msra.mxu0 0
      %266 = vmatpush.bf16.msra.mxu0 0
      %267 = vmatpush.bf16.msra.mxu0 0
      %268 = vmatpush.bf16.msra.mxu0 %v194
      %269 = vmatmul.bf16.gmra.mxu0 %v178
      %v270 = vpop.f32.mrf.mxu0
      %v271 = vadd.f32 0.0, %v270
      %v272 = vpop.f32.mrf.mxu0
      %v273 = vadd.f32 0.0, %v272
      %274 = vdwg.mxu0
      %275 = vmatpush.bf16.msra.mxu0 0
      %276 = vmatpush.bf16.msra.mxu0 0
      %277 = vmatpush.bf16.msra.mxu0 0
      %278 = vmatpush.bf16.msra.mxu0 0
      %279 = vmatpush.bf16.msra.mxu0 0
      %280 = vmatpush.bf16.msra.mxu0 0
      %281 = vmatpush.bf16.msra.mxu0 0
      %282 = vmatpush.bf16.msra.mxu0 %v197
      %283 = vmatmul.bf16.gmra.mxu0 %v178
      %v284 = vpop.f32.mrf.mxu0
      %v285 = vadd.f32 0.0, %v284
      %v286 = vpop.f32.mrf.mxu0
      %v287 = vadd.f32 0.0, %v286
      %288 = vdwg.mxu0
      %289 = vmatpush.bf16.msra.mxu0 0
      %290 = vmatpush.bf16.msra.mxu0 0
      %291 = vmatpush.bf16.msra.mxu0 0
      %292 = vmatpush.bf16.msra.mxu0 0
      %293 = vmatpush.bf16.msra.mxu0 0
      %294 = vmatpush.bf16.msra.mxu0 0
      %295 = vmatpush.bf16.msra.mxu0 0
      %296 = vmatpush.bf16.msra.mxu0 %v200
      %297 = vmatmul.bf16.gmra.mxu0 %v178
      %v298 = vpop.f32.mrf.mxu0
      %v299 = vadd.f32 0.0, %v298
      %v300 = vpop.f32.mrf.mxu0
      %v301 = vadd.f32 0.0, %v300
      %302 = vdwg.mxu0
      %303 = vmatpush.bf16.msra.mxu0 0
      %304 = vmatpush.bf16.msra.mxu0 0
      %305 = vmatpush.bf16.msra.mxu0 0
      %306 = vmatpush.bf16.msra.mxu0 0
      %307 = vmatpush.bf16.msra.mxu0 0
      %308 = vmatpush.bf16.msra.mxu0 0
      %309 = vmatpush.bf16.msra.mxu0 0
      %310 = vmatpush.bf16.msra.mxu0 %v203
      %311 = vmatmul.bf16.gmra.mxu0 %v178
      %v312 = vpop.f32.mrf.mxu0
      %v313 = vadd.f32 0.0, %v312
      %v314 = vpop.f32.mrf.mxu0
      %v315 = vadd.f32 0.0, %v314
      %316 = vdwg.mxu0
      %v317 = vpack.c.bf16 %v229, %v215
      %v318 = vpack.c.bf16 %v257, %v243
      %v319 = vpack.c.bf16 %v285, %v271
      %v320 = vpack.c.bf16 %v313, %v299
      %v321 = vpack.c.bf16 %v231, %v217
      %v322 = vpack.c.bf16 %v259, %v245
      %v323 = vpack.c.bf16 %v287, %v273
      %v324 = vpack.c.bf16 %v315, %v301
      %325 = vst [vmem:[%s143] sm:$0xff] %v317
      %326 = vst [vmem:[%s143 + $0x8] sm:$0xff] %v318
      %327 = vst [vmem:[%s143 + $0x10] sm:$0xff] %v319
      %328 = vst [vmem:[%s143 + $0x18] sm:$0xff] %v320
      %329 = vst [vmem:[%s143 + $0x20] sm:$0xff] %v321
      %330 = vst [vmem:[%s143 + $0x28] sm:$0xff] %v322
      %331 = vst [vmem:[%s143 + $0x30] sm:$0xff] %v323
      %332 = vst [vmem:[%s143 + $0x38] sm:$0xff] %v324
      %p333 = scmp.lt.s32.totalorder %s13, 1
      %s334 = scalar_select %p333, %s13, 1
      %s335 = smul.addr %s334, 16
      %s336 = smul.addr %s335, 4
      %s337 = scalar_lea.vmem %s2, %s336
      // Predicated region
      $region29: #{deeplabv3plus_forward.16} parent=27 // pred_check
        %p338 = pneg %p78
      $region30: #{deeplabv3plus_forward.16} parent=27 // pred_check_branch
        %340 = sbr.rel (%p338) target = $region32
      $region31: #{deeplabv3plus_forward.16} parent=27 // pred_region
        _
      $region32: #{deeplabv3plus_forward.16} parent=27 // pred_fallthru
        _
    $region28: #{deeplabv3plus_forward.16} parent=5 // pred_fallthru
      _
    %p341 = scmp.le.s32.totalorder 2, %s8
    // Predicated region
    $region33: #{deeplabv3plus_forward.16} parent=5 // pred_check
      %p342 = pneg %p341
    $region34: #{deeplabv3plus_forward.16} parent=5 // pred_check_branch
      %344 = sbr.rel (%p342) target = $region36
    $region35: #{deeplabv3plus_forward.16} parent=5 // pred_region
      %s345 = ssub.s32 %s8, 2
      // Predicated region
      $region37: #{deeplabv3plus_forward.16} parent=35 // pred_check
        %p346 = pneg %p84
      $region38: #{deeplabv3plus_forward.16} parent=35 // pred_check_branch
        %348 = sbr.rel (%p346) target = $region40
      $region39: #{deeplabv3plus_forward.16} parent=35 // pred_region
        %p349 = scmp.lt.s32.totalorder %s14, 1
        %s350 = scalar_select %p349, %s14, 1
        %s351 = smul.addr %s350, 16
        %s352 = smul.addr %s351, 4
        %s353 = scalar_lea.vmem %s2, %s352
      $region40: #{deeplabv3plus_forward.16} parent=35 // pred_fallthru
        _
    $region36: #{deeplabv3plus_forward.16} parent=5 // pred_fallthru
      _
  $region6: #{deeplabv3plus_forward.16} parent=0 // loop_footer
    %s12 = sadd.s32 1, %s8
  $region7: #{deeplabv3plus_forward.16} parent=0 // loop_footer_branch
    %7 = sbr.rel target = $region3
  $region8: #{deeplabv3plus_forward.16} parent=0 // loop_exit
    _

// kernel: deeplabv3plus_forward.17
$region0: #{deeplabv3plus_forward.17}
  #allocation0 [shape = 'u32[]', space=smem, size = 0x4, offset = 0x4, fixed_abs, tag = 'smem constant byte address 0x4 - core index']
  #allocation1 [shape = 'u32[72,128]{1,0:T(1,128)}', space=vmem, size = 0x9000, scoped, tag = 'internal scratch']
  %s0 = inlined_call_operand.vmem [shape: bf16[16,8], index: 0, kind: input, shape index: {}]
  %s1 = inlined_call_operand.vmem [shape: bf16[2,16,8,128], index: 1, kind: input, shape index: {}]
  %s2 = inlined_call_operand.vmem [shape: bf16[2,16,16,128], index: 2, kind: output, shape index: {}]
  %s3 = sld [smem:[#allocation0]]
  $region41: #{deeplabv3plus_forward.17} parent=0
    _
  %s5 = ssub.s32 1, %s3
  %s6 = scalar_select 0, %s5, %s3
  loop: start=0, step=1, limit=4
  $region2: #{deeplabv3plus_forward.17} parent=0 // loop_pre_header
    _
  $region3: #{deeplabv3plus_forward.17} parent=0 // loop_header
    %s8 = sphi 0, %s12
    %p9 = scmp.ge.s32.totalorder %s8, 4
    %s16 = sphi 0, %s16
    %s18 = sphi 0, %s16
    %s19 = sphi 0, %s18
    %s33 = sphi 0, %s19
    %s39 = sphi 0, %s41
    %s42 = sphi 0, %s39
    %s43 = sphi 0, %s42
    %s59 = sphi 0, %s43
    %s65 = sphi 0, %s67
    %s68 = sphi 0, %s65
    %s69 = sphi 0, %s68
    %s85 = sphi 0, %s69
  $region4: #{deeplabv3plus_forward.17} parent=0 // loop_header_branch
    %11 = sbr.rel (%p9) target = $region8
  $region5: #{deeplabv3plus_forward.17} parent=0 // loop_body
    %s13 = ssub.s32 %s8, 1
    %s14 = ssub.s32 %s8, 2
    %s15 = sadd.s32 %s8, 1
    %s17 = sadd.s32 %s16, 1
    %p20 = scmp.eq.s32.totalorder %s8, 1
    %p21 = scmp.ne.s32.totalorder %s16, %s18
    %p22 = scmp.eq.s32.totalorder %s8, 0
    %p23 = por %p21, %p22
    %p24 = scmp.ne.s32.totalorder %s16, %s18
    %p25 = scmp.eq.s32.totalorder %s13, 1
    %p26 = por %p24, %p25
    %p27 = scmp.ne.s32.totalorder %s18, %s19
    %p28 = scmp.eq.s32.totalorder %s13, 0
    %p29 = por %p27, %p28
    %p30 = scmp.ne.s32.totalorder %s18, %s19
    %p31 = scmp.eq.s32.totalorder %s14, 1
    %p32 = por %p30, %p31
    %p34 = scmp.ne.s32.totalorder %s19, %s33
    %p35 = scmp.eq.s32.totalorder %s14, 0
    %p36 = por %p34, %p35
    %s37 = ssub.s32 %s8, %s15
    %p38 = scmp.eq.s32.totalorder %s37, 0
    %s40 = sadd.s32 %s39, 1
    %s41 = scalar_select %p38, %s39, %s40
    %p44 = pneg %p38
    %p45 = scmp.eq.s32.totalorder %s8, 1
    %p46 = por %p44, %p45
    %p47 = scmp.ne.s32.totalorder %s39, %s42
    %p48 = scmp.eq.s32.totalorder %s8, 0
    %p49 = por %p47, %p48
    %p50 = scmp.ne.s32.totalorder %s39, %s42
    %p51 = scmp.eq.s32.totalorder %s13, 1
    %p52 = por %p50, %p51
    %p53 = scmp.ne.s32.totalorder %s42, %s43
    %p54 = scmp.eq.s32.totalorder %s13, 0
    %p55 = por %p53, %p54
    %p56 = scmp.ne.s32.totalorder %s42, %s43
    %p57 = scmp.eq.s32.totalorder %s14, 1
    %p58 = por %p56, %p57
    %p60 = scmp.ne.s32.totalorder %s43, %s59
    %p61 = scmp.eq.s32.totalorder %s14, 0
    %p62 = por %p60, %p61
    %s63 = ssub.s32 %s8, %s15
    %p64 = scmp.eq.s32.totalorder %s63, 0
    %s66 = sadd.s32 %s65, 1
    %s67 = scalar_select %p64, %s65, %s66
    %p70 = pneg %p64
    %p71 = scmp.eq.s32.totalorder %s8, 1
    %p72 = por %p70, %p71
    %p73 = scmp.ne.s32.totalorder %s65, %s68
    %p74 = scmp.eq.s32.totalorder %s8, 0
    %p75 = por %p73, %p74
    %p76 = scmp.ne.s32.totalorder %s65, %s68
    %p77 = scmp.eq.s32.totalorder %s13, 1
    %p78 = por %p76, %p77
    %p79 = scmp.ne.s32.totalorder %s68, %s69
    %p80 = scmp.eq.s32.totalorder %s13, 0
    %p81 = por %p79, %p80
    %p82 = scmp.ne.s32.totalorder %s68, %s69
    %p83 = scmp.eq.s32.totalorder %s14, 1
    %p84 = por %p82, %p83
    %p86 = scmp.ne.s32.totalorder %s69, %s85
    %p87 = scmp.eq.s32.totalorder %s14, 0
    %p88 = por %p86, %p87
    %p89 = scmp.le.s32.totalorder 1, %s8
    %p90 = scmp.lt.s32.totalorder %s8, 3
    %p91 = pnand %p89, %p90
    %p92 = pneg %p91
    // Predicated region
    $region9: #{deeplabv3plus_forward.17} parent=5 // pred_check
      _
    $region10: #{deeplabv3plus_forward.17} parent=5 // pred_check_branch
      %94 = sbr.rel (%p91) target = $region12
    $region11: #{deeplabv3plus_forward.17} parent=5 // pred_region
      %s95 = ssub.s32 %s8, 1
      // Predicated region
      $region13: #{deeplabv3plus_forward.17} parent=11 // pred_check
        %p96 = pneg %p29
      $region14: #{deeplabv3plus_forward.17} parent=11 // pred_check_branch
        %98 = sbr.rel (%p96) target = $region16
      $region15: #{deeplabv3plus_forward.17} parent=11 // pred_region
        _
      $region16: #{deeplabv3plus_forward.17} parent=11 // pred_fallthru
        _
    $region12: #{deeplabv3plus_forward.17} parent=5 // pred_fallthru
      _
    %p99 = scmp.lt.s32.totalorder %s8, 2
    // Predicated region
    $region17: #{deeplabv3plus_forward.17} parent=5 // pred_check
      %p100 = pneg %p99
    $region18: #{deeplabv3plus_forward.17} parent=5 // pred_check_branch
      %102 = sbr.rel (%p100) target = $region20
    $region19: #{deeplabv3plus_forward.17} parent=5 // pred_region
      // Predicated region
      $region21: #{deeplabv3plus_forward.17} parent=19 // pred_check
        %p103 = pneg %p49
      $region22: #{deeplabv3plus_forward.17} parent=19 // pred_check_branch
        %105 = sbr.rel (%p103) target = $region24
      $region23: #{deeplabv3plus_forward.17} parent=19 // pred_region
        %p106 = scmp.lt.s32.totalorder %s8, 1
        %s107 = scalar_select %p106, %s8, 1
        %s108 = smul.addr %s107, 16
        %s109 = smul.addr %s108, 4
        %s110 = scalar_lea.vmem %s1, %s109
      $region24: #{deeplabv3plus_forward.17} parent=19 // pred_fallthru
        _
    $region20: #{deeplabv3plus_forward.17} parent=5 // pred_fallthru
      _
    %p111 = scmp.le.s32.totalorder 1, %s8
    %p112 = scmp.lt.s32.totalorder %s8, 3
    %p113 = pnand %p111, %p112
    %p114 = pneg %p113
    // Predicated region
    $region25: #{deeplabv3plus_forward.17} parent=5 // pred_check
      _
    $region26: #{deeplabv3plus_forward.17} parent=5 // pred_check_branch
      %116 = sbr.rel (%p113) target = $region28
    $region27: #{deeplabv3plus_forward.17} parent=5 // pred_region
      %s117 = ssub.s32 %s8, 1
      %p118 = pneg %p29
      %p119 = pneg %p26
      %p120 = scmp.lt.s32.totalorder %s13, 1
      %s121 = scalar_select %p120, %s13, 1
      %s122 = smul.addr %s121, 16
      %s123 = smul.addr %s122, 4
      %s124 = scalar_lea.vmem %s1, %s123
      %p125 = pneg %p55
      %p126 = pneg %p52
      %p127 = pneg %p81
      %p128 = pneg %p78
      %p129 = scmp.lt.s32.totalorder %s13, 1
      %s130 = scalar_select %p129, %s13, 1
      %s131 = smul.addr %s130, 32
      %s132 = smul.addr %s131, 4
      %s133 = scalar_lea.vmem %s2, %s132
      %p134 = scmp.lt.s32.totalorder %s13, 1
      %s135 = scalar_select %p134, %s13, 1
      %s136 = smul.addr %s135, 16
      %s137 = smul.addr %s136, 4
      %s138 = scalar_lea.vmem %s1, %s137
      %p139 = scmp.lt.s32.totalorder %s13, 1
      %s140 = scalar_select %p139, %s13, 1
      %s141 = smul.addr %s140, 32
      %s142 = smul.addr %s141, 4
      %s143 = scalar_lea.vmem %s2, %s142
      %v145 = vld [vmem:[%s0] sm:$0xf]
      %v146 = vld [vmem:[%s0 + $0x4] sm:$0xf]
      %v147 = vld [vmem:[%s138] sm:$0xf]
      %v150 = vunpack.c.l.b16 %v145
      %v151 = vunpack.c.l.b16 %v146
      %v152 = vpack.c.b16 %v151, %v150
      %vm153 = vcmask 64512
      %v155 = vsel %vm153, %v152, 0
      %vm157 = vcmask 1043456
      %v159 = vsel %vm157, %v147, 0
      %161 = vmatpush.bf16.msra.mxu0 0
      %162 = vmatpush.bf16.msra.mxu0 0
      %163 = vmatpush.bf16.msra.mxu0 0
      %164 = vmatpush.bf16.msra.mxu0 0
      %165 = vmatpush.bf16.msra.mxu0 0
      %166 = vmatpush.bf16.msra.mxu0 0
      %167 = vmatpush.bf16.msra.mxu0 0
      %168 = vmatpush.bf16.msra.mxu0 %v159
      %169 = vmatmul.bf16.gmra.mxu0 %v155
      %v170 = vpop.f32.mrf.mxu0
      %v171 = vadd.f32 0.0, %v170
      %v172 = vpop.f32.mrf.mxu0
      %v173 = vadd.f32 0.0, %v172
      %174 = vdwg.mxu0
      %v175 = vpack.c.bf16 %v171, %v171
      %v176 = vpack.c.bf16 %v173, %v173
      %177 = vst [vmem:[%s143] sm:$0xf] %v175
      %178 = vst [vmem:[%s143 + $0x4] sm:$0xf] %v176
      %s179 = scalar_lea.vmem %s138, 4
      %v180 = vld [vmem:[%s179] sm:$0xf]
      %v182 = vsel %vm157, %v180, 0
      %184 = vmatpush.bf16.msra.mxu0 0
      %185 = vmatpush.bf16.msra.mxu0 0
      %186 = vmatpush.bf16.msra.mxu0 0
      %187 = vmatpush.bf16.msra.mxu0 0
      %188 = vmatpush.bf16.msra.mxu0 0
      %189 = vmatpush.bf16.msra.mxu0 0
      %190 = vmatpush.bf16.msra.mxu0 0
      %191 = vmatpush.bf16.msra.mxu0 %v182
      %192 = vmatmul.bf16.gmra.mxu0 %v155
      %v193 = vpop.f32.mrf.mxu0
      %v194 = vadd.f32 0.0, %v193
      %v195 = vpop.f32.mrf.mxu0
      %v196 = vadd.f32 0.0, %v195
      %197 = vdwg.mxu0
      %v198 = vpack.c.bf16 %v194, %v194
      %v199 = vpack.c.bf16 %v196, %v196
      %s200 = scalar_lea.vmem %s143, 8
      %201 = vst [vmem:[%s200] sm:$0xf] %v198
      %202 = vst [vmem:[%s200 + $0x4] sm:$0xf] %v199
      %s203 = scalar_lea.vmem %s138, 8
      %v204 = vld [vmem:[%s203] sm:$0xf]
      %v206 = vsel %vm157, %v204, 0
      %208 = vmatpush.bf16.msra.mxu0 0
      %209 = vmatpush.bf16.msra.mxu0 0
      %210 = vmatpush.bf16.msra.mxu0 0
      %211 = vmatpush.bf16.msra.mxu0 0
      %212 = vmatpush.bf16.msra.mxu0 0
      %213 = vmatpush.bf16.msra.mxu0 0
      %214 = vmatpush.bf16.msra.mxu0 0
      %215 = vmatpush.bf16.msra.mxu0 %v206
      %216 = vmatmul.bf16.gmra.mxu0 %v155
      %v217 = vpop.f32.mrf.mxu0
      %v218 = vadd.f32 0.0, %v217
      %v219 = vpop.f32.mrf.mxu0
      %v220 = vadd.f32 0.0, %v219
      %221 = vdwg.mxu0
      %v222 = vpack.c.bf16 %v218, %v218
      %v223 = vpack.c.bf16 %v220, %v220
      %s224 = scalar_lea.vmem %s143, 16
      %225 = vst [vmem:[%s224] sm:$0xf] %v222
      %226 = vst [vmem:[%s224 + $0x4] sm:$0xf] %v223
      %s227 = scalar_lea.vmem %s138, 12
      %v228 = vld [vmem:[%s227] sm:$0xf]
      %v230 = vsel %vm157, %v228, 0
      %232 = vmatpush.bf16.msra.mxu0 0
      %233 = vmatpush.bf16.msra.mxu0 0
      %234 = vmatpush.bf16.msra.mxu0 0
      %235 = vmatpush.bf16.msra.mxu0 0
      %236 = vmatpush.bf16.msra.mxu0 0
      %237 = vmatpush.bf16.msra.mxu0 0
      %238 = vmatpush.bf16.msra.mxu0 0
      %239 = vmatpush.bf16.msra.mxu0 %v230
      %240 = vmatmul.bf16.gmra.mxu0 %v155
      %v241 = vpop.f32.mrf.mxu0
      %v242 = vadd.f32 0.0, %v241
      %v243 = vpop.f32.mrf.mxu0
      %v244 = vadd.f32 0.0, %v243
      %245 = vdwg.mxu0
      %v246 = vpack.c.bf16 %v242, %v242
      %v247 = vpack.c.bf16 %v244, %v244
      %s248 = scalar_lea.vmem %s143, 24
      %249 = vst [vmem:[%s248] sm:$0xf] %v246
      %250 = vst [vmem:[%s248 + $0x4] sm:$0xf] %v247
      %s251 = scalar_lea.vmem %s138, 16
      %v252 = vld [vmem:[%s251] sm:$0xf]
      %v254 = vsel %vm157, %v252, 0
      %256 = vmatpush.bf16.msra.mxu0 0
      %257 = vmatpush.bf16.msra.mxu0 0
      %258 = vmatpush.bf16.msra.mxu0 0
      %259 = vmatpush.bf16.msra.mxu0 0
      %260 = vmatpush.bf16.msra.mxu0 0
      %261 = vmatpush.bf16.msra.mxu0 0
      %262 = vmatpush.bf16.msra.mxu0 0
      %263 = vmatpush.bf16.msra.mxu0 %v254
      %264 = vmatmul.bf16.gmra.mxu0 %v155
      %v265 = vpop.f32.mrf.mxu0
      %v266 = vadd.f32 0.0, %v265
      %v267 = vpop.f32.mrf.mxu0
      %v268 = vadd.f32 0.0, %v267
      %269 = vdwg.mxu0
      %v270 = vpack.c.bf16 %v266, %v266
      %v271 = vpack.c.bf16 %v268, %v268
      %s272 = scalar_lea.vmem %s143, 32
      %273 = vst [vmem:[%s272] sm:$0xf] %v270
      %274 = vst [vmem:[%s272 + $0x4] sm:$0xf] %v271
      %s275 = scalar_lea.vmem %s138, 20
      %v276 = vld [vmem:[%s275] sm:$0xf]
      %v278 = vsel %vm157, %v276, 0
      %280 = vmatpush.bf16.msra.mxu0 0
      %281 = vmatpush.bf16.msra.mxu0 0
      %282 = vmatpush.bf16.msra.mxu0 0
      %283 = vmatpush.bf16.msra.mxu0 0
      %284 = vmatpush.bf16.msra.mxu0 0
      %285 = vmatpush.bf16.msra.mxu0 0
      %286 = vmatpush.bf16.msra.mxu0 0
      %287 = vmatpush.bf16.msra.mxu0 %v278
      %288 = vmatmul.bf16.gmra.mxu0 %v155
      %v289 = vpop.f32.mrf.mxu0
      %v290 = vadd.f32 0.0, %v289
      %v291 = vpop.f32.mrf.mxu0
      %v292 = vadd.f32 0.0, %v291
      %293 = vdwg.mxu0
      %v294 = vpack.c.bf16 %v290, %v290
      %v295 = vpack.c.bf16 %v292, %v292
      %s296 = scalar_lea.vmem %s143, 40
      %297 = vst [vmem:[%s296] sm:$0xf] %v294
      %298 = vst [vmem:[%s296 + $0x4] sm:$0xf] %v295
      %s299 = scalar_lea.vmem %s138, 24
      %v300 = vld [vmem:[%s299] sm:$0xf]
      %v302 = vsel %vm157, %v300, 0
      %304 = vmatpush.bf16.msra.mxu0 0
      %305 = vmatpush.bf16.msra.mxu0 0
      %306 = vmatpush.bf16.msra.mxu0 0
      %307 = vmatpush.bf16.msra.mxu0 0
      %308 = vmatpush.bf16.msra.mxu0 0
      %309 = vmatpush.bf16.msra.mxu0 0
      %310 = vmatpush.bf16.msra.mxu0 0
      %311 = vmatpush.bf16.msra.mxu0 %v302
      %312 = vmatmul.bf16.gmra.mxu0 %v155
      %v313 = vpop.f32.mrf.mxu0
      %v314 = vadd.f32 0.0, %v313
      %v315 = vpop.f32.mrf.mxu0
      %v316 = vadd.f32 0.0, %v315
      %317 = vdwg.mxu0
      %v318 = vpack.c.bf16 %v314, %v314
      %v319 = vpack.c.bf16 %v316, %v316
      %s320 = scalar_lea.vmem %s143, 48
      %321 = vst [vmem:[%s320] sm:$0xf] %v318
      %322 = vst [vmem:[%s320 + $0x4] sm:$0xf] %v319
      %s323 = scalar_lea.vmem %s138, 28
      %v324 = vld [vmem:[%s323] sm:$0xf]
      %v326 = vsel %vm157, %v324, 0
      %328 = vmatpush.bf16.msra.mxu0 0
      %329 = vmatpush.bf16.msra.mxu0 0
      %330 = vmatpush.bf16.msra.mxu0 0
      %331 = vmatpush.bf16.msra.mxu0 0
      %332 = vmatpush.bf16.msra.mxu0 0
      %333 = vmatpush.bf16.msra.mxu0 0
      %334 = vmatpush.bf16.msra.mxu0 0
      %335 = vmatpush.bf16.msra.mxu0 %v326
      %336 = vmatmul.bf16.gmra.mxu0 %v155
      %v337 = vpop.f32.mrf.mxu0
      %v338 = vadd.f32 0.0, %v337
      %v339 = vpop.f32.mrf.mxu0
      %v340 = vadd.f32 0.0, %v339
      %341 = vdwg.mxu0
      %v342 = vpack.c.bf16 %v338, %v338
      %v343 = vpack.c.bf16 %v340, %v340
      %s344 = scalar_lea.vmem %s143, 56
      %345 = vst [vmem:[%s344] sm:$0xf] %v342
      %346 = vst [vmem:[%s344 + $0x4] sm:$0xf] %v343
      %s347 = scalar_lea.vmem %s138, 32
      %v348 = vld [vmem:[%s347] sm:$0xf]
      %v350 = vsel %vm157, %v348, 0
      %352 = vmatpush.bf16.msra.mxu0 0
      %353 = vmatpush.bf16.msra.mxu0 0
      %354 = vmatpush.bf16.msra.mxu0 0
      %355 = vmatpush.bf16.msra.mxu0 0
      %356 = vmatpush.bf16.msra.mxu0 0
      %357 = vmatpush.bf16.msra.mxu0 0
      %358 = vmatpush.bf16.msra.mxu0 0
      %359 = vmatpush.bf16.msra.mxu0 %v350
      %360 = vmatmul.bf16.gmra.mxu0 %v155
      %v361 = vpop.f32.mrf.mxu0
      %v362 = vadd.f32 0.0, %v361
      %v363 = vpop.f32.mrf.mxu0
      %v364 = vadd.f32 0.0, %v363
      %365 = vdwg.mxu0
      %v366 = vpack.c.bf16 %v362, %v362
      %v367 = vpack.c.bf16 %v364, %v364
      %s368 = scalar_lea.vmem %s143, 64
      %369 = vst [vmem:[%s368] sm:$0xf] %v366
      %370 = vst [vmem:[%s368 + $0x4] sm:$0xf] %v367
      %s371 = scalar_lea.vmem %s138, 36
      %v372 = vld [vmem:[%s371] sm:$0xf]
      %v374 = vsel %vm157, %v372, 0
      %376 = vmatpush.bf16.msra.mxu0 0
      %377 = vmatpush.bf16.msra.mxu0 0
      %378 = vmatpush.bf16.msra.mxu0 0
      %379 = vmatpush.bf16.msra.mxu0 0
      %380 = vmatpush.bf16.msra.mxu0 0
      %381 = vmatpush.bf16.msra.mxu0 0
      %382 = vmatpush.bf16.msra.mxu0 0
      %383 = vmatpush.bf16.msra.mxu0 %v374
      %384 = vmatmul.bf16.gmra.mxu0 %v155
      %v385 = vpop.f32.mrf.mxu0
      %v386 = vadd.f32 0.0, %v385
      %v387 = vpop.f32.mrf.mxu0
      %v388 = vadd.f32 0.0, %v387
      %389 = vdwg.mxu0
      %v390 = vpack.c.bf16 %v386, %v386
      %v391 = vpack.c.bf16 %v388, %v388
      %s392 = scalar_lea.vmem %s143, 72
      %393 = vst [vmem:[%s392] sm:$0xf] %v390
      %394 = vst [vmem:[%s392 + $0x4] sm:$0xf] %v391
      %s395 = scalar_lea.vmem %s138, 40
      %v396 = vld [vmem:[%s395] sm:$0xf]
      %v398 = vsel %vm157, %v396, 0
      %400 = vmatpush.bf16.msra.mxu0 0
      %401 = vmatpush.bf16.msra.mxu0 0
      %402 = vmatpush.bf16.msra.mxu0 0
      %403 = vmatpush.bf16.msra.mxu0 0
      %404 = vmatpush.bf16.msra.mxu0 0
      %405 = vmatpush.bf16.msra.mxu0 0
      %406 = vmatpush.bf16.msra.mxu0 0
      %407 = vmatpush.bf16.msra.mxu0 %v398
      %408 = vmatmul.bf16.gmra.mxu0 %v155
      %v409 = vpop.f32.mrf.mxu0
      %v410 = vadd.f32 0.0, %v409
      %v411 = vpop.f32.mrf.mxu0
      %v412 = vadd.f32 0.0, %v411
      %413 = vdwg.mxu0
      %v414 = vpack.c.bf16 %v410, %v410
      %v415 = vpack.c.bf16 %v412, %v412
      %s416 = scalar_lea.vmem %s143, 80
      %417 = vst [vmem:[%s416] sm:$0xf] %v414
      %418 = vst [vmem:[%s416 + $0x4] sm:$0xf] %v415
      %s419 = scalar_lea.vmem %s138, 44
      %v420 = vld [vmem:[%s419] sm:$0xf]
      %v422 = vsel %vm157, %v420, 0
      %424 = vmatpush.bf16.msra.mxu0 0
      %425 = vmatpush.bf16.msra.mxu0 0
      %426 = vmatpush.bf16.msra.mxu0 0
      %427 = vmatpush.bf16.msra.mxu0 0
      %428 = vmatpush.bf16.msra.mxu0 0
      %429 = vmatpush.bf16.msra.mxu0 0
      %430 = vmatpush.bf16.msra.mxu0 0
      %431 = vmatpush.bf16.msra.mxu0 %v422
      %432 = vmatmul.bf16.gmra.mxu0 %v155
      %v433 = vpop.f32.mrf.mxu0
      %v434 = vadd.f32 0.0, %v433
      %v435 = vpop.f32.mrf.mxu0
      %v436 = vadd.f32 0.0, %v435
      %437 = vdwg.mxu0
      %v438 = vpack.c.bf16 %v434, %v434
      %v439 = vpack.c.bf16 %v436, %v436
      %s440 = scalar_lea.vmem %s143, 88
      %441 = vst [vmem:[%s440] sm:$0xf] %v438
      %442 = vst [vmem:[%s440 + $0x4] sm:$0xf] %v439
      %s443 = scalar_lea.vmem %s138, 48
      %v444 = vld [vmem:[%s443] sm:$0xf]
      %v446 = vsel %vm157, %v444, 0
      %448 = vmatpush.bf16.msra.mxu0 0
      %449 = vmatpush.bf16.msra.mxu0 0
      %450 = vmatpush.bf16.msra.mxu0 0
      %451 = vmatpush.bf16.msra.mxu0 0
      %452 = vmatpush.bf16.msra.mxu0 0
      %453 = vmatpush.bf16.msra.mxu0 0
      %454 = vmatpush.bf16.msra.mxu0 0
      %455 = vmatpush.bf16.msra.mxu0 %v446
      %456 = vmatmul.bf16.gmra.mxu0 %v155
      %v457 = vpop.f32.mrf.mxu0
      %v458 = vadd.f32 0.0, %v457
      %v459 = vpop.f32.mrf.mxu0
      %v460 = vadd.f32 0.0, %v459
      %461 = vdwg.mxu0
      %v462 = vpack.c.bf16 %v458, %v458
      %v463 = vpack.c.bf16 %v460, %v460
      %s464 = scalar_lea.vmem %s143, 96
      %465 = vst [vmem:[%s464] sm:$0xf] %v462
      %466 = vst [vmem:[%s464 + $0x4] sm:$0xf] %v463
      %s467 = scalar_lea.vmem %s138, 52
      %v468 = vld [vmem:[%s467] sm:$0xf]
      %v470 = vsel %vm157, %v468, 0
      %472 = vmatpush.bf16.msra.mxu0 0
      %473 = vmatpush.bf16.msra.mxu0 0
      %474 = vmatpush.bf16.msra.mxu0 0
      %475 = vmatpush.bf16.msra.mxu0 0
      %476 = vmatpush.bf16.msra.mxu0 0
      %477 = vmatpush.bf16.msra.mxu0 0
      %478 = vmatpush.bf16.msra.mxu0 0
      %479 = vmatpush.bf16.msra.mxu0 %v470
      %480 = vmatmul.bf16.gmra.mxu0 %v155
      %v481 = vpop.f32.mrf.mxu0
      %v482 = vadd.f32 0.0, %v481
      %v483 = vpop.f32.mrf.mxu0
      %v484 = vadd.f32 0.0, %v483
      %485 = vdwg.mxu0
      %v486 = vpack.c.bf16 %v482, %v482
      %v487 = vpack.c.bf16 %v484, %v484
      %s488 = scalar_lea.vmem %s143, 104
      %489 = vst [vmem:[%s488] sm:$0xf] %v486
      %490 = vst [vmem:[%s488 + $0x4] sm:$0xf] %v487
      %s491 = scalar_lea.vmem %s138, 56
      %v492 = vld [vmem:[%s491] sm:$0xf]
      %v494 = vsel %vm157, %v492, 0
      %496 = vmatpush.bf16.msra.mxu0 0
      %497 = vmatpush.bf16.msra.mxu0 0
      %498 = vmatpush.bf16.msra.mxu0 0
      %499 = vmatpush.bf16.msra.mxu0 0
      %500 = vmatpush.bf16.msra.mxu0 0
      %501 = vmatpush.bf16.msra.mxu0 0
      %502 = vmatpush.bf16.msra.mxu0 0
      %503 = vmatpush.bf16.msra.mxu0 %v494
      %504 = vmatmul.bf16.gmra.mxu0 %v155
      %v505 = vpop.f32.mrf.mxu0
      %v506 = vadd.f32 0.0, %v505
      %v507 = vpop.f32.mrf.mxu0
      %v508 = vadd.f32 0.0, %v507
      %509 = vdwg.mxu0
      %v510 = vpack.c.bf16 %v506, %v506
      %v511 = vpack.c.bf16 %v508, %v508
      %s512 = scalar_lea.vmem %s143, 112
      %513 = vst [vmem:[%s512] sm:$0xf] %v510
      %514 = vst [vmem:[%s512 + $0x4] sm:$0xf] %v511
      %s515 = scalar_lea.vmem %s138, 60
      %v516 = vld [vmem:[%s515] sm:$0xf]
      %v518 = vsel %vm157, %v516, 0
      %520 = vmatpush.bf16.msra.mxu0 0
      %521 = vmatpush.bf16.msra.mxu0 0
      %522 = vmatpush.bf16.msra.mxu0 0
      %523 = vmatpush.bf16.msra.mxu0 0
      %524 = vmatpush.bf16.msra.mxu0 0
      %525 = vmatpush.bf16.msra.mxu0 0
      %526 = vmatpush.bf16.msra.mxu0 0
      %527 = vmatpush.bf16.msra.mxu0 %v518
      %528 = vmatmul.bf16.gmra.mxu0 %v155
      %v529 = vpop.f32.mrf.mxu0
      %v530 = vadd.f32 0.0, %v529
      %v531 = vpop.f32.mrf.mxu0
      %v532 = vadd.f32 0.0, %v531
      %533 = vdwg.mxu0
      %v534 = vpack.c.bf16 %v530, %v530
      %v535 = vpack.c.bf16 %v532, %v532
      %s536 = scalar_lea.vmem %s143, 120
      %537 = vst [vmem:[%s536] sm:$0xf] %v534
      %538 = vst [vmem:[%s536 + $0x4] sm:$0xf] %v535
      %p539 = scmp.lt.s32.totalorder %s13, 1
      %s540 = scalar_select %p539, %s13, 1
      %s541 = smul.addr %s540, 32
      %s542 = smul.addr %s541, 4
      %s543 = scalar_lea.vmem %s2, %s542
      // Predicated region
      $region29: #{deeplabv3plus_forward.17} parent=27 // pred_check
        %p544 = pneg %p78
      $region30: #{deeplabv3plus_forward.17} parent=27 // pred_check_branch
        %546 = sbr.rel (%p544) target = $region32
      $region31: #{deeplabv3plus_forward.17} parent=27 // pred_region
        _
      $region32: #{deeplabv3plus_forward.17} parent=27 // pred_fallthru
        _
    $region28: #{deeplabv3plus_forward.17} parent=5 // pred_fallthru
      _
    %p547 = scmp.le.s32.totalorder 2, %s8
    // Predicated region
    $region33: #{deeplabv3plus_forward.17} parent=5 // pred_check
      %p548 = pneg %p547
    $region34: #{deeplabv3plus_forward.17} parent=5 // pred_check_branch
      %550 = sbr.rel (%p548) target = $region36
    $region35: #{deeplabv3plus_forward.17} parent=5 // pred_region
      %s551 = ssub.s32 %s8, 2
      // Predicated region
      $region37: #{deeplabv3plus_forward.17} parent=35 // pred_check
        %p552 = pneg %p84
      $region38: #{deeplabv3plus_forward.17} parent=35 // pred_check_branch
        %554 = sbr.rel (%p552) target = $region40
      $region39: #{deeplabv3plus_forward.17} parent=35 // pred_region
        %p555 = scmp.lt.s32.totalorder %s14, 1
        %s556 = scalar_select %p555, %s14, 1
        %s557 = smul.addr %s556, 32
        %s558 = smul.addr %s557, 4
        %s559 = scalar_lea.vmem %s2, %s558
      $region40: #{deeplabv3plus_forward.17} parent=35 // pred_fallthru
        _
    $region36: #{deeplabv3plus_forward.17} parent=5 // pred_fallthru
      _
  $region6: #{deeplabv3plus_forward.17} parent=0 // loop_footer
    %s12 = sadd.s32 1, %s8
  $region7: #{deeplabv3plus_forward.17} parent=0 // loop_footer_branch
    %7 = sbr.rel target = $region3
  $region8: #{deeplabv3plus_forward.17} parent=0 // loop_exit
    _

// kernel: deeplabv3plus_forward.15
$region0: #{deeplabv3plus_forward.15}
  #allocation0 [shape = 'u32[]', space=smem, size = 0x4, offset = 0x4, fixed_abs, tag = 'smem constant byte address 0x4 - core index']
  #allocation1 [shape = 'u32[72,128]{1,0:T(1,128)}', space=vmem, size = 0x9000, scoped, tag = 'internal scratch']
  %s0 = inlined_call_operand.vmem [shape: bf16[2,10,10,128], index: 0, kind: input, shape index: {}]
  %s1 = inlined_call_operand.vmem [shape: bf16[9,128,128], index: 1, kind: input, shape index: {}]
  %s2 = inlined_call_operand.vmem [shape: f32[1,128], index: 2, kind: input, shape index: {}]
  %s3 = inlined_call_operand.vmem [shape: bf16[2,8,8,128], index: 3, kind: output, shape index: {}]
  %s4 = sld [smem:[#allocation0]]
  $region45: #{deeplabv3plus_forward.15} parent=0
    _
  %s6 = ssub.s32 1, %s4
  %s7 = scalar_select 0, %s6, %s4
  loop: start=0, step=1, limit=4
  $region2: #{deeplabv3plus_forward.15} parent=0 // loop_pre_header
    _
  $region3: #{deeplabv3plus_forward.15} parent=0 // loop_header
    %s9 = sphi 0, %s13
    %p10 = scmp.ge.s32.totalorder %s9, 4
    %s16 = sphi 0, %s28
    %s17 = sphi 0, %s24
    %s18 = sphi 0, %s16
    %s19 = sphi 0, %s17
    %s20 = sphi 0, %s18
    %s21 = sphi 0, %s19
    %s31 = sphi 0, %s33
    %s34 = sphi 0, %s31
    %s35 = sphi 0, %s34
    %s51 = sphi 0, %s35
    %s55 = sphi 0, %s55
    %s57 = sphi 0, %s55
    %s58 = sphi 0, %s57
    %s72 = sphi 0, %s58
    %s76 = sphi 0, %s76
    %s78 = sphi 0, %s76
    %s79 = sphi 0, %s78
    %s93 = sphi 0, %s79
    %s101 = sphi 0, %s103
    %s104 = sphi 0, %s101
    %s105 = sphi 0, %s104
    %s121 = sphi 0, %s105
  $region4: #{deeplabv3plus_forward.15} parent=0 // loop_header_branch
    %12 = sbr.rel (%p10) target = $region8
  $region5: #{deeplabv3plus_forward.15} parent=0 // loop_body
    %s14 = ssub.s32 %s9, 1
    %s15 = ssub.s32 %s9, 2
    %s22 = sadd.s32 1, %s17
    %p23 = scmp.ge.s32.totalorder %s22, 1
    %s24 = scalar_select %p23, 0, %s22
    %s25 = sadd.s32 1, %s16
    %s26 = scalar_select %p23, %s25, %s16
    %p27 = scmp.ge.s32.totalorder %s26, 2
    %s28 = scalar_select %p27, 0, %s26
    %s29 = ssub.s32 %s16, %s28
    %p30 = scmp.eq.s32.totalorder %s29, 0
    %s32 = sadd.s32 %s31, 1
    %s33 = scalar_select %p30, %s31, %s32
    %p36 = pneg %p30
    %p37 = scmp.eq.s32.totalorder %s9, 1
    %p38 = por %p36, %p37
    %p39 = scmp.ne.s32.totalorder %s31, %s34
    %p40 = scmp.eq.s32.totalorder %s9, 0
    %p41 = por %p39, %p40
    %p42 = scmp.ne.s32.totalorder %s31, %s34
    %p43 = scmp.eq.s32.totalorder %s14, 1
    %p44 = por %p42, %p43
    %p45 = scmp.ne.s32.totalorder %s34, %s35
    %p46 = scmp.eq.s32.totalorder %s14, 0
    %p47 = por %p45, %p46
    %p48 = scmp.ne.s32.totalorder %s34, %s35
    %p49 = scmp.eq.s32.totalorder %s15, 1
    %p50 = por %p48, %p49
    %p52 = scmp.ne.s32.totalorder %s35, %s51
    %p53 = scmp.eq.s32.totalorder %s15, 0
    %p54 = por %p52, %p53
    %s56 = sadd.s32 %s55, 1
    %p59 = scmp.eq.s32.totalorder %s9, 1
    %p60 = scmp.ne.s32.totalorder %s55, %s57
    %p61 = scmp.eq.s32.totalorder %s9, 0
    %p62 = por %p60, %p61
    %p63 = scmp.ne.s32.totalorder %s55, %s57
    %p64 = scmp.eq.s32.totalorder %s14, 1
    %p65 = por %p63, %p64
    %p66 = scmp.ne.s32.totalorder %s57, %s58
    %p67 = scmp.eq.s32.totalorder %s14, 0
    %p68 = por %p66, %p67
    %p69 = scmp.ne.s32.totalorder %s57, %s58
    %p70 = scmp.eq.s32.totalorder %s15, 1
    %p71 = por %p69, %p70
    %p73 = scmp.ne.s32.totalorder %s58, %s72
    %p74 = scmp.eq.s32.totalorder %s15, 0
    %p75 = por %p73, %p74
    %s77 = sadd.s32 %s76, 1
    %p80 = scmp.eq.s32.totalorder %s9, 1
    %p81 = scmp.ne.s32.totalorder %s76, %s78
    %p82 = scmp.eq.s32.totalorder %s9, 0
    %p83 = por %p81, %p82
    %p84 = scmp.ne.s32.totalorder %s76, %s78
    %p85 = scmp.eq.s32.totalorder %s14, 1
    %p86 = por %p84, %p85
    %p87 = scmp.ne.s32.totalorder %s78, %s79
    %p88 = scmp.eq.s32.totalorder %s14, 0
    %p89 = por %p87, %p88
    %p90 = scmp.ne.s32.totalorder %s78, %s79
    %p91 = scmp.eq.s32.totalorder %s15, 1
    %p92 = por %p90, %p91
    %p94 = scmp.ne.s32.totalorder %s79, %s93
    %p95 = scmp.eq.s32.totalorder %s15, 0
    %p96 = por %p94, %p95
    %s97 = ssub.s32 %s16, %s28
    %s98 = ssub.s32 %s17, %s24
    %s99 = sor.u32 %s97, %s98
    %p100 = scmp.eq.s32.totalorder %s99, 0
    %s102 = sadd.s32 %s101, 1
    %s103 = scalar_select %p100, %s101, %s102
    %p106 = pneg %p100
    %p107 = scmp.eq.s32.totalorder %s9, 1
    %p108 = por %p106, %p107
    %p109 = scmp.ne.s32.totalorder %s101, %s104
    %p110 = scmp.eq.s32.totalorder %s9, 0
    %p111 = por %p109, %p110
    %p112 = scmp.ne.s32.totalorder %s101, %s104
    %p113 = scmp.eq.s32.totalorder %s14, 1
    %p114 = por %p112, %p113
    %p115 = scmp.ne.s32.totalorder %s104, %s105
    %p116 = scmp.eq.s32.totalorder %s14, 0
    %p117 = por %p115, %p116
    %p118 = scmp.ne.s32.totalorder %s104, %s105
    %p119 = scmp.eq.s32.totalorder %s15, 1
    %p120 = por %p118, %p119
    %p122 = scmp.ne.s32.totalorder %s105, %s121
    %p123 = scmp.eq.s32.totalorder %s15, 0
    %p124 = por %p122, %p123
    %p125 = scmp.le.s32.totalorder 1, %s9
    %p126 = scmp.lt.s32.totalorder %s9, 3
    %p127 = pnand %p125, %p126
    %p128 = pneg %p127
    // Predicated region
    $region9: #{deeplabv3plus_forward.15} parent=5 // pred_check
      _
    $region10: #{deeplabv3plus_forward.15} parent=5 // pred_check_branch
      %130 = sbr.rel (%p127) target = $region12
    $region11: #{deeplabv3plus_forward.15} parent=5 // pred_region
      %s131 = ssub.s32 %s9, 1
      // Predicated region
      $region13: #{deeplabv3plus_forward.15} parent=11 // pred_check
        %p132 = pneg %p68
      $region14: #{deeplabv3plus_forward.15} parent=11 // pred_check_branch
        %134 = sbr.rel (%p132) target = $region16
      $region15: #{deeplabv3plus_forward.15} parent=11 // pred_region
        _
      $region16: #{deeplabv3plus_forward.15} parent=11 // pred_fallthru
        _
      // Predicated region
      $region17: #{deeplabv3plus_forward.15} parent=11 // pred_check
        %p135 = pneg %p89
      $region18: #{deeplabv3plus_forward.15} parent=11 // pred_check_branch
        %137 = sbr.rel (%p135) target = $region20
      $region19: #{deeplabv3plus_forward.15} parent=11 // pred_region
        _
      $region20: #{deeplabv3plus_forward.15} parent=11 // pred_fallthru
        _
    $region12: #{deeplabv3plus_forward.15} parent=5 // pred_fallthru
      _
    %p138 = scmp.lt.s32.totalorder %s9, 2
    // Predicated region
    $region21: #{deeplabv3plus_forward.15} parent=5 // pred_check
      %p139 = pneg %p138
    $region22: #{deeplabv3plus_forward.15} parent=5 // pred_check_branch
      %141 = sbr.rel (%p139) target = $region24
    $region23: #{deeplabv3plus_forward.15} parent=5 // pred_region
      // Predicated region
      $region25: #{deeplabv3plus_forward.15} parent=23 // pred_check
        %p142 = pneg %p41
      $region26: #{deeplabv3plus_forward.15} parent=23 // pred_check_branch
        %144 = sbr.rel (%p142) target = $region28
      $region27: #{deeplabv3plus_forward.15} parent=23 // pred_region
        %p145 = scmp.lt.s32.totalorder %s16, 1
        %s146 = scalar_select %p145, %s16, 1
        %s147 = smul.addr %s146, 20
        %s148 = smul.addr %s147, 4
        %s149 = scalar_lea.vmem %s0, %s148
      $region28: #{deeplabv3plus_forward.15} parent=23 // pred_fallthru
        _
    $region24: #{deeplabv3plus_forward.15} parent=5 // pred_fallthru
      _
    %p150 = scmp.le.s32.totalorder 1, %s9
    %p151 = scmp.lt.s32.totalorder %s9, 3
    %p152 = pnand %p150, %p151
    %p153 = pneg %p152
    // Predicated region
    $region29: #{deeplabv3plus_forward.15} parent=5 // pred_check
      _
    $region30: #{deeplabv3plus_forward.15} parent=5 // pred_check_branch
      %155 = sbr.rel (%p152) target = $region32
    $region31: #{deeplabv3plus_forward.15} parent=5 // pred_region
      %s156 = ssub.s32 %s9, 1
      %p157 = scmp.lt.s32.totalorder %s18, 1
      %s158 = scalar_select %p157, %s18, 1
      %s159 = smul.addr %s158, 20
      %s160 = smul.addr %s159, 4
      %s161 = scalar_lea.vmem %s0, %s160
      %p162 = pneg %p47
      %p163 = pneg %p44
      %p164 = pneg %p68
      %p165 = pneg %p65
      %p166 = pneg %p89
      %p167 = pneg %p86
      %p168 = pneg %p117
      %p169 = pneg %p114
      %s170 = smul.u32 8, %s19
      %p171 = scmp.lt.s32.totalorder %s18, 1
      %s172 = scalar_select %p171, %s18, 1
      %p173 = scmp.lt.s32.totalorder %s170, 7
      %s174 = scalar_select %p173, %s170, 7
      %s175 = smul.addr %s172, 8
      %s176 = sadd.s32 %s174, %s175
      %s177 = smul.addr %s176, 4
      %s178 = scalar_lea.vmem %s3, %s177
      %p179 = scmp.lt.s32.totalorder %s18, 1
      %s180 = scalar_select %p179, %s18, 1
      %s181 = smul.addr %s180, 20
      %s182 = smul.addr %s181, 4
      %s183 = scalar_lea.vmem %s0, %s182
      %s184 = smul.u32 8, %s19
      %p185 = scmp.lt.s32.totalorder %s18, 1
      %s186 = scalar_select %p185, %s18, 1
      %p187 = scmp.lt.s32.totalorder %s184, 7
      %s188 = scalar_select %p187, %s184, 7
      %s189 = smul.addr %s186, 8
      %s190 = sadd.s32 %s188, %s189
      %s191 = smul.addr %s190, 4
      %s192 = scalar_lea.vmem %s3, %s191
      %s193 = smul.u32 8, %s19
      %s194 = smul.u32 %s19, 8
      %s195 = smul.u32 %s194, 2
      %s196 = smul.addr %s195, 4
      %s197 = scalar_lea.vmem %s183, %s196
      %v198 = vld [vmem:[%s197] sm:$0xf]
      %v199 = vld [vmem:[%s197 + $0x8] sm:$0xf]
      %v200 = vld [vmem:[%s197 + $0x10] sm:$0xf]
      %v201 = vld [vmem:[%s197 + $0x18] sm:$0xf]
      %v202 = vld [vmem:[%s197 + $0x20] sm:$0xf]
      %v203 = vld [vmem:[%s197 + $0x28] sm:$0xf]
      %v204 = vld [vmem:[%s197 + $0x30] sm:$0xf]
      %v205 = vld [vmem:[%s197 + $0x38] sm:$0xf]
      %v206 = vld [vmem:[%s1] sm:$0xf]
      %v207 = vld [vmem:[%s1 + $0x4] sm:$0xf]
      %v208 = vld [vmem:[%s1 + $0x8] sm:$0xf]
      %v209 = vld [vmem:[%s1 + $0xc] sm:$0xf]
      %v210 = vld [vmem:[%s1 + $0x10] sm:$0xf]
      %v211 = vld [vmem:[%s1 + $0x14] sm:$0xf]
      %v212 = vld [vmem:[%s1 + $0x18] sm:$0xf]
      %v213 = vld [vmem:[%s1 + $0x1c] sm:$0xf]
      %v214 = vld [vmem:[%s1 + $0x20] sm:$0xf]
      %v215 = vld [vmem:[%s1 + $0x24] sm:$0xf]
      %v216 = vld [vmem:[%s1 + $0x28] sm:$0xf]
      %v217 = vld [vmem:[%s1 + $0x2c] sm:$0xf]
      %v218 = vld [vmem:[%s1 + $0x30] sm:$0xf]
      %v219 = vld [vmem:[%s1 + $0x34] sm:$0xf]
      %v220 = vld [vmem:[%s1 + $0x38] sm:$0xf]
      %v221 = vld [vmem:[%s1 + $0x3c] sm:$0xf]
      %v222 = vld [vmem:[%s197 + $0x4] sm:$0x1]
      %v223 = vld [vmem:[%s197 + $0xc] sm:$0x1]
      %v224 = vld [vmem:[%s197 + $0x14] sm:$0x1]
      %v225 = vld [vmem:[%s197 + $0x1c] sm:$0x1]
      %v226 = vld [vmem:[%s197 + $0x24] sm:$0x1]
      %v227 = vld [vmem:[%s197 + $0x2c] sm:$0x1]
      %v228 = vld [vmem:[%s197 + $0x34] sm:$0x1]
      %v229 = vld [vmem:[%s197 + $0x3c] sm:$0x1]
      %vm230 = vsmask.f32 3328
      %vm231 = vsmask.f32 7440
      %vm232 = vmor %vm230, %vm231
      %v234 = vshrl.u32 %v198, 16
      %v236 = vrot.slane %v234, 4
      %v237 = vshll.u32 %v198, 16
      %v239 = vrot.slane %v237, 5
      %v240 = vor.u32 %v236, %v239
      %v241 = vrot.slane %v240, 4
      %v243 = vshll.u32 %v222, 16
      %v245 = vrot.slane %v243, 5
      %v246 = vsel %vm232, %v241, %v245
      %v248 = vshrl.u32 %v199, 16
      %v250 = vrot.slane %v248, 4
      %v251 = vshll.u32 %v199, 16
      %v253 = vrot.slane %v251, 5
      %v254 = vor.u32 %v250, %v253
      %v255 = vrot.slane %v254, 4
      %v257 = vshll.u32 %v223, 16
      %v259 = vrot.slane %v257, 5
      %v260 = vsel %vm232, %v255, %v259
      %v262 = vshrl.u32 %v200, 16
      %v264 = vrot.slane %v262, 4
      %v265 = vshll.u32 %v200, 16
      %v267 = vrot.slane %v265, 5
      %v268 = vor.u32 %v264, %v267
      %v269 = vrot.slane %v268, 4
      %v271 = vshll.u32 %v224, 16
      %v273 = vrot.slane %v271, 5
      %v274 = vsel %vm232, %v269, %v273
      %v276 = vshrl.u32 %v201, 16
      %v278 = vrot.slane %v276, 4
      %v279 = vshll.u32 %v201, 16
      %v281 = vrot.slane %v279, 5
      %v282 = vor.u32 %v278, %v281
      %v283 = vrot.slane %v282, 4
      %v285 = vshll.u32 %v225, 16
      %v287 = vrot.slane %v285, 5
      %v288 = vsel %vm232, %v283, %v287
      %v290 = vshrl.u32 %v202, 16
      %v292 = vrot.slane %v290, 4
      %v293 = vshll.u32 %v202, 16
      %v295 = vrot.slane %v293, 5
      %v296 = vor.u32 %v292, %v295
      %v297 = vrot.slane %v296, 4
      %v299 = vshll.u32 %v226, 16
      %v301 = vrot.slane %v299, 5
      %v302 = vsel %vm232, %v297, %v301
      %v304 = vshrl.u32 %v203, 16
      %v306 = vrot.slane %v304, 4
      %v307 = vshll.u32 %v203, 16
      %v309 = vrot.slane %v307, 5
      %v310 = vor.u32 %v306, %v309
      %v311 = vrot.slane %v310, 4
      %v313 = vshll.u32 %v227, 16
      %v315 = vrot.slane %v313, 5
      %v316 = vsel %vm232, %v311, %v315
      %v318 = vshrl.u32 %v204, 16
      %v320 = vrot.slane %v318, 4
      %v321 = vshll.u32 %v204, 16
      %v323 = vrot.slane %v321, 5
      %v324 = vor.u32 %v320, %v323
      %v325 = vrot.slane %v324, 4
      %v327 = vshll.u32 %v228, 16
      %v329 = vrot.slane %v327, 5
      %v330 = vsel %vm232, %v325, %v329
      %v332 = vshrl.u32 %v205, 16
      %v334 = vrot.slane %v332, 4
      %v335 = vshll.u32 %v205, 16
      %v337 = vrot.slane %v335, 5
      %v338 = vor.u32 %v334, %v337
      %v339 = vrot.slane %v338, 4
      %v341 = vshll.u32 %v229, 16
      %v343 = vrot.slane %v341, 5
      %v344 = vsel %vm232, %v339, %v343
      %s345 = scalar_lea.vmem %s1, 64
      %v346 = vld [vmem:[%s345] sm:$0xf]
      %v347 = vld [vmem:[%s345 + $0x4] sm:$0xf]
      %v348 = vld [vmem:[%s345 + $0x8] sm:$0xf]
      %v349 = vld [vmem:[%s345 + $0xc] sm:$0xf]
      %v350 = vld [vmem:[%s345 + $0x10] sm:$0xf]
      %v351 = vld [vmem:[%s345 + $0x14] sm:$0xf]
      %v352 = vld [vmem:[%s345 + $0x18] sm:$0xf]
      %v353 = vld [vmem:[%s345 + $0x1c] sm:$0xf]
      %v354 = vld [vmem:[%s345 + $0x20] sm:$0xf]
      %v355 = vld [vmem:[%s345 + $0x24] sm:$0xf]
      %v356 = vld [vmem:[%s345 + $0x28] sm:$0xf]
      %v357 = vld [vmem:[%s345 + $0x2c] sm:$0xf]
      %v358 = vld [vmem:[%s345 + $0x30] sm:$0xf]
      %v359 = vld [vmem:[%s345 + $0x34] sm:$0xf]
      %v360 = vld [vmem:[%s345 + $0x38] sm:$0xf]
      %v361 = vld [vmem:[%s345 + $0x3c] sm:$0xf]
      %v362 = vunpack.c.l.b16 %v246
      %v363 = vunpack.c.l.b16 %v260
      %v364 = vunpack.c.l.b16 %v274
      %v365 = vunpack.c.l.b16 %v288
      %v366 = vunpack.c.l.b16 %v302
      %v367 = vunpack.c.l.b16 %v316
      %v368 = vunpack.c.l.b16 %v330
      %v369 = vunpack.c.l.b16 %v344
      %v370 = vpack.c.b16 %v363, %v362
      %v371 = vpack.c.b16 %v365, %v364
      %v372 = vpack.c.b16 %v367, %v366
      %v373 = vpack.c.b16 %v369, %v368
      %v394 = vunpack.c.l.b16 %v346
      %v395 = vunpack.c.l.b16 %v347
      %v396 = vunpack.c.l.b16 %v348
      %v397 = vunpack.c.l.b16 %v349
      %v398 = vunpack.c.l.b16 %v350
      %v399 = vunpack.c.l.b16 %v351
      %v400 = vunpack.c.l.b16 %v352
      %v401 = vunpack.c.l.b16 %v353
      %v402 = vunpack.c.l.b16 %v354
      %v403 = vunpack.c.l.b16 %v355
      %v404 = vunpack.c.l.b16 %v356
      %v405 = vunpack.c.l.b16 %v357
      %v406 = vunpack.c.l.b16 %v358
      %v407 = vunpack.c.l.b16 %v359
      %v408 = vunpack.c.l.b16 %v360
      %v409 = vunpack.c.l.b16 %v361
      %v410 = vpack.c.b16 %v395, %v394
      %v411 = vpack.c.b16 %v397, %v396
      %v412 = vpack.c.b16 %v399, %v398
      %v413 = vpack.c.b16 %v401, %v400
      %v414 = vpack.c.b16 %v403, %v402
      %v415 = vpack.c.b16 %v405, %v404
      %v416 = vpack.c.b16 %v407, %v406
      %v417 = vpack.c.b16 %v409, %v408
      %426 = vmatpush.bf16.msra.mxu0 %v417
      %427 = vmatpush.bf16.msra.mxu0 %v416
      %428 = vmatpush.bf16.msra.mxu0 %v415
      %429 = vmatpush.bf16.msra.mxu0 %v414
      %430 = vmatpush.bf16.msra.mxu0 %v413
      %431 = vmatpush.bf16.msra.mxu0 %v412
      %432 = vmatpush.bf16.msra.mxu0 %v411
      %433 = vmatpush.bf16.msra.mxu0 %v410
      %434 = vmatmul.bf16.gmra.mxu0 %v370
      %v435 = vpop.f32.mrf.mxu0
      %v436 = vadd.f32 0.0, %v435
      %v437 = vpop.f32.mrf.mxu0
      %v438 = vadd.f32 0.0, %v437
      %439 = vmatmul.bf16.gmra.mxu0 %v371
      %v440 = vpop.f32.mrf.mxu0
      %v441 = vadd.f32 0.0, %v440
      %v442 = vpop.f32.mrf.mxu0
      %v443 = vadd.f32 0.0, %v442
      %444 = vmatmul.bf16.gmra.mxu0 %v372
      %v445 = vpop.f32.mrf.mxu0
      %v446 = vadd.f32 0.0, %v445
      %v447 = vpop.f32.mrf.mxu0
      %v448 = vadd.f32 0.0, %v447
      %449 = vmatmul.bf16.gmra.mxu0 %v373
      %v450 = vpop.f32.mrf.mxu0
      %v451 = vadd.f32 0.0, %v450
      %v452 = vpop.f32.mrf.mxu0
      %v453 = vadd.f32 0.0, %v452
      %454 = vdwg.mxu0
      %v463 = vunpack.c.l.b16 %v198
      %v464 = vunpack.c.l.b16 %v199
      %v465 = vunpack.c.l.b16 %v200
      %v466 = vunpack.c.l.b16 %v201
      %v467 = vunpack.c.l.b16 %v202
      %v468 = vunpack.c.l.b16 %v203
      %v469 = vunpack.c.l.b16 %v204
      %v470 = vunpack.c.l.b16 %v205
      %v471 = vpack.c.b16 %v464, %v463
      %v472 = vpack.c.b16 %v466, %v465
      %v473 = vpack.c.b16 %v468, %v467
      %v474 = vpack.c.b16 %v470, %v469
      %v495 = vunpack.c.l.b16 %v206
      %v496 = vunpack.c.l.b16 %v207
      %v497 = vunpack.c.l.b16 %v208
      %v498 = vunpack.c.l.b16 %v209
      %v499 = vunpack.c.l.b16 %v210
      %v500 = vunpack.c.l.b16 %v211
      %v501 = vunpack.c.l.b16 %v212
      %v502 = vunpack.c.l.b16 %v213
      %v503 = vunpack.c.l.b16 %v214
      %v504 = vunpack.c.l.b16 %v215
      %v505 = vunpack.c.l.b16 %v216
      %v506 = vunpack.c.l.b16 %v217
      %v507 = vunpack.c.l.b16 %v218
      %v508 = vunpack.c.l.b16 %v219
      %v509 = vunpack.c.l.b16 %v220
      %v510 = vunpack.c.l.b16 %v221
      %v511 = vpack.c.b16 %v496, %v495
      %v512 = vpack.c.b16 %v498, %v497
      %v513 = vpack.c.b16 %v500, %v499
      %v514 = vpack.c.b16 %v502, %v501
      %v515 = vpack.c.b16 %v504, %v503
      %v516 = vpack.c.b16 %v506, %v505
      %v517 = vpack.c.b16 %v508, %v507
      %v518 = vpack.c.b16 %v510, %v509
      %527 = vmatpush.bf16.msra.mxu0 %v518
      %528 = vmatpush.bf16.msra.mxu0 %v517
      %529 = vmatpush.bf16.msra.mxu0 %v516
      %530 = vmatpush.bf16.msra.mxu0 %v515
      %531 = vmatpush.bf16.msra.mxu0 %v514
      %532 = vmatpush.bf16.msra.mxu0 %v513
      %533 = vmatpush.bf16.msra.mxu0 %v512
      %534 = vmatpush.bf16.msra.mxu0 %v511
      %535 = vmatmul.bf16.gmra.mxu0 %v471
      %v536 = vpop.f32.mrf.mxu0
      %v537 = vadd.f32 %v436, %v536
      %v538 = vpop.f32.mrf.mxu0
      %v539 = vadd.f32 %v438, %v538
      %540 = vmatmul.bf16.gmra.mxu0 %v472
      %v541 = vpop.f32.mrf.mxu0
      %v542 = vadd.f32 %v441, %v541
      %v543 = vpop.f32.mrf.mxu0
      %v544 = vadd.f32 %v443, %v543
      %545 = vmatmul.bf16.gmra.mxu0 %v473
      %v546 = vpop.f32.mrf.mxu0
      %v547 = vadd.f32 %v446, %v546
      %v548 = vpop.f32.mrf.mxu0
      %v549 = vadd.f32 %v448, %v548
      %550 = vmatmul.bf16.gmra.mxu0 %v474
      %v551 = vpop.f32.mrf.mxu0
      %v552 = vadd.f32 %v451, %v551
      %v553 = vpop.f32.mrf.mxu0
      %v554 = vadd.f32 %v453, %v553
      %555 = vdwg.mxu0
      %v556 = vld [vmem:[%s197] sm:$0xe]
      %v557 = vld [vmem:[%s197 + $0x8] sm:$0xe]
      %v558 = vld [vmem:[%s197 + $0x10] sm:$0xe]
      %v559 = vld [vmem:[%s197 + $0x18] sm:$0xe]
      %v560 = vld [vmem:[%s197 + $0x20] sm:$0xe]
      %v561 = vld [vmem:[%s197 + $0x28] sm:$0xe]
      %v562 = vld [vmem:[%s197 + $0x30] sm:$0xe]
      %v563 = vld [vmem:[%s197 + $0x38] sm:$0xe]
      %vm580 = vcmask 1042432
      %vm581 = vcmask 1046532
      %vm582 = vmor %vm580, %vm581
      %v583 = vrot.slane %v556, 5
      %v584 = vrot.slane %v583, 4
      %v585 = vrot.slane %v222, 5
      %v586 = vsel %vm582, %v584, %v585
      %v587 = vrot.slane %v557, 5
      %v588 = vrot.slane %v587, 4
      %v589 = vrot.slane %v223, 5
      %v590 = vsel %vm582, %v588, %v589
      %v591 = vrot.slane %v558, 5
      %v592 = vrot.slane %v591, 4
      %v593 = vrot.slane %v224, 5
      %v594 = vsel %vm582, %v592, %v593
      %v595 = vrot.slane %v559, 5
      %v596 = vrot.slane %v595, 4
      %v597 = vrot.slane %v225, 5
      %v598 = vsel %vm582, %v596, %v597
      %v599 = vrot.slane %v560, 5
      %v600 = vrot.slane %v599, 4
      %v601 = vrot.slane %v226, 5
      %v602 = vsel %vm582, %v600, %v601
      %v603 = vrot.slane %v561, 5
      %v604 = vrot.slane %v603, 4
      %v605 = vrot.slane %v227, 5
      %v606 = vsel %vm582, %v604, %v605
      %v607 = vrot.slane %v562, 5
      %v608 = vrot.slane %v607, 4
      %v609 = vrot.slane %v228, 5
      %v610 = vsel %vm582, %v608, %v609
      %v611 = vrot.slane %v563, 5
      %v612 = vrot.slane %v611, 4
      %v613 = vrot.slane %v229, 5
      %v614 = vsel %vm582, %v612, %v613
      %s615 = scalar_lea.vmem %s1, 128
      %v616 = vld [vmem:[%s615] sm:$0xf]
      %v617 = vld [vmem:[%s615 + $0x4] sm:$0xf]
      %v618 = vld [vmem:[%s615 + $0x8] sm:$0xf]
      %v619 = vld [vmem:[%s615 + $0xc] sm:$0xf]
      %v620 = vld [vmem:[%s615 + $0x10] sm:$0xf]
      %v621 = vld [vmem:[%s615 + $0x14] sm:$0xf]
      %v622 = vld [vmem:[%s615 + $0x18] sm:$0xf]
      %v623 = vld [vmem:[%s615 + $0x1c] sm:$0xf]
      %v624 = vld [vmem:[%s615 + $0x20] sm:$0xf]
      %v625 = vld [vmem:[%s615 + $0x24] sm:$0xf]
      %v626 = vld [vmem:[%s615 + $0x28] sm:$0xf]
      %v627 = vld [vmem:[%s615 + $0x2c] sm:$0xf]
      %v628 = vld [vmem:[%s615 + $0x30] sm:$0xf]
      %v629 = vld [vmem:[%s615 + $0x34] sm:$0xf]
      %v630 = vld [vmem:[%s615 + $0x38] sm:$0xf]
      %v631 = vld [vmem:[%s615 + $0x3c] sm:$0xf]
      %v632 = vunpack.c.l.b16 %v586
      %v633 = vunpack.c.l.b16 %v590
      %v634 = vunpack.c.l.b16 %v594
      %v635 = vunpack.c.l.b16 %v598
      %v636 = vunpack.c.l.b16 %v602
      %v637 = vunpack.c.l.b16 %v606
      %v638 = vunpack.c.l.b16 %v610
      %v639 = vunpack.c.l.b16 %v614
      %v640 = vpack.c.b16 %v633, %v632
      %v641 = vpack.c.b16 %v635, %v634
      %v642 = vpack.c.b16 %v637, %v636
      %v643 = vpack.c.b16 %v639, %v638
      %v664 = vunpack.c.l.b16 %v616
      %v665 = vunpack.c.l.b16 %v617
      %v666 = vunpack.c.l.b16 %v618
      %v667 = vunpack.c.l.b16 %v619
      %v668 = vunpack.c.l.b16 %v620
      %v669 = vunpack.c.l.b16 %v621
      %v670 = vunpack.c.l.b16 %v622
      %v671 = vunpack.c.l.b16 %v623
      %v672 = vunpack.c.l.b16 %v624
      %v673 = vunpack.c.l.b16 %v625
      %v674 = vunpack.c.l.b16 %v626
      %v675 = vunpack.c.l.b16 %v627
      %v676 = vunpack.c.l.b16 %v628
      %v677 = vunpack.c.l.b16 %v629
      %v678 = vunpack.c.l.b16 %v630
      %v679 = vunpack.c.l.b16 %v631
      %v680 = vpack.c.b16 %v665, %v664
      %v681 = vpack.c.b16 %v667, %v666
      %v682 = vpack.c.b16 %v669, %v668
      %v683 = vpack.c.b16 %v671, %v670
      %v684 = vpack.c.b16 %v673, %v672
      %v685 = vpack.c.b16 %v675, %v674
      %v686 = vpack.c.b16 %v677, %v676
      %v687 = vpack.c.b16 %v679, %v678
      %696 = vmatpush.bf16.msra.mxu0 %v687
      %697 = vmatpush.bf16.msra.mxu0 %v686
      %698 = vmatpush.bf16.msra.mxu0 %v685
      %699 = vmatpush.bf16.msra.mxu0 %v684
      %700 = vmatpush.bf16.msra.mxu0 %v683
      %701 = vmatpush.bf16.msra.mxu0 %v682
      %702 = vmatpush.bf16.msra.mxu0 %v681
      %703 = vmatpush.bf16.msra.mxu0 %v680
      %704 = vmatmul.bf16.gmra.mxu0 %v640
      %v705 = vpop.f32.mrf.mxu0
      %v706 = vadd.f32 0.0, %v705
      %v707 = vpop.f32.mrf.mxu0
      %v708 = vadd.f32 0.0, %v707
      %709 = vmatmul.bf16.gmra.mxu0 %v641
      %v710 = vpop.f32.mrf.mxu0
      %v711 = vadd.f32 0.0, %v710
      %v712 = vpop.f32.mrf.mxu0
      %v713 = vadd.f32 0.0, %v712
      %714 = vmatmul.bf16.gmra.mxu0 %v642
      %v715 = vpop.f32.mrf.mxu0
      %v716 = vadd.f32 0.0, %v715
      %v717 = vpop.f32.mrf.mxu0
      %v718 = vadd.f32 0.0, %v717
      %719 = vmatmul.bf16.gmra.mxu0 %v643
      %v720 = vpop.f32.mrf.mxu0
      %v721 = vadd.f32 0.0, %v720
      %v722 = vpop.f32.mrf.mxu0
      %v723 = vadd.f32 0.0, %v722
      %724 = vdwg.mxu0
      %v725 = vadd.f32 %v537, %v706
      %v726 = vadd.f32 %v539, %v708
      %v727 = vadd.f32 %v542, %v711
      %v728 = vadd.f32 %v544, %v713
      %v729 = vadd.f32 %v547, %v716
      %v730 = vadd.f32 %v549, %v718
      %v731 = vadd.f32 %v552, %v721
      %v732 = vadd.f32 %v554, %v723
      %s733 = sadd.s32 %s194, 1
      %s734 = smul.u32 %s733, 2
      %s735 = smul.addr %s734, 4
      %s736 = scalar_lea.vmem %s183, %s735
      %v737 = vld [vmem:[%s736] sm:$0xf]
      %v738 = vld [vmem:[%s736 + $0x8] sm:$0xf]
      %v739 = vld [vmem:[%s736 + $0x10] sm:$0xf]
      %v740 = vld [vmem:[%s736 + $0x18] sm:$0xf]
      %v741 = vld [vmem:[%s736 + $0x20] sm:$0xf]
      %v742 = vld [vmem:[%s736 + $0x28] sm:$0xf]
      %v743 = vld [vmem:[%s736 + $0x30] sm:$0xf]
      %v744 = vld [vmem:[%s736 + $0x38] sm:$0xf]
      %s745 = scalar_lea.vmem %s1, 192
      %v746 = vld [vmem:[%s745] sm:$0xf]
      %v747 = vld [vmem:[%s745 + $0x4] sm:$0xf]
      %v748 = vld [vmem:[%s745 + $0x8] sm:$0xf]
      %v749 = vld [vmem:[%s745 + $0xc] sm:$0xf]
      %v750 = vld [vmem:[%s745 + $0x10] sm:$0xf]
      %v751 = vld [vmem:[%s745 + $0x14] sm:$0xf]
      %v752 = vld [vmem:[%s745 + $0x18] sm:$0xf]
      %v753 = vld [vmem:[%s745 + $0x1c] sm:$0xf]
      %v754 = vld [vmem:[%s745 + $0x20] sm:$0xf]
      %v755 = vld [vmem:[%s745 + $0x24] sm:$0xf]
      %v756 = vld [vmem:[%s745 + $0x28] sm:$0xf]
      %v757 = vld [vmem:[%s745 + $0x2c] sm:$0xf]
      %v758 = vld [vmem:[%s745 + $0x30] sm:$0xf]
      %v759 = vld [vmem:[%s745 + $0x34] sm:$0xf]
      %v760 = vld [vmem:[%s745 + $0x38] sm:$0xf]
      %v761 = vld [vmem:[%s745 + $0x3c] sm:$0xf]
      %v770 = vunpack.c.l.b16 %v737
      %v771 = vunpack.c.l.b16 %v738
      %v772 = vunpack.c.l.b16 %v739
      %v773 = vunpack.c.l.b16 %v740
      %v774 = vunpack.c.l.b16 %v741
      %v775 = vunpack.c.l.b16 %v742
      %v776 = vunpack.c.l.b16 %v743
      %v777 = vunpack.c.l.b16 %v744
      %v778 = vpack.c.b16 %v771, %v770
      %v779 = vpack.c.b16 %v773, %v772
      %v780 = vpack.c.b16 %v775, %v774
      %v781 = vpack.c.b16 %v777, %v776
      %v802 = vunpack.c.l.b16 %v746
      %v803 = vunpack.c.l.b16 %v747
      %v804 = vunpack.c.l.b16 %v748
      %v805 = vunpack.c.l.b16 %v749
      %v806 = vunpack.c.l.b16 %v750
      %v807 = vunpack.c.l.b16 %v751
      %v808 = vunpack.c.l.b16 %v752
      %v809 = vunpack.c.l.b16 %v753
      %v810 = vunpack.c.l.b16 %v754
      %v811 = vunpack.c.l.b16 %v755
      %v812 = vunpack.c.l.b16 %v756
      %v813 = vunpack.c.l.b16 %v757
      %v814 = vunpack.c.l.b16 %v758
      %v815 = vunpack.c.l.b16 %v759
      %v816 = vunpack.c.l.b16 %v760
      %v817 = vunpack.c.l.b16 %v761
      %v818 = vpack.c.b16 %v803, %v802
      %v819 = vpack.c.b16 %v805, %v804
      %v820 = vpack.c.b16 %v807, %v806
      %v821 = vpack.c.b16 %v809, %v808
      %v822 = vpack.c.b16 %v811, %v810
      %v823 = vpack.c.b16 %v813, %v812
      %v824 = vpack.c.b16 %v815, %v814
      %v825 = vpack.c.b16 %v817, %v816
      %834 = vmatpush.bf16.msra.mxu0 %v825
      %835 = vmatpush.bf16.msra.mxu0 %v824
      %836 = vmatpush.bf16.msra.mxu0 %v823
      %837 = vmatpush.bf16.msra.mxu0 %v822
      %838 = vmatpush.bf16.msra.mxu0 %v821
      %839 = vmatpush.bf16.msra.mxu0 %v820
      %840 = vmatpush.bf16.msra.mxu0 %v819
      %841 = vmatpush.bf16.msra.mxu0 %v818
      %842 = vmatmul.bf16.gmra.mxu0 %v778
      %v843 = vpop.f32.mrf.mxu0
      %v844 = vadd.f32 0.0, %v843
      %v845 = vpop.f32.mrf.mxu0
      %v846 = vadd.f32 0.0, %v845
      %847 = vmatmul.bf16.gmra.mxu0 %v779
      %v848 = vpop.f32.mrf.mxu0
      %v849 = vadd.f32 0.0, %v848
      %v850 = vpop.f32.mrf.mxu0
      %v851 = vadd.f32 0.0, %v850
      %852 = vmatmul.bf16.gmra.mxu0 %v780
      %v853 = vpop.f32.mrf.mxu0
      %v854 = vadd.f32 0.0, %v853
      %v855 = vpop.f32.mrf.mxu0
      %v856 = vadd.f32 0.0, %v855
      %857 = vmatmul.bf16.gmra.mxu0 %v781
      %v858 = vpop.f32.mrf.mxu0
      %v859 = vadd.f32 0.0, %v858
      %v860 = vpop.f32.mrf.mxu0
      %v861 = vadd.f32 0.0, %v860
      %862 = vdwg.mxu0
      %v863 = vadd.f32 %v725, %v844
      %v864 = vadd.f32 %v726, %v846
      %v865 = vadd.f32 %v727, %v849
      %v866 = vadd.f32 %v728, %v851
      %v867 = vadd.f32 %v729, %v854
      %v868 = vadd.f32 %v730, %v856
      %v869 = vadd.f32 %v731, %v859
      %v870 = vadd.f32 %v732, %v861
      %v871 = vld [vmem:[%s736] sm:$0xf]
      %v872 = vld [vmem:[%s736 + $0x4] sm:$0x1]
      %v873 = vld [vmem:[%s736 + $0x8] sm:$0xf]
      %v874 = vld [vmem:[%s736 + $0xc] sm:$0x1]
      %v875 = vld [vmem:[%s736 + $0x10] sm:$0xf]
      %v876 = vld [vmem:[%s736 + $0x14] sm:$0x1]
      %v877 = vld [vmem:[%s736 + $0x18] sm:$0xf]
      %v878 = vld [vmem:[%s736 + $0x1c] sm:$0x1]
      %v879 = vld [vmem:[%s736 + $0x20] sm:$0xf]
      %v880 = vld [vmem:[%s736 + $0x24] sm:$0x1]
      %v881 = vld [vmem:[%s736 + $0x28] sm:$0xf]
      %v882 = vld [vmem:[%s736 + $0x2c] sm:$0x1]
      %v883 = vld [vmem:[%s736 + $0x30] sm:$0xf]
      %v884 = vld [vmem:[%s736 + $0x34] sm:$0x1]
      %v885 = vld [vmem:[%s736 + $0x38] sm:$0xf]
      %v886 = vld [vmem:[%s736 + $0x3c] sm:$0x1]
      %v888 = vshrl.u32 %v871, 16
      %v890 = vrot.slane %v888, 4
      %v891 = vshll.u32 %v871, 16
      %v893 = vrot.slane %v891, 5
      %v894 = vor.u32 %v890, %v893
      %v895 = vrot.slane %v894, 4
      %v897 = vshll.u32 %v872, 16
      %v899 = vrot.slane %v897, 5
      %v900 = vsel %vm232, %v895, %v899
      %v902 = vshrl.u32 %v873, 16
      %v904 = vrot.slane %v902, 4
      %v905 = vshll.u32 %v873, 16
      %v907 = vrot.slane %v905, 5
      %v908 = vor.u32 %v904, %v907
      %v909 = vrot.slane %v908, 4
      %v911 = vshll.u32 %v874, 16
      %v913 = vrot.slane %v911, 5
      %v914 = vsel %vm232, %v909, %v913
      %v916 = vshrl.u32 %v875, 16
      %v918 = vrot.slane %v916, 4
      %v919 = vshll.u32 %v875, 16
      %v921 = vrot.slane %v919, 5
      %v922 = vor.u32 %v918, %v921
      %v923 = vrot.slane %v922, 4
      %v925 = vshll.u32 %v876, 16
      %v927 = vrot.slane %v925, 5
      %v928 = vsel %vm232, %v923, %v927
      %v930 = vshrl.u32 %v877, 16
      %v932 = vrot.slane %v930, 4
      %v933 = vshll.u32 %v877, 16
      %v935 = vrot.slane %v933, 5
      %v936 = vor.u32 %v932, %v935
      %v937 = vrot.slane %v936, 4
      %v939 = vshll.u32 %v878, 16
      %v941 = vrot.slane %v939, 5
      %v942 = vsel %vm232, %v937, %v941
      %v944 = vshrl.u32 %v879, 16
      %v946 = vrot.slane %v944, 4
      %v947 = vshll.u32 %v879, 16
      %v949 = vrot.slane %v947, 5
      %v950 = vor.u32 %v946, %v949
      %v951 = vrot.slane %v950, 4
      %v953 = vshll.u32 %v880, 16
      %v955 = vrot.slane %v953, 5
      %v956 = vsel %vm232, %v951, %v955
      %v958 = vshrl.u32 %v881, 16
      %v960 = vrot.slane %v958, 4
      %v961 = vshll.u32 %v881, 16
      %v963 = vrot.slane %v961, 5
      %v964 = vor.u32 %v960, %v963
      %v965 = vrot.slane %v964, 4
      %v967 = vshll.u32 %v882, 16
      %v969 = vrot.slane %v967, 5
      %v970 = vsel %vm232, %v965, %v969
      %v972 = vshrl.u32 %v883, 16
      %v974 = vrot.slane %v972, 4
      %v975 = vshll.u32 %v883, 16
      %v977 = vrot.slane %v975, 5
      %v978 = vor.u32 %v974, %v977
      %v979 = vrot.slane %v978, 4
      %v981 = vshll.u32 %v884, 16
      %v983 = vrot.slane %v981, 5
      %v984 = vsel %vm232, %v979, %v983
      %v986 = vshrl.u32 %v885, 16
      %v988 = vrot.slane %v986, 4
      %v989 = vshll.u32 %v885, 16
      %v991 = vrot.slane %v989, 5
      %v992 = vor.u32 %v988, %v991
      %v993 = vrot.slane %v992, 4
      %v995 = vshll.u32 %v886, 16
      %v997 = vrot.slane %v995, 5
      %v998 = vsel %vm232, %v993, %v997
      %s999 = scalar_lea.vmem %s1, 256
      %v1000 = vld [vmem:[%s999] sm:$0xf]
      %v1001 = vld [vmem:[%s999 + $0x4] sm:$0xf]
      %v1002 = vld [vmem:[%s999 + $0x8] sm:$0xf]
      %v1003 = vld [vmem:[%s999 + $0xc] sm:$0xf]
      %v1004 = vld [vmem:[%s999 + $0x10] sm:$0xf]
      %v1005 = vld [vmem:[%s999 + $0x14] sm:$0xf]
      %v1006 = vld [vmem:[%s999 + $0x18] sm:$0xf]
      %v1007 = vld [vmem:[%s999 + $0x1c] sm:$0xf]
      %v1008 = vld [vmem:[%s999 + $0x20] sm:$0xf]
      %v1009 = vld [vmem:[%s999 + $0x24] sm:$0xf]
      %v1010 = vld [vmem:[%s999 + $0x28] sm:$0xf]
      %v1011 = vld [vmem:[%s999 + $0x2c] sm:$0xf]
      %v1012 = vld [vmem:[%s999 + $0x30] sm:$0xf]
      %v1013 = vld [vmem:[%s999 + $0x34] sm:$0xf]
      %v1014 = vld [vmem:[%s999 + $0x38] sm:$0xf]
      %v1015 = vld [vmem:[%s999 + $0x3c] sm:$0xf]
      %v1016 = vunpack.c.l.b16 %v900
      %v1017 = vunpack.c.l.b16 %v914
      %v1018 = vunpack.c.l.b16 %v928
      %v1019 = vunpack.c.l.b16 %v942
      %v1020 = vunpack.c.l.b16 %v956
      %v1021 = vunpack.c.l.b16 %v970
      %v1022 = vunpack.c.l.b16 %v984
      %v1023 = vunpack.c.l.b16 %v998
      %v1024 = vpack.c.b16 %v1017, %v1016
      %v1025 = vpack.c.b16 %v1019, %v1018
      %v1026 = vpack.c.b16 %v1021, %v1020
      %v1027 = vpack.c.b16 %v1023, %v1022
      %v1048 = vunpack.c.l.b16 %v1000
      %v1049 = vunpack.c.l.b16 %v1001
      %v1050 = vunpack.c.l.b16 %v1002
      %v1051 = vunpack.c.l.b16 %v1003
      %v1052 = vunpack.c.l.b16 %v1004
      %v1053 = vunpack.c.l.b16 %v1005
      %v1054 = vunpack.c.l.b16 %v1006
      %v1055 = vunpack.c.l.b16 %v1007
      %v1056 = vunpack.c.l.b16 %v1008
      %v1057 = vunpack.c.l.b16 %v1009
      %v1058 = vunpack.c.l.b16 %v1010
      %v1059 = vunpack.c.l.b16 %v1011
      %v1060 = vunpack.c.l.b16 %v1012
      %v1061 = vunpack.c.l.b16 %v1013
      %v1062 = vunpack.c.l.b16 %v1014
      %v1063 = vunpack.c.l.b16 %v1015
      %v1064 = vpack.c.b16 %v1049, %v1048
      %v1065 = vpack.c.b16 %v1051, %v1050
      %v1066 = vpack.c.b16 %v1053, %v1052
      %v1067 = vpack.c.b16 %v1055, %v1054
      %v1068 = vpack.c.b16 %v1057, %v1056
      %v1069 = vpack.c.b16 %v1059, %v1058
      %v1070 = vpack.c.b16 %v1061, %v1060
      %v1071 = vpack.c.b16 %v1063, %v1062
      %1080 = vmatpush.bf16.msra.mxu0 %v1071
      %1081 = vmatpush.bf16.msra.mxu0 %v1070
      %1082 = vmatpush.bf16.msra.mxu0 %v1069
      %1083 = vmatpush.bf16.msra.mxu0 %v1068
      %1084 = vmatpush.bf16.msra.mxu0 %v1067
      %1085 = vmatpush.bf16.msra.mxu0 %v1066
      %1086 = vmatpush.bf16.msra.mxu0 %v1065
      %1087 = vmatpush.bf16.msra.mxu0 %v1064
      %1088 = vmatmul.bf16.gmra.mxu0 %v1024
      %v1089 = vpop.f32.mrf.mxu0
      %v1090 = vadd.f32 0.0, %v1089
      %v1091 = vpop.f32.mrf.mxu0
      %v1092 = vadd.f32 0.0, %v1091
      %1093 = vmatmul.bf16.gmra.mxu0 %v1025
      %v1094 = vpop.f32.mrf.mxu0
      %v1095 = vadd.f32 0.0, %v1094
      %v1096 = vpop.f32.mrf.mxu0
      %v1097 = vadd.f32 0.0, %v1096
      %1098 = vmatmul.bf16.gmra.mxu0 %v1026
      %v1099 = vpop.f32.mrf.mxu0
      %v1100 = vadd.f32 0.0, %v1099
      %v1101 = vpop.f32.mrf.mxu0
      %v1102 = vadd.f32 0.0, %v1101
      %1103 = vmatmul.bf16.gmra.mxu0 %v1027
      %v1104 = vpop.f32.mrf.mxu0
      %v1105 = vadd.f32 0.0, %v1104
      %v1106 = vpop.f32.mrf.mxu0
      %v1107 = vadd.f32 0.0, %v1106
      %1108 = vdwg.mxu0
      %v1109 = vadd.f32 %v863, %v1090
      %v1110 = vadd.f32 %v864, %v1092
      %v1111 = vadd.f32 %v865, %v1095
      %v1112 = vadd.f32 %v866, %v1097
      %v1113 = vadd.f32 %v867, %v1100
      %v1114 = vadd.f32 %v868, %v1102
      %v1115 = vadd.f32 %v869, %v1105
      %v1116 = vadd.f32 %v870, %v1107
      %v1117 = vld [vmem:[%s736] sm:$0xe]
      %v1118 = vld [vmem:[%s736 + $0x8] sm:$0xe]
      %v1119 = vld [vmem:[%s736 + $0x10] sm:$0xe]
      %v1120 = vld [vmem:[%s736 + $0x18] sm:$0xe]
      %v1121 = vld [vmem:[%s736 + $0x20] sm:$0xe]
      %v1122 = vld [vmem:[%s736 + $0x28] sm:$0xe]
      %v1123 = vld [vmem:[%s736 + $0x30] sm:$0xe]
      %v1124 = vld [vmem:[%s736 + $0x38] sm:$0xe]
      %v1141 = vrot.slane %v1117, 5
      %v1142 = vrot.slane %v1141, 4
      %v1143 = vrot.slane %v872, 5
      %v1144 = vsel %vm582, %v1142, %v1143
      %v1145 = vrot.slane %v1118, 5
      %v1146 = vrot.slane %v1145, 4
      %v1147 = vrot.slane %v874, 5
      %v1148 = vsel %vm582, %v1146, %v1147
      %v1149 = vrot.slane %v1119, 5
      %v1150 = vrot.slane %v1149, 4
      %v1151 = vrot.slane %v876, 5
      %v1152 = vsel %vm582, %v1150, %v1151
      %v1153 = vrot.slane %v1120, 5
      %v1154 = vrot.slane %v1153, 4
      %v1155 = vrot.slane %v878, 5
      %v1156 = vsel %vm582, %v1154, %v1155
      %v1157 = vrot.slane %v1121, 5
      %v1158 = vrot.slane %v1157, 4
      %v1159 = vrot.slane %v880, 5
      %v1160 = vsel %vm582, %v1158, %v1159
      %v1161 = vrot.slane %v1122, 5
      %v1162 = vrot.slane %v1161, 4
      %v1163 = vrot.slane %v882, 5
      %v1164 = vsel %vm582, %v1162, %v1163
      %v1165 = vrot.slane %v1123, 5
      %v1166 = vrot.slane %v1165, 4
      %v1167 = vrot.slane %v884, 5
      %v1168 = vsel %vm582, %v1166, %v1167
      %v1169 = vrot.slane %v1124, 5
      %v1170 = vrot.slane %v1169, 4
      %v1171 = vrot.slane %v886, 5
      %v1172 = vsel %vm582, %v1170, %v1171
      %s1173 = scalar_lea.vmem %s1, 320
      %v1174 = vld [vmem:[%s1173] sm:$0xf]
      %v1175 = vld [vmem:[%s1173 + $0x4] sm:$0xf]
      %v1176 = vld [vmem:[%s1173 + $0x8] sm:$0xf]
      %v1177 = vld [vmem:[%s1173 + $0xc] sm:$0xf]
      %v1178 = vld [vmem:[%s1173 + $0x10] sm:$0xf]
      %v1179 = vld [vmem:[%s1173 + $0x14] sm:$0xf]
      %v1180 = vld [vmem:[%s1173 + $0x18] sm:$0xf]
      %v1181 = vld [vmem:[%s1173 + $0x1c] sm:$0xf]
      %v1182 = vld [vmem:[%s1173 + $0x20] sm:$0xf]
      %v1183 = vld [vmem:[%s1173 + $0x24] sm:$0xf]
      %v1184 = vld [vmem:[%s1173 + $0x28] sm:$0xf]
      %v1185 = vld [vmem:[%s1173 + $0x2c] sm:$0xf]
      %v1186 = vld [vmem:[%s1173 + $0x30] sm:$0xf]
      %v1187 = vld [vmem:[%s1173 + $0x34] sm:$0xf]
      %v1188 = vld [vmem:[%s1173 + $0x38] sm:$0xf]
      %v1189 = vld [vmem:[%s1173 + $0x3c] sm:$0xf]
      %v1190 = vunpack.c.l.b16 %v1144
      %v1191 = vunpack.c.l.b16 %v1148
      %v1192 = vunpack.c.l.b16 %v1152
      %v1193 = vunpack.c.l.b16 %v1156
      %v1194 = vunpack.c.l.b16 %v1160
      %v1195 = vunpack.c.l.b16 %v1164
      %v1196 = vunpack.c.l.b16 %v1168
      %v1197 = vunpack.c.l.b16 %v1172
      %v1198 = vpack.c.b16 %v1191, %v1190
      %v1199 = vpack.c.b16 %v1193, %v1192
      %v1200 = vpack.c.b16 %v1195, %v1194
      %v1201 = vpack.c.b16 %v1197, %v1196
      %v1222 = vunpack.c.l.b16 %v1174
      %v1223 = vunpack.c.l.b16 %v1175
      %v1224 = vunpack.c.l.b16 %v1176
      %v1225 = vunpack.c.l.b16 %v1177
      %v1226 = vunpack.c.l.b16 %v1178
      %v1227 = vunpack.c.l.b16 %v1179
      %v1228 = vunpack.c.l.b16 %v1180
      %v1229 = vunpack.c.l.b16 %v1181
      %v1230 = vunpack.c.l.b16 %v1182
      %v1231 = vunpack.c.l.b16 %v1183
      %v1232 = vunpack.c.l.b16 %v1184
      %v1233 = vunpack.c.l.b16 %v1185
      %v1234 = vunpack.c.l.b16 %v1186
      %v1235 = vunpack.c.l.b16 %v1187
      %v1236 = vunpack.c.l.b16 %v1188
      %v1237 = vunpack.c.l.b16 %v1189
      %v1238 = vpack.c.b16 %v1223, %v1222
      %v1239 = vpack.c.b16 %v1225, %v1224
      %v1240 = vpack.c.b16 %v1227, %v1226
      %v1241 = vpack.c.b16 %v1229, %v1228
      %v1242 = vpack.c.b16 %v1231, %v1230
      %v1243 = vpack.c.b16 %v1233, %v1232
      %v1244 = vpack.c.b16 %v1235, %v1234
      %v1245 = vpack.c.b16 %v1237, %v1236
      %1254 = vmatpush.bf16.msra.mxu0 %v1245
      %1255 = vmatpush.bf16.msra.mxu0 %v1244
      %1256 = vmatpush.bf16.msra.mxu0 %v1243
      %1257 = vmatpush.bf16.msra.mxu0 %v1242
      %1258 = vmatpush.bf16.msra.mxu0 %v1241
      %1259 = vmatpush.bf16.msra.mxu0 %v1240
      %1260 = vmatpush.bf16.msra.mxu0 %v1239
      %1261 = vmatpush.bf16.msra.mxu0 %v1238
      %1262 = vmatmul.bf16.gmra.mxu0 %v1198
      %v1263 = vpop.f32.mrf.mxu0
      %v1264 = vadd.f32 0.0, %v1263
      %v1265 = vpop.f32.mrf.mxu0
      %v1266 = vadd.f32 0.0, %v1265
      %1267 = vmatmul.bf16.gmra.mxu0 %v1199
      %v1268 = vpop.f32.mrf.mxu0
      %v1269 = vadd.f32 0.0, %v1268
      %v1270 = vpop.f32.mrf.mxu0
      %v1271 = vadd.f32 0.0, %v1270
      %1272 = vmatmul.bf16.gmra.mxu0 %v1200
      %v1273 = vpop.f32.mrf.mxu0
      %v1274 = vadd.f32 0.0, %v1273
      %v1275 = vpop.f32.mrf.mxu0
      %v1276 = vadd.f32 0.0, %v1275
      %1277 = vmatmul.bf16.gmra.mxu0 %v1201
      %v1278 = vpop.f32.mrf.mxu0
      %v1279 = vadd.f32 0.0, %v1278
      %v1280 = vpop.f32.mrf.mxu0
      %v1281 = vadd.f32 0.0, %v1280
      %1282 = vdwg.mxu0
      %v1283 = vadd.f32 %v1109, %v1264
      %v1284 = vadd.f32 %v1110, %v1266
      %v1285 = vadd.f32 %v1111, %v1269
      %v1286 = vadd.f32 %v1112, %v1271
      %v1287 = vadd.f32 %v1113, %v1274
      %v1288 = vadd.f32 %v1114, %v1276
      %v1289 = vadd.f32 %v1115, %v1279
      %v1290 = vadd.f32 %v1116, %v1281
      %s1291 = sadd.s32 %s194, 2
      %s1292 = smul.u32 %s1291, 2
      %s1293 = smul.addr %s1292, 4
      %s1294 = scalar_lea.vmem %s183, %s1293
      %v1295 = vld [vmem:[%s1294] sm:$0xf]
      %v1296 = vld [vmem:[%s1294 + $0x8] sm:$0xf]
      %v1297 = vld [vmem:[%s1294 + $0x10] sm:$0xf]
      %v1298 = vld [vmem:[%s1294 + $0x18] sm:$0xf]
      %v1299 = vld [vmem:[%s1294 + $0x20] sm:$0xf]
      %v1300 = vld [vmem:[%s1294 + $0x28] sm:$0xf]
      %v1301 = vld [vmem:[%s1294 + $0x30] sm:$0xf]
      %v1302 = vld [vmem:[%s1294 + $0x38] sm:$0xf]
      %s1303 = scalar_lea.vmem %s1, 384
      %v1304 = vld [vmem:[%s1303] sm:$0xf]
      %v1305 = vld [vmem:[%s1303 + $0x4] sm:$0xf]
      %v1306 = vld [vmem:[%s1303 + $0x8] sm:$0xf]
      %v1307 = vld [vmem:[%s1303 + $0xc] sm:$0xf]
      %v1308 = vld [vmem:[%s1303 + $0x10] sm:$0xf]
      %v1309 = vld [vmem:[%s1303 + $0x14] sm:$0xf]
      %v1310 = vld [vmem:[%s1303 + $0x18] sm:$0xf]
      %v1311 = vld [vmem:[%s1303 + $0x1c] sm:$0xf]
      %v1312 = vld [vmem:[%s1303 + $0x20] sm:$0xf]
      %v1313 = vld [vmem:[%s1303 + $0x24] sm:$0xf]
      %v1314 = vld [vmem:[%s1303 + $0x28] sm:$0xf]
      %v1315 = vld [vmem:[%s1303 + $0x2c] sm:$0xf]
      %v1316 = vld [vmem:[%s1303 + $0x30] sm:$0xf]
      %v1317 = vld [vmem:[%s1303 + $0x34] sm:$0xf]
      %v1318 = vld [vmem:[%s1303 + $0x38] sm:$0xf]
      %v1319 = vld [vmem:[%s1303 + $0x3c] sm:$0xf]
      %v1328 = vunpack.c.l.b16 %v1295
      %v1329 = vunpack.c.l.b16 %v1296
      %v1330 = vunpack.c.l.b16 %v1297
      %v1331 = vunpack.c.l.b16 %v1298
      %v1332 = vunpack.c.l.b16 %v1299
      %v1333 = vunpack.c.l.b16 %v1300
      %v1334 = vunpack.c.l.b16 %v1301
      %v1335 = vunpack.c.l.b16 %v1302
      %v1336 = vpack.c.b16 %v1329, %v1328
      %v1337 = vpack.c.b16 %v1331, %v1330
      %v1338 = vpack.c.b16 %v1333, %v1332
      %v1339 = vpack.c.b16 %v1335, %v1334
      %v1360 = vunpack.c.l.b16 %v1304
      %v1361 = vunpack.c.l.b16 %v1305
      %v1362 = vunpack.c.l.b16 %v1306
      %v1363 = vunpack.c.l.b16 %v1307
      %v1364 = vunpack.c.l.b16 %v1308
      %v1365 = vunpack.c.l.b16 %v1309
      %v1366 = vunpack.c.l.b16 %v1310
      %v1367 = vunpack.c.l.b16 %v1311
      %v1368 = vunpack.c.l.b16 %v1312
      %v1369 = vunpack.c.l.b16 %v1313
      %v1370 = vunpack.c.l.b16 %v1314
      %v1371 = vunpack.c.l.b16 %v1315
      %v1372 = vunpack.c.l.b16 %v1316
      %v1373 = vunpack.c.l.b16 %v1317
      %v1374 = vunpack.c.l.b16 %v1318
      %v1375 = vunpack.c.l.b16 %v1319
      %v1376 = vpack.c.b16 %v1361, %v1360
      %v1377 = vpack.c.b16 %v1363, %v1362
      %v1378 = vpack.c.b16 %v1365, %v1364
      %v1379 = vpack.c.b16 %v1367, %v1366
      %v1380 = vpack.c.b16 %v1369, %v1368
      %v1381 = vpack.c.b16 %v1371, %v1370
      %v1382 = vpack.c.b16 %v1373, %v1372
      %v1383 = vpack.c.b16 %v1375, %v1374
      %1392 = vmatpush.bf16.msra.mxu0 %v1383
      %1393 = vmatpush.bf16.msra.mxu0 %v1382
      %1394 = vmatpush.bf16.msra.mxu0 %v1381
      %1395 = vmatpush.bf16.msra.mxu0 %v1380
      %1396 = vmatpush.bf16.msra.mxu0 %v1379
      %1397 = vmatpush.bf16.msra.mxu0 %v1378
      %1398 = vmatpush.bf16.msra.mxu0 %v1377
      %1399 = vmatpush.bf16.msra.mxu0 %v1376
      %1400 = vmatmul.bf16.gmra.mxu0 %v1336
      %v1401 = vpop.f32.mrf.mxu0
      %v1402 = vadd.f32 0.0, %v1401
      %v1403 = vpop.f32.mrf.mxu0
      %v1404 = vadd.f32 0.0, %v1403
      %1405 = vmatmul.bf16.gmra.mxu0 %v1337
      %v1406 = vpop.f32.mrf.mxu0
      %v1407 = vadd.f32 0.0, %v1406
      %v1408 = vpop.f32.mrf.mxu0
      %v1409 = vadd.f32 0.0, %v1408
      %1410 = vmatmul.bf16.gmra.mxu0 %v1338
      %v1411 = vpop.f32.mrf.mxu0
      %v1412 = vadd.f32 0.0, %v1411
      %v1413 = vpop.f32.mrf.mxu0
      %v1414 = vadd.f32 0.0, %v1413
      %1415 = vmatmul.bf16.gmra.mxu0 %v1339
      %v1416 = vpop.f32.mrf.mxu0
      %v1417 = vadd.f32 0.0, %v1416
      %v1418 = vpop.f32.mrf.mxu0
      %v1419 = vadd.f32 0.0, %v1418
      %1420 = vdwg.mxu0
      %v1421 = vadd.f32 %v1283, %v1402
      %v1422 = vadd.f32 %v1284, %v1404
      %v1423 = vadd.f32 %v1285, %v1407
      %v1424 = vadd.f32 %v1286, %v1409
      %v1425 = vadd.f32 %v1287, %v1412
      %v1426 = vadd.f32 %v1288, %v1414
      %v1427 = vadd.f32 %v1289, %v1417
      %v1428 = vadd.f32 %v1290, %v1419
      %v1429 = vld [vmem:[%s1294] sm:$0xf]
      %v1430 = vld [vmem:[%s1294 + $0x4] sm:$0x1]
      %v1431 = vld [vmem:[%s1294 + $0x8] sm:$0xf]
      %v1432 = vld [vmem:[%s1294 + $0xc] sm:$0x1]
      %v1433 = vld [vmem:[%s1294 + $0x10] sm:$0xf]
      %v1434 = vld [vmem:[%s1294 + $0x14] sm:$0x1]
      %v1435 = vld [vmem:[%s1294 + $0x18] sm:$0xf]
      %v1436 = vld [vmem:[%s1294 + $0x1c] sm:$0x1]
      %v1437 = vld [vmem:[%s1294 + $0x20] sm:$0xf]
      %v1438 = vld [vmem:[%s1294 + $0x24] sm:$0x1]
      %v1439 = vld [vmem:[%s1294 + $0x28] sm:$0xf]
      %v1440 = vld [vmem:[%s1294 + $0x2c] sm:$0x1]
      %v1441 = vld [vmem:[%s1294 + $0x30] sm:$0xf]
      %v1442 = vld [vmem:[%s1294 + $0x34] sm:$0x1]
      %v1443 = vld [vmem:[%s1294 + $0x38] sm:$0xf]
      %v1444 = vld [vmem:[%s1294 + $0x3c] sm:$0x1]
      %v1446 = vshrl.u32 %v1429, 16
      %v1448 = vrot.slane %v1446, 4
      %v1449 = vshll.u32 %v1429, 16
      %v1451 = vrot.slane %v1449, 5
      %v1452 = vor.u32 %v1448, %v1451
      %v1453 = vrot.slane %v1452, 4
      %v1455 = vshll.u32 %v1430, 16
      %v1457 = vrot.slane %v1455, 5
      %v1458 = vsel %vm232, %v1453, %v1457
      %v1460 = vshrl.u32 %v1431, 16
      %v1462 = vrot.slane %v1460, 4
      %v1463 = vshll.u32 %v1431, 16
      %v1465 = vrot.slane %v1463, 5
      %v1466 = vor.u32 %v1462, %v1465
      %v1467 = vrot.slane %v1466, 4
      %v1469 = vshll.u32 %v1432, 16
      %v1471 = vrot.slane %v1469, 5
      %v1472 = vsel %vm232, %v1467, %v1471
      %v1474 = vshrl.u32 %v1433, 16
      %v1476 = vrot.slane %v1474, 4
      %v1477 = vshll.u32 %v1433, 16
      %v1479 = vrot.slane %v1477, 5
      %v1480 = vor.u32 %v1476, %v1479
      %v1481 = vrot.slane %v1480, 4
      %v1483 = vshll.u32 %v1434, 16
      %v1485 = vrot.slane %v1483, 5
      %v1486 = vsel %vm232, %v1481, %v1485
      %v1488 = vshrl.u32 %v1435, 16
      %v1490 = vrot.slane %v1488, 4
      %v1491 = vshll.u32 %v1435, 16
      %v1493 = vrot.slane %v1491, 5
      %v1494 = vor.u32 %v1490, %v1493
      %v1495 = vrot.slane %v1494, 4
      %v1497 = vshll.u32 %v1436, 16
      %v1499 = vrot.slane %v1497, 5
      %v1500 = vsel %vm232, %v1495, %v1499
      %v1502 = vshrl.u32 %v1437, 16
      %v1504 = vrot.slane %v1502, 4
      %v1505 = vshll.u32 %v1437, 16
      %v1507 = vrot.slane %v1505, 5
      %v1508 = vor.u32 %v1504, %v1507
      %v1509 = vrot.slane %v1508, 4
      %v1511 = vshll.u32 %v1438, 16
      %v1513 = vrot.slane %v1511, 5
      %v1514 = vsel %vm232, %v1509, %v1513
      %v1516 = vshrl.u32 %v1439, 16
      %v1518 = vrot.slane %v1516, 4
      %v1519 = vshll.u32 %v1439, 16
      %v1521 = vrot.slane %v1519, 5
      %v1522 = vor.u32 %v1518, %v1521
      %v1523 = vrot.slane %v1522, 4
      %v1525 = vshll.u32 %v1440, 16
      %v1527 = vrot.slane %v1525, 5
      %v1528 = vsel %vm232, %v1523, %v1527
      %v1530 = vshrl.u32 %v1441, 16
      %v1532 = vrot.slane %v1530, 4
      %v1533 = vshll.u32 %v1441, 16
      %v1535 = vrot.slane %v1533, 5
      %v1536 = vor.u32 %v1532, %v1535
      %v1537 = vrot.slane %v1536, 4
      %v1539 = vshll.u32 %v1442, 16
      %v1541 = vrot.slane %v1539, 5
      %v1542 = vsel %vm232, %v1537, %v1541
      %v1544 = vshrl.u32 %v1443, 16
      %v1546 = vrot.slane %v1544, 4
      %v1547 = vshll.u32 %v1443, 16
      %v1549 = vrot.slane %v1547, 5
      %v1550 = vor.u32 %v1546, %v1549
      %v1551 = vrot.slane %v1550, 4
      %v1553 = vshll.u32 %v1444, 16
      %v1555 = vrot.slane %v1553, 5
      %v1556 = vsel %vm232, %v1551, %v1555
      %s1557 = scalar_lea.vmem %s1, 448
      %v1558 = vld [vmem:[%s1557] sm:$0xf]
      %v1559 = vld [vmem:[%s1557 + $0x4] sm:$0xf]
      %v1560 = vld [vmem:[%s1557 + $0x8] sm:$0xf]
      %v1561 = vld [vmem:[%s1557 + $0xc] sm:$0xf]
      %v1562 = vld [vmem:[%s1557 + $0x10] sm:$0xf]
      %v1563 = vld [vmem:[%s1557 + $0x14] sm:$0xf]
      %v1564 = vld [vmem:[%s1557 + $0x18] sm:$0xf]
      %v1565 = vld [vmem:[%s1557 + $0x1c] sm:$0xf]
      %v1566 = vld [vmem:[%s1557 + $0x20] sm:$0xf]
      %v1567 = vld [vmem:[%s1557 + $0x24] sm:$0xf]
      %v1568 = vld [vmem:[%s1557 + $0x28] sm:$0xf]
      %v1569 = vld [vmem:[%s1557 + $0x2c] sm:$0xf]
      %v1570 = vld [vmem:[%s1557 + $0x30] sm:$0xf]
      %v1571 = vld [vmem:[%s1557 + $0x34] sm:$0xf]
      %v1572 = vld [vmem:[%s1557 + $0x38] sm:$0xf]
      %v1573 = vld [vmem:[%s1557 + $0x3c] sm:$0xf]
      %v1574 = vunpack.c.l.b16 %v1458
      %v1575 = vunpack.c.l.b16 %v1472
      %v1576 = vunpack.c.l.b16 %v1486
      %v1577 = vunpack.c.l.b16 %v1500
      %v1578 = vunpack.c.l.b16 %v1514
      %v1579 = vunpack.c.l.b16 %v1528
      %v1580 = vunpack.c.l.b16 %v1542
      %v1581 = vunpack.c.l.b16 %v1556
      %v1582 = vpack.c.b16 %v1575, %v1574
      %v1583 = vpack.c.b16 %v1577, %v1576
      %v1584 = vpack.c.b16 %v1579, %v1578
      %v1585 = vpack.c.b16 %v1581, %v1580
      %v1606 = vunpack.c.l.b16 %v1558
      %v1607 = vunpack.c.l.b16 %v1559
      %v1608 = vunpack.c.l.b16 %v1560
      %v1609 = vunpack.c.l.b16 %v1561
      %v1610 = vunpack.c.l.b16 %v1562
      %v1611 = vunpack.c.l.b16 %v1563
      %v1612 = vunpack.c.l.b16 %v1564
      %v1613 = vunpack.c.l.b16 %v1565
      %v1614 = vunpack.c.l.b16 %v1566
      %v1615 = vunpack.c.l.b16 %v1567
      %v1616 = vunpack.c.l.b16 %v1568
      %v1617 = vunpack.c.l.b16 %v1569
      %v1618 = vunpack.c.l.b16 %v1570
      %v1619 = vunpack.c.l.b16 %v1571
      %v1620 = vunpack.c.l.b16 %v1572
      %v1621 = vunpack.c.l.b16 %v1573
      %v1622 = vpack.c.b16 %v1607, %v1606
      %v1623 = vpack.c.b16 %v1609, %v1608
      %v1624 = vpack.c.b16 %v1611, %v1610
      %v1625 = vpack.c.b16 %v1613, %v1612
      %v1626 = vpack.c.b16 %v1615, %v1614
      %v1627 = vpack.c.b16 %v1617, %v1616
      %v1628 = vpack.c.b16 %v1619, %v1618
      %v1629 = vpack.c.b16 %v1621, %v1620
      %1638 = vmatpush.bf16.msra.mxu0 %v1629
      %1639 = vmatpush.bf16.msra.mxu0 %v1628
      %1640 = vmatpush.bf16.msra.mxu0 %v1627
      %1641 = vmatpush.bf16.msra.mxu0 %v1626
      %1642 = vmatpush.bf16.msra.mxu0 %v1625
      %1643 = vmatpush.bf16.msra.mxu0 %v1624
      %1644 = vmatpush.bf16.msra.mxu0 %v1623
      %1645 = vmatpush.bf16.msra.mxu0 %v1622
      %1646 = vmatmul.bf16.gmra.mxu0 %v1582
      %v1647 = vpop.f32.mrf.mxu0
      %v1648 = vadd.f32 0.0, %v1647
      %v1649 = vpop.f32.mrf.mxu0
      %v1650 = vadd.f32 0.0, %v1649
      %1651 = vmatmul.bf16.gmra.mxu0 %v1583
      %v1652 = vpop.f32.mrf.mxu0
      %v1653 = vadd.f32 0.0, %v1652
      %v1654 = vpop.f32.mrf.mxu0
      %v1655 = vadd.f32 0.0, %v1654
      %1656 = vmatmul.bf16.gmra.mxu0 %v1584
      %v1657 = vpop.f32.mrf.mxu0
      %v1658 = vadd.f32 0.0, %v1657
      %v1659 = vpop.f32.mrf.mxu0
      %v1660 = vadd.f32 0.0, %v1659
      %1661 = vmatmul.bf16.gmra.mxu0 %v1585
      %v1662 = vpop.f32.mrf.mxu0
      %v1663 = vadd.f32 0.0, %v1662
      %v1664 = vpop.f32.mrf.mxu0
      %v1665 = vadd.f32 0.0, %v1664
      %1666 = vdwg.mxu0
      %v1667 = vadd.f32 %v1421, %v1648
      %v1668 = vadd.f32 %v1422, %v1650
      %v1669 = vadd.f32 %v1423, %v1653
      %v1670 = vadd.f32 %v1424, %v1655
      %v1671 = vadd.f32 %v1425, %v1658
      %v1672 = vadd.f32 %v1426, %v1660
      %v1673 = vadd.f32 %v1427, %v1663
      %v1674 = vadd.f32 %v1428, %v1665
      %v1675 = vld [vmem:[%s1294] sm:$0xe]
      %v1676 = vld [vmem:[%s1294 + $0x8] sm:$0xe]
      %v1677 = vld [vmem:[%s1294 + $0x10] sm:$0xe]
      %v1678 = vld [vmem:[%s1294 + $0x18] sm:$0xe]
      %v1679 = vld [vmem:[%s1294 + $0x20] sm:$0xe]
      %v1680 = vld [vmem:[%s1294 + $0x28] sm:$0xe]
      %v1681 = vld [vmem:[%s1294 + $0x30] sm:$0xe]
      %v1682 = vld [vmem:[%s1294 + $0x38] sm:$0xe]
      %v1699 = vrot.slane %v1675, 5
      %v1700 = vrot.slane %v1699, 4
      %v1701 = vrot.slane %v1430, 5
      %v1702 = vsel %vm582, %v1700, %v1701
      %v1703 = vrot.slane %v1676, 5
      %v1704 = vrot.slane %v1703, 4
      %v1705 = vrot.slane %v1432, 5
      %v1706 = vsel %vm582, %v1704, %v1705
      %v1707 = vrot.slane %v1677, 5
      %v1708 = vrot.slane %v1707, 4
      %v1709 = vrot.slane %v1434, 5
      %v1710 = vsel %vm582, %v1708, %v1709
      %v1711 = vrot.slane %v1678, 5
      %v1712 = vrot.slane %v1711, 4
      %v1713 = vrot.slane %v1436, 5
      %v1714 = vsel %vm582, %v1712, %v1713
      %v1715 = vrot.slane %v1679, 5
      %v1716 = vrot.slane %v1715, 4
      %v1717 = vrot.slane %v1438, 5
      %v1718 = vsel %vm582, %v1716, %v1717
      %v1719 = vrot.slane %v1680, 5
      %v1720 = vrot.slane %v1719, 4
      %v1721 = vrot.slane %v1440, 5
      %v1722 = vsel %vm582, %v1720, %v1721
      %v1723 = vrot.slane %v1681, 5
      %v1724 = vrot.slane %v1723, 4
      %v1725 = vrot.slane %v1442, 5
      %v1726 = vsel %vm582, %v1724, %v1725
      %v1727 = vrot.slane %v1682, 5
      %v1728 = vrot.slane %v1727, 4
      %v1729 = vrot.slane %v1444, 5
      %v1730 = vsel %vm582, %v1728, %v1729
      %s1731 = scalar_lea.vmem %s1, 512
      %v1732 = vld [vmem:[%s1731] sm:$0xf]
      %v1733 = vld [vmem:[%s1731 + $0x4] sm:$0xf]
      %v1734 = vld [vmem:[%s1731 + $0x8] sm:$0xf]
      %v1735 = vld [vmem:[%s1731 + $0xc] sm:$0xf]
      %v1736 = vld [vmem:[%s1731 + $0x10] sm:$0xf]
      %v1737 = vld [vmem:[%s1731 + $0x14] sm:$0xf]
      %v1738 = vld [vmem:[%s1731 + $0x18] sm:$0xf]
      %v1739 = vld [vmem:[%s1731 + $0x1c] sm:$0xf]
      %v1740 = vld [vmem:[%s1731 + $0x20] sm:$0xf]
      %v1741 = vld [vmem:[%s1731 + $0x24] sm:$0xf]
      %v1742 = vld [vmem:[%s1731 + $0x28] sm:$0xf]
      %v1743 = vld [vmem:[%s1731 + $0x2c] sm:$0xf]
      %v1744 = vld [vmem:[%s1731 + $0x30] sm:$0xf]
      %v1745 = vld [vmem:[%s1731 + $0x34] sm:$0xf]
      %v1746 = vld [vmem:[%s1731 + $0x38] sm:$0xf]
      %v1747 = vld [vmem:[%s1731 + $0x3c] sm:$0xf]
      %v1748 = vunpack.c.l.b16 %v1702
      %v1749 = vunpack.c.l.b16 %v1706
      %v1750 = vunpack.c.l.b16 %v1710
      %v1751 = vunpack.c.l.b16 %v1714
      %v1752 = vunpack.c.l.b16 %v1718
      %v1753 = vunpack.c.l.b16 %v1722
      %v1754 = vunpack.c.l.b16 %v1726
      %v1755 = vunpack.c.l.b16 %v1730
      %v1756 = vpack.c.b16 %v1749, %v1748
      %v1757 = vpack.c.b16 %v1751, %v1750
      %v1758 = vpack.c.b16 %v1753, %v1752
      %v1759 = vpack.c.b16 %v1755, %v1754
      %v1780 = vunpack.c.l.b16 %v1732
      %v1781 = vunpack.c.l.b16 %v1733
      %v1782 = vunpack.c.l.b16 %v1734
      %v1783 = vunpack.c.l.b16 %v1735
      %v1784 = vunpack.c.l.b16 %v1736
      %v1785 = vunpack.c.l.b16 %v1737
      %v1786 = vunpack.c.l.b16 %v1738
      %v1787 = vunpack.c.l.b16 %v1739
      %v1788 = vunpack.c.l.b16 %v1740
      %v1789 = vunpack.c.l.b16 %v1741
      %v1790 = vunpack.c.l.b16 %v1742
      %v1791 = vunpack.c.l.b16 %v1743
      %v1792 = vunpack.c.l.b16 %v1744
      %v1793 = vunpack.c.l.b16 %v1745
      %v1794 = vunpack.c.l.b16 %v1746
      %v1795 = vunpack.c.l.b16 %v1747
      %v1796 = vpack.c.b16 %v1781, %v1780
      %v1797 = vpack.c.b16 %v1783, %v1782
      %v1798 = vpack.c.b16 %v1785, %v1784
      %v1799 = vpack.c.b16 %v1787, %v1786
      %v1800 = vpack.c.b16 %v1789, %v1788
      %v1801 = vpack.c.b16 %v1791, %v1790
      %v1802 = vpack.c.b16 %v1793, %v1792
      %v1803 = vpack.c.b16 %v1795, %v1794
      %1812 = vmatpush.bf16.msra.mxu0 %v1803
      %1813 = vmatpush.bf16.msra.mxu0 %v1802
      %1814 = vmatpush.bf16.msra.mxu0 %v1801
      %1815 = vmatpush.bf16.msra.mxu0 %v1800
      %1816 = vmatpush.bf16.msra.mxu0 %v1799
      %1817 = vmatpush.bf16.msra.mxu0 %v1798
      %1818 = vmatpush.bf16.msra.mxu0 %v1797
      %1819 = vmatpush.bf16.msra.mxu0 %v1796
      %1820 = vmatmul.bf16.gmra.mxu0 %v1756
      %v1821 = vpop.f32.mrf.mxu0
      %v1822 = vadd.f32 0.0, %v1821
      %v1823 = vpop.f32.mrf.mxu0
      %v1824 = vadd.f32 0.0, %v1823
      %1825 = vmatmul.bf16.gmra.mxu0 %v1757
      %v1826 = vpop.f32.mrf.mxu0
      %v1827 = vadd.f32 0.0, %v1826
      %v1828 = vpop.f32.mrf.mxu0
      %v1829 = vadd.f32 0.0, %v1828
      %1830 = vmatmul.bf16.gmra.mxu0 %v1758
      %v1831 = vpop.f32.mrf.mxu0
      %v1832 = vadd.f32 0.0, %v1831
      %v1833 = vpop.f32.mrf.mxu0
      %v1834 = vadd.f32 0.0, %v1833
      %1835 = vmatmul.bf16.gmra.mxu0 %v1759
      %v1836 = vpop.f32.mrf.mxu0
      %v1837 = vadd.f32 0.0, %v1836
      %v1838 = vpop.f32.mrf.mxu0
      %v1839 = vadd.f32 0.0, %v1838
      %1840 = vdwg.mxu0
      %v1841 = vadd.f32 %v1667, %v1822
      %v1842 = vadd.f32 %v1668, %v1824
      %v1843 = vadd.f32 %v1669, %v1827
      %v1844 = vadd.f32 %v1670, %v1829
      %v1845 = vadd.f32 %v1671, %v1832
      %v1846 = vadd.f32 %v1672, %v1834
      %v1847 = vadd.f32 %v1673, %v1837
      %v1848 = vadd.f32 %v1674, %v1839
      %v1849 = vld [vmem:[%s2] sm:$0x1]
      %v1851 = vperm.slane %v1849, 0
      %v1853 = vadd.f32 %v1841, %v1851
      %v1854 = vadd.f32 %v1842, %v1851
      %v1855 = vadd.f32 %v1843, %v1851
      %v1856 = vadd.f32 %v1844, %v1851
      %v1857 = vadd.f32 %v1845, %v1851
      %v1858 = vadd.f32 %v1846, %v1851
      %v1859 = vadd.f32 %v1847, %v1851
      %v1860 = vadd.f32 %v1848, %v1851
      %v1861 = vpack.c.bf16 %v1853, %v1853
      %v1862 = vpack.c.bf16 %v1854, %v1854
      %v1863 = vpack.c.bf16 %v1855, %v1855
      %v1864 = vpack.c.bf16 %v1856, %v1856
      %v1865 = vpack.c.bf16 %v1857, %v1857
      %v1866 = vpack.c.bf16 %v1858, %v1858
      %v1867 = vpack.c.bf16 %v1859, %v1859
      %v1868 = vpack.c.bf16 %v1860, %v1860
      %1869 = vst [vmem:[%s192] sm:$0xf] %v1861
      %1870 = vst [vmem:[%s192 + $0x4] sm:$0xf] %v1862
      %1871 = vst [vmem:[%s192 + $0x8] sm:$0xf] %v1863
      %1872 = vst [vmem:[%s192 + $0xc] sm:$0xf] %v1864
      %1873 = vst [vmem:[%s192 + $0x10] sm:$0xf] %v1865
      %1874 = vst [vmem:[%s192 + $0x14] sm:$0xf] %v1866
      %1875 = vst [vmem:[%s192 + $0x18] sm:$0xf] %v1867
      %1876 = vst [vmem:[%s192 + $0x1c] sm:$0xf] %v1868
      %s1877 = smul.u32 8, %s19
      %p1878 = scmp.lt.s32.totalorder %s18, 1
      %s1879 = scalar_select %p1878, %s18, 1
      %p1880 = scmp.lt.s32.totalorder %s1877, 7
      %s1881 = scalar_select %p1880, %s1877, 7
      %s1882 = smul.addr %s1879, 8
      %s1883 = sadd.s32 %s1881, %s1882
      %s1884 = smul.addr %s1883, 4
      %s1885 = scalar_lea.vmem %s3, %s1884
      // Predicated region
      $region33: #{deeplabv3plus_forward.15} parent=31 // pred_check
        %p1886 = pneg %p114
      $region34: #{deeplabv3plus_forward.15} parent=31 // pred_check_branch
        %1888 = sbr.rel (%p1886) target = $region36
      $region35: #{deeplabv3plus_forward.15} parent=31 // pred_region
        %s1889 = smul.u32 8, %s19
      $region36: #{deeplabv3plus_forward.15} parent=31 // pred_fallthru
        _
    $region32: #{deeplabv3plus_forward.15} parent=5 // pred_fallthru
      _
    %p1890 = scmp.le.s32.totalorder 2, %s9
    // Predicated region
    $region37: #{deeplabv3plus_forward.15} parent=5 // pred_check
      %p1891 = pneg %p1890
    $region38: #{deeplabv3plus_forward.15} parent=5 // pred_check_branch
      %1893 = sbr.rel (%p1891) target = $region40
    $region39: #{deeplabv3plus_forward.15} parent=5 // pred_region
      %s1894 = ssub.s32 %s9, 2
      // Predicated region
      $region41: #{deeplabv3plus_forward.15} parent=39 // pred_check
        %p1895 = pneg %p120
      $region42: #{deeplabv3plus_forward.15} parent=39 // pred_check_branch
        %1897 = sbr.rel (%p1895) target = $region44
      $region43: #{deeplabv3plus_forward.15} parent=39 // pred_region
        %s1898 = smul.u32 8, %s21
        %p1899 = scmp.lt.s32.totalorder %s20, 1
        %s1900 = scalar_select %p1899, %s20, 1
        %p1901 = scmp.lt.s32.totalorder %s1898, 7
        %s1902 = scalar_select %p1901, %s1898, 7
        %s1903 = smul.addr %s1900, 8
        %s1904 = sadd.s32 %s1902, %s1903
        %s1905 = smul.addr %s1904, 4
        %s1906 = scalar_lea.vmem %s3, %s1905
      $region44: #{deeplabv3plus_forward.15} parent=39 // pred_fallthru
        _
    $region40: #{deeplabv3plus_forward.15} parent=5 // pred_fallthru
      _
  $region6: #{deeplabv3plus_forward.15} parent=0 // loop_footer
    %s13 = sadd.s32 1, %s9
  $region7: #{deeplabv3plus_forward.15} parent=0 // loop_footer_branch
    %8 = sbr.rel target = $region3
  $region8: #{deeplabv3plus_forward.15} parent=0 // loop_exit
    _

</llo_original>
